<compile_context>
chip_gen: v6e
topology: v6e:2x2x1
jax: 0.10.0
libtpu: 0.0.40
codegen_flags: <defaults>
</compile_context>

<pallas_src>
import functools
import math

import numpy as np
import jax
import jax.numpy as jnp
from jax.experimental import pallas as pl
from jax.experimental.pallas import tpu as pltpu  # noqa: F401  (kept for TPU-specific tuning hooks)

LN_EPS = 1e-6
NEG_INF = -1e9


# ----------------------------------------------------------------------------
# In-kernel helpers (traced inside Pallas kernels)
# ----------------------------------------------------------------------------

def _ln(x, g, b, eps):
    mean = jnp.mean(x, axis=-1, keepdims=True)
    var = jnp.mean(jnp.square(x - mean), axis=-1, keepdims=True)   # biased, torch-style
    return (x - mean) * jax.lax.rsqrt(var + eps) * g + b


def _mha(q, k, v, bias, wo, num_heads, dk, scale):
    """Multi-head attention over flat row slabs.

    q:(Rq,De) k,v:(Rk,De) f32.  bias:(Rq,Rk) additive f32 that already encodes
    the batch block-diagonal structure plus padding/causal masks.  wo:(De,De)
    bf16.  Heads are batched along a leading axis for score/softmax/PV; each
    head's output is accumulated into the matching K-slice of the output
    projection (no lane concat)."""
    H = num_heads
    qh = jnp.stack([q[:, h * dk:(h + 1) * dk] for h in range(H)], axis=0).astype(jnp.bfloat16)
    kh = jnp.stack([k[:, h * dk:(h + 1) * dk] for h in range(H)], axis=0).astype(jnp.bfloat16)
    vh = jnp.stack([v[:, h * dk:(h + 1) * dk] for h in range(H)], axis=0).astype(jnp.bfloat16)
    s = jnp.einsum('hqd,hkd->hqk', qh, kh,
                   preferred_element_type=jnp.float32) * scale + bias[None]
    m = jnp.max(s, axis=-1, keepdims=True)
    e = jnp.exp(s - m)
    p = e * pl.reciprocal(jnp.sum(e, axis=-1, keepdims=True), approx=True)
    ov = jnp.einsum('hqk,hkd->hqd', p.astype(jnp.bfloat16), vh,
                    preferred_element_type=jnp.float32)              # (H, Rq, dk)
    out = jnp.zeros((q.shape[0], wo.shape[1]), jnp.float32)
    for h in range(H):
        out = out + jnp.dot(ov[h].astype(jnp.bfloat16),
                            wo[h * dk:(h + 1) * dk, :],
                            preferred_element_type=jnp.float32)
    return out


# ----------------------------------------------------------------------------
# Fused encoder-stack kernel: GRU + PE pack + all encoder layers + final LN
# ----------------------------------------------------------------------------

def _encoder_stack_kernel(gru_x_ref, pe_ref, bias_ref,
                          wih_ref, whh_ref, bih_ref, bhh_ref,
                          ln1g_ref, ln1b_ref, wqkv_ref, bqkv_ref, wo_ref, bo_ref,
                          ln2g_ref, ln2b_ref, wff1_ref, bff1_ref, wff2_ref, bff2_ref,
                          lnfg_ref, lnfb_ref,
                          o_ref, *,
                          num_heads, dk, n_layers, n_real, n_pad, seq_len, hidden, eps):
    De = num_heads * dk
    Hd = hidden
    scale = 1.0 / math.sqrt(dk)

    # ---- GRU prologue: input projection hoisted into one big MXU matmul ----
    gi_all = jnp.dot(gru_x_ref[...].astype(jnp.bfloat16), wih_ref[...],
                     preferred_element_type=jnp.float32) + bih_ref[...]   # (L*Np, 3H)
    whh = whh_ref[...]
    bhh = bhh_ref[...]
    h = jnp.zeros((n_pad, Hd), jnp.float32)
    for t in range(seq_len):                       # static unroll; aligned n_pad-row slices
        gi = gi_all[t * n_pad:(t + 1) * n_pad, :]
        gh = jnp.dot(h.astype(jnp.bfloat16), whh,
                     preferred_element_type=jnp.float32) + bhh
        r = jax.nn.sigmoid(gi[:, :Hd] + gh[:, :Hd])
        z = jax.nn.sigmoid(gi[:, Hd:2 * Hd] + gh[:, Hd:2 * Hd])
        n = jnp.tanh(gi[:, 2 * Hd:] + r * gh[:, 2 * Hd:])
        h = (1.0 - z) * n + z * h

    # ---- pack GRU context with time positional encoding (stays in VMEM) ----
    x = jnp.concatenate([h[:n_real, :], pe_ref[...]], axis=-1)            # (B*T, De)
    bias = bias_ref[...]                                                  # (B*T, B*T)

    # ---- encoder layers (statically unrolled; weights indexed by layer) ----
    for l in range(n_layers):
        x1 = _ln(x, ln1g_ref[l], ln1b_ref[l], eps)
        qkv = jnp.dot(x1.astype(jnp.bfloat16), wqkv_ref[l],
                      preferred_element_type=jnp.float32) + bqkv_ref[l]
        x = x + _mha(qkv[:, :De], qkv[:, De:2 * De], qkv[:, 2 * De:],
                     bias, wo_ref[l], num_heads, dk, scale) + bo_ref[l]

        x2 = _ln(x, ln2g_ref[l], ln2b_ref[l], eps)
        h1 = jnp.maximum(jnp.dot(x2.astype(jnp.bfloat16), wff1_ref[l],
                                 preferred_element_type=jnp.float32) + bff1_ref[l], 0.0)
        x = x + jnp.dot(h1.astype(jnp.bfloat16), wff2_ref[l],
                        preferred_element_type=jnp.float32) + bff2_ref[l]

    # ---- encoder final LayerNorm ----
    o_ref[...] = _ln(x, lnfg_ref[...], lnfb_ref[...], eps)


# ----------------------------------------------------------------------------
# Fused decoder-stack kernel: PE pack + all decoder layers + final LN + head
# ----------------------------------------------------------------------------

def _decoder_stack_kernel(trg_ref, pe_ref, eo_ref, dbias_ref, xbias_ref,
                          ln1g_ref, ln1b_ref, wqkvs_ref, bqkvs_ref, wos_ref, bos_ref,
                          ln2g_ref, ln2b_ref, wqc_ref, bqc_ref, wkvc_ref, bkvc_ref,
                          woc_ref, boc_ref,
                          ln3g_ref, ln3b_ref, wff1_ref, bff1_ref, wff2_ref, bff2_ref,
                          lnfg_ref, lnfb_ref, outw_ref, outb_ref,
                          o_ref, *, num_heads, dk, n_layers, eps):
    De = num_heads * dk
    scale = 1.0 / math.sqrt(dk)

    # pack target embedding with word positional encoding (stays in VMEM)
    y = jnp.concatenate([trg_ref[...], pe_ref[...]], axis=-1)             # (B*L, De)
    eo = eo_ref[...]                                                      # (B*T, De)
    dbias = dbias_ref[...]                                                # (B*L, B*L)
    xbias = xbias_ref[...]                                                # (B*L, B*T)

    for l in range(n_layers):
        # masked self-attention
        y1 = _ln(y, ln1g_ref[l], ln1b_ref[l], eps)
        qkv = jnp.dot(y1.astype(jnp.bfloat16), wqkvs_ref[l],
                      preferred_element_type=jnp.float32) + bqkvs_ref[l]
        y = y + _mha(qkv[:, :De], qkv[:, De:2 * De], qkv[:, 2 * De:],
                     dbias, wos_ref[l], num_heads, dk, scale) + bos_ref[l]

        # cross-attention over encoder output
        y2 = _ln(y, ln2g_ref[l], ln2b_ref[l], eps)
        q = jnp.dot(y2.astype(jnp.bfloat16), wqc_ref[l],
                    preferred_element_type=jnp.float32) + bqc_ref[l]
        kv = jnp.dot(eo.astype(jnp.bfloat16), wkvc_ref[l],
                     preferred_element_type=jnp.float32) + bkvc_ref[l]
        y = y + _mha(q, kv[:, :De], kv[:, De:],
                     xbias, woc_ref[l], num_heads, dk, scale) + boc_ref[l]

        # feed-forward
        y3 = _ln(y, ln3g_ref[l], ln3b_ref[l], eps)
        h1 = jnp.maximum(jnp.dot(y3.astype(jnp.bfloat16), wff1_ref[l],
                                 preferred_element_type=jnp.float32) + bff1_ref[l], 0.0)
        y = y + jnp.dot(h1.astype(jnp.bfloat16), wff2_ref[l],
                        preferred_element_type=jnp.float32) + bff2_ref[l]

    # decoder final LN + padded vocab projection (128 lanes) + exact log-softmax
    yf = _ln(y, lnfg_ref[...], lnfb_ref[...], eps)
    logits = jnp.dot(yf.astype(jnp.bfloat16), outw_ref[...],
                     preferred_element_type=jnp.float32) + outb_ref[...]
    m = jnp.max(logits, axis=-1, keepdims=True)
    sh = logits - m
    lse = jnp.log(jnp.sum(jnp.exp(sh), axis=-1, keepdims=True))
    o_ref[...] = sh - lse                                                 # (B*L, 128) lane-dense


# ----------------------------------------------------------------------------
# pallas_call wrappers (no grid: one program handles the whole batch)
# ----------------------------------------------------------------------------

def _vmem_spec(arr):
    shape = arr.shape
    nd = len(shape)

    def _idx():
        return (0,) * nd
    return pl.BlockSpec(shape, _idx)


def encoder_stack_pallas(gru_x, pe_time_b, e_bias, prep, cfg, B):
    De = cfg["d_model"] + cfg["hidden_size"]
    T = cfg["max_time"]
    L = cfg["max_len"]
    H = cfg["num_heads"]
    Hd = cfg["hidden_size"]
    n_real = B * T
    n_pad = gru_x.shape[0] // L
    g = prep["gru"]
    enc = prep["enc_stack"]
    fl = prep["enc_ln"]

    args = [gru_x, pe_time_b, e_bias,
            g["w_ih"], g["w_hh"], g["b_ih"], g["b_hh"],
            enc["ln1_g"], enc["ln1_b"], enc["w_qkv"], enc["b_qkv"], enc["w_o"], enc["b_o"],
            enc["ln2_g"], enc["ln2_b"], enc["w_ff1"], enc["b_ff1"], enc["w_ff2"], enc["b_ff2"],
            fl["g"], fl["b"]]

    kernel = functools.partial(
        _encoder_stack_kernel,
        num_heads=H, dk=De // H, n_layers=cfg["encoder_num_layers"],
        n_real=n_real, n_pad=n_pad, seq_len=L, hidden=Hd, eps=LN_EPS)

    return pl.pallas_call(
        kernel,
        out_shape=jax.ShapeDtypeStruct((n_real, De), jnp.float32),
        in_specs=[_vmem_spec(a) for a in args],
        out_specs=pl.BlockSpec((n_real, De), lambda: (0, 0)),
    )(*args)


def decoder_stack_pallas(trg_emb, pe_word_b, e_out, d_bias, x_bias, prep, cfg, B):
    De = cfg["d_model"] + cfg["hidden_size"]
    H = cfg["num_heads"]
    dec = prep["dec_stack"]
    fl = prep["dec_ln"]
    Vp = prep["out_w_pad"].shape[1]
    RL = trg_emb.shape[0]                                  # B * max_len

    args = [trg_emb, pe_word_b, e_out, d_bias, x_bias,
            dec["ln1_g"], dec["ln1_b"], dec["w_qkv_s"], dec["b_qkv_s"], dec["w_o_s"], dec["b_o_s"],
            dec["ln2_g"], dec["ln2_b"], dec["w_q_c"], dec["b_q_c"], dec["w_kv_c"], dec["b_kv_c"],
            dec["w_o_c"], dec["b_o_c"],
            dec["ln3_g"], dec["ln3_b"], dec["w_ff1"], dec["b_ff1"], dec["w_ff2"], dec["b_ff2"],
            fl["g"], fl["b"], prep["out_w_pad"], prep["out_b_pad"]]

    kernel = functools.partial(
        _decoder_stack_kernel,
        num_heads=H, dk=De // H, n_layers=cfg["decoder_num_layers"], eps=LN_EPS)

    return pl.pallas_call(
        kernel,
        out_shape=jax.ShapeDtypeStruct((RL, Vp), jnp.float32),
        in_specs=[_vmem_spec(a) for a in args],
        out_specs=pl.BlockSpec((RL, Vp), lambda: (0, 0)),
    )(*args)


# ----------------------------------------------------------------------------
# Forward pass
# ----------------------------------------------------------------------------

def recosa_forward(prep, src_input, trg_input, e_mask, d_mask, cfg):
    D = cfg["d_model"]
    V = cfg["vocab_size"]
    T = cfg["max_time"]
    L = cfg["max_len"]
    emb = prep["embedding"]
    B = src_input.shape[0]
    N = B * T
    Np = ((N + 7) // 8) * 8                                  # sublane-aligned GRU batch

    # ---- glue: embedding gathers + packing (tiny, one-time per call) ----
    # TODO(synk): embedding gather stays in XLA; a dynamic row gather this small has no
    # clean Pallas equivalent (would need a manual DMA gather for no benefit).
    src_emb = emb[src_input]                                 # (B, T, L, D)
    x_tmn = jnp.transpose(src_emb.reshape(N, L, D), (1, 0, 2))   # (L, N, D) time-major
    gru_x = jnp.pad(x_tmn, ((0, 0), (0, Np - N), (0, 0))).reshape(L * Np, D)
    pe_time_b = jnp.tile(prep["pe_time"], (B, 1))            # (B*T, D)

    trg_emb = emb[trg_input].reshape(B * L, D)               # (B*L, D)
    pe_word_b = jnp.tile(prep["pe_word"], (B, 1))            # (B*L, D)

    # ---- block-diagonal additive attention biases (batch separation + masks) ----
    ek = e_mask[:, 0, :].reshape(-1)                         # (B*T,) encoder key validity
    tb = jnp.repeat(jnp.arange(B), T)                        # batch id per encoder row
    lb = jnp.repeat(jnp.arange(B), L)                        # batch id per decoder row
    e_bias_self = jnp.where((tb[:, None] == tb[None, :]) & (ek[None, :] > 0.5),
                            0.0, NEG_INF).astype(jnp.float32)           # (B*T, B*T)
    x_bias = jnp.where((lb[:, None] == tb[None, :]) & (ek[None, :] > 0.5),
                       0.0, NEG_INF).astype(jnp.float32)                # (B*L, B*T)
    ii = jnp.arange(B * L)
    r_b, r_i, c_j = ii // L, ii % L, ii % L
    dm = d_mask[r_b[:, None], r_i[:, None], c_j[None, :]]               # (B*L, B*L)
    d_bias_self = jnp.where((lb[:, None] == lb[None, :]) & (dm > 0.5),
                            0.0, NEG_INF).astype(jnp.float32)           # (B*L, B*L)

    # ---- fused encoder: GRU + PE pack + all layers + final LN (one launch) ----
    e_out = encoder_stack_pallas(gru_x, pe_time_b, e_bias_self, prep, cfg, B)   # (B*T, De)

    # ---- fused decoder: PE pack + all layers + final LN + head + log-softmax ----
    logp_pad = decoder_stack_pallas(trg_emb, pe_word_b, e_out, d_bias_self, x_bias,
                                    prep, cfg, B)                               # (B*L, 128)
    return logp_pad[:, :V].reshape(B, L, V)


# ----------------------------------------------------------------------------
# Parameter init (torch layout) + one-time prepare (kernel-friendly layout)
# ----------------------------------------------------------------------------

def make_pe(max_len, d_model):
    pe = np.zeros((max_len, d_model), dtype=np.float32)
    for pos in range(max_len):
        for i in range(d_model):
            angle = pos / (10000 ** (2 * i / d_model))
            pe[pos, i] = math.sin(angle) if i % 2 == 0 else math.cos(angle)
    return jnp.asarray(pe)


def init_params(key, cfg):
    D = cfg["d_model"]
    Hd = cfg["hidden_size"]
    De = D + Hd
    d_ff = cfg["d_ff"]
    V = cfg["vocab_size"]
    keys = iter(jax.random.split(key, 256))

    def nrm(shape, scale=0.1):
        return scale * jax.random.normal(next(keys), shape, dtype=jnp.float32)

    def mha_p():
        return dict(w_q=nrm((De, De)), b_q=nrm((De,)),
                    w_k=nrm((De, De)), b_k=nrm((De,)),
                    w_v=nrm((De, De)), b_v=nrm((De,)),
                    w_0=nrm((De, De)), b_0=nrm((De,)))

    def ln_p():
        return dict(gamma=jnp.ones((De,), jnp.float32), beta=jnp.zeros((De,), jnp.float32))

    def ff_p():
        return dict(w1=nrm((d_ff, De)), b1=nrm((d_ff,)),
                    w2=nrm((De, d_ff)), b2=nrm((De,)))

    return {
        "embedding": nrm((V, D)),
        "gru": dict(w_ih=nrm((3 * Hd, D)), w_hh=nrm((3 * Hd, Hd)),
                    b_ih=nrm((3 * Hd,)), b_hh=nrm((3 * Hd,))),
        "enc_layers": [dict(ln1=ln_p(), attn=mha_p(), ln2=ln_p(), ff=ff_p())
                       for _ in range(cfg["encoder_num_layers"])],
        "enc_ln": ln_p(),
        "dec_layers": [dict(ln1=ln_p(), self_attn=mha_p(), ln2=ln_p(),
                            cross_attn=mha_p(), ln3=ln_p(), ff=ff_p())
                       for _ in range(cfg["decoder_num_layers"])],
        "dec_ln": ln_p(),
        "out_w": nrm((V, De)),
        "out_b": nrm((V,)),
        "pe_word": make_pe(cfg["max_len"], D),
        "pe_time": make_pe(cfg["max_time"], D),
    }


def prepare_params(params, cfg):
    """One-time transform: transpose to (Din,Dout), concat QKV, stack per-layer
    weights along a leading layer axis, cast matmul weights to bf16, pad vocab."""
    De = cfg["d_model"] + cfg["hidden_size"]
    V = cfg["vocab_size"]
    Vp = int(pl.cdiv(V, 128) * 128)
    bf16 = jnp.bfloat16

    def row(v):
        return v.reshape(1, -1)

    def enc_layer(lp):
        a, f = lp["attn"], lp["ff"]
        return dict(
            ln1_g=row(lp["ln1"]["gamma"]), ln1_b=row(lp["ln1"]["beta"]),
            w_qkv=jnp.concatenate([a["w_q"], a["w_k"], a["w_v"]], axis=0).T.astype(bf16),
            b_qkv=row(jnp.concatenate([a["b_q"], a["b_k"], a["b_v"]])),
            w_o=a["w_0"].T.astype(bf16), b_o=row(a["b_0"]),
            ln2_g=row(lp["ln2"]["gamma"]), ln2_b=row(lp["ln2"]["beta"]),
            w_ff1=f["w1"].T.astype(bf16), b_ff1=row(f["b1"]),
            w_ff2=f["w2"].T.astype(bf16), b_ff2=row(f["b2"]))

    def dec_layer(lp):
        s, c, f = lp["self_attn"], lp["cross_attn"], lp["ff"]
        return dict(
            ln1_g=row(lp["ln1"]["gamma"]), ln1_b=row(lp["ln1"]["beta"]),
            w_qkv_s=jnp.concatenate([s["w_q"], s["w_k"], s["w_v"]], axis=0).T.astype(bf16),
            b_qkv_s=row(jnp.concatenate([s["b_q"], s["b_k"], s["b_v"]])),
            w_o_s=s["w_0"].T.astype(bf16), b_o_s=row(s["b_0"]),
            ln2_g=row(lp["ln2"]["gamma"]), ln2_b=row(lp["ln2"]["beta"]),
            w_q_c=c["w_q"].T.astype(bf16), b_q_c=row(c["b_q"]),
            w_kv_c=jnp.concatenate([c["w_k"], c["w_v"]], axis=0).T.astype(bf16),
            b_kv_c=row(jnp.concatenate([c["b_k"], c["b_v"]])),
            w_o_c=c["w_0"].T.astype(bf16), b_o_c=row(c["b_0"]),
            ln3_g=row(lp["ln3"]["gamma"]), ln3_b=row(lp["ln3"]["beta"]),
            w_ff1=f["w1"].T.astype(bf16), b_ff1=row(f["b1"]),
            w_ff2=f["w2"].T.astype(bf16), b_ff2=row(f["b2"]))

    def stack(layers):
        return {k: jnp.stack([lp[k] for lp in layers], axis=0) for k in layers[0]}

    g = params["gru"]
    out_w_pad = jnp.zeros((De, Vp), jnp.float32).at[:, :V].set(params["out_w"].T).astype(bf16)
    out_b_pad = jnp.full((1, Vp), NEG_INF, jnp.float32).at[:, :V].set(params["out_b"])

    return {
        "embedding": params["embedding"],
        "gru": dict(w_ih=g["w_ih"].T.astype(bf16), w_hh=g["w_hh"].T.astype(bf16),
                    b_ih=g["b_ih"].reshape(1, -1), b_hh=g["b_hh"].reshape(1, -1)),
        "enc_stack": stack([enc_layer(lp) for lp in params["enc_layers"]]),
        "enc_ln": dict(g=row(params["enc_ln"]["gamma"]), b=row(params["enc_ln"]["beta"])),
        "dec_stack": stack([dec_layer(lp) for lp in params["dec_layers"]]),
        "dec_ln": dict(g=row(params["dec_ln"]["gamma"]), b=row(params["dec_ln"]["beta"])),
        "out_w_pad": out_w_pad,
        "out_b_pad": out_b_pad,
        "pe_word": params["pe_word"],
        "pe_time": params["pe_time"],
    }


# ----------------------------------------------------------------------------
# Main
# ----------------------------------------------------------------------------

if __name__ == "__main__":
    cfg = dict(
        vocab_size=100,
        d_model=32,
        hidden_size=32,          # must equal d_model for the original .view() to give (B,T,d)
        d_ff=64,
        num_heads=4,
        dropout=0.0,             # dropout layers are identity
        max_len=8,               # words per utterance / target length
        max_time=6,              # dialogue turns
        encoder_num_layers=2,
        decoder_num_layers=2,
        gru_num_layers=1,
        device="tpu",
    )

    key = jax.random.PRNGKey(0)
    k_param, k_src, k_trg = jax.random.split(key, 3)
    params = init_params(k_param, cfg)
    prep = prepare_params(params, cfg)

    B = 2
    src_input = jax.random.randint(k_src, (B, cfg["max_time"], cfg["max_len"]),
                                   0, cfg["vocab_size"], dtype=jnp.int32)
    trg_input = jax.random.randint(k_trg, (B, cfg["max_len"]),
                                   0, cfg["vocab_size"], dtype=jnp.int32)

    # encoder padding mask over dialogue turns: (B, 1, max_time); last turn of batch 1 masked
    e_mask = np.ones((B, 1, cfg["max_time"]), dtype=np.float32)
    e_mask[1, 0, -1] = 0.0
    e_mask = jnp.asarray(e_mask)
    # decoder causal mask: (B, max_len, max_len)
    d_mask = jnp.broadcast_to(
        jnp.tril(jnp.ones((cfg["max_len"], cfg["max_len"]), jnp.float32))[None],
        (B, cfg["max_len"], cfg["max_len"]))

    fwd = jax.jit(functools.partial(recosa_forward, cfg=cfg))
    out = fwd(prep, src_input, trg_input, e_mask, d_mask)
    out = jax.block_until_ready(out)

    assert out.shape == (B, cfg["max_len"], cfg["vocab_size"])
    assert bool(jnp.all(jnp.isfinite(out)))
    # rows of log-softmax should sum to ~1 after exp (padded vocab columns carry ~0 mass)
    assert bool(jnp.allclose(jnp.sum(jnp.exp(out), axis=-1), 1.0, atol=1e-4))
    print("KERNEL_OK")
</pallas_src>

<mosaic_0001>
module attributes {stable_mosaic.version = 11 : i64} {
  func.func @_encoder_stack_kernel(%arg0: memref<128x32xf32, #tpu.memory_space<vmem>>, %arg1: memref<12x32xf32, #tpu.memory_space<vmem>>, %arg2: memref<12x12xf32, #tpu.memory_space<vmem>>, %arg3: memref<32x96xbf16, #tpu.memory_space<vmem>>, %arg4: memref<32x96xbf16, #tpu.memory_space<vmem>>, %arg5: memref<1x96xf32, #tpu.memory_space<vmem>>, %arg6: memref<1x96xf32, #tpu.memory_space<vmem>>, %arg7: memref<2x1x64xf32, #tpu.memory_space<vmem>>, %arg8: memref<2x1x64xf32, #tpu.memory_space<vmem>>, %arg9: memref<2x64x192xbf16, #tpu.memory_space<vmem>>, %arg10: memref<2x1x192xf32, #tpu.memory_space<vmem>>, %arg11: memref<2x64x64xbf16, #tpu.memory_space<vmem>>, %arg12: memref<2x1x64xf32, #tpu.memory_space<vmem>>, %arg13: memref<2x1x64xf32, #tpu.memory_space<vmem>>, %arg14: memref<2x1x64xf32, #tpu.memory_space<vmem>>, %arg15: memref<2x64x64xbf16, #tpu.memory_space<vmem>>, %arg16: memref<2x1x64xf32, #tpu.memory_space<vmem>>, %arg17: memref<2x64x64xbf16, #tpu.memory_space<vmem>>, %arg18: memref<2x1x64xf32, #tpu.memory_space<vmem>>, %arg19: memref<1x64xf32, #tpu.memory_space<vmem>>, %arg20: memref<1x64xf32, #tpu.memory_space<vmem>>, %arg21: memref<12x64xf32, #tpu.memory_space<vmem>>) attributes {dimension_semantics = [], scalar_prefetch = 0 : i64, scratch_operands = 0 : i64, tpu.core_type = #tpu.core_type<tc>} {
    %c0 = arith.constant 0 : index
    %c0_0 = arith.constant 0 : index
    %0 = vector.load %arg0[%c0, %c0_0] : memref<128x32xf32, #tpu.memory_space<vmem>>, vector<128x32xf32>
    %1 = arith.truncf %0 : vector<128x32xf32> to vector<128x32xbf16>
    %c0_1 = arith.constant 0 : index
    %c0_2 = arith.constant 0 : index
    %2 = vector.load %arg3[%c0_1, %c0_2] : memref<32x96xbf16, #tpu.memory_space<vmem>>, vector<32x96xbf16>
    %cst = arith.constant dense<0.000000e+00> : vector<128x96xf32>
    %3 = tpu.matmul %1, %2, %cst {dimension_numbers = #tpu.dot_dimension_numbers<[1], [0], [0], [1], [0, 0, 1, 1], [], []>} : vector<128x32xbf16>, vector<32x96xbf16>, vector<128x96xf32> -> vector<128x96xf32>
    %c0_3 = arith.constant 0 : index
    %c0_4 = arith.constant 0 : index
    %4 = vector.load %arg5[%c0_3, %c0_4] : memref<1x96xf32, #tpu.memory_space<vmem>>, vector<1x96xf32>
    %5 = vector.broadcast %4 : vector<1x96xf32> to vector<128x96xf32>
    %6 = arith.addf %3, %5 : vector<128x96xf32>
    %c0_5 = arith.constant 0 : index
    %c0_6 = arith.constant 0 : index
    %7 = vector.load %arg4[%c0_5, %c0_6] : memref<32x96xbf16, #tpu.memory_space<vmem>>, vector<32x96xbf16>
    %c0_7 = arith.constant 0 : index
    %c0_8 = arith.constant 0 : index
    %8 = vector.load %arg6[%c0_7, %c0_8] : memref<1x96xf32, #tpu.memory_space<vmem>>, vector<1x96xf32>
    %cst_9 = arith.constant 0.000000e+00 : f32
    %9 = vector.broadcast %cst_9 : f32 to vector<16x32xf32>
    %10 = vector.extract_strided_slice %6 {offsets = [0, 0], sizes = [16, 96], strides = [1, 1]} : vector<128x96xf32> to vector<16x96xf32>
    %11 = arith.truncf %9 : vector<16x32xf32> to vector<16x32xbf16>
    %cst_10 = arith.constant dense<0.000000e+00> : vector<16x96xf32>
    %12 = tpu.matmul %11, %7, %cst_10 {dimension_numbers = #tpu.dot_dimension_numbers<[1], [0], [0], [1], [0, 0, 1, 1], [], []>} : vector<16x32xbf16>, vector<32x96xbf16>, vector<16x96xf32> -> vector<16x96xf32>
    %13 = vector.broadcast %8 : vector<1x96xf32> to vector<16x96xf32>
    %14 = arith.addf %12, %13 : vector<16x96xf32>
    %15 = vector.extract_strided_slice %10 {offsets = [0, 0], sizes = [16, 32], strides = [1, 1]} : vector<16x96xf32> to vector<16x32xf32>
    %16 = vector.extract_strided_slice %14 {offsets = [0, 0], sizes = [16, 32], strides = [1, 1]} : vector<16x96xf32> to vector<16x32xf32>
    %17 = arith.addf %15, %16 : vector<16x32xf32>
    %18 = arith.negf %17 : vector<16x32xf32>
    %19 = math.exp %18 : vector<16x32xf32>
    %cst_11 = arith.constant 1.000000e+00 : f32
    %20 = vector.broadcast %cst_11 : f32 to vector<16x32xf32>
    %21 = arith.addf %20, %19 : vector<16x32xf32>
    %22 = arith.divf %20, %21 : vector<16x32xf32>
    %23 = vector.extract_strided_slice %10 {offsets = [0, 32], sizes = [16, 32], strides = [1, 1]} : vector<16x96xf32> to vector<16x32xf32>
    %24 = vector.extract_strided_slice %14 {offsets = [0, 32], sizes = [16, 32], strides = [1, 1]} : vector<16x96xf32> to vector<16x32xf32>
    %25 = arith.addf %23, %24 : vector<16x32xf32>
    %26 = arith.negf %25 : vector<16x32xf32>
    %27 = math.exp %26 : vector<16x32xf32>
    %cst_12 = arith.constant 1.000000e+00 : f32
    %28 = vector.broadcast %cst_12 : f32 to vector<16x32xf32>
    %29 = arith.addf %28, %27 : vector<16x32xf32>
    %30 = arith.divf %28, %29 : vector<16x32xf32>
    %31 = vector.extract_strided_slice %10 {offsets = [0, 64], sizes = [16, 32], strides = [1, 1]} : vector<16x96xf32> to vector<16x32xf32>
    %32 = vector.extract_strided_slice %14 {offsets = [0, 64], sizes = [16, 32], strides = [1, 1]} : vector<16x96xf32> to vector<16x32xf32>
    %33 = arith.mulf %22, %32 : vector<16x32xf32>
    %34 = arith.addf %31, %33 : vector<16x32xf32>
    %35 = math.tanh %34 : vector<16x32xf32>
    %cst_13 = arith.constant 1.000000e+00 : f32
    %36 = vector.broadcast %cst_13 : f32 to vector<16x32xf32>
    %37 = arith.subf %36, %30 : vector<16x32xf32>
    %38 = arith.mulf %37, %35 : vector<16x32xf32>
    %39 = arith.mulf %30, %9 : vector<16x32xf32>
    %40 = arith.addf %38, %39 : vector<16x32xf32>
    %41 = vector.extract_strided_slice %6 {offsets = [16, 0], sizes = [16, 96], strides = [1, 1]} : vector<128x96xf32> to vector<16x96xf32>
    %42 = arith.truncf %40 : vector<16x32xf32> to vector<16x32xbf16>
    %cst_14 = arith.constant dense<0.000000e+00> : vector<16x96xf32>
    %43 = tpu.matmul %42, %7, %cst_14 {dimension_numbers = #tpu.dot_dimension_numbers<[1], [0], [0], [1], [0, 0, 1, 1], [], []>} : vector<16x32xbf16>, vector<32x96xbf16>, vector<16x96xf32> -> vector<16x96xf32>
    %44 = vector.broadcast %8 : vector<1x96xf32> to vector<16x96xf32>
    %45 = arith.addf %43, %44 : vector<16x96xf32>
    %46 = vector.extract_strided_slice %41 {offsets = [0, 0], sizes = [16, 32], strides = [1, 1]} : vector<16x96xf32> to vector<16x32xf32>
    %47 = vector.extract_strided_slice %45 {offsets = [0, 0], sizes = [16, 32], strides = [1, 1]} : vector<16x96xf32> to vector<16x32xf32>
    %48 = arith.addf %46, %47 : vector<16x32xf32>
    %49 = arith.negf %48 : vector<16x32xf32>
    %50 = math.exp %49 : vector<16x32xf32>
    %cst_15 = arith.constant 1.000000e+00 : f32
    %51 = vector.broadcast %cst_15 : f32 to vector<16x32xf32>
    %52 = arith.addf %51, %50 : vector<16x32xf32>
    %53 = arith.divf %51, %52 : vector<16x32xf32>
    %54 = vector.extract_strided_slice %41 {offsets = [0, 32], sizes = [16, 32], strides = [1, 1]} : vector<16x96xf32> to vector<16x32xf32>
    %55 = vector.extract_strided_slice %45 {offsets = [0, 32], sizes = [16, 32], strides = [1, 1]} : vector<16x96xf32> to vector<16x32xf32>
    %56 = arith.addf %54, %55 : vector<16x32xf32>
    %57 = arith.negf %56 : vector<16x32xf32>
    %58 = math.exp %57 : vector<16x32xf32>
    %cst_16 = arith.constant 1.000000e+00 : f32
    %59 = vector.broadcast %cst_16 : f32 to vector<16x32xf32>
    %60 = arith.addf %59, %58 : vector<16x32xf32>
    %61 = arith.divf %59, %60 : vector<16x32xf32>
    %62 = vector.extract_strided_slice %41 {offsets = [0, 64], sizes = [16, 32], strides = [1, 1]} : vector<16x96xf32> to vector<16x32xf32>
    %63 = vector.extract_strided_slice %45 {offsets = [0, 64], sizes = [16, 32], strides = [1, 1]} : vector<16x96xf32> to vector<16x32xf32>
    %64 = arith.mulf %53, %63 : vector<16x32xf32>
    %65 = arith.addf %62, %64 : vector<16x32xf32>
    %66 = math.tanh %65 : vector<16x32xf32>
    %cst_17 = arith.constant 1.000000e+00 : f32
    %67 = vector.broadcast %cst_17 : f32 to vector<16x32xf32>
    %68 = arith.subf %67, %61 : vector<16x32xf32>
    %69 = arith.mulf %68, %66 : vector<16x32xf32>
    %70 = arith.mulf %61, %40 : vector<16x32xf32>
    %71 = arith.addf %69, %70 : vector<16x32xf32>
    %72 = vector.extract_strided_slice %6 {offsets = [32, 0], sizes = [16, 96], strides = [1, 1]} : vector<128x96xf32> to vector<16x96xf32>
    %73 = arith.truncf %71 : vector<16x32xf32> to vector<16x32xbf16>
    %cst_18 = arith.constant dense<0.000000e+00> : vector<16x96xf32>
    %74 = tpu.matmul %73, %7, %cst_18 {dimension_numbers = #tpu.dot_dimension_numbers<[1], [0], [0], [1], [0, 0, 1, 1], [], []>} : vector<16x32xbf16>, vector<32x96xbf16>, vector<16x96xf32> -> vector<16x96xf32>
    %75 = vector.broadcast %8 : vector<1x96xf32> to vector<16x96xf32>
    %76 = arith.addf %74, %75 : vector<16x96xf32>
    %77 = vector.extract_strided_slice %72 {offsets = [0, 0], sizes = [16, 32], strides = [1, 1]} : vector<16x96xf32> to vector<16x32xf32>
    %78 = vector.extract_strided_slice %76 {offsets = [0, 0], sizes = [16, 32], strides = [1, 1]} : vector<16x96xf32> to vector<16x32xf32>
    %79 = arith.addf %77, %78 : vector<16x32xf32>
    %80 = arith.negf %79 : vector<16x32xf32>
    %81 = math.exp %80 : vector<16x32xf32>
    %cst_19 = arith.constant 1.000000e+00 : f32
    %82 = vector.broadcast %cst_19 : f32 to vector<16x32xf32>
    %83 = arith.addf %82, %81 : vector<16x32xf32>
    %84 = arith.divf %82, %83 : vector<16x32xf32>
    %85 = vector.extract_strided_slice %72 {offsets = [0, 32], sizes = [16, 32], strides = [1, 1]} : vector<16x96xf32> to vector<16x32xf32>
    %86 = vector.extract_strided_slice %76 {offsets = [0, 32], sizes = [16, 32], strides = [1, 1]} : vector<16x96xf32> to vector<16x32xf32>
    %87 = arith.addf %85, %86 : vector<16x32xf32>
    %88 = arith.negf %87 : vector<16x32xf32>
    %89 = math.exp %88 : vector<16x32xf32>
    %cst_20 = arith.constant 1.000000e+00 : f32
    %90 = vector.broadcast %cst_20 : f32 to vector<16x32xf32>
    %91 = arith.addf %90, %89 : vector<16x32xf32>
    %92 = arith.divf %90, %91 : vector<16x32xf32>
    %93 = vector.extract_strided_slice %72 {offsets = [0, 64], sizes = [16, 32], strides = [1, 1]} : vector<16x96xf32> to vector<16x32xf32>
    %94 = vector.extract_strided_slice %76 {offsets = [0, 64], sizes = [16, 32], strides = [1, 1]} : vector<16x96xf32> to vector<16x32xf32>
    %95 = arith.mulf %84, %94 : vector<16x32xf32>
    %96 = arith.addf %93, %95 : vector<16x32xf32>
    %97 = math.tanh %96 : vector<16x32xf32>
    %cst_21 = arith.constant 1.000000e+00 : f32
    %98 = vector.broadcast %cst_21 : f32 to vector<16x32xf32>
    %99 = arith.subf %98, %92 : vector<16x32xf32>
    %100 = arith.mulf %99, %97 : vector<16x32xf32>
    %101 = arith.mulf %92, %71 : vector<16x32xf32>
    %102 = arith.addf %100, %101 : vector<16x32xf32>
    %103 = vector.extract_strided_slice %6 {offsets = [48, 0], sizes = [16, 96], strides = [1, 1]} : vector<128x96xf32> to vector<16x96xf32>
    %104 = arith.truncf %102 : vector<16x32xf32> to vector<16x32xbf16>
    %cst_22 = arith.constant dense<0.000000e+00> : vector<16x96xf32>
    %105 = tpu.matmul %104, %7, %cst_22 {dimension_numbers = #tpu.dot_dimension_numbers<[1], [0], [0], [1], [0, 0, 1, 1], [], []>} : vector<16x32xbf16>, vector<32x96xbf16>, vector<16x96xf32> -> vector<16x96xf32>
    %106 = vector.broadcast %8 : vector<1x96xf32> to vector<16x96xf32>
    %107 = arith.addf %105, %106 : vector<16x96xf32>
    %108 = vector.extract_strided_slice %103 {offsets = [0, 0], sizes = [16, 32], strides = [1, 1]} : vector<16x96xf32> to vector<16x32xf32>
    %109 = vector.extract_strided_slice %107 {offsets = [0, 0], sizes = [16, 32], strides = [1, 1]} : vector<16x96xf32> to vector<16x32xf32>
    %110 = arith.addf %108, %109 : vector<16x32xf32>
    %111 = arith.negf %110 : vector<16x32xf32>
    %112 = math.exp %111 : vector<16x32xf32>
    %cst_23 = arith.constant 1.000000e+00 : f32
    %113 = vector.broadcast %cst_23 : f32 to vector<16x32xf32>
    %114 = arith.addf %113, %112 : vector<16x32xf32>
    %115 = arith.divf %113, %114 : vector<16x32xf32>
    %116 = vector.extract_strided_slice %103 {offsets = [0, 32], sizes = [16, 32], strides = [1, 1]} : vector<16x96xf32> to vector<16x32xf32>
    %117 = vector.extract_strided_slice %107 {offsets = [0, 32], sizes = [16, 32], strides = [1, 1]} : vector<16x96xf32> to vector<16x32xf32>
    %118 = arith.addf %116, %117 : vector<16x32xf32>
    %119 = arith.negf %118 : vector<16x32xf32>
    %120 = math.exp %119 : vector<16x32xf32>
    %cst_24 = arith.constant 1.000000e+00 : f32
    %121 = vector.broadcast %cst_24 : f32 to vector<16x32xf32>
    %122 = arith.addf %121, %120 : vector<16x32xf32>
    %123 = arith.divf %121, %122 : vector<16x32xf32>
    %124 = vector.extract_strided_slice %103 {offsets = [0, 64], sizes = [16, 32], strides = [1, 1]} : vector<16x96xf32> to vector<16x32xf32>
    %125 = vector.extract_strided_slice %107 {offsets = [0, 64], sizes = [16, 32], strides = [1, 1]} : vector<16x96xf32> to vector<16x32xf32>
    %126 = arith.mulf %115, %125 : vector<16x32xf32>
    %127 = arith.addf %124, %126 : vector<16x32xf32>
    %128 = math.tanh %127 : vector<16x32xf32>
    %cst_25 = arith.constant 1.000000e+00 : f32
    %129 = vector.broadcast %cst_25 : f32 to vector<16x32xf32>
    %130 = arith.subf %129, %123 : vector<16x32xf32>
    %131 = arith.mulf %130, %128 : vector<16x32xf32>
    %132 = arith.mulf %123, %102 : vector<16x32xf32>
    %133 = arith.addf %131, %132 : vector<16x32xf32>
    %134 = vector.extract_strided_slice %6 {offsets = [64, 0], sizes = [16, 96], strides = [1, 1]} : vector<128x96xf32> to vector<16x96xf32>
    %135 = arith.truncf %133 : vector<16x32xf32> to vector<16x32xbf16>
    %cst_26 = arith.constant dense<0.000000e+00> : vector<16x96xf32>
    %136 = tpu.matmul %135, %7, %cst_26 {dimension_numbers = #tpu.dot_dimension_numbers<[1], [0], [0], [1], [0, 0, 1, 1], [], []>} : vector<16x32xbf16>, vector<32x96xbf16>, vector<16x96xf32> -> vector<16x96xf32>
    %137 = vector.broadcast %8 : vector<1x96xf32> to vector<16x96xf32>
    %138 = arith.addf %136, %137 : vector<16x96xf32>
    %139 = vector.extract_strided_slice %134 {offsets = [0, 0], sizes = [16, 32], strides = [1, 1]} : vector<16x96xf32> to vector<16x32xf32>
    %140 = vector.extract_strided_slice %138 {offsets = [0, 0], sizes = [16, 32], strides = [1, 1]} : vector<16x96xf32> to vector<16x32xf32>
    %141 = arith.addf %139, %140 : vector<16x32xf32>
    %142 = arith.negf %141 : vector<16x32xf32>
    %143 = math.exp %142 : vector<16x32xf32>
    %cst_27 = arith.constant 1.000000e+00 : f32
    %144 = vector.broadcast %cst_27 : f32 to vector<16x32xf32>
    %145 = arith.addf %144, %143 : vector<16x32xf32>
    %146 = arith.divf %144, %145 : vector<16x32xf32>
    %147 = vector.extract_strided_slice %134 {offsets = [0, 32], sizes = [16, 32], strides = [1, 1]} : vector<16x96xf32> to vector<16x32xf32>
    %148 = vector.extract_strided_slice %138 {offsets = [0, 32], sizes = [16, 32], strides = [1, 1]} : vector<16x96xf32> to vector<16x32xf32>
    %149 = arith.addf %147, %148 : vector<16x32xf32>
    %150 = arith.negf %149 : vector<16x32xf32>
    %151 = math.exp %150 : vector<16x32xf32>
    %cst_28 = arith.constant 1.000000e+00 : f32
    %152 = vector.broadcast %cst_28 : f32 to vector<16x32xf32>
    %153 = arith.addf %152, %151 : vector<16x32xf32>
    %154 = arith.divf %152, %153 : vector<16x32xf32>
    %155 = vector.extract_strided_slice %134 {offsets = [0, 64], sizes = [16, 32], strides = [1, 1]} : vector<16x96xf32> to vector<16x32xf32>
    %156 = vector.extract_strided_slice %138 {offsets = [0, 64], sizes = [16, 32], strides = [1, 1]} : vector<16x96xf32> to vector<16x32xf32>
    %157 = arith.mulf %146, %156 : vector<16x32xf32>
    %158 = arith.addf %155, %157 : vector<16x32xf32>
    %159 = math.tanh %158 : vector<16x32xf32>
    %cst_29 = arith.constant 1.000000e+00 : f32
    %160 = vector.broadcast %cst_29 : f32 to vector<16x32xf32>
    %161 = arith.subf %160, %154 : vector<16x32xf32>
    %162 = arith.mulf %161, %159 : vector<16x32xf32>
    %163 = arith.mulf %154, %133 : vector<16x32xf32>
    %164 = arith.addf %162, %163 : vector<16x32xf32>
    %165 = vector.extract_strided_slice %6 {offsets = [80, 0], sizes = [16, 96], strides = [1, 1]} : vector<128x96xf32> to vector<16x96xf32>
    %166 = arith.truncf %164 : vector<16x32xf32> to vector<16x32xbf16>
    %cst_30 = arith.constant dense<0.000000e+00> : vector<16x96xf32>
    %167 = tpu.matmul %166, %7, %cst_30 {dimension_numbers = #tpu.dot_dimension_numbers<[1], [0], [0], [1], [0, 0, 1, 1], [], []>} : vector<16x32xbf16>, vector<32x96xbf16>, vector<16x96xf32> -> vector<16x96xf32>
    %168 = vector.broadcast %8 : vector<1x96xf32> to vector<16x96xf32>
    %169 = arith.addf %167, %168 : vector<16x96xf32>
    %170 = vector.extract_strided_slice %165 {offsets = [0, 0], sizes = [16, 32], strides = [1, 1]} : vector<16x96xf32> to vector<16x32xf32>
    %171 = vector.extract_strided_slice %169 {offsets = [0, 0], sizes = [16, 32], strides = [1, 1]} : vector<16x96xf32> to vector<16x32xf32>
    %172 = arith.addf %170, %171 : vector<16x32xf32>
    %173 = arith.negf %172 : vector<16x32xf32>
    %174 = math.exp %173 : vector<16x32xf32>
    %cst_31 = arith.constant 1.000000e+00 : f32
    %175 = vector.broadcast %cst_31 : f32 to vector<16x32xf32>
    %176 = arith.addf %175, %174 : vector<16x32xf32>
    %177 = arith.divf %175, %176 : vector<16x32xf32>
    %178 = vector.extract_strided_slice %165 {offsets = [0, 32], sizes = [16, 32], strides = [1, 1]} : vector<16x96xf32> to vector<16x32xf32>
    %179 = vector.extract_strided_slice %169 {offsets = [0, 32], sizes = [16, 32], strides = [1, 1]} : vector<16x96xf32> to vector<16x32xf32>
    %180 = arith.addf %178, %179 : vector<16x32xf32>
    %181 = arith.negf %180 : vector<16x32xf32>
    %182 = math.exp %181 : vector<16x32xf32>
    %cst_32 = arith.constant 1.000000e+00 : f32
    %183 = vector.broadcast %cst_32 : f32 to vector<16x32xf32>
    %184 = arith.addf %183, %182 : vector<16x32xf32>
    %185 = arith.divf %183, %184 : vector<16x32xf32>
    %186 = vector.extract_strided_slice %165 {offsets = [0, 64], sizes = [16, 32], strides = [1, 1]} : vector<16x96xf32> to vector<16x32xf32>
    %187 = vector.extract_strided_slice %169 {offsets = [0, 64], sizes = [16, 32], strides = [1, 1]} : vector<16x96xf32> to vector<16x32xf32>
    %188 = arith.mulf %177, %187 : vector<16x32xf32>
    %189 = arith.addf %186, %188 : vector<16x32xf32>
    %190 = math.tanh %189 : vector<16x32xf32>
    %cst_33 = arith.constant 1.000000e+00 : f32
    %191 = vector.broadcast %cst_33 : f32 to vector<16x32xf32>
    %192 = arith.subf %191, %185 : vector<16x32xf32>
    %193 = arith.mulf %192, %190 : vector<16x32xf32>
    %194 = arith.mulf %185, %164 : vector<16x32xf32>
    %195 = arith.addf %193, %194 : vector<16x32xf32>
    %196 = vector.extract_strided_slice %6 {offsets = [96, 0], sizes = [16, 96], strides = [1, 1]} : vector<128x96xf32> to vector<16x96xf32>
    %197 = arith.truncf %195 : vector<16x32xf32> to vector<16x32xbf16>
    %cst_34 = arith.constant dense<0.000000e+00> : vector<16x96xf32>
    %198 = tpu.matmul %197, %7, %cst_34 {dimension_numbers = #tpu.dot_dimension_numbers<[1], [0], [0], [1], [0, 0, 1, 1], [], []>} : vector<16x32xbf16>, vector<32x96xbf16>, vector<16x96xf32> -> vector<16x96xf32>
    %199 = vector.broadcast %8 : vector<1x96xf32> to vector<16x96xf32>
    %200 = arith.addf %198, %199 : vector<16x96xf32>
    %201 = vector.extract_strided_slice %196 {offsets = [0, 0], sizes = [16, 32], strides = [1, 1]} : vector<16x96xf32> to vector<16x32xf32>
    %202 = vector.extract_strided_slice %200 {offsets = [0, 0], sizes = [16, 32], strides = [1, 1]} : vector<16x96xf32> to vector<16x32xf32>
    %203 = arith.addf %201, %202 : vector<16x32xf32>
    %204 = arith.negf %203 : vector<16x32xf32>
    %205 = math.exp %204 : vector<16x32xf32>
    %cst_35 = arith.constant 1.000000e+00 : f32
    %206 = vector.broadcast %cst_35 : f32 to vector<16x32xf32>
    %207 = arith.addf %206, %205 : vector<16x32xf32>
    %208 = arith.divf %206, %207 : vector<16x32xf32>
    %209 = vector.extract_strided_slice %196 {offsets = [0, 32], sizes = [16, 32], strides = [1, 1]} : vector<16x96xf32> to vector<16x32xf32>
    %210 = vector.extract_strided_slice %200 {offsets = [0, 32], sizes = [16, 32], strides = [1, 1]} : vector<16x96xf32> to vector<16x32xf32>
    %211 = arith.addf %209, %210 : vector<16x32xf32>
    %212 = arith.negf %211 : vector<16x32xf32>
    %213 = math.exp %212 : vector<16x32xf32>
    %cst_36 = arith.constant 1.000000e+00 : f32
    %214 = vector.broadcast %cst_36 : f32 to vector<16x32xf32>
    %215 = arith.addf %214, %213 : vector<16x32xf32>
    %216 = arith.divf %214, %215 : vector<16x32xf32>
    %217 = vector.extract_strided_slice %196 {offsets = [0, 64], sizes = [16, 32], strides = [1, 1]} : vector<16x96xf32> to vector<16x32xf32>
    %218 = vector.extract_strided_slice %200 {offsets = [0, 64], sizes = [16, 32], strides = [1, 1]} : vector<16x96xf32> to vector<16x32xf32>
    %219 = arith.mulf %208, %218 : vector<16x32xf32>
    %220 = arith.addf %217, %219 : vector<16x32xf32>
    %221 = math.tanh %220 : vector<16x32xf32>
    %cst_37 = arith.constant 1.000000e+00 : f32
    %222 = vector.broadcast %cst_37 : f32 to vector<16x32xf32>
    %223 = arith.subf %222, %216 : vector<16x32xf32>
    %224 = arith.mulf %223, %221 : vector<16x32xf32>
    %225 = arith.mulf %216, %195 : vector<16x32xf32>
    %226 = arith.addf %224, %225 : vector<16x32xf32>
    %227 = vector.extract_strided_slice %6 {offsets = [112, 0], sizes = [16, 96], strides = [1, 1]} : vector<128x96xf32> to vector<16x96xf32>
    %228 = arith.truncf %226 : vector<16x32xf32> to vector<16x32xbf16>
    %cst_38 = arith.constant dense<0.000000e+00> : vector<16x96xf32>
    %229 = tpu.matmul %228, %7, %cst_38 {dimension_numbers = #tpu.dot_dimension_numbers<[1], [0], [0], [1], [0, 0, 1, 1], [], []>} : vector<16x32xbf16>, vector<32x96xbf16>, vector<16x96xf32> -> vector<16x96xf32>
    %230 = vector.broadcast %8 : vector<1x96xf32> to vector<16x96xf32>
    %231 = arith.addf %229, %230 : vector<16x96xf32>
    %232 = vector.extract_strided_slice %227 {offsets = [0, 0], sizes = [16, 32], strides = [1, 1]} : vector<16x96xf32> to vector<16x32xf32>
    %233 = vector.extract_strided_slice %231 {offsets = [0, 0], sizes = [16, 32], strides = [1, 1]} : vector<16x96xf32> to vector<16x32xf32>
    %234 = arith.addf %232, %233 : vector<16x32xf32>
    %235 = arith.negf %234 : vector<16x32xf32>
    %236 = math.exp %235 : vector<16x32xf32>
    %cst_39 = arith.constant 1.000000e+00 : f32
    %237 = vector.broadcast %cst_39 : f32 to vector<16x32xf32>
    %238 = arith.addf %237, %236 : vector<16x32xf32>
    %239 = arith.divf %237, %238 : vector<16x32xf32>
    %240 = vector.extract_strided_slice %227 {offsets = [0, 32], sizes = [16, 32], strides = [1, 1]} : vector<16x96xf32> to vector<16x32xf32>
    %241 = vector.extract_strided_slice %231 {offsets = [0, 32], sizes = [16, 32], strides = [1, 1]} : vector<16x96xf32> to vector<16x32xf32>
    %242 = arith.addf %240, %241 : vector<16x32xf32>
    %243 = arith.negf %242 : vector<16x32xf32>
    %244 = math.exp %243 : vector<16x32xf32>
    %cst_40 = arith.constant 1.000000e+00 : f32
    %245 = vector.broadcast %cst_40 : f32 to vector<16x32xf32>
    %246 = arith.addf %245, %244 : vector<16x32xf32>
    %247 = arith.divf %245, %246 : vector<16x32xf32>
    %248 = vector.extract_strided_slice %227 {offsets = [0, 64], sizes = [16, 32], strides = [1, 1]} : vector<16x96xf32> to vector<16x32xf32>
    %249 = vector.extract_strided_slice %231 {offsets = [0, 64], sizes = [16, 32], strides = [1, 1]} : vector<16x96xf32> to vector<16x32xf32>
    %250 = arith.mulf %239, %249 : vector<16x32xf32>
    %251 = arith.addf %248, %250 : vector<16x32xf32>
    %252 = math.tanh %251 : vector<16x32xf32>
    %cst_41 = arith.constant 1.000000e+00 : f32
    %253 = vector.broadcast %cst_41 : f32 to vector<16x32xf32>
    %254 = arith.subf %253, %247 : vector<16x32xf32>
    %255 = arith.mulf %254, %252 : vector<16x32xf32>
    %256 = arith.mulf %247, %226 : vector<16x32xf32>
    %257 = arith.addf %255, %256 : vector<16x32xf32>
    %258 = vector.extract_strided_slice %257 {offsets = [0, 0], sizes = [12, 32], strides = [1, 1]} : vector<16x32xf32> to vector<12x32xf32>
    %c0_42 = arith.constant 0 : index
    %c0_43 = arith.constant 0 : index
    %259 = vector.load %arg1[%c0_42, %c0_43] : memref<12x32xf32, #tpu.memory_space<vmem>>, vector<12x32xf32>
    %260 = tpu.concatenate %258, %259 in 1 : vector<12x32xf32>, vector<12x32xf32> -> vector<12x64xf32>
    %c0_44 = arith.constant 0 : index
    %c0_45 = arith.constant 0 : index
    %261 = vector.load %arg2[%c0_44, %c0_45] : memref<12x12xf32, #tpu.memory_space<vmem>>, vector<12x12xf32>
    %c0_46 = arith.constant 0 : index
    %c0_47 = arith.constant 0 : index
    %c0_48 = arith.constant 0 : index
    %262 = vector.load %arg7[%c0_46, %c0_47, %c0_48] : memref<2x1x64xf32, #tpu.memory_space<vmem>>, vector<1x1x64xf32>
    %263 = vector.shape_cast %262 : vector<1x1x64xf32> to vector<1x64xf32>
    %c0_49 = arith.constant 0 : index
    %c0_50 = arith.constant 0 : index
    %c0_51 = arith.constant 0 : index
    %264 = vector.load %arg8[%c0_49, %c0_50, %c0_51] : memref<2x1x64xf32, #tpu.memory_space<vmem>>, vector<1x1x64xf32>
    %265 = vector.shape_cast %264 : vector<1x1x64xf32> to vector<1x64xf32>
    %cst_52 = arith.constant dense<0.000000e+00> : vector<12xf32>
    %266 = vector.multi_reduction <add>, %260, %cst_52 [1] : vector<12x64xf32> to vector<12xf32>
    %267 = vector.shape_cast %266 : vector<12xf32> to vector<12x1xf32>
    %cst_53 = arith.constant 6.400000e+01 : f32
    %268 = vector.broadcast %cst_53 : f32 to vector<12x1xf32>
    %269 = arith.divf %267, %268 : vector<12x1xf32>
    %270 = vector.broadcast %269 : vector<12x1xf32> to vector<12x64xf32>
    %271 = arith.subf %260, %270 : vector<12x64xf32>
    %272 = arith.mulf %271, %271 : vector<12x64xf32>
    %cst_54 = arith.constant dense<0.000000e+00> : vector<12xf32>
    %273 = vector.multi_reduction <add>, %272, %cst_54 [1] : vector<12x64xf32> to vector<12xf32>
    %274 = vector.shape_cast %273 : vector<12xf32> to vector<12x1xf32>
    %cst_55 = arith.constant 6.400000e+01 : f32
    %275 = vector.broadcast %cst_55 : f32 to vector<12x1xf32>
    %276 = arith.divf %274, %275 : vector<12x1xf32>
    %277 = vector.broadcast %269 : vector<12x1xf32> to vector<12x64xf32>
    %278 = arith.subf %260, %277 : vector<12x64xf32>
    %cst_56 = arith.constant 9.99999997E-7 : f32
    %279 = vector.broadcast %cst_56 : f32 to vector<12x1xf32>
    %280 = arith.addf %276, %279 : vector<12x1xf32>
    %281 = math.rsqrt %280 : vector<12x1xf32>
    %282 = vector.broadcast %281 : vector<12x1xf32> to vector<12x64xf32>
    %283 = arith.mulf %278, %282 : vector<12x64xf32>
    %284 = vector.broadcast %263 : vector<1x64xf32> to vector<12x64xf32>
    %285 = arith.mulf %283, %284 : vector<12x64xf32>
    %286 = vector.broadcast %265 : vector<1x64xf32> to vector<12x64xf32>
    %287 = arith.addf %285, %286 : vector<12x64xf32>
    %288 = arith.truncf %287 : vector<12x64xf32> to vector<12x64xbf16>
    %c0_57 = arith.constant 0 : index
    %c0_58 = arith.constant 0 : index
    %c0_59 = arith.constant 0 : index
    %289 = vector.load %arg9[%c0_57, %c0_58, %c0_59] : memref<2x64x192xbf16, #tpu.memory_space<vmem>>, vector<1x64x192xbf16>
    %290 = vector.shape_cast %289 : vector<1x64x192xbf16> to vector<64x192xbf16>
    %cst_60 = arith.constant dense<0.000000e+00> : vector<12x192xf32>
    %291 = tpu.matmul %288, %290, %cst_60 {dimension_numbers = #tpu.dot_dimension_numbers<[1], [0], [0], [1], [0, 0, 1, 1], [], []>} : vector<12x64xbf16>, vector<64x192xbf16>, vector<12x192xf32> -> vector<12x192xf32>
    %c0_61 = arith.constant 0 : index
    %c0_62 = arith.constant 0 : index
    %c0_63 = arith.constant 0 : index
    %292 = vector.load %arg10[%c0_61, %c0_62, %c0_63] : memref<2x1x192xf32, #tpu.memory_space<vmem>>, vector<1x1x192xf32>
    %293 = vector.shape_cast %292 : vector<1x1x192xf32> to vector<1x192xf32>
    %294 = vector.broadcast %293 : vector<1x192xf32> to vector<12x192xf32>
    %295 = arith.addf %291, %294 : vector<12x192xf32>
    %296 = vector.extract_strided_slice %295 {offsets = [0, 0], sizes = [12, 64], strides = [1, 1]} : vector<12x192xf32> to vector<12x64xf32>
    %297 = vector.extract_strided_slice %295 {offsets = [0, 64], sizes = [12, 64], strides = [1, 1]} : vector<12x192xf32> to vector<12x64xf32>
    %298 = vector.extract_strided_slice %295 {offsets = [0, 128], sizes = [12, 64], strides = [1, 1]} : vector<12x192xf32> to vector<12x64xf32>
    %c0_64 = arith.constant 0 : index
    %c0_65 = arith.constant 0 : index
    %c0_66 = arith.constant 0 : index
    %299 = vector.load %arg11[%c0_64, %c0_65, %c0_66] : memref<2x64x64xbf16, #tpu.memory_space<vmem>>, vector<1x64x64xbf16>
    %300 = vector.shape_cast %299 : vector<1x64x64xbf16> to vector<64x64xbf16>
    %301 = vector.extract_strided_slice %296 {offsets = [0, 0], sizes = [12, 16], strides = [1, 1]} : vector<12x64xf32> to vector<12x16xf32>
    %302 = vector.extract_strided_slice %296 {offsets = [0, 16], sizes = [12, 16], strides = [1, 1]} : vector<12x64xf32> to vector<12x16xf32>
    %303 = vector.extract_strided_slice %296 {offsets = [0, 32], sizes = [12, 16], strides = [1, 1]} : vector<12x64xf32> to vector<12x16xf32>
    %304 = vector.extract_strided_slice %296 {offsets = [0, 48], sizes = [12, 16], strides = [1, 1]} : vector<12x64xf32> to vector<12x16xf32>
    %305 = vector.shape_cast %301 : vector<12x16xf32> to vector<1x12x16xf32>
    %306 = vector.shape_cast %302 : vector<12x16xf32> to vector<1x12x16xf32>
    %307 = vector.shape_cast %303 : vector<12x16xf32> to vector<1x12x16xf32>
    %308 = vector.shape_cast %304 : vector<12x16xf32> to vector<1x12x16xf32>
    %309 = tpu.concatenate %305, %306, %307, %308 in 0 : vector<1x12x16xf32>, vector<1x12x16xf32>, vector<1x12x16xf32>, vector<1x12x16xf32> -> vector<4x12x16xf32>
    %310 = arith.truncf %309 : vector<4x12x16xf32> to vector<4x12x16xbf16>
    %311 = vector.extract_strided_slice %297 {offsets = [0, 0], sizes = [12, 16], strides = [1, 1]} : vector<12x64xf32> to vector<12x16xf32>
    %312 = vector.extract_strided_slice %297 {offsets = [0, 16], sizes = [12, 16], strides = [1, 1]} : vector<12x64xf32> to vector<12x16xf32>
    %313 = vector.extract_strided_slice %297 {offsets = [0, 32], sizes = [12, 16], strides = [1, 1]} : vector<12x64xf32> to vector<12x16xf32>
    %314 = vector.extract_strided_slice %297 {offsets = [0, 48], sizes = [12, 16], strides = [1, 1]} : vector<12x64xf32> to vector<12x16xf32>
    %315 = vector.shape_cast %311 : vector<12x16xf32> to vector<1x12x16xf32>
    %316 = vector.shape_cast %312 : vector<12x16xf32> to vector<1x12x16xf32>
    %317 = vector.shape_cast %313 : vector<12x16xf32> to vector<1x12x16xf32>
    %318 = vector.shape_cast %314 : vector<12x16xf32> to vector<1x12x16xf32>
    %319 = tpu.concatenate %315, %316, %317, %318 in 0 : vector<1x12x16xf32>, vector<1x12x16xf32>, vector<1x12x16xf32>, vector<1x12x16xf32> -> vector<4x12x16xf32>
    %320 = arith.truncf %319 : vector<4x12x16xf32> to vector<4x12x16xbf16>
    %321 = vector.extract_strided_slice %298 {offsets = [0, 0], sizes = [12, 16], strides = [1, 1]} : vector<12x64xf32> to vector<12x16xf32>
    %322 = vector.extract_strided_slice %298 {offsets = [0, 16], sizes = [12, 16], strides = [1, 1]} : vector<12x64xf32> to vector<12x16xf32>
    %323 = vector.extract_strided_slice %298 {offsets = [0, 32], sizes = [12, 16], strides = [1, 1]} : vector<12x64xf32> to vector<12x16xf32>
    %324 = vector.extract_strided_slice %298 {offsets = [0, 48], sizes = [12, 16], strides = [1, 1]} : vector<12x64xf32> to vector<12x16xf32>
    %325 = vector.shape_cast %321 : vector<12x16xf32> to vector<1x12x16xf32>
    %326 = vector.shape_cast %322 : vector<12x16xf32> to vector<1x12x16xf32>
    %327 = vector.shape_cast %323 : vector<12x16xf32> to vector<1x12x16xf32>
    %328 = vector.shape_cast %324 : vector<12x16xf32> to vector<1x12x16xf32>
    %329 = tpu.concatenate %325, %326, %327, %328 in 0 : vector<1x12x16xf32>, vector<1x12x16xf32>, vector<1x12x16xf32>, vector<1x12x16xf32> -> vector<4x12x16xf32>
    %330 = arith.truncf %329 : vector<4x12x16xf32> to vector<4x12x16xbf16>
    "tpu.trace_start"() <{level = 10 : i32, message = "hqd,hkd->hqk"}> : () -> ()
    %cst_67 = arith.constant dense<0.000000e+00> : vector<4x12x12xf32>
    %331 = tpu.matmul %310, %320, %cst_67 {dimension_numbers = #tpu.dot_dimension_numbers<[2], [2], [1], [1], [0, 0, 0, 1, 1, 1], [0], [0]>} : vector<4x12x16xbf16>, vector<4x12x16xbf16>, vector<4x12x12xf32> -> vector<4x12x12xf32>
    "tpu.trace_stop"() : () -> ()
    %cst_68 = arith.constant 2.500000e-01 : f32
    %332 = vector.broadcast %cst_68 : f32 to vector<4x12x12xf32>
    %333 = arith.mulf %331, %332 : vector<4x12x12xf32>
    %334 = vector.shape_cast %261 : vector<12x12xf32> to vector<1x12x12xf32>
    %335 = vector.broadcast %334 : vector<1x12x12xf32> to vector<4x12x12xf32>
    %336 = arith.addf %333, %335 : vector<4x12x12xf32>
    %cst_69 = arith.constant dense<0xFF800000> : vector<4x12xf32>
    %337 = vector.multi_reduction <maximumf>, %336, %cst_69 [2] : vector<4x12x12xf32> to vector<4x12xf32>
    %338 = vector.shape_cast %337 : vector<4x12xf32> to vector<4x12x1xf32>
    %339 = vector.broadcast %338 : vector<4x12x1xf32> to vector<4x12x12xf32>
    %340 = arith.subf %336, %339 : vector<4x12x12xf32>
    %341 = math.exp %340 : vector<4x12x12xf32>
    %cst_70 = arith.constant dense<0.000000e+00> : vector<4x12xf32>
    %342 = vector.multi_reduction <add>, %341, %cst_70 [2] : vector<4x12x12xf32> to vector<4x12xf32>
    %343 = vector.shape_cast %342 : vector<4x12xf32> to vector<4x12x1xf32>
    %344 = tpu.reciprocal %343 {approx = true} : vector<4x12x1xf32> -> vector<4x12x1xf32>
    %345 = vector.broadcast %344 : vector<4x12x1xf32> to vector<4x12x12xf32>
    %346 = arith.mulf %341, %345 : vector<4x12x12xf32>
    %347 = arith.truncf %346 : vector<4x12x12xf32> to vector<4x12x12xbf16>
    "tpu.trace_start"() <{level = 10 : i32, message = "hqk,hkd->hqd"}> : () -> ()
    %cst_71 = arith.constant dense<0.000000e+00> : vector<4x12x16xf32>
    %348 = tpu.matmul %347, %330, %cst_71 {dimension_numbers = #tpu.dot_dimension_numbers<[2], [1], [1], [2], [0, 0, 0, 1, 1, 2], [0], [0]>} : vector<4x12x12xbf16>, vector<4x12x16xbf16>, vector<4x12x16xf32> -> vector<4x12x16xf32>
    %cst_72 = arith.constant 0.000000e+00 : f32
    "tpu.trace_stop"() : () -> ()
    %349 = vector.broadcast %cst_72 : f32 to vector<12x64xf32>
    %350 = vector.extract_strided_slice %348 {offsets = [0, 0, 0], sizes = [1, 12, 16], strides = [1, 1, 1]} : vector<4x12x16xf32> to vector<1x12x16xf32>
    %351 = vector.shape_cast %350 : vector<1x12x16xf32> to vector<12x16xf32>
    %352 = arith.truncf %351 : vector<12x16xf32> to vector<12x16xbf16>
    %353 = vector.extract_strided_slice %300 {offsets = [0, 0], sizes = [16, 64], strides = [1, 1]} : vector<64x64xbf16> to vector<16x64xbf16>
    %cst_73 = arith.constant dense<0.000000e+00> : vector<12x64xf32>
    %354 = tpu.matmul %352, %353, %cst_73 {dimension_numbers = #tpu.dot_dimension_numbers<[1], [0], [0], [1], [0, 0, 1, 1], [], []>} : vector<12x16xbf16>, vector<16x64xbf16>, vector<12x64xf32> -> vector<12x64xf32>
    %355 = arith.addf %349, %354 : vector<12x64xf32>
    %356 = vector.extract_strided_slice %348 {offsets = [1, 0, 0], sizes = [1, 12, 16], strides = [1, 1, 1]} : vector<4x12x16xf32> to vector<1x12x16xf32>
    %357 = vector.shape_cast %356 : vector<1x12x16xf32> to vector<12x16xf32>
    %358 = arith.truncf %357 : vector<12x16xf32> to vector<12x16xbf16>
    %359 = vector.extract_strided_slice %300 {offsets = [16, 0], sizes = [16, 64], strides = [1, 1]} : vector<64x64xbf16> to vector<16x64xbf16>
    %cst_74 = arith.constant dense<0.000000e+00> : vector<12x64xf32>
    %360 = tpu.matmul %358, %359, %cst_74 {dimension_numbers = #tpu.dot_dimension_numbers<[1], [0], [0], [1], [0, 0, 1, 1], [], []>} : vector<12x16xbf16>, vector<16x64xbf16>, vector<12x64xf32> -> vector<12x64xf32>
    %361 = arith.addf %355, %360 : vector<12x64xf32>
    %362 = vector.extract_strided_slice %348 {offsets = [2, 0, 0], sizes = [1, 12, 16], strides = [1, 1, 1]} : vector<4x12x16xf32> to vector<1x12x16xf32>
    %363 = vector.shape_cast %362 : vector<1x12x16xf32> to vector<12x16xf32>
    %364 = arith.truncf %363 : vector<12x16xf32> to vector<12x16xbf16>
    %365 = vector.extract_strided_slice %300 {offsets = [32, 0], sizes = [16, 64], strides = [1, 1]} : vector<64x64xbf16> to vector<16x64xbf16>
    %cst_75 = arith.constant dense<0.000000e+00> : vector<12x64xf32>
    %366 = tpu.matmul %364, %365, %cst_75 {dimension_numbers = #tpu.dot_dimension_numbers<[1], [0], [0], [1], [0, 0, 1, 1], [], []>} : vector<12x16xbf16>, vector<16x64xbf16>, vector<12x64xf32> -> vector<12x64xf32>
    %367 = arith.addf %361, %366 : vector<12x64xf32>
    %368 = vector.extract_strided_slice %348 {offsets = [3, 0, 0], sizes = [1, 12, 16], strides = [1, 1, 1]} : vector<4x12x16xf32> to vector<1x12x16xf32>
    %369 = vector.shape_cast %368 : vector<1x12x16xf32> to vector<12x16xf32>
    %370 = arith.truncf %369 : vector<12x16xf32> to vector<12x16xbf16>
    %371 = vector.extract_strided_slice %300 {offsets = [48, 0], sizes = [16, 64], strides = [1, 1]} : vector<64x64xbf16> to vector<16x64xbf16>
    %cst_76 = arith.constant dense<0.000000e+00> : vector<12x64xf32>
    %372 = tpu.matmul %370, %371, %cst_76 {dimension_numbers = #tpu.dot_dimension_numbers<[1], [0], [0], [1], [0, 0, 1, 1], [], []>} : vector<12x16xbf16>, vector<16x64xbf16>, vector<12x64xf32> -> vector<12x64xf32>
    %373 = arith.addf %367, %372 : vector<12x64xf32>
    %374 = arith.addf %260, %373 : vector<12x64xf32>
    %c0_77 = arith.constant 0 : index
    %c0_78 = arith.constant 0 : index
    %c0_79 = arith.constant 0 : index
    %375 = vector.load %arg12[%c0_77, %c0_78, %c0_79] : memref<2x1x64xf32, #tpu.memory_space<vmem>>, vector<1x1x64xf32>
    %376 = vector.shape_cast %375 : vector<1x1x64xf32> to vector<1x64xf32>
    %377 = vector.broadcast %376 : vector<1x64xf32> to vector<12x64xf32>
    %378 = arith.addf %374, %377 : vector<12x64xf32>
    %c0_80 = arith.constant 0 : index
    %c0_81 = arith.constant 0 : index
    %c0_82 = arith.constant 0 : index
    %379 = vector.load %arg13[%c0_80, %c0_81, %c0_82] : memref<2x1x64xf32, #tpu.memory_space<vmem>>, vector<1x1x64xf32>
    %380 = vector.shape_cast %379 : vector<1x1x64xf32> to vector<1x64xf32>
    %c0_83 = arith.constant 0 : index
    %c0_84 = arith.constant 0 : index
    %c0_85 = arith.constant 0 : index
    %381 = vector.load %arg14[%c0_83, %c0_84, %c0_85] : memref<2x1x64xf32, #tpu.memory_space<vmem>>, vector<1x1x64xf32>
    %382 = vector.shape_cast %381 : vector<1x1x64xf32> to vector<1x64xf32>
    %cst_86 = arith.constant dense<0.000000e+00> : vector<12xf32>
    %383 = vector.multi_reduction <add>, %378, %cst_86 [1] : vector<12x64xf32> to vector<12xf32>
    %384 = vector.shape_cast %383 : vector<12xf32> to vector<12x1xf32>
    %cst_87 = arith.constant 6.400000e+01 : f32
    %385 = vector.broadcast %cst_87 : f32 to vector<12x1xf32>
    %386 = arith.divf %384, %385 : vector<12x1xf32>
    %387 = vector.broadcast %386 : vector<12x1xf32> to vector<12x64xf32>
    %388 = arith.subf %378, %387 : vector<12x64xf32>
    %389 = arith.mulf %388, %388 : vector<12x64xf32>
    %cst_88 = arith.constant dense<0.000000e+00> : vector<12xf32>
    %390 = vector.multi_reduction <add>, %389, %cst_88 [1] : vector<12x64xf32> to vector<12xf32>
    %391 = vector.shape_cast %390 : vector<12xf32> to vector<12x1xf32>
    %cst_89 = arith.constant 6.400000e+01 : f32
    %392 = vector.broadcast %cst_89 : f32 to vector<12x1xf32>
    %393 = arith.divf %391, %392 : vector<12x1xf32>
    %394 = vector.broadcast %386 : vector<12x1xf32> to vector<12x64xf32>
    %395 = arith.subf %378, %394 : vector<12x64xf32>
    %cst_90 = arith.constant 9.99999997E-7 : f32
    %396 = vector.broadcast %cst_90 : f32 to vector<12x1xf32>
    %397 = arith.addf %393, %396 : vector<12x1xf32>
    %398 = math.rsqrt %397 : vector<12x1xf32>
    %399 = vector.broadcast %398 : vector<12x1xf32> to vector<12x64xf32>
    %400 = arith.mulf %395, %399 : vector<12x64xf32>
    %401 = vector.broadcast %380 : vector<1x64xf32> to vector<12x64xf32>
    %402 = arith.mulf %400, %401 : vector<12x64xf32>
    %403 = vector.broadcast %382 : vector<1x64xf32> to vector<12x64xf32>
    %404 = arith.addf %402, %403 : vector<12x64xf32>
    %405 = arith.truncf %404 : vector<12x64xf32> to vector<12x64xbf16>
    %c0_91 = arith.constant 0 : index
    %c0_92 = arith.constant 0 : index
    %c0_93 = arith.constant 0 : index
    %406 = vector.load %arg15[%c0_91, %c0_92, %c0_93] : memref<2x64x64xbf16, #tpu.memory_space<vmem>>, vector<1x64x64xbf16>
    %407 = vector.shape_cast %406 : vector<1x64x64xbf16> to vector<64x64xbf16>
    %cst_94 = arith.constant dense<0.000000e+00> : vector<12x64xf32>
    %408 = tpu.matmul %405, %407, %cst_94 {dimension_numbers = #tpu.dot_dimension_numbers<[1], [0], [0], [1], [0, 0, 1, 1], [], []>} : vector<12x64xbf16>, vector<64x64xbf16>, vector<12x64xf32> -> vector<12x64xf32>
    %c0_95 = arith.constant 0 : index
    %c0_96 = arith.constant 0 : index
    %c0_97 = arith.constant 0 : index
    %409 = vector.load %arg16[%c0_95, %c0_96, %c0_97] : memref<2x1x64xf32, #tpu.memory_space<vmem>>, vector<1x1x64xf32>
    %410 = vector.shape_cast %409 : vector<1x1x64xf32> to vector<1x64xf32>
    %411 = vector.broadcast %410 : vector<1x64xf32> to vector<12x64xf32>
    %412 = arith.addf %408, %411 : vector<12x64xf32>
    %cst_98 = arith.constant 0.000000e+00 : f32
    %413 = vector.broadcast %cst_98 : f32 to vector<12x64xf32>
    %414 = arith.maximumf %412, %413 : vector<12x64xf32>
    %415 = arith.truncf %414 : vector<12x64xf32> to vector<12x64xbf16>
    %c0_99 = arith.constant 0 : index
    %c0_100 = arith.constant 0 : index
    %c0_101 = arith.constant 0 : index
    %416 = vector.load %arg17[%c0_99, %c0_100, %c0_101] : memref<2x64x64xbf16, #tpu.memory_space<vmem>>, vector<1x64x64xbf16>
    %417 = vector.shape_cast %416 : vector<1x64x64xbf16> to vector<64x64xbf16>
    %cst_102 = arith.constant dense<0.000000e+00> : vector<12x64xf32>
    %418 = tpu.matmul %415, %417, %cst_102 {dimension_numbers = #tpu.dot_dimension_numbers<[1], [0], [0], [1], [0, 0, 1, 1], [], []>} : vector<12x64xbf16>, vector<64x64xbf16>, vector<12x64xf32> -> vector<12x64xf32>
    %419 = arith.addf %378, %418 : vector<12x64xf32>
    %c0_103 = arith.constant 0 : index
    %c0_104 = arith.constant 0 : index
    %c0_105 = arith.constant 0 : index
    %420 = vector.load %arg18[%c0_103, %c0_104, %c0_105] : memref<2x1x64xf32, #tpu.memory_space<vmem>>, vector<1x1x64xf32>
    %421 = vector.shape_cast %420 : vector<1x1x64xf32> to vector<1x64xf32>
    %422 = vector.broadcast %421 : vector<1x64xf32> to vector<12x64xf32>
    %423 = arith.addf %419, %422 : vector<12x64xf32>
    %c1 = arith.constant 1 : index
    %c0_106 = arith.constant 0 : index
    %c0_107 = arith.constant 0 : index
    %424 = vector.load %arg7[%c1, %c0_106, %c0_107] : memref<2x1x64xf32, #tpu.memory_space<vmem>>, vector<1x1x64xf32>
    %425 = vector.shape_cast %424 : vector<1x1x64xf32> to vector<1x64xf32>
    %c1_108 = arith.constant 1 : index
    %c0_109 = arith.constant 0 : index
    %c0_110 = arith.constant 0 : index
    %426 = vector.load %arg8[%c1_108, %c0_109, %c0_110] : memref<2x1x64xf32, #tpu.memory_space<vmem>>, vector<1x1x64xf32>
    %427 = vector.shape_cast %426 : vector<1x1x64xf32> to vector<1x64xf32>
    %cst_111 = arith.constant dense<0.000000e+00> : vector<12xf32>
    %428 = vector.multi_reduction <add>, %423, %cst_111 [1] : vector<12x64xf32> to vector<12xf32>
    %429 = vector.shape_cast %428 : vector<12xf32> to vector<12x1xf32>
    %cst_112 = arith.constant 6.400000e+01 : f32
    %430 = vector.broadcast %cst_112 : f32 to vector<12x1xf32>
    %431 = arith.divf %429, %430 : vector<12x1xf32>
    %432 = vector.broadcast %431 : vector<12x1xf32> to vector<12x64xf32>
    %433 = arith.subf %423, %432 : vector<12x64xf32>
    %434 = arith.mulf %433, %433 : vector<12x64xf32>
    %cst_113 = arith.constant dense<0.000000e+00> : vector<12xf32>
    %435 = vector.multi_reduction <add>, %434, %cst_113 [1] : vector<12x64xf32> to vector<12xf32>
    %436 = vector.shape_cast %435 : vector<12xf32> to vector<12x1xf32>
    %cst_114 = arith.constant 6.400000e+01 : f32
    %437 = vector.broadcast %cst_114 : f32 to vector<12x1xf32>
    %438 = arith.divf %436, %437 : vector<12x1xf32>
    %439 = vector.broadcast %431 : vector<12x1xf32> to vector<12x64xf32>
    %440 = arith.subf %423, %439 : vector<12x64xf32>
    %cst_115 = arith.constant 9.99999997E-7 : f32
    %441 = vector.broadcast %cst_115 : f32 to vector<12x1xf32>
    %442 = arith.addf %438, %441 : vector<12x1xf32>
    %443 = math.rsqrt %442 : vector<12x1xf32>
    %444 = vector.broadcast %443 : vector<12x1xf32> to vector<12x64xf32>
    %445 = arith.mulf %440, %444 : vector<12x64xf32>
    %446 = vector.broadcast %425 : vector<1x64xf32> to vector<12x64xf32>
    %447 = arith.mulf %445, %446 : vector<12x64xf32>
    %448 = vector.broadcast %427 : vector<1x64xf32> to vector<12x64xf32>
    %449 = arith.addf %447, %448 : vector<12x64xf32>
    %450 = arith.truncf %449 : vector<12x64xf32> to vector<12x64xbf16>
    %c1_116 = arith.constant 1 : index
    %c0_117 = arith.constant 0 : index
    %c0_118 = arith.constant 0 : index
    %451 = vector.load %arg9[%c1_116, %c0_117, %c0_118] : memref<2x64x192xbf16, #tpu.memory_space<vmem>>, vector<1x64x192xbf16>
    %452 = vector.shape_cast %451 : vector<1x64x192xbf16> to vector<64x192xbf16>
    %cst_119 = arith.constant dense<0.000000e+00> : vector<12x192xf32>
    %453 = tpu.matmul %450, %452, %cst_119 {dimension_numbers = #tpu.dot_dimension_numbers<[1], [0], [0], [1], [0, 0, 1, 1], [], []>} : vector<12x64xbf16>, vector<64x192xbf16>, vector<12x192xf32> -> vector<12x192xf32>
    %c1_120 = arith.constant 1 : index
    %c0_121 = arith.constant 0 : index
    %c0_122 = arith.constant 0 : index
    %454 = vector.load %arg10[%c1_120, %c0_121, %c0_122] : memref<2x1x192xf32, #tpu.memory_space<vmem>>, vector<1x1x192xf32>
    %455 = vector.shape_cast %454 : vector<1x1x192xf32> to vector<1x192xf32>
    %456 = vector.broadcast %455 : vector<1x192xf32> to vector<12x192xf32>
    %457 = arith.addf %453, %456 : vector<12x192xf32>
    %458 = vector.extract_strided_slice %457 {offsets = [0, 0], sizes = [12, 64], strides = [1, 1]} : vector<12x192xf32> to vector<12x64xf32>
    %459 = vector.extract_strided_slice %457 {offsets = [0, 64], sizes = [12, 64], strides = [1, 1]} : vector<12x192xf32> to vector<12x64xf32>
    %460 = vector.extract_strided_slice %457 {offsets = [0, 128], sizes = [12, 64], strides = [1, 1]} : vector<12x192xf32> to vector<12x64xf32>
    %c1_123 = arith.constant 1 : index
    %c0_124 = arith.constant 0 : index
    %c0_125 = arith.constant 0 : index
    %461 = vector.load %arg11[%c1_123, %c0_124, %c0_125] : memref<2x64x64xbf16, #tpu.memory_space<vmem>>, vector<1x64x64xbf16>
    %462 = vector.shape_cast %461 : vector<1x64x64xbf16> to vector<64x64xbf16>
    %463 = vector.extract_strided_slice %458 {offsets = [0, 0], sizes = [12, 16], strides = [1, 1]} : vector<12x64xf32> to vector<12x16xf32>
    %464 = vector.extract_strided_slice %458 {offsets = [0, 16], sizes = [12, 16], strides = [1, 1]} : vector<12x64xf32> to vector<12x16xf32>
    %465 = vector.extract_strided_slice %458 {offsets = [0, 32], sizes = [12, 16], strides = [1, 1]} : vector<12x64xf32> to vector<12x16xf32>
    %466 = vector.extract_strided_slice %458 {offsets = [0, 48], sizes = [12, 16], strides = [1, 1]} : vector<12x64xf32> to vector<12x16xf32>
    %467 = vector.shape_cast %463 : vector<12x16xf32> to vector<1x12x16xf32>
    %468 = vector.shape_cast %464 : vector<12x16xf32> to vector<1x12x16xf32>
    %469 = vector.shape_cast %465 : vector<12x16xf32> to vector<1x12x16xf32>
    %470 = vector.shape_cast %466 : vector<12x16xf32> to vector<1x12x16xf32>
    %471 = tpu.concatenate %467, %468, %469, %470 in 0 : vector<1x12x16xf32>, vector<1x12x16xf32>, vector<1x12x16xf32>, vector<1x12x16xf32> -> vector<4x12x16xf32>
    %472 = arith.truncf %471 : vector<4x12x16xf32> to vector<4x12x16xbf16>
    %473 = vector.extract_strided_slice %459 {offsets = [0, 0], sizes = [12, 16], strides = [1, 1]} : vector<12x64xf32> to vector<12x16xf32>
    %474 = vector.extract_strided_slice %459 {offsets = [0, 16], sizes = [12, 16], strides = [1, 1]} : vector<12x64xf32> to vector<12x16xf32>
    %475 = vector.extract_strided_slice %459 {offsets = [0, 32], sizes = [12, 16], strides = [1, 1]} : vector<12x64xf32> to vector<12x16xf32>
    %476 = vector.extract_strided_slice %459 {offsets = [0, 48], sizes = [12, 16], strides = [1, 1]} : vector<12x64xf32> to vector<12x16xf32>
    %477 = vector.shape_cast %473 : vector<12x16xf32> to vector<1x12x16xf32>
    %478 = vector.shape_cast %474 : vector<12x16xf32> to vector<1x12x16xf32>
    %479 = vector.shape_cast %475 : vector<12x16xf32> to vector<1x12x16xf32>
    %480 = vector.shape_cast %476 : vector<12x16xf32> to vector<1x12x16xf32>
    %481 = tpu.concatenate %477, %478, %479, %480 in 0 : vector<1x12x16xf32>, vector<1x12x16xf32>, vector<1x12x16xf32>, vector<1x12x16xf32> -> vector<4x12x16xf32>
    %482 = arith.truncf %481 : vector<4x12x16xf32> to vector<4x12x16xbf16>
    %483 = vector.extract_strided_slice %460 {offsets = [0, 0], sizes = [12, 16], strides = [1, 1]} : vector<12x64xf32> to vector<12x16xf32>
    %484 = vector.extract_strided_slice %460 {offsets = [0, 16], sizes = [12, 16], strides = [1, 1]} : vector<12x64xf32> to vector<12x16xf32>
    %485 = vector.extract_strided_slice %460 {offsets = [0, 32], sizes = [12, 16], strides = [1, 1]} : vector<12x64xf32> to vector<12x16xf32>
    %486 = vector.extract_strided_slice %460 {offsets = [0, 48], sizes = [12, 16], strides = [1, 1]} : vector<12x64xf32> to vector<12x16xf32>
    %487 = vector.shape_cast %483 : vector<12x16xf32> to vector<1x12x16xf32>
    %488 = vector.shape_cast %484 : vector<12x16xf32> to vector<1x12x16xf32>
    %489 = vector.shape_cast %485 : vector<12x16xf32> to vector<1x12x16xf32>
    %490 = vector.shape_cast %486 : vector<12x16xf32> to vector<1x12x16xf32>
    %491 = tpu.concatenate %487, %488, %489, %490 in 0 : vector<1x12x16xf32>, vector<1x12x16xf32>, vector<1x12x16xf32>, vector<1x12x16xf32> -> vector<4x12x16xf32>
    %492 = arith.truncf %491 : vector<4x12x16xf32> to vector<4x12x16xbf16>
    "tpu.trace_start"() <{level = 10 : i32, message = "hqd,hkd->hqk"}> : () -> ()
    %cst_126 = arith.constant dense<0.000000e+00> : vector<4x12x12xf32>
    %493 = tpu.matmul %472, %482, %cst_126 {dimension_numbers = #tpu.dot_dimension_numbers<[2], [2], [1], [1], [0, 0, 0, 1, 1, 1], [0], [0]>} : vector<4x12x16xbf16>, vector<4x12x16xbf16>, vector<4x12x12xf32> -> vector<4x12x12xf32>
    "tpu.trace_stop"() : () -> ()
    %cst_127 = arith.constant 2.500000e-01 : f32
    %494 = vector.broadcast %cst_127 : f32 to vector<4x12x12xf32>
    %495 = arith.mulf %493, %494 : vector<4x12x12xf32>
    %496 = vector.shape_cast %261 : vector<12x12xf32> to vector<1x12x12xf32>
    %497 = vector.broadcast %496 : vector<1x12x12xf32> to vector<4x12x12xf32>
    %498 = arith.addf %495, %497 : vector<4x12x12xf32>
    %cst_128 = arith.constant dense<0xFF800000> : vector<4x12xf32>
    %499 = vector.multi_reduction <maximumf>, %498, %cst_128 [2] : vector<4x12x12xf32> to vector<4x12xf32>
    %500 = vector.shape_cast %499 : vector<4x12xf32> to vector<4x12x1xf32>
    %501 = vector.broadcast %500 : vector<4x12x1xf32> to vector<4x12x12xf32>
    %502 = arith.subf %498, %501 : vector<4x12x12xf32>
    %503 = math.exp %502 : vector<4x12x12xf32>
    %cst_129 = arith.constant dense<0.000000e+00> : vector<4x12xf32>
    %504 = vector.multi_reduction <add>, %503, %cst_129 [2] : vector<4x12x12xf32> to vector<4x12xf32>
    %505 = vector.shape_cast %504 : vector<4x12xf32> to vector<4x12x1xf32>
    %506 = tpu.reciprocal %505 {approx = true} : vector<4x12x1xf32> -> vector<4x12x1xf32>
    %507 = vector.broadcast %506 : vector<4x12x1xf32> to vector<4x12x12xf32>
    %508 = arith.mulf %503, %507 : vector<4x12x12xf32>
    %509 = arith.truncf %508 : vector<4x12x12xf32> to vector<4x12x12xbf16>
    "tpu.trace_start"() <{level = 10 : i32, message = "hqk,hkd->hqd"}> : () -> ()
    %cst_130 = arith.constant dense<0.000000e+00> : vector<4x12x16xf32>
    %510 = tpu.matmul %509, %492, %cst_130 {dimension_numbers = #tpu.dot_dimension_numbers<[2], [1], [1], [2], [0, 0, 0, 1, 1, 2], [0], [0]>} : vector<4x12x12xbf16>, vector<4x12x16xbf16>, vector<4x12x16xf32> -> vector<4x12x16xf32>
    %cst_131 = arith.constant 0.000000e+00 : f32
    "tpu.trace_stop"() : () -> ()
    %511 = vector.broadcast %cst_131 : f32 to vector<12x64xf32>
    %512 = vector.extract_strided_slice %510 {offsets = [0, 0, 0], sizes = [1, 12, 16], strides = [1, 1, 1]} : vector<4x12x16xf32> to vector<1x12x16xf32>
    %513 = vector.shape_cast %512 : vector<1x12x16xf32> to vector<12x16xf32>
    %514 = arith.truncf %513 : vector<12x16xf32> to vector<12x16xbf16>
    %515 = vector.extract_strided_slice %462 {offsets = [0, 0], sizes = [16, 64], strides = [1, 1]} : vector<64x64xbf16> to vector<16x64xbf16>
    %cst_132 = arith.constant dense<0.000000e+00> : vector<12x64xf32>
    %516 = tpu.matmul %514, %515, %cst_132 {dimension_numbers = #tpu.dot_dimension_numbers<[1], [0], [0], [1], [0, 0, 1, 1], [], []>} : vector<12x16xbf16>, vector<16x64xbf16>, vector<12x64xf32> -> vector<12x64xf32>
    %517 = arith.addf %511, %516 : vector<12x64xf32>
    %518 = vector.extract_strided_slice %510 {offsets = [1, 0, 0], sizes = [1, 12, 16], strides = [1, 1, 1]} : vector<4x12x16xf32> to vector<1x12x16xf32>
    %519 = vector.shape_cast %518 : vector<1x12x16xf32> to vector<12x16xf32>
    %520 = arith.truncf %519 : vector<12x16xf32> to vector<12x16xbf16>
    %521 = vector.extract_strided_slice %462 {offsets = [16, 0], sizes = [16, 64], strides = [1, 1]} : vector<64x64xbf16> to vector<16x64xbf16>
    %cst_133 = arith.constant dense<0.000000e+00> : vector<12x64xf32>
    %522 = tpu.matmul %520, %521, %cst_133 {dimension_numbers = #tpu.dot_dimension_numbers<[1], [0], [0], [1], [0, 0, 1, 1], [], []>} : vector<12x16xbf16>, vector<16x64xbf16>, vector<12x64xf32> -> vector<12x64xf32>
    %523 = arith.addf %517, %522 : vector<12x64xf32>
    %524 = vector.extract_strided_slice %510 {offsets = [2, 0, 0], sizes = [1, 12, 16], strides = [1, 1, 1]} : vector<4x12x16xf32> to vector<1x12x16xf32>
    %525 = vector.shape_cast %524 : vector<1x12x16xf32> to vector<12x16xf32>
    %526 = arith.truncf %525 : vector<12x16xf32> to vector<12x16xbf16>
    %527 = vector.extract_strided_slice %462 {offsets = [32, 0], sizes = [16, 64], strides = [1, 1]} : vector<64x64xbf16> to vector<16x64xbf16>
    %cst_134 = arith.constant dense<0.000000e+00> : vector<12x64xf32>
    %528 = tpu.matmul %526, %527, %cst_134 {dimension_numbers = #tpu.dot_dimension_numbers<[1], [0], [0], [1], [0, 0, 1, 1], [], []>} : vector<12x16xbf16>, vector<16x64xbf16>, vector<12x64xf32> -> vector<12x64xf32>
    %529 = arith.addf %523, %528 : vector<12x64xf32>
    %530 = vector.extract_strided_slice %510 {offsets = [3, 0, 0], sizes = [1, 12, 16], strides = [1, 1, 1]} : vector<4x12x16xf32> to vector<1x12x16xf32>
    %531 = vector.shape_cast %530 : vector<1x12x16xf32> to vector<12x16xf32>
    %532 = arith.truncf %531 : vector<12x16xf32> to vector<12x16xbf16>
    %533 = vector.extract_strided_slice %462 {offsets = [48, 0], sizes = [16, 64], strides = [1, 1]} : vector<64x64xbf16> to vector<16x64xbf16>
    %cst_135 = arith.constant dense<0.000000e+00> : vector<12x64xf32>
    %534 = tpu.matmul %532, %533, %cst_135 {dimension_numbers = #tpu.dot_dimension_numbers<[1], [0], [0], [1], [0, 0, 1, 1], [], []>} : vector<12x16xbf16>, vector<16x64xbf16>, vector<12x64xf32> -> vector<12x64xf32>
    %535 = arith.addf %529, %534 : vector<12x64xf32>
    %536 = arith.addf %423, %535 : vector<12x64xf32>
    %c1_136 = arith.constant 1 : index
    %c0_137 = arith.constant 0 : index
    %c0_138 = arith.constant 0 : index
    %537 = vector.load %arg12[%c1_136, %c0_137, %c0_138] : memref<2x1x64xf32, #tpu.memory_space<vmem>>, vector<1x1x64xf32>
    %538 = vector.shape_cast %537 : vector<1x1x64xf32> to vector<1x64xf32>
    %539 = vector.broadcast %538 : vector<1x64xf32> to vector<12x64xf32>
    %540 = arith.addf %536, %539 : vector<12x64xf32>
    %c1_139 = arith.constant 1 : index
    %c0_140 = arith.constant 0 : index
    %c0_141 = arith.constant 0 : index
    %541 = vector.load %arg13[%c1_139, %c0_140, %c0_141] : memref<2x1x64xf32, #tpu.memory_space<vmem>>, vector<1x1x64xf32>
    %542 = vector.shape_cast %541 : vector<1x1x64xf32> to vector<1x64xf32>
    %c1_142 = arith.constant 1 : index
    %c0_143 = arith.constant 0 : index
    %c0_144 = arith.constant 0 : index
    %543 = vector.load %arg14[%c1_142, %c0_143, %c0_144] : memref<2x1x64xf32, #tpu.memory_space<vmem>>, vector<1x1x64xf32>
    %544 = vector.shape_cast %543 : vector<1x1x64xf32> to vector<1x64xf32>
    %cst_145 = arith.constant dense<0.000000e+00> : vector<12xf32>
    %545 = vector.multi_reduction <add>, %540, %cst_145 [1] : vector<12x64xf32> to vector<12xf32>
    %546 = vector.shape_cast %545 : vector<12xf32> to vector<12x1xf32>
    %cst_146 = arith.constant 6.400000e+01 : f32
    %547 = vector.broadcast %cst_146 : f32 to vector<12x1xf32>
    %548 = arith.divf %546, %547 : vector<12x1xf32>
    %549 = vector.broadcast %548 : vector<12x1xf32> to vector<12x64xf32>
    %550 = arith.subf %540, %549 : vector<12x64xf32>
    %551 = arith.mulf %550, %550 : vector<12x64xf32>
    %cst_147 = arith.constant dense<0.000000e+00> : vector<12xf32>
    %552 = vector.multi_reduction <add>, %551, %cst_147 [1] : vector<12x64xf32> to vector<12xf32>
    %553 = vector.shape_cast %552 : vector<12xf32> to vector<12x1xf32>
    %cst_148 = arith.constant 6.400000e+01 : f32
    %554 = vector.broadcast %cst_148 : f32 to vector<12x1xf32>
    %555 = arith.divf %553, %554 : vector<12x1xf32>
    %556 = vector.broadcast %548 : vector<12x1xf32> to vector<12x64xf32>
    %557 = arith.subf %540, %556 : vector<12x64xf32>
    %cst_149 = arith.constant 9.99999997E-7 : f32
    %558 = vector.broadcast %cst_149 : f32 to vector<12x1xf32>
    %559 = arith.addf %555, %558 : vector<12x1xf32>
    %560 = math.rsqrt %559 : vector<12x1xf32>
    %561 = vector.broadcast %560 : vector<12x1xf32> to vector<12x64xf32>
    %562 = arith.mulf %557, %561 : vector<12x64xf32>
    %563 = vector.broadcast %542 : vector<1x64xf32> to vector<12x64xf32>
    %564 = arith.mulf %562, %563 : vector<12x64xf32>
    %565 = vector.broadcast %544 : vector<1x64xf32> to vector<12x64xf32>
    %566 = arith.addf %564, %565 : vector<12x64xf32>
    %567 = arith.truncf %566 : vector<12x64xf32> to vector<12x64xbf16>
    %c1_150 = arith.constant 1 : index
    %c0_151 = arith.constant 0 : index
    %c0_152 = arith.constant 0 : index
    %568 = vector.load %arg15[%c1_150, %c0_151, %c0_152] : memref<2x64x64xbf16, #tpu.memory_space<vmem>>, vector<1x64x64xbf16>
    %569 = vector.shape_cast %568 : vector<1x64x64xbf16> to vector<64x64xbf16>
    %cst_153 = arith.constant dense<0.000000e+00> : vector<12x64xf32>
    %570 = tpu.matmul %567, %569, %cst_153 {dimension_numbers = #tpu.dot_dimension_numbers<[1], [0], [0], [1], [0, 0, 1, 1], [], []>} : vector<12x64xbf16>, vector<64x64xbf16>, vector<12x64xf32> -> vector<12x64xf32>
    %c1_154 = arith.constant 1 : index
    %c0_155 = arith.constant 0 : index
    %c0_156 = arith.constant 0 : index
    %571 = vector.load %arg16[%c1_154, %c0_155, %c0_156] : memref<2x1x64xf32, #tpu.memory_space<vmem>>, vector<1x1x64xf32>
    %572 = vector.shape_cast %571 : vector<1x1x64xf32> to vector<1x64xf32>
    %573 = vector.broadcast %572 : vector<1x64xf32> to vector<12x64xf32>
    %574 = arith.addf %570, %573 : vector<12x64xf32>
    %cst_157 = arith.constant 0.000000e+00 : f32
    %575 = vector.broadcast %cst_157 : f32 to vector<12x64xf32>
    %576 = arith.maximumf %574, %575 : vector<12x64xf32>
    %577 = arith.truncf %576 : vector<12x64xf32> to vector<12x64xbf16>
    %c1_158 = arith.constant 1 : index
    %c0_159 = arith.constant 0 : index
    %c0_160 = arith.constant 0 : index
    %578 = vector.load %arg17[%c1_158, %c0_159, %c0_160] : memref<2x64x64xbf16, #tpu.memory_space<vmem>>, vector<1x64x64xbf16>
    %579 = vector.shape_cast %578 : vector<1x64x64xbf16> to vector<64x64xbf16>
    %cst_161 = arith.constant dense<0.000000e+00> : vector<12x64xf32>
    %580 = tpu.matmul %577, %579, %cst_161 {dimension_numbers = #tpu.dot_dimension_numbers<[1], [0], [0], [1], [0, 0, 1, 1], [], []>} : vector<12x64xbf16>, vector<64x64xbf16>, vector<12x64xf32> -> vector<12x64xf32>
    %581 = arith.addf %540, %580 : vector<12x64xf32>
    %c1_162 = arith.constant 1 : index
    %c0_163 = arith.constant 0 : index
    %c0_164 = arith.constant 0 : index
    %582 = vector.load %arg18[%c1_162, %c0_163, %c0_164] : memref<2x1x64xf32, #tpu.memory_space<vmem>>, vector<1x1x64xf32>
    %583 = vector.shape_cast %582 : vector<1x1x64xf32> to vector<1x64xf32>
    %584 = vector.broadcast %583 : vector<1x64xf32> to vector<12x64xf32>
    %585 = arith.addf %581, %584 : vector<12x64xf32>
    %c0_165 = arith.constant 0 : index
    %c0_166 = arith.constant 0 : index
    %586 = vector.load %arg19[%c0_165, %c0_166] : memref<1x64xf32, #tpu.memory_space<vmem>>, vector<1x64xf32>
    %c0_167 = arith.constant 0 : index
    %c0_168 = arith.constant 0 : index
    %587 = vector.load %arg20[%c0_167, %c0_168] : memref<1x64xf32, #tpu.memory_space<vmem>>, vector<1x64xf32>
    %cst_169 = arith.constant dense<0.000000e+00> : vector<12xf32>
    %588 = vector.multi_reduction <add>, %585, %cst_169 [1] : vector<12x64xf32> to vector<12xf32>
    %589 = vector.shape_cast %588 : vector<12xf32> to vector<12x1xf32>
    %cst_170 = arith.constant 6.400000e+01 : f32
    %590 = vector.broadcast %cst_170 : f32 to vector<12x1xf32>
    %591 = arith.divf %589, %590 : vector<12x1xf32>
    %592 = vector.broadcast %591 : vector<12x1xf32> to vector<12x64xf32>
    %593 = arith.subf %585, %592 : vector<12x64xf32>
    %594 = arith.mulf %593, %593 : vector<12x64xf32>
    %cst_171 = arith.constant dense<0.000000e+00> : vector<12xf32>
    %595 = vector.multi_reduction <add>, %594, %cst_171 [1] : vector<12x64xf32> to vector<12xf32>
    %596 = vector.shape_cast %595 : vector<12xf32> to vector<12x1xf32>
    %cst_172 = arith.constant 6.400000e+01 : f32
    %597 = vector.broadcast %cst_172 : f32 to vector<12x1xf32>
    %598 = arith.divf %596, %597 : vector<12x1xf32>
    %599 = vector.broadcast %591 : vector<12x1xf32> to vector<12x64xf32>
    %600 = arith.subf %585, %599 : vector<12x64xf32>
    %cst_173 = arith.constant 9.99999997E-7 : f32
    %601 = vector.broadcast %cst_173 : f32 to vector<12x1xf32>
    %602 = arith.addf %598, %601 : vector<12x1xf32>
    %603 = math.rsqrt %602 : vector<12x1xf32>
    %604 = vector.broadcast %603 : vector<12x1xf32> to vector<12x64xf32>
    %605 = arith.mulf %600, %604 : vector<12x64xf32>
    %606 = vector.broadcast %586 : vector<1x64xf32> to vector<12x64xf32>
    %607 = arith.mulf %605, %606 : vector<12x64xf32>
    %608 = vector.broadcast %587 : vector<1x64xf32> to vector<12x64xf32>
    %609 = arith.addf %607, %608 : vector<12x64xf32>
    %c0_174 = arith.constant 0 : index
    %c0_175 = arith.constant 0 : index
    %610 = vector.load %arg21[%c0_174, %c0_175] : memref<12x64xf32, #tpu.memory_space<vmem>>, vector<12x64xf32>
    tpu.vector_store %arg21[%c0_174, %c0_175], %609 {strides = array<i32>} : memref<12x64xf32, #tpu.memory_space<vmem>>, vector<12x64xf32>,
    return
  }
}

module attributes {stable_mosaic.version = 11 : i64} {
  func.func @_decoder_stack_kernel(%arg0: memref<16x32xf32, #tpu.memory_space<vmem>>, %arg1: memref<16x32xf32, #tpu.memory_space<vmem>>, %arg2: memref<12x64xf32, #tpu.memory_space<vmem>>, %arg3: memref<16x16xf32, #tpu.memory_space<vmem>>, %arg4: memref<16x12xf32, #tpu.memory_space<vmem>>, %arg5: memref<2x1x64xf32, #tpu.memory_space<vmem>>, %arg6: memref<2x1x64xf32, #tpu.memory_space<vmem>>, %arg7: memref<2x64x192xbf16, #tpu.memory_space<vmem>>, %arg8: memref<2x1x192xf32, #tpu.memory_space<vmem>>, %arg9: memref<2x64x64xbf16, #tpu.memory_space<vmem>>, %arg10: memref<2x1x64xf32, #tpu.memory_space<vmem>>, %arg11: memref<2x1x64xf32, #tpu.memory_space<vmem>>, %arg12: memref<2x1x64xf32, #tpu.memory_space<vmem>>, %arg13: memref<2x64x64xbf16, #tpu.memory_space<vmem>>, %arg14: memref<2x1x64xf32, #tpu.memory_space<vmem>>, %arg15: memref<2x64x128xbf16, #tpu.memory_space<vmem>>, %arg16: memref<2x1x128xf32, #tpu.memory_space<vmem>>, %arg17: memref<2x64x64xbf16, #tpu.memory_space<vmem>>, %arg18: memref<2x1x64xf32, #tpu.memory_space<vmem>>, %arg19: memref<2x1x64xf32, #tpu.memory_space<vmem>>, %arg20: memref<2x1x64xf32, #tpu.memory_space<vmem>>, %arg21: memref<2x64x64xbf16, #tpu.memory_space<vmem>>, %arg22: memref<2x1x64xf32, #tpu.memory_space<vmem>>, %arg23: memref<2x64x64xbf16, #tpu.memory_space<vmem>>, %arg24: memref<2x1x64xf32, #tpu.memory_space<vmem>>, %arg25: memref<1x64xf32, #tpu.memory_space<vmem>>, %arg26: memref<1x64xf32, #tpu.memory_space<vmem>>, %arg27: memref<64x128xbf16, #tpu.memory_space<vmem>>, %arg28: memref<1x128xf32, #tpu.memory_space<vmem>>, %arg29: memref<16x128xf32, #tpu.memory_space<vmem>>) attributes {dimension_semantics = [], scalar_prefetch = 0 : i64, scratch_operands = 0 : i64, tpu.core_type = #tpu.core_type<tc>} {
    %c0 = arith.constant 0 : index
    %c0_0 = arith.constant 0 : index
    %0 = vector.load %arg0[%c0, %c0_0] : memref<16x32xf32, #tpu.memory_space<vmem>>, vector<16x32xf32>
    %c0_1 = arith.constant 0 : index
    %c0_2 = arith.constant 0 : index
    %1 = vector.load %arg1[%c0_1, %c0_2] : memref<16x32xf32, #tpu.memory_space<vmem>>, vector<16x32xf32>
    %2 = tpu.concatenate %0, %1 in 1 : vector<16x32xf32>, vector<16x32xf32> -> vector<16x64xf32>
    %c0_3 = arith.constant 0 : index
    %c0_4 = arith.constant 0 : index
    %3 = vector.load %arg2[%c0_3, %c0_4] : memref<12x64xf32, #tpu.memory_space<vmem>>, vector<12x64xf32>
    %c0_5 = arith.constant 0 : index
    %c0_6 = arith.constant 0 : index
    %4 = vector.load %arg3[%c0_5, %c0_6] : memref<16x16xf32, #tpu.memory_space<vmem>>, vector<16x16xf32>
    %c0_7 = arith.constant 0 : index
    %c0_8 = arith.constant 0 : index
    %5 = vector.load %arg4[%c0_7, %c0_8] : memref<16x12xf32, #tpu.memory_space<vmem>>, vector<16x12xf32>
    %c0_9 = arith.constant 0 : index
    %c0_10 = arith.constant 0 : index
    %c0_11 = arith.constant 0 : index
    %6 = vector.load %arg5[%c0_9, %c0_10, %c0_11] : memref<2x1x64xf32, #tpu.memory_space<vmem>>, vector<1x1x64xf32>
    %7 = vector.shape_cast %6 : vector<1x1x64xf32> to vector<1x64xf32>
    %c0_12 = arith.constant 0 : index
    %c0_13 = arith.constant 0 : index
    %c0_14 = arith.constant 0 : index
    %8 = vector.load %arg6[%c0_12, %c0_13, %c0_14] : memref<2x1x64xf32, #tpu.memory_space<vmem>>, vector<1x1x64xf32>
    %9 = vector.shape_cast %8 : vector<1x1x64xf32> to vector<1x64xf32>
    %cst = arith.constant dense<0.000000e+00> : vector<16xf32>
    %10 = vector.multi_reduction <add>, %2, %cst [1] : vector<16x64xf32> to vector<16xf32>
    %11 = vector.shape_cast %10 : vector<16xf32> to vector<16x1xf32>
    %cst_15 = arith.constant 6.400000e+01 : f32
    %12 = vector.broadcast %cst_15 : f32 to vector<16x1xf32>
    %13 = arith.divf %11, %12 : vector<16x1xf32>
    %14 = vector.broadcast %13 : vector<16x1xf32> to vector<16x64xf32>
    %15 = arith.subf %2, %14 : vector<16x64xf32>
    %16 = arith.mulf %15, %15 : vector<16x64xf32>
    %cst_16 = arith.constant dense<0.000000e+00> : vector<16xf32>
    %17 = vector.multi_reduction <add>, %16, %cst_16 [1] : vector<16x64xf32> to vector<16xf32>
    %18 = vector.shape_cast %17 : vector<16xf32> to vector<16x1xf32>
    %cst_17 = arith.constant 6.400000e+01 : f32
    %19 = vector.broadcast %cst_17 : f32 to vector<16x1xf32>
    %20 = arith.divf %18, %19 : vector<16x1xf32>
    %21 = vector.broadcast %13 : vector<16x1xf32> to vector<16x64xf32>
    %22 = arith.subf %2, %21 : vector<16x64xf32>
    %cst_18 = arith.constant 9.99999997E-7 : f32
    %23 = vector.broadcast %cst_18 : f32 to vector<16x1xf32>
    %24 = arith.addf %20, %23 : vector<16x1xf32>
    %25 = math.rsqrt %24 : vector<16x1xf32>
    %26 = vector.broadcast %25 : vector<16x1xf32> to vector<16x64xf32>
    %27 = arith.mulf %22, %26 : vector<16x64xf32>
    %28 = vector.broadcast %7 : vector<1x64xf32> to vector<16x64xf32>
    %29 = arith.mulf %27, %28 : vector<16x64xf32>
    %30 = vector.broadcast %9 : vector<1x64xf32> to vector<16x64xf32>
    %31 = arith.addf %29, %30 : vector<16x64xf32>
    %32 = arith.truncf %31 : vector<16x64xf32> to vector<16x64xbf16>
    %c0_19 = arith.constant 0 : index
    %c0_20 = arith.constant 0 : index
    %c0_21 = arith.constant 0 : index
    %33 = vector.load %arg7[%c0_19, %c0_20, %c0_21] : memref<2x64x192xbf16, #tpu.memory_space<vmem>>, vector<1x64x192xbf16>
    %34 = vector.shape_cast %33 : vector<1x64x192xbf16> to vector<64x192xbf16>
    %cst_22 = arith.constant dense<0.000000e+00> : vector<16x192xf32>
    %35 = tpu.matmul %32, %34, %cst_22 {dimension_numbers = #tpu.dot_dimension_numbers<[1], [0], [0], [1], [0, 0, 1, 1], [], []>} : vector<16x64xbf16>, vector<64x192xbf16>, vector<16x192xf32> -> vector<16x192xf32>
    %c0_23 = arith.constant 0 : index
    %c0_24 = arith.constant 0 : index
    %c0_25 = arith.constant 0 : index
    %36 = vector.load %arg8[%c0_23, %c0_24, %c0_25] : memref<2x1x192xf32, #tpu.memory_space<vmem>>, vector<1x1x192xf32>
    %37 = vector.shape_cast %36 : vector<1x1x192xf32> to vector<1x192xf32>
    %38 = vector.broadcast %37 : vector<1x192xf32> to vector<16x192xf32>
    %39 = arith.addf %35, %38 : vector<16x192xf32>
    %40 = vector.extract_strided_slice %39 {offsets = [0, 0], sizes = [16, 64], strides = [1, 1]} : vector<16x192xf32> to vector<16x64xf32>
    %41 = vector.extract_strided_slice %39 {offsets = [0, 64], sizes = [16, 64], strides = [1, 1]} : vector<16x192xf32> to vector<16x64xf32>
    %42 = vector.extract_strided_slice %39 {offsets = [0, 128], sizes = [16, 64], strides = [1, 1]} : vector<16x192xf32> to vector<16x64xf32>
    %c0_26 = arith.constant 0 : index
    %c0_27 = arith.constant 0 : index
    %c0_28 = arith.constant 0 : index
    %43 = vector.load %arg9[%c0_26, %c0_27, %c0_28] : memref<2x64x64xbf16, #tpu.memory_space<vmem>>, vector<1x64x64xbf16>
    %44 = vector.shape_cast %43 : vector<1x64x64xbf16> to vector<64x64xbf16>
    %45 = vector.extract_strided_slice %40 {offsets = [0, 0], sizes = [16, 16], strides = [1, 1]} : vector<16x64xf32> to vector<16x16xf32>
    %46 = vector.extract_strided_slice %40 {offsets = [0, 16], sizes = [16, 16], strides = [1, 1]} : vector<16x64xf32> to vector<16x16xf32>
    %47 = vector.extract_strided_slice %40 {offsets = [0, 32], sizes = [16, 16], strides = [1, 1]} : vector<16x64xf32> to vector<16x16xf32>
    %48 = vector.extract_strided_slice %40 {offsets = [0, 48], sizes = [16, 16], strides = [1, 1]} : vector<16x64xf32> to vector<16x16xf32>
    %49 = vector.shape_cast %45 : vector<16x16xf32> to vector<1x16x16xf32>
    %50 = vector.shape_cast %46 : vector<16x16xf32> to vector<1x16x16xf32>
    %51 = vector.shape_cast %47 : vector<16x16xf32> to vector<1x16x16xf32>
    %52 = vector.shape_cast %48 : vector<16x16xf32> to vector<1x16x16xf32>
    %53 = tpu.concatenate %49, %50, %51, %52 in 0 : vector<1x16x16xf32>, vector<1x16x16xf32>, vector<1x16x16xf32>, vector<1x16x16xf32> -> vector<4x16x16xf32>
    %54 = arith.truncf %53 : vector<4x16x16xf32> to vector<4x16x16xbf16>
    %55 = vector.extract_strided_slice %41 {offsets = [0, 0], sizes = [16, 16], strides = [1, 1]} : vector<16x64xf32> to vector<16x16xf32>
    %56 = vector.extract_strided_slice %41 {offsets = [0, 16], sizes = [16, 16], strides = [1, 1]} : vector<16x64xf32> to vector<16x16xf32>
    %57 = vector.extract_strided_slice %41 {offsets = [0, 32], sizes = [16, 16], strides = [1, 1]} : vector<16x64xf32> to vector<16x16xf32>
    %58 = vector.extract_strided_slice %41 {offsets = [0, 48], sizes = [16, 16], strides = [1, 1]} : vector<16x64xf32> to vector<16x16xf32>
    %59 = vector.shape_cast %55 : vector<16x16xf32> to vector<1x16x16xf32>
    %60 = vector.shape_cast %56 : vector<16x16xf32> to vector<1x16x16xf32>
    %61 = vector.shape_cast %57 : vector<16x16xf32> to vector<1x16x16xf32>
    %62 = vector.shape_cast %58 : vector<16x16xf32> to vector<1x16x16xf32>
    %63 = tpu.concatenate %59, %60, %61, %62 in 0 : vector<1x16x16xf32>, vector<1x16x16xf32>, vector<1x16x16xf32>, vector<1x16x16xf32> -> vector<4x16x16xf32>
    %64 = arith.truncf %63 : vector<4x16x16xf32> to vector<4x16x16xbf16>
    %65 = vector.extract_strided_slice %42 {offsets = [0, 0], sizes = [16, 16], strides = [1, 1]} : vector<16x64xf32> to vector<16x16xf32>
    %66 = vector.extract_strided_slice %42 {offsets = [0, 16], sizes = [16, 16], strides = [1, 1]} : vector<16x64xf32> to vector<16x16xf32>
    %67 = vector.extract_strided_slice %42 {offsets = [0, 32], sizes = [16, 16], strides = [1, 1]} : vector<16x64xf32> to vector<16x16xf32>
    %68 = vector.extract_strided_slice %42 {offsets = [0, 48], sizes = [16, 16], strides = [1, 1]} : vector<16x64xf32> to vector<16x16xf32>
    %69 = vector.shape_cast %65 : vector<16x16xf32> to vector<1x16x16xf32>
    %70 = vector.shape_cast %66 : vector<16x16xf32> to vector<1x16x16xf32>
    %71 = vector.shape_cast %67 : vector<16x16xf32> to vector<1x16x16xf32>
    %72 = vector.shape_cast %68 : vector<16x16xf32> to vector<1x16x16xf32>
    %73 = tpu.concatenate %69, %70, %71, %72 in 0 : vector<1x16x16xf32>, vector<1x16x16xf32>, vector<1x16x16xf32>, vector<1x16x16xf32> -> vector<4x16x16xf32>
    %74 = arith.truncf %73 : vector<4x16x16xf32> to vector<4x16x16xbf16>
    "tpu.trace_start"() <{level = 10 : i32, message = "hqd,hkd->hqk"}> : () -> ()
    %cst_29 = arith.constant dense<0.000000e+00> : vector<4x16x16xf32>
    %75 = tpu.matmul %54, %64, %cst_29 {dimension_numbers = #tpu.dot_dimension_numbers<[2], [2], [1], [1], [0, 0, 0, 1, 1, 1], [0], [0]>} : vector<4x16x16xbf16>, vector<4x16x16xbf16>, vector<4x16x16xf32> -> vector<4x16x16xf32>
    "tpu.trace_stop"() : () -> ()
    %cst_30 = arith.constant 2.500000e-01 : f32
    %76 = vector.broadcast %cst_30 : f32 to vector<4x16x16xf32>
    %77 = arith.mulf %75, %76 : vector<4x16x16xf32>
    %78 = vector.shape_cast %4 : vector<16x16xf32> to vector<1x16x16xf32>
    %79 = vector.broadcast %78 : vector<1x16x16xf32> to vector<4x16x16xf32>
    %80 = arith.addf %77, %79 : vector<4x16x16xf32>
    %cst_31 = arith.constant dense<0xFF800000> : vector<4x16xf32>
    %81 = vector.multi_reduction <maximumf>, %80, %cst_31 [2] : vector<4x16x16xf32> to vector<4x16xf32>
    %82 = vector.shape_cast %81 : vector<4x16xf32> to vector<4x16x1xf32>
    %83 = vector.broadcast %82 : vector<4x16x1xf32> to vector<4x16x16xf32>
    %84 = arith.subf %80, %83 : vector<4x16x16xf32>
    %85 = math.exp %84 : vector<4x16x16xf32>
    %cst_32 = arith.constant dense<0.000000e+00> : vector<4x16xf32>
    %86 = vector.multi_reduction <add>, %85, %cst_32 [2] : vector<4x16x16xf32> to vector<4x16xf32>
    %87 = vector.shape_cast %86 : vector<4x16xf32> to vector<4x16x1xf32>
    %88 = tpu.reciprocal %87 {approx = true} : vector<4x16x1xf32> -> vector<4x16x1xf32>
    %89 = vector.broadcast %88 : vector<4x16x1xf32> to vector<4x16x16xf32>
    %90 = arith.mulf %85, %89 : vector<4x16x16xf32>
    %91 = arith.truncf %90 : vector<4x16x16xf32> to vector<4x16x16xbf16>
    "tpu.trace_start"() <{level = 10 : i32, message = "hqk,hkd->hqd"}> : () -> ()
    %cst_33 = arith.constant dense<0.000000e+00> : vector<4x16x16xf32>
    %92 = tpu.matmul %91, %74, %cst_33 {dimension_numbers = #tpu.dot_dimension_numbers<[2], [1], [1], [2], [0, 0, 0, 1, 1, 2], [0], [0]>} : vector<4x16x16xbf16>, vector<4x16x16xbf16>, vector<4x16x16xf32> -> vector<4x16x16xf32>
    %cst_34 = arith.constant 0.000000e+00 : f32
    "tpu.trace_stop"() : () -> ()
    %93 = vector.broadcast %cst_34 : f32 to vector<16x64xf32>
    %94 = vector.extract_strided_slice %92 {offsets = [0, 0, 0], sizes = [1, 16, 16], strides = [1, 1, 1]} : vector<4x16x16xf32> to vector<1x16x16xf32>
    %95 = vector.shape_cast %94 : vector<1x16x16xf32> to vector<16x16xf32>
    %96 = arith.truncf %95 : vector<16x16xf32> to vector<16x16xbf16>
    %97 = vector.extract_strided_slice %44 {offsets = [0, 0], sizes = [16, 64], strides = [1, 1]} : vector<64x64xbf16> to vector<16x64xbf16>
    %cst_35 = arith.constant dense<0.000000e+00> : vector<16x64xf32>
    %98 = tpu.matmul %96, %97, %cst_35 {dimension_numbers = #tpu.dot_dimension_numbers<[1], [0], [0], [1], [0, 0, 1, 1], [], []>} : vector<16x16xbf16>, vector<16x64xbf16>, vector<16x64xf32> -> vector<16x64xf32>
    %99 = arith.addf %93, %98 : vector<16x64xf32>
    %100 = vector.extract_strided_slice %92 {offsets = [1, 0, 0], sizes = [1, 16, 16], strides = [1, 1, 1]} : vector<4x16x16xf32> to vector<1x16x16xf32>
    %101 = vector.shape_cast %100 : vector<1x16x16xf32> to vector<16x16xf32>
    %102 = arith.truncf %101 : vector<16x16xf32> to vector<16x16xbf16>
    %103 = vector.extract_strided_slice %44 {offsets = [16, 0], sizes = [16, 64], strides = [1, 1]} : vector<64x64xbf16> to vector<16x64xbf16>
    %cst_36 = arith.constant dense<0.000000e+00> : vector<16x64xf32>
    %104 = tpu.matmul %102, %103, %cst_36 {dimension_numbers = #tpu.dot_dimension_numbers<[1], [0], [0], [1], [0, 0, 1, 1], [], []>} : vector<16x16xbf16>, vector<16x64xbf16>, vector<16x64xf32> -> vector<16x64xf32>
    %105 = arith.addf %99, %104 : vector<16x64xf32>
    %106 = vector.extract_strided_slice %92 {offsets = [2, 0, 0], sizes = [1, 16, 16], strides = [1, 1, 1]} : vector<4x16x16xf32> to vector<1x16x16xf32>
    %107 = vector.shape_cast %106 : vector<1x16x16xf32> to vector<16x16xf32>
    %108 = arith.truncf %107 : vector<16x16xf32> to vector<16x16xbf16>
    %109 = vector.extract_strided_slice %44 {offsets = [32, 0], sizes = [16, 64], strides = [1, 1]} : vector<64x64xbf16> to vector<16x64xbf16>
    %cst_37 = arith.constant dense<0.000000e+00> : vector<16x64xf32>
    %110 = tpu.matmul %108, %109, %cst_37 {dimension_numbers = #tpu.dot_dimension_numbers<[1], [0], [0], [1], [0, 0, 1, 1], [], []>} : vector<16x16xbf16>, vector<16x64xbf16>, vector<16x64xf32> -> vector<16x64xf32>
    %111 = arith.addf %105, %110 : vector<16x64xf32>
    %112 = vector.extract_strided_slice %92 {offsets = [3, 0, 0], sizes = [1, 16, 16], strides = [1, 1, 1]} : vector<4x16x16xf32> to vector<1x16x16xf32>
    %113 = vector.shape_cast %112 : vector<1x16x16xf32> to vector<16x16xf32>
    %114 = arith.truncf %113 : vector<16x16xf32> to vector<16x16xbf16>
    %115 = vector.extract_strided_slice %44 {offsets = [48, 0], sizes = [16, 64], strides = [1, 1]} : vector<64x64xbf16> to vector<16x64xbf16>
    %cst_38 = arith.constant dense<0.000000e+00> : vector<16x64xf32>
    %116 = tpu.matmul %114, %115, %cst_38 {dimension_numbers = #tpu.dot_dimension_numbers<[1], [0], [0], [1], [0, 0, 1, 1], [], []>} : vector<16x16xbf16>, vector<16x64xbf16>, vector<16x64xf32> -> vector<16x64xf32>
    %117 = arith.addf %111, %116 : vector<16x64xf32>
    %118 = arith.addf %2, %117 : vector<16x64xf32>
    %c0_39 = arith.constant 0 : index
    %c0_40 = arith.constant 0 : index
    %c0_41 = arith.constant 0 : index
    %119 = vector.load %arg10[%c0_39, %c0_40, %c0_41] : memref<2x1x64xf32, #tpu.memory_space<vmem>>, vector<1x1x64xf32>
    %120 = vector.shape_cast %119 : vector<1x1x64xf32> to vector<1x64xf32>
    %121 = vector.broadcast %120 : vector<1x64xf32> to vector<16x64xf32>
    %122 = arith.addf %118, %121 : vector<16x64xf32>
    %c0_42 = arith.constant 0 : index
    %c0_43 = arith.constant 0 : index
    %c0_44 = arith.constant 0 : index
    %123 = vector.load %arg11[%c0_42, %c0_43, %c0_44] : memref<2x1x64xf32, #tpu.memory_space<vmem>>, vector<1x1x64xf32>
    %124 = vector.shape_cast %123 : vector<1x1x64xf32> to vector<1x64xf32>
    %c0_45 = arith.constant 0 : index
    %c0_46 = arith.constant 0 : index
    %c0_47 = arith.constant 0 : index
    %125 = vector.load %arg12[%c0_45, %c0_46, %c0_47] : memref<2x1x64xf32, #tpu.memory_space<vmem>>, vector<1x1x64xf32>
    %126 = vector.shape_cast %125 : vector<1x1x64xf32> to vector<1x64xf32>
    %cst_48 = arith.constant dense<0.000000e+00> : vector<16xf32>
    %127 = vector.multi_reduction <add>, %122, %cst_48 [1] : vector<16x64xf32> to vector<16xf32>
    %128 = vector.shape_cast %127 : vector<16xf32> to vector<16x1xf32>
    %cst_49 = arith.constant 6.400000e+01 : f32
    %129 = vector.broadcast %cst_49 : f32 to vector<16x1xf32>
    %130 = arith.divf %128, %129 : vector<16x1xf32>
    %131 = vector.broadcast %130 : vector<16x1xf32> to vector<16x64xf32>
    %132 = arith.subf %122, %131 : vector<16x64xf32>
    %133 = arith.mulf %132, %132 : vector<16x64xf32>
    %cst_50 = arith.constant dense<0.000000e+00> : vector<16xf32>
    %134 = vector.multi_reduction <add>, %133, %cst_50 [1] : vector<16x64xf32> to vector<16xf32>
    %135 = vector.shape_cast %134 : vector<16xf32> to vector<16x1xf32>
    %cst_51 = arith.constant 6.400000e+01 : f32
    %136 = vector.broadcast %cst_51 : f32 to vector<16x1xf32>
    %137 = arith.divf %135, %136 : vector<16x1xf32>
    %138 = vector.broadcast %130 : vector<16x1xf32> to vector<16x64xf32>
    %139 = arith.subf %122, %138 : vector<16x64xf32>
    %cst_52 = arith.constant 9.99999997E-7 : f32
    %140 = vector.broadcast %cst_52 : f32 to vector<16x1xf32>
    %141 = arith.addf %137, %140 : vector<16x1xf32>
    %142 = math.rsqrt %141 : vector<16x1xf32>
    %143 = vector.broadcast %142 : vector<16x1xf32> to vector<16x64xf32>
    %144 = arith.mulf %139, %143 : vector<16x64xf32>
    %145 = vector.broadcast %124 : vector<1x64xf32> to vector<16x64xf32>
    %146 = arith.mulf %144, %145 : vector<16x64xf32>
    %147 = vector.broadcast %126 : vector<1x64xf32> to vector<16x64xf32>
    %148 = arith.addf %146, %147 : vector<16x64xf32>
    %149 = arith.truncf %148 : vector<16x64xf32> to vector<16x64xbf16>
    %c0_53 = arith.constant 0 : index
    %c0_54 = arith.constant 0 : index
    %c0_55 = arith.constant 0 : index
    %150 = vector.load %arg13[%c0_53, %c0_54, %c0_55] : memref<2x64x64xbf16, #tpu.memory_space<vmem>>, vector<1x64x64xbf16>
    %151 = vector.shape_cast %150 : vector<1x64x64xbf16> to vector<64x64xbf16>
    %cst_56 = arith.constant dense<0.000000e+00> : vector<16x64xf32>
    %152 = tpu.matmul %149, %151, %cst_56 {dimension_numbers = #tpu.dot_dimension_numbers<[1], [0], [0], [1], [0, 0, 1, 1], [], []>} : vector<16x64xbf16>, vector<64x64xbf16>, vector<16x64xf32> -> vector<16x64xf32>
    %c0_57 = arith.constant 0 : index
    %c0_58 = arith.constant 0 : index
    %c0_59 = arith.constant 0 : index
    %153 = vector.load %arg14[%c0_57, %c0_58, %c0_59] : memref<2x1x64xf32, #tpu.memory_space<vmem>>, vector<1x1x64xf32>
    %154 = vector.shape_cast %153 : vector<1x1x64xf32> to vector<1x64xf32>
    %155 = vector.broadcast %154 : vector<1x64xf32> to vector<16x64xf32>
    %156 = arith.addf %152, %155 : vector<16x64xf32>
    %157 = arith.truncf %3 : vector<12x64xf32> to vector<12x64xbf16>
    %c0_60 = arith.constant 0 : index
    %c0_61 = arith.constant 0 : index
    %c0_62 = arith.constant 0 : index
    %158 = vector.load %arg15[%c0_60, %c0_61, %c0_62] : memref<2x64x128xbf16, #tpu.memory_space<vmem>>, vector<1x64x128xbf16>
    %159 = vector.shape_cast %158 : vector<1x64x128xbf16> to vector<64x128xbf16>
    %cst_63 = arith.constant dense<0.000000e+00> : vector<12x128xf32>
    %160 = tpu.matmul %157, %159, %cst_63 {dimension_numbers = #tpu.dot_dimension_numbers<[1], [0], [0], [1], [0, 0, 1, 1], [], []>} : vector<12x64xbf16>, vector<64x128xbf16>, vector<12x128xf32> -> vector<12x128xf32>
    %c0_64 = arith.constant 0 : index
    %c0_65 = arith.constant 0 : index
    %c0_66 = arith.constant 0 : index
    %161 = vector.load %arg16[%c0_64, %c0_65, %c0_66] : memref<2x1x128xf32, #tpu.memory_space<vmem>>, vector<1x1x128xf32>
    %162 = vector.shape_cast %161 : vector<1x1x128xf32> to vector<1x128xf32>
    %163 = vector.broadcast %162 : vector<1x128xf32> to vector<12x128xf32>
    %164 = arith.addf %160, %163 : vector<12x128xf32>
    %165 = vector.extract_strided_slice %164 {offsets = [0, 0], sizes = [12, 64], strides = [1, 1]} : vector<12x128xf32> to vector<12x64xf32>
    %166 = vector.extract_strided_slice %164 {offsets = [0, 64], sizes = [12, 64], strides = [1, 1]} : vector<12x128xf32> to vector<12x64xf32>
    %c0_67 = arith.constant 0 : index
    %c0_68 = arith.constant 0 : index
    %c0_69 = arith.constant 0 : index
    %167 = vector.load %arg17[%c0_67, %c0_68, %c0_69] : memref<2x64x64xbf16, #tpu.memory_space<vmem>>, vector<1x64x64xbf16>
    %168 = vector.shape_cast %167 : vector<1x64x64xbf16> to vector<64x64xbf16>
    %169 = vector.extract_strided_slice %156 {offsets = [0, 0], sizes = [16, 16], strides = [1, 1]} : vector<16x64xf32> to vector<16x16xf32>
    %170 = vector.extract_strided_slice %156 {offsets = [0, 16], sizes = [16, 16], strides = [1, 1]} : vector<16x64xf32> to vector<16x16xf32>
    %171 = vector.extract_strided_slice %156 {offsets = [0, 32], sizes = [16, 16], strides = [1, 1]} : vector<16x64xf32> to vector<16x16xf32>
    %172 = vector.extract_strided_slice %156 {offsets = [0, 48], sizes = [16, 16], strides = [1, 1]} : vector<16x64xf32> to vector<16x16xf32>
    %173 = vector.shape_cast %169 : vector<16x16xf32> to vector<1x16x16xf32>
    %174 = vector.shape_cast %170 : vector<16x16xf32> to vector<1x16x16xf32>
    %175 = vector.shape_cast %171 : vector<16x16xf32> to vector<1x16x16xf32>
    %176 = vector.shape_cast %172 : vector<16x16xf32> to vector<1x16x16xf32>
    %177 = tpu.concatenate %173, %174, %175, %176 in 0 : vector<1x16x16xf32>, vector<1x16x16xf32>, vector<1x16x16xf32>, vector<1x16x16xf32> -> vector<4x16x16xf32>
    %178 = arith.truncf %177 : vector<4x16x16xf32> to vector<4x16x16xbf16>
    %179 = vector.extract_strided_slice %165 {offsets = [0, 0], sizes = [12, 16], strides = [1, 1]} : vector<12x64xf32> to vector<12x16xf32>
    %180 = vector.extract_strided_slice %165 {offsets = [0, 16], sizes = [12, 16], strides = [1, 1]} : vector<12x64xf32> to vector<12x16xf32>
    %181 = vector.extract_strided_slice %165 {offsets = [0, 32], sizes = [12, 16], strides = [1, 1]} : vector<12x64xf32> to vector<12x16xf32>
    %182 = vector.extract_strided_slice %165 {offsets = [0, 48], sizes = [12, 16], strides = [1, 1]} : vector<12x64xf32> to vector<12x16xf32>
    %183 = vector.shape_cast %179 : vector<12x16xf32> to vector<1x12x16xf32>
    %184 = vector.shape_cast %180 : vector<12x16xf32> to vector<1x12x16xf32>
    %185 = vector.shape_cast %181 : vector<12x16xf32> to vector<1x12x16xf32>
    %186 = vector.shape_cast %182 : vector<12x16xf32> to vector<1x12x16xf32>
    %187 = tpu.concatenate %183, %184, %185, %186 in 0 : vector<1x12x16xf32>, vector<1x12x16xf32>, vector<1x12x16xf32>, vector<1x12x16xf32> -> vector<4x12x16xf32>
    %188 = arith.truncf %187 : vector<4x12x16xf32> to vector<4x12x16xbf16>
    %189 = vector.extract_strided_slice %166 {offsets = [0, 0], sizes = [12, 16], strides = [1, 1]} : vector<12x64xf32> to vector<12x16xf32>
    %190 = vector.extract_strided_slice %166 {offsets = [0, 16], sizes = [12, 16], strides = [1, 1]} : vector<12x64xf32> to vector<12x16xf32>
    %191 = vector.extract_strided_slice %166 {offsets = [0, 32], sizes = [12, 16], strides = [1, 1]} : vector<12x64xf32> to vector<12x16xf32>
    %192 = vector.extract_strided_slice %166 {offsets = [0, 48], sizes = [12, 16], strides = [1, 1]} : vector<12x64xf32> to vector<12x16xf32>
    %193 = vector.shape_cast %189 : vector<12x16xf32> to vector<1x12x16xf32>
    %194 = vector.shape_cast %190 : vector<12x16xf32> to vector<1x12x16xf32>
    %195 = vector.shape_cast %191 : vector<12x16xf32> to vector<1x12x16xf32>
    %196 = vector.shape_cast %192 : vector<12x16xf32> to vector<1x12x16xf32>
    %197 = tpu.concatenate %193, %194, %195, %196 in 0 : vector<1x12x16xf32>, vector<1x12x16xf32>, vector<1x12x16xf32>, vector<1x12x16xf32> -> vector<4x12x16xf32>
    %198 = arith.truncf %197 : vector<4x12x16xf32> to vector<4x12x16xbf16>
    "tpu.trace_start"() <{level = 10 : i32, message = "hqd,hkd->hqk"}> : () -> ()
    %cst_70 = arith.constant dense<0.000000e+00> : vector<4x16x12xf32>
    %199 = tpu.matmul %178, %188, %cst_70 {dimension_numbers = #tpu.dot_dimension_numbers<[2], [2], [1], [1], [0, 0, 0, 1, 1, 1], [0], [0]>} : vector<4x16x16xbf16>, vector<4x12x16xbf16>, vector<4x16x12xf32> -> vector<4x16x12xf32>
    "tpu.trace_stop"() : () -> ()
    %cst_71 = arith.constant 2.500000e-01 : f32
    %200 = vector.broadcast %cst_71 : f32 to vector<4x16x12xf32>
    %201 = arith.mulf %199, %200 : vector<4x16x12xf32>
    %202 = vector.shape_cast %5 : vector<16x12xf32> to vector<1x16x12xf32>
    %203 = vector.broadcast %202 : vector<1x16x12xf32> to vector<4x16x12xf32>
    %204 = arith.addf %201, %203 : vector<4x16x12xf32>
    %cst_72 = arith.constant dense<0xFF800000> : vector<4x16xf32>
    %205 = vector.multi_reduction <maximumf>, %204, %cst_72 [2] : vector<4x16x12xf32> to vector<4x16xf32>
    %206 = vector.shape_cast %205 : vector<4x16xf32> to vector<4x16x1xf32>
    %207 = vector.broadcast %206 : vector<4x16x1xf32> to vector<4x16x12xf32>
    %208 = arith.subf %204, %207 : vector<4x16x12xf32>
    %209 = math.exp %208 : vector<4x16x12xf32>
    %cst_73 = arith.constant dense<0.000000e+00> : vector<4x16xf32>
    %210 = vector.multi_reduction <add>, %209, %cst_73 [2] : vector<4x16x12xf32> to vector<4x16xf32>
    %211 = vector.shape_cast %210 : vector<4x16xf32> to vector<4x16x1xf32>
    %212 = tpu.reciprocal %211 {approx = true} : vector<4x16x1xf32> -> vector<4x16x1xf32>
    %213 = vector.broadcast %212 : vector<4x16x1xf32> to vector<4x16x12xf32>
    %214 = arith.mulf %209, %213 : vector<4x16x12xf32>
    %215 = arith.truncf %214 : vector<4x16x12xf32> to vector<4x16x12xbf16>
    "tpu.trace_start"() <{level = 10 : i32, message = "hqk,hkd->hqd"}> : () -> ()
    %cst_74 = arith.constant dense<0.000000e+00> : vector<4x16x16xf32>
    %216 = tpu.matmul %215, %198, %cst_74 {dimension_numbers = #tpu.dot_dimension_numbers<[2], [1], [1], [2], [0, 0, 0, 1, 1, 2], [0], [0]>} : vector<4x16x12xbf16>, vector<4x12x16xbf16>, vector<4x16x16xf32> -> vector<4x16x16xf32>
    %cst_75 = arith.constant 0.000000e+00 : f32
    "tpu.trace_stop"() : () -> ()
    %217 = vector.broadcast %cst_75 : f32 to vector<16x64xf32>
    %218 = vector.extract_strided_slice %216 {offsets = [0, 0, 0], sizes = [1, 16, 16], strides = [1, 1, 1]} : vector<4x16x16xf32> to vector<1x16x16xf32>
    %219 = vector.shape_cast %218 : vector<1x16x16xf32> to vector<16x16xf32>
    %220 = arith.truncf %219 : vector<16x16xf32> to vector<16x16xbf16>
    %221 = vector.extract_strided_slice %168 {offsets = [0, 0], sizes = [16, 64], strides = [1, 1]} : vector<64x64xbf16> to vector<16x64xbf16>
    %cst_76 = arith.constant dense<0.000000e+00> : vector<16x64xf32>
    %222 = tpu.matmul %220, %221, %cst_76 {dimension_numbers = #tpu.dot_dimension_numbers<[1], [0], [0], [1], [0, 0, 1, 1], [], []>} : vector<16x16xbf16>, vector<16x64xbf16>, vector<16x64xf32> -> vector<16x64xf32>
    %223 = arith.addf %217, %222 : vector<16x64xf32>
    %224 = vector.extract_strided_slice %216 {offsets = [1, 0, 0], sizes = [1, 16, 16], strides = [1, 1, 1]} : vector<4x16x16xf32> to vector<1x16x16xf32>
    %225 = vector.shape_cast %224 : vector<1x16x16xf32> to vector<16x16xf32>
    %226 = arith.truncf %225 : vector<16x16xf32> to vector<16x16xbf16>
    %227 = vector.extract_strided_slice %168 {offsets = [16, 0], sizes = [16, 64], strides = [1, 1]} : vector<64x64xbf16> to vector<16x64xbf16>
    %cst_77 = arith.constant dense<0.000000e+00> : vector<16x64xf32>
    %228 = tpu.matmul %226, %227, %cst_77 {dimension_numbers = #tpu.dot_dimension_numbers<[1], [0], [0], [1], [0, 0, 1, 1], [], []>} : vector<16x16xbf16>, vector<16x64xbf16>, vector<16x64xf32> -> vector<16x64xf32>
    %229 = arith.addf %223, %228 : vector<16x64xf32>
    %230 = vector.extract_strided_slice %216 {offsets = [2, 0, 0], sizes = [1, 16, 16], strides = [1, 1, 1]} : vector<4x16x16xf32> to vector<1x16x16xf32>
    %231 = vector.shape_cast %230 : vector<1x16x16xf32> to vector<16x16xf32>
    %232 = arith.truncf %231 : vector<16x16xf32> to vector<16x16xbf16>
    %233 = vector.extract_strided_slice %168 {offsets = [32, 0], sizes = [16, 64], strides = [1, 1]} : vector<64x64xbf16> to vector<16x64xbf16>
    %cst_78 = arith.constant dense<0.000000e+00> : vector<16x64xf32>
    %234 = tpu.matmul %232, %233, %cst_78 {dimension_numbers = #tpu.dot_dimension_numbers<[1], [0], [0], [1], [0, 0, 1, 1], [], []>} : vector<16x16xbf16>, vector<16x64xbf16>, vector<16x64xf32> -> vector<16x64xf32>
    %235 = arith.addf %229, %234 : vector<16x64xf32>
    %236 = vector.extract_strided_slice %216 {offsets = [3, 0, 0], sizes = [1, 16, 16], strides = [1, 1, 1]} : vector<4x16x16xf32> to vector<1x16x16xf32>
    %237 = vector.shape_cast %236 : vector<1x16x16xf32> to vector<16x16xf32>
    %238 = arith.truncf %237 : vector<16x16xf32> to vector<16x16xbf16>
    %239 = vector.extract_strided_slice %168 {offsets = [48, 0], sizes = [16, 64], strides = [1, 1]} : vector<64x64xbf16> to vector<16x64xbf16>
    %cst_79 = arith.constant dense<0.000000e+00> : vector<16x64xf32>
    %240 = tpu.matmul %238, %239, %cst_79 {dimension_numbers = #tpu.dot_dimension_numbers<[1], [0], [0], [1], [0, 0, 1, 1], [], []>} : vector<16x16xbf16>, vector<16x64xbf16>, vector<16x64xf32> -> vector<16x64xf32>
    %241 = arith.addf %235, %240 : vector<16x64xf32>
    %242 = arith.addf %122, %241 : vector<16x64xf32>
    %c0_80 = arith.constant 0 : index
    %c0_81 = arith.constant 0 : index
    %c0_82 = arith.constant 0 : index
    %243 = vector.load %arg18[%c0_80, %c0_81, %c0_82] : memref<2x1x64xf32, #tpu.memory_space<vmem>>, vector<1x1x64xf32>
    %244 = vector.shape_cast %243 : vector<1x1x64xf32> to vector<1x64xf32>
    %245 = vector.broadcast %244 : vector<1x64xf32> to vector<16x64xf32>
    %246 = arith.addf %242, %245 : vector<16x64xf32>
    %c0_83 = arith.constant 0 : index
    %c0_84 = arith.constant 0 : index
    %c0_85 = arith.constant 0 : index
    %247 = vector.load %arg19[%c0_83, %c0_84, %c0_85] : memref<2x1x64xf32, #tpu.memory_space<vmem>>, vector<1x1x64xf32>
    %248 = vector.shape_cast %247 : vector<1x1x64xf32> to vector<1x64xf32>
    %c0_86 = arith.constant 0 : index
    %c0_87 = arith.constant 0 : index
    %c0_88 = arith.constant 0 : index
    %249 = vector.load %arg20[%c0_86, %c0_87, %c0_88] : memref<2x1x64xf32, #tpu.memory_space<vmem>>, vector<1x1x64xf32>
    %250 = vector.shape_cast %249 : vector<1x1x64xf32> to vector<1x64xf32>
    %cst_89 = arith.constant dense<0.000000e+00> : vector<16xf32>
    %251 = vector.multi_reduction <add>, %246, %cst_89 [1] : vector<16x64xf32> to vector<16xf32>
    %252 = vector.shape_cast %251 : vector<16xf32> to vector<16x1xf32>
    %cst_90 = arith.constant 6.400000e+01 : f32
    %253 = vector.broadcast %cst_90 : f32 to vector<16x1xf32>
    %254 = arith.divf %252, %253 : vector<16x1xf32>
    %255 = vector.broadcast %254 : vector<16x1xf32> to vector<16x64xf32>
    %256 = arith.subf %246, %255 : vector<16x64xf32>
    %257 = arith.mulf %256, %256 : vector<16x64xf32>
    %cst_91 = arith.constant dense<0.000000e+00> : vector<16xf32>
    %258 = vector.multi_reduction <add>, %257, %cst_91 [1] : vector<16x64xf32> to vector<16xf32>
    %259 = vector.shape_cast %258 : vector<16xf32> to vector<16x1xf32>
    %cst_92 = arith.constant 6.400000e+01 : f32
    %260 = vector.broadcast %cst_92 : f32 to vector<16x1xf32>
    %261 = arith.divf %259, %260 : vector<16x1xf32>
    %262 = vector.broadcast %254 : vector<16x1xf32> to vector<16x64xf32>
    %263 = arith.subf %246, %262 : vector<16x64xf32>
    %cst_93 = arith.constant 9.99999997E-7 : f32
    %264 = vector.broadcast %cst_93 : f32 to vector<16x1xf32>
    %265 = arith.addf %261, %264 : vector<16x1xf32>
    %266 = math.rsqrt %265 : vector<16x1xf32>
    %267 = vector.broadcast %266 : vector<16x1xf32> to vector<16x64xf32>
    %268 = arith.mulf %263, %267 : vector<16x64xf32>
    %269 = vector.broadcast %248 : vector<1x64xf32> to vector<16x64xf32>
    %270 = arith.mulf %268, %269 : vector<16x64xf32>
    %271 = vector.broadcast %250 : vector<1x64xf32> to vector<16x64xf32>
    %272 = arith.addf %270, %271 : vector<16x64xf32>
    %273 = arith.truncf %272 : vector<16x64xf32> to vector<16x64xbf16>
    %c0_94 = arith.constant 0 : index
    %c0_95 = arith.constant 0 : index
    %c0_96 = arith.constant 0 : index
    %274 = vector.load %arg21[%c0_94, %c0_95, %c0_96] : memref<2x64x64xbf16, #tpu.memory_space<vmem>>, vector<1x64x64xbf16>
    %275 = vector.shape_cast %274 : vector<1x64x64xbf16> to vector<64x64xbf16>
    %cst_97 = arith.constant dense<0.000000e+00> : vector<16x64xf32>
    %276 = tpu.matmul %273, %275, %cst_97 {dimension_numbers = #tpu.dot_dimension_numbers<[1], [0], [0], [1], [0, 0, 1, 1], [], []>} : vector<16x64xbf16>, vector<64x64xbf16>, vector<16x64xf32> -> vector<16x64xf32>
    %c0_98 = arith.constant 0 : index
    %c0_99 = arith.constant 0 : index
    %c0_100 = arith.constant 0 : index
    %277 = vector.load %arg22[%c0_98, %c0_99, %c0_100] : memref<2x1x64xf32, #tpu.memory_space<vmem>>, vector<1x1x64xf32>
    %278 = vector.shape_cast %277 : vector<1x1x64xf32> to vector<1x64xf32>
    %279 = vector.broadcast %278 : vector<1x64xf32> to vector<16x64xf32>
    %280 = arith.addf %276, %279 : vector<16x64xf32>
    %cst_101 = arith.constant 0.000000e+00 : f32
    %281 = vector.broadcast %cst_101 : f32 to vector<16x64xf32>
    %282 = arith.maximumf %280, %281 : vector<16x64xf32>
    %283 = arith.truncf %282 : vector<16x64xf32> to vector<16x64xbf16>
    %c0_102 = arith.constant 0 : index
    %c0_103 = arith.constant 0 : index
    %c0_104 = arith.constant 0 : index
    %284 = vector.load %arg23[%c0_102, %c0_103, %c0_104] : memref<2x64x64xbf16, #tpu.memory_space<vmem>>, vector<1x64x64xbf16>
    %285 = vector.shape_cast %284 : vector<1x64x64xbf16> to vector<64x64xbf16>
    %cst_105 = arith.constant dense<0.000000e+00> : vector<16x64xf32>
    %286 = tpu.matmul %283, %285, %cst_105 {dimension_numbers = #tpu.dot_dimension_numbers<[1], [0], [0], [1], [0, 0, 1, 1], [], []>} : vector<16x64xbf16>, vector<64x64xbf16>, vector<16x64xf32> -> vector<16x64xf32>
    %287 = arith.addf %246, %286 : vector<16x64xf32>
    %c0_106 = arith.constant 0 : index
    %c0_107 = arith.constant 0 : index
    %c0_108 = arith.constant 0 : index
    %288 = vector.load %arg24[%c0_106, %c0_107, %c0_108] : memref<2x1x64xf32, #tpu.memory_space<vmem>>, vector<1x1x64xf32>
    %289 = vector.shape_cast %288 : vector<1x1x64xf32> to vector<1x64xf32>
    %290 = vector.broadcast %289 : vector<1x64xf32> to vector<16x64xf32>
    %291 = arith.addf %287, %290 : vector<16x64xf32>
    %c1 = arith.constant 1 : index
    %c0_109 = arith.constant 0 : index
    %c0_110 = arith.constant 0 : index
    %292 = vector.load %arg5[%c1, %c0_109, %c0_110] : memref<2x1x64xf32, #tpu.memory_space<vmem>>, vector<1x1x64xf32>
    %293 = vector.shape_cast %292 : vector<1x1x64xf32> to vector<1x64xf32>
    %c1_111 = arith.constant 1 : index
    %c0_112 = arith.constant 0 : index
    %c0_113 = arith.constant 0 : index
    %294 = vector.load %arg6[%c1_111, %c0_112, %c0_113] : memref<2x1x64xf32, #tpu.memory_space<vmem>>, vector<1x1x64xf32>
    %295 = vector.shape_cast %294 : vector<1x1x64xf32> to vector<1x64xf32>
    %cst_114 = arith.constant dense<0.000000e+00> : vector<16xf32>
    %296 = vector.multi_reduction <add>, %291, %cst_114 [1] : vector<16x64xf32> to vector<16xf32>
    %297 = vector.shape_cast %296 : vector<16xf32> to vector<16x1xf32>
    %cst_115 = arith.constant 6.400000e+01 : f32
    %298 = vector.broadcast %cst_115 : f32 to vector<16x1xf32>
    %299 = arith.divf %297, %298 : vector<16x1xf32>
    %300 = vector.broadcast %299 : vector<16x1xf32> to vector<16x64xf32>
    %301 = arith.subf %291, %300 : vector<16x64xf32>
    %302 = arith.mulf %301, %301 : vector<16x64xf32>
    %cst_116 = arith.constant dense<0.000000e+00> : vector<16xf32>
    %303 = vector.multi_reduction <add>, %302, %cst_116 [1] : vector<16x64xf32> to vector<16xf32>
    %304 = vector.shape_cast %303 : vector<16xf32> to vector<16x1xf32>
    %cst_117 = arith.constant 6.400000e+01 : f32
    %305 = vector.broadcast %cst_117 : f32 to vector<16x1xf32>
    %306 = arith.divf %304, %305 : vector<16x1xf32>
    %307 = vector.broadcast %299 : vector<16x1xf32> to vector<16x64xf32>
    %308 = arith.subf %291, %307 : vector<16x64xf32>
    %cst_118 = arith.constant 9.99999997E-7 : f32
    %309 = vector.broadcast %cst_118 : f32 to vector<16x1xf32>
    %310 = arith.addf %306, %309 : vector<16x1xf32>
    %311 = math.rsqrt %310 : vector<16x1xf32>
    %312 = vector.broadcast %311 : vector<16x1xf32> to vector<16x64xf32>
    %313 = arith.mulf %308, %312 : vector<16x64xf32>
    %314 = vector.broadcast %293 : vector<1x64xf32> to vector<16x64xf32>
    %315 = arith.mulf %313, %314 : vector<16x64xf32>
    %316 = vector.broadcast %295 : vector<1x64xf32> to vector<16x64xf32>
    %317 = arith.addf %315, %316 : vector<16x64xf32>
    %318 = arith.truncf %317 : vector<16x64xf32> to vector<16x64xbf16>
    %c1_119 = arith.constant 1 : index
    %c0_120 = arith.constant 0 : index
    %c0_121 = arith.constant 0 : index
    %319 = vector.load %arg7[%c1_119, %c0_120, %c0_121] : memref<2x64x192xbf16, #tpu.memory_space<vmem>>, vector<1x64x192xbf16>
    %320 = vector.shape_cast %319 : vector<1x64x192xbf16> to vector<64x192xbf16>
    %cst_122 = arith.constant dense<0.000000e+00> : vector<16x192xf32>
    %321 = tpu.matmul %318, %320, %cst_122 {dimension_numbers = #tpu.dot_dimension_numbers<[1], [0], [0], [1], [0, 0, 1, 1], [], []>} : vector<16x64xbf16>, vector<64x192xbf16>, vector<16x192xf32> -> vector<16x192xf32>
    %c1_123 = arith.constant 1 : index
    %c0_124 = arith.constant 0 : index
    %c0_125 = arith.constant 0 : index
    %322 = vector.load %arg8[%c1_123, %c0_124, %c0_125] : memref<2x1x192xf32, #tpu.memory_space<vmem>>, vector<1x1x192xf32>
    %323 = vector.shape_cast %322 : vector<1x1x192xf32> to vector<1x192xf32>
    %324 = vector.broadcast %323 : vector<1x192xf32> to vector<16x192xf32>
    %325 = arith.addf %321, %324 : vector<16x192xf32>
    %326 = vector.extract_strided_slice %325 {offsets = [0, 0], sizes = [16, 64], strides = [1, 1]} : vector<16x192xf32> to vector<16x64xf32>
    %327 = vector.extract_strided_slice %325 {offsets = [0, 64], sizes = [16, 64], strides = [1, 1]} : vector<16x192xf32> to vector<16x64xf32>
    %328 = vector.extract_strided_slice %325 {offsets = [0, 128], sizes = [16, 64], strides = [1, 1]} : vector<16x192xf32> to vector<16x64xf32>
    %c1_126 = arith.constant 1 : index
    %c0_127 = arith.constant 0 : index
    %c0_128 = arith.constant 0 : index
    %329 = vector.load %arg9[%c1_126, %c0_127, %c0_128] : memref<2x64x64xbf16, #tpu.memory_space<vmem>>, vector<1x64x64xbf16>
    %330 = vector.shape_cast %329 : vector<1x64x64xbf16> to vector<64x64xbf16>
    %331 = vector.extract_strided_slice %326 {offsets = [0, 0], sizes = [16, 16], strides = [1, 1]} : vector<16x64xf32> to vector<16x16xf32>
    %332 = vector.extract_strided_slice %326 {offsets = [0, 16], sizes = [16, 16], strides = [1, 1]} : vector<16x64xf32> to vector<16x16xf32>
    %333 = vector.extract_strided_slice %326 {offsets = [0, 32], sizes = [16, 16], strides = [1, 1]} : vector<16x64xf32> to vector<16x16xf32>
    %334 = vector.extract_strided_slice %326 {offsets = [0, 48], sizes = [16, 16], strides = [1, 1]} : vector<16x64xf32> to vector<16x16xf32>
    %335 = vector.shape_cast %331 : vector<16x16xf32> to vector<1x16x16xf32>
    %336 = vector.shape_cast %332 : vector<16x16xf32> to vector<1x16x16xf32>
    %337 = vector.shape_cast %333 : vector<16x16xf32> to vector<1x16x16xf32>
    %338 = vector.shape_cast %334 : vector<16x16xf32> to vector<1x16x16xf32>
    %339 = tpu.concatenate %335, %336, %337, %338 in 0 : vector<1x16x16xf32>, vector<1x16x16xf32>, vector<1x16x16xf32>, vector<1x16x16xf32> -> vector<4x16x16xf32>
    %340 = arith.truncf %339 : vector<4x16x16xf32> to vector<4x16x16xbf16>
    %341 = vector.extract_strided_slice %327 {offsets = [0, 0], sizes = [16, 16], strides = [1, 1]} : vector<16x64xf32> to vector<16x16xf32>
    %342 = vector.extract_strided_slice %327 {offsets = [0, 16], sizes = [16, 16], strides = [1, 1]} : vector<16x64xf32> to vector<16x16xf32>
    %343 = vector.extract_strided_slice %327 {offsets = [0, 32], sizes = [16, 16], strides = [1, 1]} : vector<16x64xf32> to vector<16x16xf32>
    %344 = vector.extract_strided_slice %327 {offsets = [0, 48], sizes = [16, 16], strides = [1, 1]} : vector<16x64xf32> to vector<16x16xf32>
    %345 = vector.shape_cast %341 : vector<16x16xf32> to vector<1x16x16xf32>
    %346 = vector.shape_cast %342 : vector<16x16xf32> to vector<1x16x16xf32>
    %347 = vector.shape_cast %343 : vector<16x16xf32> to vector<1x16x16xf32>
    %348 = vector.shape_cast %344 : vector<16x16xf32> to vector<1x16x16xf32>
    %349 = tpu.concatenate %345, %346, %347, %348 in 0 : vector<1x16x16xf32>, vector<1x16x16xf32>, vector<1x16x16xf32>, vector<1x16x16xf32> -> vector<4x16x16xf32>
    %350 = arith.truncf %349 : vector<4x16x16xf32> to vector<4x16x16xbf16>
    %351 = vector.extract_strided_slice %328 {offsets = [0, 0], sizes = [16, 16], strides = [1, 1]} : vector<16x64xf32> to vector<16x16xf32>
    %352 = vector.extract_strided_slice %328 {offsets = [0, 16], sizes = [16, 16], strides = [1, 1]} : vector<16x64xf32> to vector<16x16xf32>
    %353 = vector.extract_strided_slice %328 {offsets = [0, 32], sizes = [16, 16], strides = [1, 1]} : vector<16x64xf32> to vector<16x16xf32>
    %354 = vector.extract_strided_slice %328 {offsets = [0, 48], sizes = [16, 16], strides = [1, 1]} : vector<16x64xf32> to vector<16x16xf32>
    %355 = vector.shape_cast %351 : vector<16x16xf32> to vector<1x16x16xf32>
    %356 = vector.shape_cast %352 : vector<16x16xf32> to vector<1x16x16xf32>
    %357 = vector.shape_cast %353 : vector<16x16xf32> to vector<1x16x16xf32>
    %358 = vector.shape_cast %354 : vector<16x16xf32> to vector<1x16x16xf32>
    %359 = tpu.concatenate %355, %356, %357, %358 in 0 : vector<1x16x16xf32>, vector<1x16x16xf32>, vector<1x16x16xf32>, vector<1x16x16xf32> -> vector<4x16x16xf32>
    %360 = arith.truncf %359 : vector<4x16x16xf32> to vector<4x16x16xbf16>
    "tpu.trace_start"() <{level = 10 : i32, message = "hqd,hkd->hqk"}> : () -> ()
    %cst_129 = arith.constant dense<0.000000e+00> : vector<4x16x16xf32>
    %361 = tpu.matmul %340, %350, %cst_129 {dimension_numbers = #tpu.dot_dimension_numbers<[2], [2], [1], [1], [0, 0, 0, 1, 1, 1], [0], [0]>} : vector<4x16x16xbf16>, vector<4x16x16xbf16>, vector<4x16x16xf32> -> vector<4x16x16xf32>
    "tpu.trace_stop"() : () -> ()
    %cst_130 = arith.constant 2.500000e-01 : f32
    %362 = vector.broadcast %cst_130 : f32 to vector<4x16x16xf32>
    %363 = arith.mulf %361, %362 : vector<4x16x16xf32>
    %364 = vector.shape_cast %4 : vector<16x16xf32> to vector<1x16x16xf32>
    %365 = vector.broadcast %364 : vector<1x16x16xf32> to vector<4x16x16xf32>
    %366 = arith.addf %363, %365 : vector<4x16x16xf32>
    %cst_131 = arith.constant dense<0xFF800000> : vector<4x16xf32>
    %367 = vector.multi_reduction <maximumf>, %366, %cst_131 [2] : vector<4x16x16xf32> to vector<4x16xf32>
    %368 = vector.shape_cast %367 : vector<4x16xf32> to vector<4x16x1xf32>
    %369 = vector.broadcast %368 : vector<4x16x1xf32> to vector<4x16x16xf32>
    %370 = arith.subf %366, %369 : vector<4x16x16xf32>
    %371 = math.exp %370 : vector<4x16x16xf32>
    %cst_132 = arith.constant dense<0.000000e+00> : vector<4x16xf32>
    %372 = vector.multi_reduction <add>, %371, %cst_132 [2] : vector<4x16x16xf32> to vector<4x16xf32>
    %373 = vector.shape_cast %372 : vector<4x16xf32> to vector<4x16x1xf32>
    %374 = tpu.reciprocal %373 {approx = true} : vector<4x16x1xf32> -> vector<4x16x1xf32>
    %375 = vector.broadcast %374 : vector<4x16x1xf32> to vector<4x16x16xf32>
    %376 = arith.mulf %371, %375 : vector<4x16x16xf32>
    %377 = arith.truncf %376 : vector<4x16x16xf32> to vector<4x16x16xbf16>
    "tpu.trace_start"() <{level = 10 : i32, message = "hqk,hkd->hqd"}> : () -> ()
    %cst_133 = arith.constant dense<0.000000e+00> : vector<4x16x16xf32>
    %378 = tpu.matmul %377, %360, %cst_133 {dimension_numbers = #tpu.dot_dimension_numbers<[2], [1], [1], [2], [0, 0, 0, 1, 1, 2], [0], [0]>} : vector<4x16x16xbf16>, vector<4x16x16xbf16>, vector<4x16x16xf32> -> vector<4x16x16xf32>
    %cst_134 = arith.constant 0.000000e+00 : f32
    "tpu.trace_stop"() : () -> ()
    %379 = vector.broadcast %cst_134 : f32 to vector<16x64xf32>
    %380 = vector.extract_strided_slice %378 {offsets = [0, 0, 0], sizes = [1, 16, 16], strides = [1, 1, 1]} : vector<4x16x16xf32> to vector<1x16x16xf32>
    %381 = vector.shape_cast %380 : vector<1x16x16xf32> to vector<16x16xf32>
    %382 = arith.truncf %381 : vector<16x16xf32> to vector<16x16xbf16>
    %383 = vector.extract_strided_slice %330 {offsets = [0, 0], sizes = [16, 64], strides = [1, 1]} : vector<64x64xbf16> to vector<16x64xbf16>
    %cst_135 = arith.constant dense<0.000000e+00> : vector<16x64xf32>
    %384 = tpu.matmul %382, %383, %cst_135 {dimension_numbers = #tpu.dot_dimension_numbers<[1], [0], [0], [1], [0, 0, 1, 1], [], []>} : vector<16x16xbf16>, vector<16x64xbf16>, vector<16x64xf32> -> vector<16x64xf32>
    %385 = arith.addf %379, %384 : vector<16x64xf32>
    %386 = vector.extract_strided_slice %378 {offsets = [1, 0, 0], sizes = [1, 16, 16], strides = [1, 1, 1]} : vector<4x16x16xf32> to vector<1x16x16xf32>
    %387 = vector.shape_cast %386 : vector<1x16x16xf32> to vector<16x16xf32>
    %388 = arith.truncf %387 : vector<16x16xf32> to vector<16x16xbf16>
    %389 = vector.extract_strided_slice %330 {offsets = [16, 0], sizes = [16, 64], strides = [1, 1]} : vector<64x64xbf16> to vector<16x64xbf16>
    %cst_136 = arith.constant dense<0.000000e+00> : vector<16x64xf32>
    %390 = tpu.matmul %388, %389, %cst_136 {dimension_numbers = #tpu.dot_dimension_numbers<[1], [0], [0], [1], [0, 0, 1, 1], [], []>} : vector<16x16xbf16>, vector<16x64xbf16>, vector<16x64xf32> -> vector<16x64xf32>
    %391 = arith.addf %385, %390 : vector<16x64xf32>
    %392 = vector.extract_strided_slice %378 {offsets = [2, 0, 0], sizes = [1, 16, 16], strides = [1, 1, 1]} : vector<4x16x16xf32> to vector<1x16x16xf32>
    %393 = vector.shape_cast %392 : vector<1x16x16xf32> to vector<16x16xf32>
    %394 = arith.truncf %393 : vector<16x16xf32> to vector<16x16xbf16>
    %395 = vector.extract_strided_slice %330 {offsets = [32, 0], sizes = [16, 64], strides = [1, 1]} : vector<64x64xbf16> to vector<16x64xbf16>
    %cst_137 = arith.constant dense<0.000000e+00> : vector<16x64xf32>
    %396 = tpu.matmul %394, %395, %cst_137 {dimension_numbers = #tpu.dot_dimension_numbers<[1], [0], [0], [1], [0, 0, 1, 1], [], []>} : vector<16x16xbf16>, vector<16x64xbf16>, vector<16x64xf32> -> vector<16x64xf32>
    %397 = arith.addf %391, %396 : vector<16x64xf32>
    %398 = vector.extract_strided_slice %378 {offsets = [3, 0, 0], sizes = [1, 16, 16], strides = [1, 1, 1]} : vector<4x16x16xf32> to vector<1x16x16xf32>
    %399 = vector.shape_cast %398 : vector<1x16x16xf32> to vector<16x16xf32>
    %400 = arith.truncf %399 : vector<16x16xf32> to vector<16x16xbf16>
    %401 = vector.extract_strided_slice %330 {offsets = [48, 0], sizes = [16, 64], strides = [1, 1]} : vector<64x64xbf16> to vector<16x64xbf16>
    %cst_138 = arith.constant dense<0.000000e+00> : vector<16x64xf32>
    %402 = tpu.matmul %400, %401, %cst_138 {dimension_numbers = #tpu.dot_dimension_numbers<[1], [0], [0], [1], [0, 0, 1, 1], [], []>} : vector<16x16xbf16>, vector<16x64xbf16>, vector<16x64xf32> -> vector<16x64xf32>
    %403 = arith.addf %397, %402 : vector<16x64xf32>
    %404 = arith.addf %291, %403 : vector<16x64xf32>
    %c1_139 = arith.constant 1 : index
    %c0_140 = arith.constant 0 : index
    %c0_141 = arith.constant 0 : index
    %405 = vector.load %arg10[%c1_139, %c0_140, %c0_141] : memref<2x1x64xf32, #tpu.memory_space<vmem>>, vector<1x1x64xf32>
    %406 = vector.shape_cast %405 : vector<1x1x64xf32> to vector<1x64xf32>
    %407 = vector.broadcast %406 : vector<1x64xf32> to vector<16x64xf32>
    %408 = arith.addf %404, %407 : vector<16x64xf32>
    %c1_142 = arith.constant 1 : index
    %c0_143 = arith.constant 0 : index
    %c0_144 = arith.constant 0 : index
    %409 = vector.load %arg11[%c1_142, %c0_143, %c0_144] : memref<2x1x64xf32, #tpu.memory_space<vmem>>, vector<1x1x64xf32>
    %410 = vector.shape_cast %409 : vector<1x1x64xf32> to vector<1x64xf32>
    %c1_145 = arith.constant 1 : index
    %c0_146 = arith.constant 0 : index
    %c0_147 = arith.constant 0 : index
    %411 = vector.load %arg12[%c1_145, %c0_146, %c0_147] : memref<2x1x64xf32, #tpu.memory_space<vmem>>, vector<1x1x64xf32>
    %412 = vector.shape_cast %411 : vector<1x1x64xf32> to vector<1x64xf32>
    %cst_148 = arith.constant dense<0.000000e+00> : vector<16xf32>
    %413 = vector.multi_reduction <add>, %408, %cst_148 [1] : vector<16x64xf32> to vector<16xf32>
    %414 = vector.shape_cast %413 : vector<16xf32> to vector<16x1xf32>
    %cst_149 = arith.constant 6.400000e+01 : f32
    %415 = vector.broadcast %cst_149 : f32 to vector<16x1xf32>
    %416 = arith.divf %414, %415 : vector<16x1xf32>
    %417 = vector.broadcast %416 : vector<16x1xf32> to vector<16x64xf32>
    %418 = arith.subf %408, %417 : vector<16x64xf32>
    %419 = arith.mulf %418, %418 : vector<16x64xf32>
    %cst_150 = arith.constant dense<0.000000e+00> : vector<16xf32>
    %420 = vector.multi_reduction <add>, %419, %cst_150 [1] : vector<16x64xf32> to vector<16xf32>
    %421 = vector.shape_cast %420 : vector<16xf32> to vector<16x1xf32>
    %cst_151 = arith.constant 6.400000e+01 : f32
    %422 = vector.broadcast %cst_151 : f32 to vector<16x1xf32>
    %423 = arith.divf %421, %422 : vector<16x1xf32>
    %424 = vector.broadcast %416 : vector<16x1xf32> to vector<16x64xf32>
    %425 = arith.subf %408, %424 : vector<16x64xf32>
    %cst_152 = arith.constant 9.99999997E-7 : f32
    %426 = vector.broadcast %cst_152 : f32 to vector<16x1xf32>
    %427 = arith.addf %423, %426 : vector<16x1xf32>
    %428 = math.rsqrt %427 : vector<16x1xf32>
    %429 = vector.broadcast %428 : vector<16x1xf32> to vector<16x64xf32>
    %430 = arith.mulf %425, %429 : vector<16x64xf32>
    %431 = vector.broadcast %410 : vector<1x64xf32> to vector<16x64xf32>
    %432 = arith.mulf %430, %431 : vector<16x64xf32>
    %433 = vector.broadcast %412 : vector<1x64xf32> to vector<16x64xf32>
    %434 = arith.addf %432, %433 : vector<16x64xf32>
    %435 = arith.truncf %434 : vector<16x64xf32> to vector<16x64xbf16>
    %c1_153 = arith.constant 1 : index
    %c0_154 = arith.constant 0 : index
    %c0_155 = arith.constant 0 : index
    %436 = vector.load %arg13[%c1_153, %c0_154, %c0_155] : memref<2x64x64xbf16, #tpu.memory_space<vmem>>, vector<1x64x64xbf16>
    %437 = vector.shape_cast %436 : vector<1x64x64xbf16> to vector<64x64xbf16>
    %cst_156 = arith.constant dense<0.000000e+00> : vector<16x64xf32>
    %438 = tpu.matmul %435, %437, %cst_156 {dimension_numbers = #tpu.dot_dimension_numbers<[1], [0], [0], [1], [0, 0, 1, 1], [], []>} : vector<16x64xbf16>, vector<64x64xbf16>, vector<16x64xf32> -> vector<16x64xf32>
    %c1_157 = arith.constant 1 : index
    %c0_158 = arith.constant 0 : index
    %c0_159 = arith.constant 0 : index
    %439 = vector.load %arg14[%c1_157, %c0_158, %c0_159] : memref<2x1x64xf32, #tpu.memory_space<vmem>>, vector<1x1x64xf32>
    %440 = vector.shape_cast %439 : vector<1x1x64xf32> to vector<1x64xf32>
    %441 = vector.broadcast %440 : vector<1x64xf32> to vector<16x64xf32>
    %442 = arith.addf %438, %441 : vector<16x64xf32>
    %443 = arith.truncf %3 : vector<12x64xf32> to vector<12x64xbf16>
    %c1_160 = arith.constant 1 : index
    %c0_161 = arith.constant 0 : index
    %c0_162 = arith.constant 0 : index
    %444 = vector.load %arg15[%c1_160, %c0_161, %c0_162] : memref<2x64x128xbf16, #tpu.memory_space<vmem>>, vector<1x64x128xbf16>
    %445 = vector.shape_cast %444 : vector<1x64x128xbf16> to vector<64x128xbf16>
    %cst_163 = arith.constant dense<0.000000e+00> : vector<12x128xf32>
    %446 = tpu.matmul %443, %445, %cst_163 {dimension_numbers = #tpu.dot_dimension_numbers<[1], [0], [0], [1], [0, 0, 1, 1], [], []>} : vector<12x64xbf16>, vector<64x128xbf16>, vector<12x128xf32> -> vector<12x128xf32>
    %c1_164 = arith.constant 1 : index
    %c0_165 = arith.constant 0 : index
    %c0_166 = arith.constant 0 : index
    %447 = vector.load %arg16[%c1_164, %c0_165, %c0_166] : memref<2x1x128xf32, #tpu.memory_space<vmem>>, vector<1x1x128xf32>
    %448 = vector.shape_cast %447 : vector<1x1x128xf32> to vector<1x128xf32>
    %449 = vector.broadcast %448 : vector<1x128xf32> to vector<12x128xf32>
    %450 = arith.addf %446, %449 : vector<12x128xf32>
    %451 = vector.extract_strided_slice %450 {offsets = [0, 0], sizes = [12, 64], strides = [1, 1]} : vector<12x128xf32> to vector<12x64xf32>
    %452 = vector.extract_strided_slice %450 {offsets = [0, 64], sizes = [12, 64], strides = [1, 1]} : vector<12x128xf32> to vector<12x64xf32>
    %c1_167 = arith.constant 1 : index
    %c0_168 = arith.constant 0 : index
    %c0_169 = arith.constant 0 : index
    %453 = vector.load %arg17[%c1_167, %c0_168, %c0_169] : memref<2x64x64xbf16, #tpu.memory_space<vmem>>, vector<1x64x64xbf16>
    %454 = vector.shape_cast %453 : vector<1x64x64xbf16> to vector<64x64xbf16>
    %455 = vector.extract_strided_slice %442 {offsets = [0, 0], sizes = [16, 16], strides = [1, 1]} : vector<16x64xf32> to vector<16x16xf32>
    %456 = vector.extract_strided_slice %442 {offsets = [0, 16], sizes = [16, 16], strides = [1, 1]} : vector<16x64xf32> to vector<16x16xf32>
    %457 = vector.extract_strided_slice %442 {offsets = [0, 32], sizes = [16, 16], strides = [1, 1]} : vector<16x64xf32> to vector<16x16xf32>
    %458 = vector.extract_strided_slice %442 {offsets = [0, 48], sizes = [16, 16], strides = [1, 1]} : vector<16x64xf32> to vector<16x16xf32>
    %459 = vector.shape_cast %455 : vector<16x16xf32> to vector<1x16x16xf32>
    %460 = vector.shape_cast %456 : vector<16x16xf32> to vector<1x16x16xf32>
    %461 = vector.shape_cast %457 : vector<16x16xf32> to vector<1x16x16xf32>
    %462 = vector.shape_cast %458 : vector<16x16xf32> to vector<1x16x16xf32>
    %463 = tpu.concatenate %459, %460, %461, %462 in 0 : vector<1x16x16xf32>, vector<1x16x16xf32>, vector<1x16x16xf32>, vector<1x16x16xf32> -> vector<4x16x16xf32>
    %464 = arith.truncf %463 : vector<4x16x16xf32> to vector<4x16x16xbf16>
    %465 = vector.extract_strided_slice %451 {offsets = [0, 0], sizes = [12, 16], strides = [1, 1]} : vector<12x64xf32> to vector<12x16xf32>
    %466 = vector.extract_strided_slice %451 {offsets = [0, 16], sizes = [12, 16], strides = [1, 1]} : vector<12x64xf32> to vector<12x16xf32>
    %467 = vector.extract_strided_slice %451 {offsets = [0, 32], sizes = [12, 16], strides = [1, 1]} : vector<12x64xf32> to vector<12x16xf32>
    %468 = vector.extract_strided_slice %451 {offsets = [0, 48], sizes = [12, 16], strides = [1, 1]} : vector<12x64xf32> to vector<12x16xf32>
    %469 = vector.shape_cast %465 : vector<12x16xf32> to vector<1x12x16xf32>
    %470 = vector.shape_cast %466 : vector<12x16xf32> to vector<1x12x16xf32>
    %471 = vector.shape_cast %467 : vector<12x16xf32> to vector<1x12x16xf32>
    %472 = vector.shape_cast %468 : vector<12x16xf32> to vector<1x12x16xf32>
    %473 = tpu.concatenate %469, %470, %471, %472 in 0 : vector<1x12x16xf32>, vector<1x12x16xf32>, vector<1x12x16xf32>, vector<1x12x16xf32> -> vector<4x12x16xf32>
    %474 = arith.truncf %473 : vector<4x12x16xf32> to vector<4x12x16xbf16>
    %475 = vector.extract_strided_slice %452 {offsets = [0, 0], sizes = [12, 16], strides = [1, 1]} : vector<12x64xf32> to vector<12x16xf32>
    %476 = vector.extract_strided_slice %452 {offsets = [0, 16], sizes = [12, 16], strides = [1, 1]} : vector<12x64xf32> to vector<12x16xf32>
    %477 = vector.extract_strided_slice %452 {offsets = [0, 32], sizes = [12, 16], strides = [1, 1]} : vector<12x64xf32> to vector<12x16xf32>
    %478 = vector.extract_strided_slice %452 {offsets = [0, 48], sizes = [12, 16], strides = [1, 1]} : vector<12x64xf32> to vector<12x16xf32>
    %479 = vector.shape_cast %475 : vector<12x16xf32> to vector<1x12x16xf32>
    %480 = vector.shape_cast %476 : vector<12x16xf32> to vector<1x12x16xf32>
    %481 = vector.shape_cast %477 : vector<12x16xf32> to vector<1x12x16xf32>
    %482 = vector.shape_cast %478 : vector<12x16xf32> to vector<1x12x16xf32>
    %483 = tpu.concatenate %479, %480, %481, %482 in 0 : vector<1x12x16xf32>, vector<1x12x16xf32>, vector<1x12x16xf32>, vector<1x12x16xf32> -> vector<4x12x16xf32>
    %484 = arith.truncf %483 : vector<4x12x16xf32> to vector<4x12x16xbf16>
    "tpu.trace_start"() <{level = 10 : i32, message = "hqd,hkd->hqk"}> : () -> ()
    %cst_170 = arith.constant dense<0.000000e+00> : vector<4x16x12xf32>
    %485 = tpu.matmul %464, %474, %cst_170 {dimension_numbers = #tpu.dot_dimension_numbers<[2], [2], [1], [1], [0, 0, 0, 1, 1, 1], [0], [0]>} : vector<4x16x16xbf16>, vector<4x12x16xbf16>, vector<4x16x12xf32> -> vector<4x16x12xf32>
    "tpu.trace_stop"() : () -> ()
    %cst_171 = arith.constant 2.500000e-01 : f32
    %486 = vector.broadcast %cst_171 : f32 to vector<4x16x12xf32>
    %487 = arith.mulf %485, %486 : vector<4x16x12xf32>
    %488 = vector.shape_cast %5 : vector<16x12xf32> to vector<1x16x12xf32>
    %489 = vector.broadcast %488 : vector<1x16x12xf32> to vector<4x16x12xf32>
    %490 = arith.addf %487, %489 : vector<4x16x12xf32>
    %cst_172 = arith.constant dense<0xFF800000> : vector<4x16xf32>
    %491 = vector.multi_reduction <maximumf>, %490, %cst_172 [2] : vector<4x16x12xf32> to vector<4x16xf32>
    %492 = vector.shape_cast %491 : vector<4x16xf32> to vector<4x16x1xf32>
    %493 = vector.broadcast %492 : vector<4x16x1xf32> to vector<4x16x12xf32>
    %494 = arith.subf %490, %493 : vector<4x16x12xf32>
    %495 = math.exp %494 : vector<4x16x12xf32>
    %cst_173 = arith.constant dense<0.000000e+00> : vector<4x16xf32>
    %496 = vector.multi_reduction <add>, %495, %cst_173 [2] : vector<4x16x12xf32> to vector<4x16xf32>
    %497 = vector.shape_cast %496 : vector<4x16xf32> to vector<4x16x1xf32>
    %498 = tpu.reciprocal %497 {approx = true} : vector<4x16x1xf32> -> vector<4x16x1xf32>
    %499 = vector.broadcast %498 : vector<4x16x1xf32> to vector<4x16x12xf32>
    %500 = arith.mulf %495, %499 : vector<4x16x12xf32>
    %501 = arith.truncf %500 : vector<4x16x12xf32> to vector<4x16x12xbf16>
    "tpu.trace_start"() <{level = 10 : i32, message = "hqk,hkd->hqd"}> : () -> ()
    %cst_174 = arith.constant dense<0.000000e+00> : vector<4x16x16xf32>
    %502 = tpu.matmul %501, %484, %cst_174 {dimension_numbers = #tpu.dot_dimension_numbers<[2], [1], [1], [2], [0, 0, 0, 1, 1, 2], [0], [0]>} : vector<4x16x12xbf16>, vector<4x12x16xbf16>, vector<4x16x16xf32> -> vector<4x16x16xf32>
    %cst_175 = arith.constant 0.000000e+00 : f32
    "tpu.trace_stop"() : () -> ()
    %503 = vector.broadcast %cst_175 : f32 to vector<16x64xf32>
    %504 = vector.extract_strided_slice %502 {offsets = [0, 0, 0], sizes = [1, 16, 16], strides = [1, 1, 1]} : vector<4x16x16xf32> to vector<1x16x16xf32>
    %505 = vector.shape_cast %504 : vector<1x16x16xf32> to vector<16x16xf32>
    %506 = arith.truncf %505 : vector<16x16xf32> to vector<16x16xbf16>
    %507 = vector.extract_strided_slice %454 {offsets = [0, 0], sizes = [16, 64], strides = [1, 1]} : vector<64x64xbf16> to vector<16x64xbf16>
    %cst_176 = arith.constant dense<0.000000e+00> : vector<16x64xf32>
    %508 = tpu.matmul %506, %507, %cst_176 {dimension_numbers = #tpu.dot_dimension_numbers<[1], [0], [0], [1], [0, 0, 1, 1], [], []>} : vector<16x16xbf16>, vector<16x64xbf16>, vector<16x64xf32> -> vector<16x64xf32>
    %509 = arith.addf %503, %508 : vector<16x64xf32>
    %510 = vector.extract_strided_slice %502 {offsets = [1, 0, 0], sizes = [1, 16, 16], strides = [1, 1, 1]} : vector<4x16x16xf32> to vector<1x16x16xf32>
    %511 = vector.shape_cast %510 : vector<1x16x16xf32> to vector<16x16xf32>
    %512 = arith.truncf %511 : vector<16x16xf32> to vector<16x16xbf16>
    %513 = vector.extract_strided_slice %454 {offsets = [16, 0], sizes = [16, 64], strides = [1, 1]} : vector<64x64xbf16> to vector<16x64xbf16>
    %cst_177 = arith.constant dense<0.000000e+00> : vector<16x64xf32>
    %514 = tpu.matmul %512, %513, %cst_177 {dimension_numbers = #tpu.dot_dimension_numbers<[1], [0], [0], [1], [0, 0, 1, 1], [], []>} : vector<16x16xbf16>, vector<16x64xbf16>, vector<16x64xf32> -> vector<16x64xf32>
    %515 = arith.addf %509, %514 : vector<16x64xf32>
    %516 = vector.extract_strided_slice %502 {offsets = [2, 0, 0], sizes = [1, 16, 16], strides = [1, 1, 1]} : vector<4x16x16xf32> to vector<1x16x16xf32>
    %517 = vector.shape_cast %516 : vector<1x16x16xf32> to vector<16x16xf32>
    %518 = arith.truncf %517 : vector<16x16xf32> to vector<16x16xbf16>
    %519 = vector.extract_strided_slice %454 {offsets = [32, 0], sizes = [16, 64], strides = [1, 1]} : vector<64x64xbf16> to vector<16x64xbf16>
    %cst_178 = arith.constant dense<0.000000e+00> : vector<16x64xf32>
    %520 = tpu.matmul %518, %519, %cst_178 {dimension_numbers = #tpu.dot_dimension_numbers<[1], [0], [0], [1], [0, 0, 1, 1], [], []>} : vector<16x16xbf16>, vector<16x64xbf16>, vector<16x64xf32> -> vector<16x64xf32>
    %521 = arith.addf %515, %520 : vector<16x64xf32>
    %522 = vector.extract_strided_slice %502 {offsets = [3, 0, 0], sizes = [1, 16, 16], strides = [1, 1, 1]} : vector<4x16x16xf32> to vector<1x16x16xf32>
    %523 = vector.shape_cast %522 : vector<1x16x16xf32> to vector<16x16xf32>
    %524 = arith.truncf %523 : vector<16x16xf32> to vector<16x16xbf16>
    %525 = vector.extract_strided_slice %454 {offsets = [48, 0], sizes = [16, 64], strides = [1, 1]} : vector<64x64xbf16> to vector<16x64xbf16>
    %cst_179 = arith.constant dense<0.000000e+00> : vector<16x64xf32>
    %526 = tpu.matmul %524, %525, %cst_179 {dimension_numbers = #tpu.dot_dimension_numbers<[1], [0], [0], [1], [0, 0, 1, 1], [], []>} : vector<16x16xbf16>, vector<16x64xbf16>, vector<16x64xf32> -> vector<16x64xf32>
    %527 = arith.addf %521, %526 : vector<16x64xf32>
    %528 = arith.addf %408, %527 : vector<16x64xf32>
    %c1_180 = arith.constant 1 : index
    %c0_181 = arith.constant 0 : index
    %c0_182 = arith.constant 0 : index
    %529 = vector.load %arg18[%c1_180, %c0_181, %c0_182] : memref<2x1x64xf32, #tpu.memory_space<vmem>>, vector<1x1x64xf32>
    %530 = vector.shape_cast %529 : vector<1x1x64xf32> to vector<1x64xf32>
    %531 = vector.broadcast %530 : vector<1x64xf32> to vector<16x64xf32>
    %532 = arith.addf %528, %531 : vector<16x64xf32>
    %c1_183 = arith.constant 1 : index
    %c0_184 = arith.constant 0 : index
    %c0_185 = arith.constant 0 : index
    %533 = vector.load %arg19[%c1_183, %c0_184, %c0_185] : memref<2x1x64xf32, #tpu.memory_space<vmem>>, vector<1x1x64xf32>
    %534 = vector.shape_cast %533 : vector<1x1x64xf32> to vector<1x64xf32>
    %c1_186 = arith.constant 1 : index
    %c0_187 = arith.constant 0 : index
    %c0_188 = arith.constant 0 : index
    %535 = vector.load %arg20[%c1_186, %c0_187, %c0_188] : memref<2x1x64xf32, #tpu.memory_space<vmem>>, vector<1x1x64xf32>
    %536 = vector.shape_cast %535 : vector<1x1x64xf32> to vector<1x64xf32>
    %cst_189 = arith.constant dense<0.000000e+00> : vector<16xf32>
    %537 = vector.multi_reduction <add>, %532, %cst_189 [1] : vector<16x64xf32> to vector<16xf32>
    %538 = vector.shape_cast %537 : vector<16xf32> to vector<16x1xf32>
    %cst_190 = arith.constant 6.400000e+01 : f32
    %539 = vector.broadcast %cst_190 : f32 to vector<16x1xf32>
    %540 = arith.divf %538, %539 : vector<16x1xf32>
    %541 = vector.broadcast %540 : vector<16x1xf32> to vector<16x64xf32>
    %542 = arith.subf %532, %541 : vector<16x64xf32>
    %543 = arith.mulf %542, %542 : vector<16x64xf32>
    %cst_191 = arith.constant dense<0.000000e+00> : vector<16xf32>
    %544 = vector.multi_reduction <add>, %543, %cst_191 [1] : vector<16x64xf32> to vector<16xf32>
    %545 = vector.shape_cast %544 : vector<16xf32> to vector<16x1xf32>
    %cst_192 = arith.constant 6.400000e+01 : f32
    %546 = vector.broadcast %cst_192 : f32 to vector<16x1xf32>
    %547 = arith.divf %545, %546 : vector<16x1xf32>
    %548 = vector.broadcast %540 : vector<16x1xf32> to vector<16x64xf32>
    %549 = arith.subf %532, %548 : vector<16x64xf32>
    %cst_193 = arith.constant 9.99999997E-7 : f32
    %550 = vector.broadcast %cst_193 : f32 to vector<16x1xf32>
    %551 = arith.addf %547, %550 : vector<16x1xf32>
    %552 = math.rsqrt %551 : vector<16x1xf32>
    %553 = vector.broadcast %552 : vector<16x1xf32> to vector<16x64xf32>
    %554 = arith.mulf %549, %553 : vector<16x64xf32>
    %555 = vector.broadcast %534 : vector<1x64xf32> to vector<16x64xf32>
    %556 = arith.mulf %554, %555 : vector<16x64xf32>
    %557 = vector.broadcast %536 : vector<1x64xf32> to vector<16x64xf32>
    %558 = arith.addf %556, %557 : vector<16x64xf32>
    %559 = arith.truncf %558 : vector<16x64xf32> to vector<16x64xbf16>
    %c1_194 = arith.constant 1 : index
    %c0_195 = arith.constant 0 : index
    %c0_196 = arith.constant 0 : index
    %560 = vector.load %arg21[%c1_194, %c0_195, %c0_196] : memref<2x64x64xbf16, #tpu.memory_space<vmem>>, vector<1x64x64xbf16>
    %561 = vector.shape_cast %560 : vector<1x64x64xbf16> to vector<64x64xbf16>
    %cst_197 = arith.constant dense<0.000000e+00> : vector<16x64xf32>
    %562 = tpu.matmul %559, %561, %cst_197 {dimension_numbers = #tpu.dot_dimension_numbers<[1], [0], [0], [1], [0, 0, 1, 1], [], []>} : vector<16x64xbf16>, vector<64x64xbf16>, vector<16x64xf32> -> vector<16x64xf32>
    %c1_198 = arith.constant 1 : index
    %c0_199 = arith.constant 0 : index
    %c0_200 = arith.constant 0 : index
    %563 = vector.load %arg22[%c1_198, %c0_199, %c0_200] : memref<2x1x64xf32, #tpu.memory_space<vmem>>, vector<1x1x64xf32>
    %564 = vector.shape_cast %563 : vector<1x1x64xf32> to vector<1x64xf32>
    %565 = vector.broadcast %564 : vector<1x64xf32> to vector<16x64xf32>
    %566 = arith.addf %562, %565 : vector<16x64xf32>
    %cst_201 = arith.constant 0.000000e+00 : f32
    %567 = vector.broadcast %cst_201 : f32 to vector<16x64xf32>
    %568 = arith.maximumf %566, %567 : vector<16x64xf32>
    %569 = arith.truncf %568 : vector<16x64xf32> to vector<16x64xbf16>
    %c1_202 = arith.constant 1 : index
    %c0_203 = arith.constant 0 : index
    %c0_204 = arith.constant 0 : index
    %570 = vector.load %arg23[%c1_202, %c0_203, %c0_204] : memref<2x64x64xbf16, #tpu.memory_space<vmem>>, vector<1x64x64xbf16>
    %571 = vector.shape_cast %570 : vector<1x64x64xbf16> to vector<64x64xbf16>
    %cst_205 = arith.constant dense<0.000000e+00> : vector<16x64xf32>
    %572 = tpu.matmul %569, %571, %cst_205 {dimension_numbers = #tpu.dot_dimension_numbers<[1], [0], [0], [1], [0, 0, 1, 1], [], []>} : vector<16x64xbf16>, vector<64x64xbf16>, vector<16x64xf32> -> vector<16x64xf32>
    %573 = arith.addf %532, %572 : vector<16x64xf32>
    %c1_206 = arith.constant 1 : index
    %c0_207 = arith.constant 0 : index
    %c0_208 = arith.constant 0 : index
    %574 = vector.load %arg24[%c1_206, %c0_207, %c0_208] : memref<2x1x64xf32, #tpu.memory_space<vmem>>, vector<1x1x64xf32>
    %575 = vector.shape_cast %574 : vector<1x1x64xf32> to vector<1x64xf32>
    %576 = vector.broadcast %575 : vector<1x64xf32> to vector<16x64xf32>
    %577 = arith.addf %573, %576 : vector<16x64xf32>
    %c0_209 = arith.constant 0 : index
    %c0_210 = arith.constant 0 : index
    %578 = vector.load %arg25[%c0_209, %c0_210] : memref<1x64xf32, #tpu.memory_space<vmem>>, vector<1x64xf32>
    %c0_211 = arith.constant 0 : index
    %c0_212 = arith.constant 0 : index
    %579 = vector.load %arg26[%c0_211, %c0_212] : memref<1x64xf32, #tpu.memory_space<vmem>>, vector<1x64xf32>
    %cst_213 = arith.constant dense<0.000000e+00> : vector<16xf32>
    %580 = vector.multi_reduction <add>, %577, %cst_213 [1] : vector<16x64xf32> to vector<16xf32>
    %581 = vector.shape_cast %580 : vector<16xf32> to vector<16x1xf32>
    %cst_214 = arith.constant 6.400000e+01 : f32
    %582 = vector.broadcast %cst_214 : f32 to vector<16x1xf32>
    %583 = arith.divf %581, %582 : vector<16x1xf32>
    %584 = vector.broadcast %583 : vector<16x1xf32> to vector<16x64xf32>
    %585 = arith.subf %577, %584 : vector<16x64xf32>
    %586 = arith.mulf %585, %585 : vector<16x64xf32>
    %cst_215 = arith.constant dense<0.000000e+00> : vector<16xf32>
    %587 = vector.multi_reduction <add>, %586, %cst_215 [1] : vector<16x64xf32> to vector<16xf32>
    %588 = vector.shape_cast %587 : vector<16xf32> to vector<16x1xf32>
    %cst_216 = arith.constant 6.400000e+01 : f32
    %589 = vector.broadcast %cst_216 : f32 to vector<16x1xf32>
    %590 = arith.divf %588, %589 : vector<16x1xf32>
    %591 = vector.broadcast %583 : vector<16x1xf32> to vector<16x64xf32>
    %592 = arith.subf %577, %591 : vector<16x64xf32>
    %cst_217 = arith.constant 9.99999997E-7 : f32
    %593 = vector.broadcast %cst_217 : f32 to vector<16x1xf32>
    %594 = arith.addf %590, %593 : vector<16x1xf32>
    %595 = math.rsqrt %594 : vector<16x1xf32>
    %596 = vector.broadcast %595 : vector<16x1xf32> to vector<16x64xf32>
    %597 = arith.mulf %592, %596 : vector<16x64xf32>
    %598 = vector.broadcast %578 : vector<1x64xf32> to vector<16x64xf32>
    %599 = arith.mulf %597, %598 : vector<16x64xf32>
    %600 = vector.broadcast %579 : vector<1x64xf32> to vector<16x64xf32>
    %601 = arith.addf %599, %600 : vector<16x64xf32>
    %602 = arith.truncf %601 : vector<16x64xf32> to vector<16x64xbf16>
    %c0_218 = arith.constant 0 : index
    %c0_219 = arith.constant 0 : index
    %603 = vector.load %arg27[%c0_218, %c0_219] : memref<64x128xbf16, #tpu.memory_space<vmem>>, vector<64x128xbf16>
    %cst_220 = arith.constant dense<0.000000e+00> : vector<16x128xf32>
    %604 = tpu.matmul %602, %603, %cst_220 {dimension_numbers = #tpu.dot_dimension_numbers<[1], [0], [0], [1], [0, 0, 1, 1], [], []>} : vector<16x64xbf16>, vector<64x128xbf16>, vector<16x128xf32> -> vector<16x128xf32>
    %c0_221 = arith.constant 0 : index
    %c0_222 = arith.constant 0 : index
    %605 = vector.load %arg28[%c0_221, %c0_222] : memref<1x128xf32, #tpu.memory_space<vmem>>, vector<1x128xf32>
    %606 = vector.broadcast %605 : vector<1x128xf32> to vector<16x128xf32>
    %607 = arith.addf %604, %606 : vector<16x128xf32>
    %cst_223 = arith.constant dense<0xFF800000> : vector<16xf32>
    %608 = vector.multi_reduction <maximumf>, %607, %cst_223 [1] : vector<16x128xf32> to vector<16xf32>
    %609 = vector.shape_cast %608 : vector<16xf32> to vector<16x1xf32>
    %610 = vector.broadcast %609 : vector<16x1xf32> to vector<16x128xf32>
    %611 = arith.subf %607, %610 : vector<16x128xf32>
    %612 = math.exp %611 : vector<16x128xf32>
    %cst_224 = arith.constant dense<0.000000e+00> : vector<16xf32>
    %613 = vector.multi_reduction <add>, %612, %cst_224 [1] : vector<16x128xf32> to vector<16xf32>
    %614 = vector.shape_cast %613 : vector<16xf32> to vector<16x1xf32>
    %615 = math.log %614 : vector<16x1xf32>
    %616 = vector.broadcast %615 : vector<16x1xf32> to vector<16x128xf32>
    %617 = arith.subf %611, %616 : vector<16x128xf32>
    %c0_225 = arith.constant 0 : index
    %c0_226 = arith.constant 0 : index
    %618 = vector.load %arg29[%c0_225, %c0_226] : memref<16x128xf32, #tpu.memory_space<vmem>>, vector<16x128xf32>
    tpu.vector_store %arg29[%c0_225, %c0_226], %617 {strides = array<i32>} : memref<16x128xf32, #tpu.memory_space<vmem>>, vector<16x128xf32>,
    return
  }
}

</mosaic_0001>

<llo_original>
// kernel: tile.14
$region0: #{tile.14}
  %s0 = inlined_call_operand.vmem [shape: f32[2,6,32], index: 0, kind: input, shape index: {}]
  %s1 = inlined_call_operand.vmem [shape: f32[12,32], index: 1, kind: output, shape index: {}]
  %v2 = vld [vmem:[%s0] sm:$0x3f]
  %vm3 = vcmask 261120
  %4 = vst.msk [vmem:[%s1] sm:$0x3f] %vm3, %v2
  %s5 = scalar_lea.vmem %s0, 8
  %v6 = vld [vmem:[%s5] sm:$0x3f]
  %vm7 = vcmask 261120
  %s8 = scalar_lea.vmem %s1, 6
  %9 = vst.msk [vmem:[%s8] sm:$0x3f] %vm7, %v6

// kernel: eq.24
$region0: #{eq.24}
  %s0 = inlined_call_operand.vmem [shape: s32[2,6], index: 0, kind: input, shape index: {}]
  %s1 = inlined_call_operand.vmem [shape: s32[12], index: 1, kind: output, shape index: {}]
  $region1: #{eq.24} parent=0
    #allocation0 [shape = 'u8[4096]{0}', space=vmem, size = 0x1000, scoped, tag = 'scoped mem for output reshape']
    #allocation1 [shape = 'u8[4096]{0}', space=vmem, size = 0x1000, scoped, tag = 'scoped mem for input reshape']
    %s3 = sshll.u32 1, 2
    %s4 = ssub.s32 %s3, 1
    %v5 = vld [vmem:[%s0] sm:%s4]
    %6 = vst [vmem:[#allocation1] sm:%s4] %v5
    %v7 = vld [vmem:[#allocation1] sm:$0x1]
    %vm8 = vcmask 48128
    %9 = vst.msk [vmem:[#allocation0] sm:$0x1] %vm8, %v7
    %s10 = scalar_lea.vmem [#allocation1], 1
    %v11 = vld [vmem:[%s10] sm:$0x1]
    %12 = vrot.lane.b32.xlu0 %v11, 6
    %v13 = vpop.permute.xlu0 %12
    %vm14 = vcmask 97328
    %15 = vst.msk [vmem:[#allocation0] sm:$0x1] %vm14, %v13
    %s17 = sshll.u32 1, 1
    %s18 = ssub.s32 %s17, 1
    %v20 = vld [vmem:[#allocation0] sm:%s18]
    %s21 = sshll.u32 1, 1
    %s22 = ssub.s32 %s21, 1
    %23 = vst [vmem:[%s1] sm:%s22] %v20

// kernel: recosa_forward.2
$region0: #{recosa_forward.2}
  #allocation0 [shape = 'u32[]', space=smem, size = 0x4, offset = 0x4, fixed_abs, tag = 'smem constant byte address 0x4 - core index']
  #allocation1 [shape = 'u32[144,128]{1,0:T(1,128)}', space=vmem, size = 0x12000, scoped, tag = 'internal scratch']
  %s0 = inlined_call_operand.vmem [shape: f32[128,32], index: 0, kind: input, shape index: {}]
  %s1 = inlined_call_operand.vmem [shape: f32[12,32], index: 1, kind: input, shape index: {}]
  %s2 = inlined_call_operand.vmem [shape: f32[12,12], index: 2, kind: input, shape index: {}]
  %s3 = inlined_call_operand.vmem [shape: bf16[32,96], index: 3, kind: input, shape index: {}]
  %s4 = inlined_call_operand.vmem [shape: bf16[32,96], index: 4, kind: input, shape index: {}]
  %s5 = inlined_call_operand.vmem [shape: f32[1,96], index: 5, kind: input, shape index: {}]
  %s6 = inlined_call_operand.vmem [shape: f32[1,96], index: 6, kind: input, shape index: {}]
  %s7 = inlined_call_operand.vmem [shape: f32[2,1,64], index: 7, kind: input, shape index: {}]
  %s8 = inlined_call_operand.vmem [shape: f32[2,1,64], index: 8, kind: input, shape index: {}]
  %s9 = inlined_call_operand.vmem [shape: bf16[2,64,192], index: 9, kind: input, shape index: {}]
  %s10 = inlined_call_operand.vmem [shape: f32[2,1,192], index: 10, kind: input, shape index: {}]
  %s11 = inlined_call_operand.vmem [shape: bf16[2,64,64], index: 11, kind: input, shape index: {}]
  %s12 = inlined_call_operand.vmem [shape: f32[2,1,64], index: 12, kind: input, shape index: {}]
  %s13 = inlined_call_operand.vmem [shape: f32[2,1,64], index: 13, kind: input, shape index: {}]
  %s14 = inlined_call_operand.vmem [shape: f32[2,1,64], index: 14, kind: input, shape index: {}]
  %s15 = inlined_call_operand.vmem [shape: bf16[2,64,64], index: 15, kind: input, shape index: {}]
  %s16 = inlined_call_operand.vmem [shape: f32[2,1,64], index: 16, kind: input, shape index: {}]
  %s17 = inlined_call_operand.vmem [shape: bf16[2,64,64], index: 17, kind: input, shape index: {}]
  %s18 = inlined_call_operand.vmem [shape: f32[2,1,64], index: 18, kind: input, shape index: {}]
  %s19 = inlined_call_operand.vmem [shape: f32[1,64], index: 19, kind: input, shape index: {}]
  %s20 = inlined_call_operand.vmem [shape: f32[1,64], index: 20, kind: input, shape index: {}]
  %s21 = inlined_call_operand.vmem [shape: f32[12,64], index: 21, kind: output, shape index: {}]
  %s22 = sld [smem:[#allocation0]]
  $region94: #{recosa_forward.2} parent=0
    _
  %s24 = ssub.s32 1, %s22
  %s25 = scalar_select 0, %s24, %s22
  // Predicated region
  $region2: #{recosa_forward.2} parent=0 // pred_check
    _
  $region3: #{recosa_forward.2} parent=0 // pred_check_branch
    %27 = sbr.rel (0) target = $region5
  $region4: #{recosa_forward.2} parent=0 // pred_region
    _
  $region5: #{recosa_forward.2} parent=0 // pred_fallthru
    _
  // Predicated region
  $region6: #{recosa_forward.2} parent=0 // pred_check
    _
  $region7: #{recosa_forward.2} parent=0 // pred_check_branch
    %29 = sbr.rel (0) target = $region9
  $region8: #{recosa_forward.2} parent=0 // pred_region
    _
  $region9: #{recosa_forward.2} parent=0 // pred_fallthru
    _
  // Predicated region
  $region10: #{recosa_forward.2} parent=0 // pred_check
    _
  $region11: #{recosa_forward.2} parent=0 // pred_check_branch
    %31 = sbr.rel (0) target = $region13
  $region12: #{recosa_forward.2} parent=0 // pred_region
    _
  $region13: #{recosa_forward.2} parent=0 // pred_fallthru
    _
  // Predicated region
  $region14: #{recosa_forward.2} parent=0 // pred_check
    _
  $region15: #{recosa_forward.2} parent=0 // pred_check_branch
    %33 = sbr.rel (0) target = $region17
  $region16: #{recosa_forward.2} parent=0 // pred_region
    _
  $region17: #{recosa_forward.2} parent=0 // pred_fallthru
    _
  // Predicated region
  $region18: #{recosa_forward.2} parent=0 // pred_check
    _
  $region19: #{recosa_forward.2} parent=0 // pred_check_branch
    %35 = sbr.rel (0) target = $region21
  $region20: #{recosa_forward.2} parent=0 // pred_region
    _
  $region21: #{recosa_forward.2} parent=0 // pred_fallthru
    _
  // Predicated region
  $region22: #{recosa_forward.2} parent=0 // pred_check
    _
  $region23: #{recosa_forward.2} parent=0 // pred_check_branch
    %37 = sbr.rel (0) target = $region25
  $region24: #{recosa_forward.2} parent=0 // pred_region
    _
  $region25: #{recosa_forward.2} parent=0 // pred_fallthru
    _
  // Predicated region
  $region26: #{recosa_forward.2} parent=0 // pred_check
    _
  $region27: #{recosa_forward.2} parent=0 // pred_check_branch
    %39 = sbr.rel (0) target = $region29
  $region28: #{recosa_forward.2} parent=0 // pred_region
    _
  $region29: #{recosa_forward.2} parent=0 // pred_fallthru
    _
  // Predicated region
  $region30: #{recosa_forward.2} parent=0 // pred_check
    _
  $region31: #{recosa_forward.2} parent=0 // pred_check_branch
    %41 = sbr.rel (0) target = $region33
  $region32: #{recosa_forward.2} parent=0 // pred_region
    _
  $region33: #{recosa_forward.2} parent=0 // pred_fallthru
    _
  // Predicated region
  $region34: #{recosa_forward.2} parent=0 // pred_check
    _
  $region35: #{recosa_forward.2} parent=0 // pred_check_branch
    %43 = sbr.rel (0) target = $region37
  $region36: #{recosa_forward.2} parent=0 // pred_region
    _
  $region37: #{recosa_forward.2} parent=0 // pred_fallthru
    _
  // Predicated region
  $region38: #{recosa_forward.2} parent=0 // pred_check
    _
  $region39: #{recosa_forward.2} parent=0 // pred_check_branch
    %45 = sbr.rel (0) target = $region41
  $region40: #{recosa_forward.2} parent=0 // pred_region
    _
  $region41: #{recosa_forward.2} parent=0 // pred_fallthru
    _
  // Predicated region
  $region42: #{recosa_forward.2} parent=0 // pred_check
    _
  $region43: #{recosa_forward.2} parent=0 // pred_check_branch
    %47 = sbr.rel (0) target = $region45
  $region44: #{recosa_forward.2} parent=0 // pred_region
    _
  $region45: #{recosa_forward.2} parent=0 // pred_fallthru
    _
  // Predicated region
  $region46: #{recosa_forward.2} parent=0 // pred_check
    _
  $region47: #{recosa_forward.2} parent=0 // pred_check_branch
    %49 = sbr.rel (0) target = $region49
  $region48: #{recosa_forward.2} parent=0 // pred_region
    _
  $region49: #{recosa_forward.2} parent=0 // pred_fallthru
    _
  // Predicated region
  $region50: #{recosa_forward.2} parent=0 // pred_check
    _
  $region51: #{recosa_forward.2} parent=0 // pred_check_branch
    %51 = sbr.rel (0) target = $region53
  $region52: #{recosa_forward.2} parent=0 // pred_region
    _
  $region53: #{recosa_forward.2} parent=0 // pred_fallthru
    _
  // Predicated region
  $region54: #{recosa_forward.2} parent=0 // pred_check
    _
  $region55: #{recosa_forward.2} parent=0 // pred_check_branch
    %53 = sbr.rel (0) target = $region57
  $region56: #{recosa_forward.2} parent=0 // pred_region
    _
  $region57: #{recosa_forward.2} parent=0 // pred_fallthru
    _
  // Predicated region
  $region58: #{recosa_forward.2} parent=0 // pred_check
    _
  $region59: #{recosa_forward.2} parent=0 // pred_check_branch
    %55 = sbr.rel (0) target = $region61
  $region60: #{recosa_forward.2} parent=0 // pred_region
    _
  $region61: #{recosa_forward.2} parent=0 // pred_fallthru
    _
  // Predicated region
  $region62: #{recosa_forward.2} parent=0 // pred_check
    _
  $region63: #{recosa_forward.2} parent=0 // pred_check_branch
    %57 = sbr.rel (0) target = $region65
  $region64: #{recosa_forward.2} parent=0 // pred_region
    _
  $region65: #{recosa_forward.2} parent=0 // pred_fallthru
    _
  // Predicated region
  $region66: #{recosa_forward.2} parent=0 // pred_check
    _
  $region67: #{recosa_forward.2} parent=0 // pred_check_branch
    %59 = sbr.rel (0) target = $region69
  $region68: #{recosa_forward.2} parent=0 // pred_region
    _
  $region69: #{recosa_forward.2} parent=0 // pred_fallthru
    _
  // Predicated region
  $region70: #{recosa_forward.2} parent=0 // pred_check
    _
  $region71: #{recosa_forward.2} parent=0 // pred_check_branch
    %61 = sbr.rel (0) target = $region73
  $region72: #{recosa_forward.2} parent=0 // pred_region
    _
  $region73: #{recosa_forward.2} parent=0 // pred_fallthru
    _
  // Predicated region
  $region74: #{recosa_forward.2} parent=0 // pred_check
    _
  $region75: #{recosa_forward.2} parent=0 // pred_check_branch
    %63 = sbr.rel (0) target = $region77
  $region76: #{recosa_forward.2} parent=0 // pred_region
    _
  $region77: #{recosa_forward.2} parent=0 // pred_fallthru
    _
  // Predicated region
  $region78: #{recosa_forward.2} parent=0 // pred_check
    _
  $region79: #{recosa_forward.2} parent=0 // pred_check_branch
    %65 = sbr.rel (0) target = $region81
  $region80: #{recosa_forward.2} parent=0 // pred_region
    _
  $region81: #{recosa_forward.2} parent=0 // pred_fallthru
    _
  // Predicated region
  $region82: #{recosa_forward.2} parent=0 // pred_check
    _
  $region83: #{recosa_forward.2} parent=0 // pred_check_branch
    %67 = sbr.rel (0) target = $region85
  $region84: #{recosa_forward.2} parent=0 // pred_region
    _
  $region85: #{recosa_forward.2} parent=0 // pred_fallthru
    _
  %v69 = vld [vmem:[%s0] sm:$0xff]
  %v70 = vld [vmem:[%s0 + $0x8] sm:$0xff]
  %v71 = vld [vmem:[%s0 + $0x10] sm:$0xff]
  %v72 = vld [vmem:[%s0 + $0x18] sm:$0xff]
  %v73 = vld [vmem:[%s0 + $0x20] sm:$0xff]
  %v74 = vld [vmem:[%s0 + $0x28] sm:$0xff]
  %v75 = vld [vmem:[%s0 + $0x30] sm:$0xff]
  %v76 = vld [vmem:[%s0 + $0x38] sm:$0xff]
  %v77 = vld [vmem:[%s0 + $0x40] sm:$0xff]
  %v78 = vld [vmem:[%s0 + $0x48] sm:$0xff]
  %v79 = vld [vmem:[%s0 + $0x50] sm:$0xff]
  %v80 = vld [vmem:[%s0 + $0x58] sm:$0xff]
  %v81 = vld [vmem:[%s0 + $0x60] sm:$0xff]
  %v82 = vld [vmem:[%s0 + $0x68] sm:$0xff]
  %v83 = vld [vmem:[%s0 + $0x70] sm:$0xff]
  %v84 = vld [vmem:[%s0 + $0x78] sm:$0xff]
  %v85 = vpack.c.bf16 %v70, %v69
  %v86 = vpack.c.bf16 %v72, %v71
  %v87 = vpack.c.bf16 %v74, %v73
  %v88 = vpack.c.bf16 %v76, %v75
  %v89 = vpack.c.bf16 %v78, %v77
  %v90 = vpack.c.bf16 %v80, %v79
  %v91 = vpack.c.bf16 %v82, %v81
  %v92 = vpack.c.bf16 %v84, %v83
  %v93 = vld [vmem:[%s3] sm:$0xf]
  %v94 = vld [vmem:[%s3 + $0x4] sm:$0xf]
  %v95 = vld [vmem:[%s3 + $0x8] sm:$0xf]
  %v96 = vld [vmem:[%s3 + $0xc] sm:$0xf]
  %v97 = vld [vmem:[%s5] sm:$0x1]
  %v99 = vlaneseq
  %v100 = vshrl.u32 %v99, 7
  %v101 = vsub.s32 0, %v100
  %v102 = vrot.slane %v97, %v101
  %v108 = vunpack.c.l.b16 %v93
  %v109 = vunpack.c.l.b16 %v94
  %v110 = vunpack.c.l.b16 %v95
  %v111 = vunpack.c.l.b16 %v96
  %v112 = vpack.c.b16 %v109, %v108
  %v113 = vpack.c.b16 %v111, %v110
  %vm116 = vcmask 261120
  %v118 = vsel %vm116, %v85, 0
  %v121 = vsel %vm116, %v86, 0
  %v124 = vsel %vm116, %v87, 0
  %v127 = vsel %vm116, %v88, 0
  %v130 = vsel %vm116, %v89, 0
  %v133 = vsel %vm116, %v90, 0
  %v136 = vsel %vm116, %v91, 0
  %v139 = vsel %vm116, %v92, 0
  %141 = vmatprep.subr.bf16.mxu0 0
  %142 = vmatpush1.bf16.msra.mxu0 0
  %143 = vmatprep.subr.bf16.mxu0 0
  %144 = vmatpush1.bf16.msra.mxu0 0
  %145 = vmatprep.subr.bf16.mxu0 0
  %146 = vmatpush1.bf16.msra.mxu0 0
  %147 = vmatprep.subr.bf16.mxu0 0
  %148 = vmatpush1.bf16.msra.mxu0 0
  %149 = vmatprep.subr.bf16.mxu0 0
  %150 = vmatpush1.bf16.msra.mxu0 0
  %151 = vmatprep.subr.bf16.mxu0 0
  %152 = vmatpush1.bf16.msra.mxu0 0
  %153 = vmatprep.subr.bf16.mxu0 0
  %154 = vmatpush1.bf16.msra.mxu0 %v113
  %155 = vmatprep.subr.bf16.mxu0 0
  %156 = vmatpush1.bf16.msra.mxu0 %v112
  %157 = vmatprep.subr.bf16.mxu0 0
  %158 = vmatpush2.bf16.msra.mxu0 0
  %159 = vmatprep.subr.bf16.mxu0 0
  %160 = vmatpush2.bf16.msra.mxu0 0
  %161 = vmatprep.subr.bf16.mxu0 0
  %162 = vmatpush2.bf16.msra.mxu0 0
  %163 = vmatprep.subr.bf16.mxu0 0
  %164 = vmatpush2.bf16.msra.mxu0 0
  %165 = vmatprep.subr.bf16.mxu0 0
  %166 = vmatpush2.bf16.msra.mxu0 0
  %167 = vmatprep.subr.bf16.mxu0 0
  %168 = vmatpush2.bf16.msra.mxu0 0
  %169 = vmatprep.subr.bf16.mxu0 0
  %170 = vmatpush2.bf16.msra.mxu0 0
  %171 = vmatprep.subr.bf16.mxu0 0
  %172 = vmatpush2.bf16.msra.mxu0 0
  %173 = vmatprep.mubr.bf16.mxu0 0
  %174 = vmatmul.mubr.bf16.gmra.mxu0 %v118
  %v175 = vpop.f32.mrf.mxu0
  %v176 = vadd.f32 %v102, %v175
  %v177 = vpop.f32.mrf.mxu0
  %v178 = vpop.f32.mrf.mxu0
  %v179 = vadd.f32 %v102, %v178
  %v180 = vpop.f32.mrf.mxu0
  %181 = vmatprep.mubr.bf16.mxu0 0
  %182 = vmatmul.mubr.bf16.gmra.mxu0 %v121
  %v183 = vpop.f32.mrf.mxu0
  %v184 = vadd.f32 %v102, %v183
  %v185 = vpop.f32.mrf.mxu0
  %v186 = vpop.f32.mrf.mxu0
  %v187 = vadd.f32 %v102, %v186
  %v188 = vpop.f32.mrf.mxu0
  %189 = vmatprep.mubr.bf16.mxu0 0
  %190 = vmatmul.mubr.bf16.gmra.mxu0 %v124
  %v191 = vpop.f32.mrf.mxu0
  %v192 = vadd.f32 %v102, %v191
  %v193 = vpop.f32.mrf.mxu0
  %v194 = vpop.f32.mrf.mxu0
  %v195 = vadd.f32 %v102, %v194
  %v196 = vpop.f32.mrf.mxu0
  %197 = vmatprep.mubr.bf16.mxu0 0
  %198 = vmatmul.mubr.bf16.gmra.mxu0 %v127
  %v199 = vpop.f32.mrf.mxu0
  %v200 = vadd.f32 %v102, %v199
  %v201 = vpop.f32.mrf.mxu0
  %v202 = vpop.f32.mrf.mxu0
  %v203 = vadd.f32 %v102, %v202
  %v204 = vpop.f32.mrf.mxu0
  %205 = vmatprep.mubr.bf16.mxu0 0
  %206 = vmatmul.mubr.bf16.gmra.mxu0 %v130
  %v207 = vpop.f32.mrf.mxu0
  %v208 = vadd.f32 %v102, %v207
  %v209 = vpop.f32.mrf.mxu0
  %v210 = vpop.f32.mrf.mxu0
  %v211 = vadd.f32 %v102, %v210
  %v212 = vpop.f32.mrf.mxu0
  %213 = vmatprep.mubr.bf16.mxu0 0
  %214 = vmatmul.mubr.bf16.gmra.mxu0 %v133
  %v215 = vpop.f32.mrf.mxu0
  %v216 = vadd.f32 %v102, %v215
  %v217 = vpop.f32.mrf.mxu0
  %v218 = vpop.f32.mrf.mxu0
  %v219 = vadd.f32 %v102, %v218
  %v220 = vpop.f32.mrf.mxu0
  %221 = vmatprep.mubr.bf16.mxu0 0
  %222 = vmatmul.mubr.bf16.gmra.mxu0 %v136
  %v223 = vpop.f32.mrf.mxu0
  %v224 = vadd.f32 %v102, %v223
  %v225 = vpop.f32.mrf.mxu0
  %v226 = vpop.f32.mrf.mxu0
  %v227 = vadd.f32 %v102, %v226
  %v228 = vpop.f32.mrf.mxu0
  %229 = vmatprep.mubr.bf16.mxu0 0
  %230 = vmatmul.mubr.bf16.gmra.mxu0 %v139
  %v231 = vpop.f32.mrf.mxu0
  %v232 = vadd.f32 %v102, %v231
  %v233 = vpop.f32.mrf.mxu0
  %v234 = vpop.f32.mrf.mxu0
  %v235 = vadd.f32 %v102, %v234
  %v236 = vpop.f32.mrf.mxu0
  %237 = vdwg.mxu0
  %v238 = vld [vmem:[%s4] sm:$0xf]
  %v239 = vld [vmem:[%s4 + $0x4] sm:$0xf]
  %v240 = vld [vmem:[%s4 + $0x8] sm:$0xf]
  %v241 = vld [vmem:[%s4 + $0xc] sm:$0xf]
  %v242 = vld [vmem:[%s6] sm:$0x1]
  %v244 = vlaneseq
  %v245 = vshrl.u32 %v244, 7
  %v246 = vsub.s32 0, %v245
  %v247 = vrot.slane %v242, %v246
  %v253 = vunpack.c.l.b16 %v238
  %v254 = vunpack.c.l.b16 %v239
  %v255 = vunpack.c.l.b16 %v240
  %v256 = vunpack.c.l.b16 %v241
  %v257 = vpack.c.b16 %v254, %v253
  %v258 = vpack.c.b16 %v256, %v255
  %v262 = vsel %vm116, 0, 0
  %264 = vmatprep.subr.bf16.mxu0 0
  %265 = vmatpush1.bf16.msra.mxu0 0
  %266 = vmatprep.subr.bf16.mxu0 0
  %267 = vmatpush1.bf16.msra.mxu0 0
  %268 = vmatprep.subr.bf16.mxu0 0
  %269 = vmatpush1.bf16.msra.mxu0 0
  %270 = vmatprep.subr.bf16.mxu0 0
  %271 = vmatpush1.bf16.msra.mxu0 0
  %272 = vmatprep.subr.bf16.mxu0 0
  %273 = vmatpush1.bf16.msra.mxu0 0
  %274 = vmatprep.subr.bf16.mxu0 0
  %275 = vmatpush1.bf16.msra.mxu0 0
  %276 = vmatprep.subr.bf16.mxu0 0
  %277 = vmatpush1.bf16.msra.mxu0 %v258
  %278 = vmatprep.subr.bf16.mxu0 0
  %279 = vmatpush1.bf16.msra.mxu0 %v257
  %280 = vmatprep.subr.bf16.mxu0 0
  %281 = vmatpush2.bf16.msra.mxu0 0
  %282 = vmatprep.subr.bf16.mxu0 0
  %283 = vmatpush2.bf16.msra.mxu0 0
  %284 = vmatprep.subr.bf16.mxu0 0
  %285 = vmatpush2.bf16.msra.mxu0 0
  %286 = vmatprep.subr.bf16.mxu0 0
  %287 = vmatpush2.bf16.msra.mxu0 0
  %288 = vmatprep.subr.bf16.mxu0 0
  %289 = vmatpush2.bf16.msra.mxu0 0
  %290 = vmatprep.subr.bf16.mxu0 0
  %291 = vmatpush2.bf16.msra.mxu0 0
  %292 = vmatprep.subr.bf16.mxu0 0
  %293 = vmatpush2.bf16.msra.mxu0 0
  %294 = vmatprep.subr.bf16.mxu0 0
  %295 = vmatpush2.bf16.msra.mxu0 0
  %296 = vmatprep.mubr.bf16.mxu0 0
  %297 = vmatmul.mubr.bf16.gmra.mxu0 %v262
  %v298 = vpop.f32.mrf.mxu0
  %v299 = vadd.f32 %v247, %v298
  %v300 = vpop.f32.mrf.mxu0
  %v301 = vpop.f32.mrf.mxu0
  %v302 = vadd.f32 %v247, %v301
  %v303 = vpop.f32.mrf.mxu0
  %304 = vdwg.mxu0
  %v305 = vadd.f32 %v176, %v299
  %v306 = vadd.f32 %v179, %v302
  %v307 = vxor.u32 %v305, 2147483648
  %v308 = vxor.u32 %v306, 2147483648
  %v309 = vmul.f32 %v307, 1.442695
  %v310 = vpow.pop %v309
  %v311 = vmul.f32 %v308, 1.442695
  %v312 = vpow.pop %v311
  %v313 = vadd.f32 %v310, 1.0
  %v314 = vadd.f32 %v312, 1.0
  %v315 = vrcp.pop %v313
  %v316 = vmul.f32 1.0, %v315
  %v317 = vrcp.pop %v314
  %v318 = vmul.f32 1.0, %v317
  %321 = vrot.lane.b32.xlu0 %v299, 64
  %v322 = vpop.permute.xlu0 %321
  %323 = vrot.lane.b32.xlu0 %v302, 64
  %v324 = vpop.permute.xlu0 %323
  %v327 = vmul.f32 %v316, %v322
  %v328 = vmul.f32 %v318, %v324
  %331 = vrot.lane.b32.xlu0 %v327, 64
  %v332 = vpop.permute.xlu0 %331
  %333 = vrot.lane.b32.xlu0 %v328, 64
  %v334 = vpop.permute.xlu0 %333
  %v337 = vadd.f32 %v176, %v332
  %v338 = vadd.f32 %v179, %v334
  %v339 = vtanh.pop %v337
  %v340 = vtanh.pop %v338
  %v341 = vsub.f32 1.0, %v316
  %v342 = vsub.f32 1.0, %v318
  %345 = vrot.lane.b32.xlu0 %v339, 96
  %v346 = vpop.permute.xlu0 %345
  %347 = vrot.lane.b32.xlu0 %v340, 96
  %v348 = vpop.permute.xlu0 %347
  %v351 = vmul.f32 %v341, %v346
  %v352 = vmul.f32 %v342, %v348
  %v353 = vmul.f32 %v316, 0.0
  %v354 = vmul.f32 %v318, 0.0
  %v355 = vadd.f32 %v351, %v353
  %v356 = vadd.f32 %v352, %v354
  %v357 = vpack.c.bf16 %v356, %v355
  %359 = vrot.lane.b32.xlu0 %v357, 96
  %v360 = vpop.permute.xlu0 %359
  %v362 = vsel %vm116, %v360, 0
  %364 = vmatprep.subr.bf16.mxu0 0
  %365 = vmatpush1.bf16.msra.mxu0 0
  %366 = vmatprep.subr.bf16.mxu0 0
  %367 = vmatpush1.bf16.msra.mxu0 0
  %368 = vmatprep.subr.bf16.mxu0 0
  %369 = vmatpush1.bf16.msra.mxu0 0
  %370 = vmatprep.subr.bf16.mxu0 0
  %371 = vmatpush1.bf16.msra.mxu0 0
  %372 = vmatprep.subr.bf16.mxu0 0
  %373 = vmatpush1.bf16.msra.mxu0 0
  %374 = vmatprep.subr.bf16.mxu0 0
  %375 = vmatpush1.bf16.msra.mxu0 0
  %376 = vmatprep.subr.bf16.mxu0 0
  %377 = vmatpush1.bf16.msra.mxu0 %v258
  %378 = vmatprep.subr.bf16.mxu0 0
  %379 = vmatpush1.bf16.msra.mxu0 %v257
  %380 = vmatprep.subr.bf16.mxu0 0
  %381 = vmatpush2.bf16.msra.mxu0 0
  %382 = vmatprep.subr.bf16.mxu0 0
  %383 = vmatpush2.bf16.msra.mxu0 0
  %384 = vmatprep.subr.bf16.mxu0 0
  %385 = vmatpush2.bf16.msra.mxu0 0
  %386 = vmatprep.subr.bf16.mxu0 0
  %387 = vmatpush2.bf16.msra.mxu0 0
  %388 = vmatprep.subr.bf16.mxu0 0
  %389 = vmatpush2.bf16.msra.mxu0 0
  %390 = vmatprep.subr.bf16.mxu0 0
  %391 = vmatpush2.bf16.msra.mxu0 0
  %392 = vmatprep.subr.bf16.mxu0 0
  %393 = vmatpush2.bf16.msra.mxu0 0
  %394 = vmatprep.subr.bf16.mxu0 0
  %395 = vmatpush2.bf16.msra.mxu0 0
  %396 = vmatprep.mubr.bf16.mxu0 0
  %397 = vmatmul.mubr.bf16.gmra.mxu0 %v362
  %v398 = vpop.f32.mrf.mxu0
  %v399 = vadd.f32 %v247, %v398
  %v400 = vpop.f32.mrf.mxu0
  %v401 = vpop.f32.mrf.mxu0
  %v402 = vadd.f32 %v247, %v401
  %v403 = vpop.f32.mrf.mxu0
  %404 = vdwg.mxu0
  %v405 = vadd.f32 %v184, %v399
  %v406 = vadd.f32 %v187, %v402
  %v407 = vxor.u32 %v405, 2147483648
  %v408 = vxor.u32 %v406, 2147483648
  %v409 = vmul.f32 %v407, 1.442695
  %v410 = vpow.pop %v409
  %v411 = vmul.f32 %v408, 1.442695
  %v412 = vpow.pop %v411
  %v413 = vadd.f32 %v410, 1.0
  %v414 = vadd.f32 %v412, 1.0
  %v415 = vrcp.pop %v413
  %v416 = vmul.f32 1.0, %v415
  %v417 = vrcp.pop %v414
  %v418 = vmul.f32 1.0, %v417
  %421 = vrot.lane.b32.xlu0 %v399, 64
  %v422 = vpop.permute.xlu0 %421
  %423 = vrot.lane.b32.xlu0 %v402, 64
  %v424 = vpop.permute.xlu0 %423
  %v427 = vmul.f32 %v416, %v422
  %v428 = vmul.f32 %v418, %v424
  %431 = vrot.lane.b32.xlu0 %v427, 64
  %v432 = vpop.permute.xlu0 %431
  %433 = vrot.lane.b32.xlu0 %v428, 64
  %v434 = vpop.permute.xlu0 %433
  %v437 = vadd.f32 %v184, %v432
  %v438 = vadd.f32 %v187, %v434
  %v439 = vtanh.pop %v437
  %v440 = vtanh.pop %v438
  %v441 = vsub.f32 1.0, %v416
  %v442 = vsub.f32 1.0, %v418
  %445 = vrot.lane.b32.xlu0 %v439, 96
  %v446 = vpop.permute.xlu0 %445
  %447 = vrot.lane.b32.xlu0 %v440, 96
  %v448 = vpop.permute.xlu0 %447
  %v451 = vmul.f32 %v441, %v446
  %v452 = vmul.f32 %v442, %v448
  %v453 = vmul.f32 %v416, %v355
  %v454 = vmul.f32 %v418, %v356
  %v455 = vadd.f32 %v451, %v453
  %v456 = vadd.f32 %v452, %v454
  %v457 = vpack.c.bf16 %v456, %v455
  %459 = vrot.lane.b32.xlu0 %v457, 96
  %v460 = vpop.permute.xlu0 %459
  %v462 = vsel %vm116, %v460, 0
  %464 = vmatprep.subr.bf16.mxu0 0
  %465 = vmatpush1.bf16.msra.mxu0 0
  %466 = vmatprep.subr.bf16.mxu0 0
  %467 = vmatpush1.bf16.msra.mxu0 0
  %468 = vmatprep.subr.bf16.mxu0 0
  %469 = vmatpush1.bf16.msra.mxu0 0
  %470 = vmatprep.subr.bf16.mxu0 0
  %471 = vmatpush1.bf16.msra.mxu0 0
  %472 = vmatprep.subr.bf16.mxu0 0
  %473 = vmatpush1.bf16.msra.mxu0 0
  %474 = vmatprep.subr.bf16.mxu0 0
  %475 = vmatpush1.bf16.msra.mxu0 0
  %476 = vmatprep.subr.bf16.mxu0 0
  %477 = vmatpush1.bf16.msra.mxu0 %v258
  %478 = vmatprep.subr.bf16.mxu0 0
  %479 = vmatpush1.bf16.msra.mxu0 %v257
  %480 = vmatprep.subr.bf16.mxu0 0
  %481 = vmatpush2.bf16.msra.mxu0 0
  %482 = vmatprep.subr.bf16.mxu0 0
  %483 = vmatpush2.bf16.msra.mxu0 0
  %484 = vmatprep.subr.bf16.mxu0 0
  %485 = vmatpush2.bf16.msra.mxu0 0
  %486 = vmatprep.subr.bf16.mxu0 0
  %487 = vmatpush2.bf16.msra.mxu0 0
  %488 = vmatprep.subr.bf16.mxu0 0
  %489 = vmatpush2.bf16.msra.mxu0 0
  %490 = vmatprep.subr.bf16.mxu0 0
  %491 = vmatpush2.bf16.msra.mxu0 0
  %492 = vmatprep.subr.bf16.mxu0 0
  %493 = vmatpush2.bf16.msra.mxu0 0
  %494 = vmatprep.subr.bf16.mxu0 0
  %495 = vmatpush2.bf16.msra.mxu0 0
  %496 = vmatprep.mubr.bf16.mxu0 0
  %497 = vmatmul.mubr.bf16.gmra.mxu0 %v462
  %v498 = vpop.f32.mrf.mxu0
  %v499 = vadd.f32 %v247, %v498
  %v500 = vpop.f32.mrf.mxu0
  %v501 = vpop.f32.mrf.mxu0
  %v502 = vadd.f32 %v247, %v501
  %v503 = vpop.f32.mrf.mxu0
  %504 = vdwg.mxu0
  %v505 = vadd.f32 %v192, %v499
  %v506 = vadd.f32 %v195, %v502
  %v507 = vxor.u32 %v505, 2147483648
  %v508 = vxor.u32 %v506, 2147483648
  %v509 = vmul.f32 %v507, 1.442695
  %v510 = vpow.pop %v509
  %v511 = vmul.f32 %v508, 1.442695
  %v512 = vpow.pop %v511
  %v513 = vadd.f32 %v510, 1.0
  %v514 = vadd.f32 %v512, 1.0
  %v515 = vrcp.pop %v513
  %v516 = vmul.f32 1.0, %v515
  %v517 = vrcp.pop %v514
  %v518 = vmul.f32 1.0, %v517
  %521 = vrot.lane.b32.xlu0 %v499, 64
  %v522 = vpop.permute.xlu0 %521
  %523 = vrot.lane.b32.xlu0 %v502, 64
  %v524 = vpop.permute.xlu0 %523
  %v527 = vmul.f32 %v516, %v522
  %v528 = vmul.f32 %v518, %v524
  %531 = vrot.lane.b32.xlu0 %v527, 64
  %v532 = vpop.permute.xlu0 %531
  %533 = vrot.lane.b32.xlu0 %v528, 64
  %v534 = vpop.permute.xlu0 %533
  %v537 = vadd.f32 %v192, %v532
  %v538 = vadd.f32 %v195, %v534
  %v539 = vtanh.pop %v537
  %v540 = vtanh.pop %v538
  %v541 = vsub.f32 1.0, %v516
  %v542 = vsub.f32 1.0, %v518
  %545 = vrot.lane.b32.xlu0 %v539, 96
  %v546 = vpop.permute.xlu0 %545
  %547 = vrot.lane.b32.xlu0 %v540, 96
  %v548 = vpop.permute.xlu0 %547
  %v551 = vmul.f32 %v541, %v546
  %v552 = vmul.f32 %v542, %v548
  %v553 = vmul.f32 %v516, %v455
  %v554 = vmul.f32 %v518, %v456
  %v555 = vadd.f32 %v551, %v553
  %v556 = vadd.f32 %v552, %v554
  %v557 = vpack.c.bf16 %v556, %v555
  %559 = vrot.lane.b32.xlu0 %v557, 96
  %v560 = vpop.permute.xlu0 %559
  %v562 = vsel %vm116, %v560, 0
  %564 = vmatprep.subr.bf16.mxu0 0
  %565 = vmatpush1.bf16.msra.mxu0 0
  %566 = vmatprep.subr.bf16.mxu0 0
  %567 = vmatpush1.bf16.msra.mxu0 0
  %568 = vmatprep.subr.bf16.mxu0 0
  %569 = vmatpush1.bf16.msra.mxu0 0
  %570 = vmatprep.subr.bf16.mxu0 0
  %571 = vmatpush1.bf16.msra.mxu0 0
  %572 = vmatprep.subr.bf16.mxu0 0
  %573 = vmatpush1.bf16.msra.mxu0 0
  %574 = vmatprep.subr.bf16.mxu0 0
  %575 = vmatpush1.bf16.msra.mxu0 0
  %576 = vmatprep.subr.bf16.mxu0 0
  %577 = vmatpush1.bf16.msra.mxu0 %v258
  %578 = vmatprep.subr.bf16.mxu0 0
  %579 = vmatpush1.bf16.msra.mxu0 %v257
  %580 = vmatprep.subr.bf16.mxu0 0
  %581 = vmatpush2.bf16.msra.mxu0 0
  %582 = vmatprep.subr.bf16.mxu0 0
  %583 = vmatpush2.bf16.msra.mxu0 0
  %584 = vmatprep.subr.bf16.mxu0 0
  %585 = vmatpush2.bf16.msra.mxu0 0
  %586 = vmatprep.subr.bf16.mxu0 0
  %587 = vmatpush2.bf16.msra.mxu0 0
  %588 = vmatprep.subr.bf16.mxu0 0
  %589 = vmatpush2.bf16.msra.mxu0 0
  %590 = vmatprep.subr.bf16.mxu0 0
  %591 = vmatpush2.bf16.msra.mxu0 0
  %592 = vmatprep.subr.bf16.mxu0 0
  %593 = vmatpush2.bf16.msra.mxu0 0
  %594 = vmatprep.subr.bf16.mxu0 0
  %595 = vmatpush2.bf16.msra.mxu0 0
  %596 = vmatprep.mubr.bf16.mxu0 0
  %597 = vmatmul.mubr.bf16.gmra.mxu0 %v562
  %v598 = vpop.f32.mrf.mxu0
  %v599 = vadd.f32 %v247, %v598
  %v600 = vpop.f32.mrf.mxu0
  %v601 = vpop.f32.mrf.mxu0
  %v602 = vadd.f32 %v247, %v601
  %v603 = vpop.f32.mrf.mxu0
  %604 = vdwg.mxu0
  %v605 = vadd.f32 %v200, %v599
  %v606 = vadd.f32 %v203, %v602
  %v607 = vxor.u32 %v605, 2147483648
  %v608 = vxor.u32 %v606, 2147483648
  %v609 = vmul.f32 %v607, 1.442695
  %v610 = vpow.pop %v609
  %v611 = vmul.f32 %v608, 1.442695
  %v612 = vpow.pop %v611
  %v613 = vadd.f32 %v610, 1.0
  %v614 = vadd.f32 %v612, 1.0
  %v615 = vrcp.pop %v613
  %v616 = vmul.f32 1.0, %v615
  %v617 = vrcp.pop %v614
  %v618 = vmul.f32 1.0, %v617
  %621 = vrot.lane.b32.xlu0 %v599, 64
  %v622 = vpop.permute.xlu0 %621
  %623 = vrot.lane.b32.xlu0 %v602, 64
  %v624 = vpop.permute.xlu0 %623
  %v627 = vmul.f32 %v616, %v622
  %v628 = vmul.f32 %v618, %v624
  %631 = vrot.lane.b32.xlu0 %v627, 64
  %v632 = vpop.permute.xlu0 %631
  %633 = vrot.lane.b32.xlu0 %v628, 64
  %v634 = vpop.permute.xlu0 %633
  %v637 = vadd.f32 %v200, %v632
  %v638 = vadd.f32 %v203, %v634
  %v639 = vtanh.pop %v637
  %v640 = vtanh.pop %v638
  %v641 = vsub.f32 1.0, %v616
  %v642 = vsub.f32 1.0, %v618
  %645 = vrot.lane.b32.xlu0 %v639, 96
  %v646 = vpop.permute.xlu0 %645
  %647 = vrot.lane.b32.xlu0 %v640, 96
  %v648 = vpop.permute.xlu0 %647
  %v651 = vmul.f32 %v641, %v646
  %v652 = vmul.f32 %v642, %v648
  %v653 = vmul.f32 %v616, %v555
  %v654 = vmul.f32 %v618, %v556
  %v655 = vadd.f32 %v651, %v653
  %v656 = vadd.f32 %v652, %v654
  %v657 = vpack.c.bf16 %v656, %v655
  %659 = vrot.lane.b32.xlu0 %v657, 96
  %v660 = vpop.permute.xlu0 %659
  %v662 = vsel %vm116, %v660, 0
  %664 = vmatprep.subr.bf16.mxu0 0
  %665 = vmatpush1.bf16.msra.mxu0 0
  %666 = vmatprep.subr.bf16.mxu0 0
  %667 = vmatpush1.bf16.msra.mxu0 0
  %668 = vmatprep.subr.bf16.mxu0 0
  %669 = vmatpush1.bf16.msra.mxu0 0
  %670 = vmatprep.subr.bf16.mxu0 0
  %671 = vmatpush1.bf16.msra.mxu0 0
  %672 = vmatprep.subr.bf16.mxu0 0
  %673 = vmatpush1.bf16.msra.mxu0 0
  %674 = vmatprep.subr.bf16.mxu0 0
  %675 = vmatpush1.bf16.msra.mxu0 0
  %676 = vmatprep.subr.bf16.mxu0 0
  %677 = vmatpush1.bf16.msra.mxu0 %v258
  %678 = vmatprep.subr.bf16.mxu0 0
  %679 = vmatpush1.bf16.msra.mxu0 %v257
  %680 = vmatprep.subr.bf16.mxu0 0
  %681 = vmatpush2.bf16.msra.mxu0 0
  %682 = vmatprep.subr.bf16.mxu0 0
  %683 = vmatpush2.bf16.msra.mxu0 0
  %684 = vmatprep.subr.bf16.mxu0 0
  %685 = vmatpush2.bf16.msra.mxu0 0
  %686 = vmatprep.subr.bf16.mxu0 0
  %687 = vmatpush2.bf16.msra.mxu0 0
  %688 = vmatprep.subr.bf16.mxu0 0
  %689 = vmatpush2.bf16.msra.mxu0 0
  %690 = vmatprep.subr.bf16.mxu0 0
  %691 = vmatpush2.bf16.msra.mxu0 0
  %692 = vmatprep.subr.bf16.mxu0 0
  %693 = vmatpush2.bf16.msra.mxu0 0
  %694 = vmatprep.subr.bf16.mxu0 0
  %695 = vmatpush2.bf16.msra.mxu0 0
  %696 = vmatprep.mubr.bf16.mxu0 0
  %697 = vmatmul.mubr.bf16.gmra.mxu0 %v662
  %v698 = vpop.f32.mrf.mxu0
  %v699 = vadd.f32 %v247, %v698
  %v700 = vpop.f32.mrf.mxu0
  %v701 = vpop.f32.mrf.mxu0
  %v702 = vadd.f32 %v247, %v701
  %v703 = vpop.f32.mrf.mxu0
  %704 = vdwg.mxu0
  %v705 = vadd.f32 %v208, %v699
  %v706 = vadd.f32 %v211, %v702
  %v707 = vxor.u32 %v705, 2147483648
  %v708 = vxor.u32 %v706, 2147483648
  %v709 = vmul.f32 %v707, 1.442695
  %v710 = vpow.pop %v709
  %v711 = vmul.f32 %v708, 1.442695
  %v712 = vpow.pop %v711
  %v713 = vadd.f32 %v710, 1.0
  %v714 = vadd.f32 %v712, 1.0
  %v715 = vrcp.pop %v713
  %v716 = vmul.f32 1.0, %v715
  %v717 = vrcp.pop %v714
  %v718 = vmul.f32 1.0, %v717
  %721 = vrot.lane.b32.xlu0 %v699, 64
  %v722 = vpop.permute.xlu0 %721
  %723 = vrot.lane.b32.xlu0 %v702, 64
  %v724 = vpop.permute.xlu0 %723
  %v727 = vmul.f32 %v716, %v722
  %v728 = vmul.f32 %v718, %v724
  %731 = vrot.lane.b32.xlu0 %v727, 64
  %v732 = vpop.permute.xlu0 %731
  %733 = vrot.lane.b32.xlu0 %v728, 64
  %v734 = vpop.permute.xlu0 %733
  %v737 = vadd.f32 %v208, %v732
  %v738 = vadd.f32 %v211, %v734
  %v739 = vtanh.pop %v737
  %v740 = vtanh.pop %v738
  %v741 = vsub.f32 1.0, %v716
  %v742 = vsub.f32 1.0, %v718
  %745 = vrot.lane.b32.xlu0 %v739, 96
  %v746 = vpop.permute.xlu0 %745
  %747 = vrot.lane.b32.xlu0 %v740, 96
  %v748 = vpop.permute.xlu0 %747
  %v751 = vmul.f32 %v741, %v746
  %v752 = vmul.f32 %v742, %v748
  %v753 = vmul.f32 %v716, %v655
  %v754 = vmul.f32 %v718, %v656
  %v755 = vadd.f32 %v751, %v753
  %v756 = vadd.f32 %v752, %v754
  %v757 = vpack.c.bf16 %v756, %v755
  %759 = vrot.lane.b32.xlu0 %v757, 96
  %v760 = vpop.permute.xlu0 %759
  %v762 = vsel %vm116, %v760, 0
  %764 = vmatprep.subr.bf16.mxu0 0
  %765 = vmatpush1.bf16.msra.mxu0 0
  %766 = vmatprep.subr.bf16.mxu0 0
  %767 = vmatpush1.bf16.msra.mxu0 0
  %768 = vmatprep.subr.bf16.mxu0 0
  %769 = vmatpush1.bf16.msra.mxu0 0
  %770 = vmatprep.subr.bf16.mxu0 0
  %771 = vmatpush1.bf16.msra.mxu0 0
  %772 = vmatprep.subr.bf16.mxu0 0
  %773 = vmatpush1.bf16.msra.mxu0 0
  %774 = vmatprep.subr.bf16.mxu0 0
  %775 = vmatpush1.bf16.msra.mxu0 0
  %776 = vmatprep.subr.bf16.mxu0 0
  %777 = vmatpush1.bf16.msra.mxu0 %v258
  %778 = vmatprep.subr.bf16.mxu0 0
  %779 = vmatpush1.bf16.msra.mxu0 %v257
  %780 = vmatprep.subr.bf16.mxu0 0
  %781 = vmatpush2.bf16.msra.mxu0 0
  %782 = vmatprep.subr.bf16.mxu0 0
  %783 = vmatpush2.bf16.msra.mxu0 0
  %784 = vmatprep.subr.bf16.mxu0 0
  %785 = vmatpush2.bf16.msra.mxu0 0
  %786 = vmatprep.subr.bf16.mxu0 0
  %787 = vmatpush2.bf16.msra.mxu0 0
  %788 = vmatprep.subr.bf16.mxu0 0
  %789 = vmatpush2.bf16.msra.mxu0 0
  %790 = vmatprep.subr.bf16.mxu0 0
  %791 = vmatpush2.bf16.msra.mxu0 0
  %792 = vmatprep.subr.bf16.mxu0 0
  %793 = vmatpush2.bf16.msra.mxu0 0
  %794 = vmatprep.subr.bf16.mxu0 0
  %795 = vmatpush2.bf16.msra.mxu0 0
  %796 = vmatprep.mubr.bf16.mxu0 0
  %797 = vmatmul.mubr.bf16.gmra.mxu0 %v762
  %v798 = vpop.f32.mrf.mxu0
  %v799 = vadd.f32 %v247, %v798
  %v800 = vpop.f32.mrf.mxu0
  %v801 = vpop.f32.mrf.mxu0
  %v802 = vadd.f32 %v247, %v801
  %v803 = vpop.f32.mrf.mxu0
  %804 = vdwg.mxu0
  %v805 = vadd.f32 %v216, %v799
  %v806 = vadd.f32 %v219, %v802
  %v807 = vxor.u32 %v805, 2147483648
  %v808 = vxor.u32 %v806, 2147483648
  %v809 = vmul.f32 %v807, 1.442695
  %v810 = vpow.pop %v809
  %v811 = vmul.f32 %v808, 1.442695
  %v812 = vpow.pop %v811
  %v813 = vadd.f32 %v810, 1.0
  %v814 = vadd.f32 %v812, 1.0
  %v815 = vrcp.pop %v813
  %v816 = vmul.f32 1.0, %v815
  %v817 = vrcp.pop %v814
  %v818 = vmul.f32 1.0, %v817
  %821 = vrot.lane.b32.xlu0 %v799, 64
  %v822 = vpop.permute.xlu0 %821
  %823 = vrot.lane.b32.xlu0 %v802, 64
  %v824 = vpop.permute.xlu0 %823
  %v827 = vmul.f32 %v816, %v822
  %v828 = vmul.f32 %v818, %v824
  %831 = vrot.lane.b32.xlu0 %v827, 64
  %v832 = vpop.permute.xlu0 %831
  %833 = vrot.lane.b32.xlu0 %v828, 64
  %v834 = vpop.permute.xlu0 %833
  %v837 = vadd.f32 %v216, %v832
  %v838 = vadd.f32 %v219, %v834
  %v839 = vtanh.pop %v837
  %v840 = vtanh.pop %v838
  %v841 = vsub.f32 1.0, %v816
  %v842 = vsub.f32 1.0, %v818
  %845 = vrot.lane.b32.xlu0 %v839, 96
  %v846 = vpop.permute.xlu0 %845
  %847 = vrot.lane.b32.xlu0 %v840, 96
  %v848 = vpop.permute.xlu0 %847
  %v851 = vmul.f32 %v841, %v846
  %v852 = vmul.f32 %v842, %v848
  %v853 = vmul.f32 %v816, %v755
  %v854 = vmul.f32 %v818, %v756
  %v855 = vadd.f32 %v851, %v853
  %v856 = vadd.f32 %v852, %v854
  %v857 = vpack.c.bf16 %v856, %v855
  %859 = vrot.lane.b32.xlu0 %v857, 96
  %v860 = vpop.permute.xlu0 %859
  %v862 = vsel %vm116, %v860, 0
  %864 = vmatprep.subr.bf16.mxu0 0
  %865 = vmatpush1.bf16.msra.mxu0 0
  %866 = vmatprep.subr.bf16.mxu0 0
  %867 = vmatpush1.bf16.msra.mxu0 0
  %868 = vmatprep.subr.bf16.mxu0 0
  %869 = vmatpush1.bf16.msra.mxu0 0
  %870 = vmatprep.subr.bf16.mxu0 0
  %871 = vmatpush1.bf16.msra.mxu0 0
  %872 = vmatprep.subr.bf16.mxu0 0
  %873 = vmatpush1.bf16.msra.mxu0 0
  %874 = vmatprep.subr.bf16.mxu0 0
  %875 = vmatpush1.bf16.msra.mxu0 0
  %876 = vmatprep.subr.bf16.mxu0 0
  %877 = vmatpush1.bf16.msra.mxu0 %v258
  %878 = vmatprep.subr.bf16.mxu0 0
  %879 = vmatpush1.bf16.msra.mxu0 %v257
  %880 = vmatprep.subr.bf16.mxu0 0
  %881 = vmatpush2.bf16.msra.mxu0 0
  %882 = vmatprep.subr.bf16.mxu0 0
  %883 = vmatpush2.bf16.msra.mxu0 0
  %884 = vmatprep.subr.bf16.mxu0 0
  %885 = vmatpush2.bf16.msra.mxu0 0
  %886 = vmatprep.subr.bf16.mxu0 0
  %887 = vmatpush2.bf16.msra.mxu0 0
  %888 = vmatprep.subr.bf16.mxu0 0
  %889 = vmatpush2.bf16.msra.mxu0 0
  %890 = vmatprep.subr.bf16.mxu0 0
  %891 = vmatpush2.bf16.msra.mxu0 0
  %892 = vmatprep.subr.bf16.mxu0 0
  %893 = vmatpush2.bf16.msra.mxu0 0
  %894 = vmatprep.subr.bf16.mxu0 0
  %895 = vmatpush2.bf16.msra.mxu0 0
  %896 = vmatprep.mubr.bf16.mxu0 0
  %897 = vmatmul.mubr.bf16.gmra.mxu0 %v862
  %v898 = vpop.f32.mrf.mxu0
  %v899 = vadd.f32 %v247, %v898
  %v900 = vpop.f32.mrf.mxu0
  %v901 = vpop.f32.mrf.mxu0
  %v902 = vadd.f32 %v247, %v901
  %v903 = vpop.f32.mrf.mxu0
  %904 = vdwg.mxu0
  %v905 = vadd.f32 %v224, %v899
  %v906 = vadd.f32 %v227, %v902
  %v907 = vxor.u32 %v905, 2147483648
  %v908 = vxor.u32 %v906, 2147483648
  %v909 = vmul.f32 %v907, 1.442695
  %v910 = vpow.pop %v909
  %v911 = vmul.f32 %v908, 1.442695
  %v912 = vpow.pop %v911
  %v913 = vadd.f32 %v910, 1.0
  %v914 = vadd.f32 %v912, 1.0
  %v915 = vrcp.pop %v913
  %v916 = vmul.f32 1.0, %v915
  %v917 = vrcp.pop %v914
  %v918 = vmul.f32 1.0, %v917
  %921 = vrot.lane.b32.xlu0 %v899, 64
  %v922 = vpop.permute.xlu0 %921
  %923 = vrot.lane.b32.xlu0 %v902, 64
  %v924 = vpop.permute.xlu0 %923
  %v927 = vmul.f32 %v916, %v922
  %v928 = vmul.f32 %v918, %v924
  %931 = vrot.lane.b32.xlu0 %v927, 64
  %v932 = vpop.permute.xlu0 %931
  %933 = vrot.lane.b32.xlu0 %v928, 64
  %v934 = vpop.permute.xlu0 %933
  %v937 = vadd.f32 %v224, %v932
  %v938 = vadd.f32 %v227, %v934
  %v939 = vtanh.pop %v937
  %v940 = vtanh.pop %v938
  %v941 = vsub.f32 1.0, %v916
  %v942 = vsub.f32 1.0, %v918
  %945 = vrot.lane.b32.xlu0 %v939, 96
  %v946 = vpop.permute.xlu0 %945
  %947 = vrot.lane.b32.xlu0 %v940, 96
  %v948 = vpop.permute.xlu0 %947
  %v951 = vmul.f32 %v941, %v946
  %v952 = vmul.f32 %v942, %v948
  %v953 = vmul.f32 %v916, %v855
  %v954 = vmul.f32 %v918, %v856
  %v955 = vadd.f32 %v951, %v953
  %v956 = vadd.f32 %v952, %v954
  %v957 = vpack.c.bf16 %v956, %v955
  %959 = vrot.lane.b32.xlu0 %v957, 96
  %v960 = vpop.permute.xlu0 %959
  %v962 = vsel %vm116, %v960, 0
  %964 = vmatprep.subr.bf16.mxu0 0
  %965 = vmatpush1.bf16.msra.mxu0 0
  %966 = vmatprep.subr.bf16.mxu0 0
  %967 = vmatpush1.bf16.msra.mxu0 0
  %968 = vmatprep.subr.bf16.mxu0 0
  %969 = vmatpush1.bf16.msra.mxu0 0
  %970 = vmatprep.subr.bf16.mxu0 0
  %971 = vmatpush1.bf16.msra.mxu0 0
  %972 = vmatprep.subr.bf16.mxu0 0
  %973 = vmatpush1.bf16.msra.mxu0 0
  %974 = vmatprep.subr.bf16.mxu0 0
  %975 = vmatpush1.bf16.msra.mxu0 0
  %976 = vmatprep.subr.bf16.mxu0 0
  %977 = vmatpush1.bf16.msra.mxu0 %v258
  %978 = vmatprep.subr.bf16.mxu0 0
  %979 = vmatpush1.bf16.msra.mxu0 %v257
  %980 = vmatprep.subr.bf16.mxu0 0
  %981 = vmatpush2.bf16.msra.mxu0 0
  %982 = vmatprep.subr.bf16.mxu0 0
  %983 = vmatpush2.bf16.msra.mxu0 0
  %984 = vmatprep.subr.bf16.mxu0 0
  %985 = vmatpush2.bf16.msra.mxu0 0
  %986 = vmatprep.subr.bf16.mxu0 0
  %987 = vmatpush2.bf16.msra.mxu0 0
  %988 = vmatprep.subr.bf16.mxu0 0
  %989 = vmatpush2.bf16.msra.mxu0 0
  %990 = vmatprep.subr.bf16.mxu0 0
  %991 = vmatpush2.bf16.msra.mxu0 0
  %992 = vmatprep.subr.bf16.mxu0 0
  %993 = vmatpush2.bf16.msra.mxu0 0
  %994 = vmatprep.subr.bf16.mxu0 0
  %995 = vmatpush2.bf16.msra.mxu0 0
  %996 = vmatprep.mubr.bf16.mxu0 0
  %997 = vmatmul.mubr.bf16.gmra.mxu0 %v962
  %v998 = vpop.f32.mrf.mxu0
  %v999 = vadd.f32 %v247, %v998
  %v1000 = vpop.f32.mrf.mxu0
  %v1001 = vpop.f32.mrf.mxu0
  %v1002 = vadd.f32 %v247, %v1001
  %v1003 = vpop.f32.mrf.mxu0
  %1004 = vdwg.mxu0
  %v1005 = vadd.f32 %v232, %v999
  %v1006 = vadd.f32 %v235, %v1002
  %v1007 = vxor.u32 %v1005, 2147483648
  %v1008 = vxor.u32 %v1006, 2147483648
  %v1009 = vmul.f32 %v1007, 1.442695
  %v1010 = vpow.pop %v1009
  %v1011 = vmul.f32 %v1008, 1.442695
  %v1012 = vpow.pop %v1011
  %v1013 = vadd.f32 %v1010, 1.0
  %v1014 = vadd.f32 %v1012, 1.0
  %v1015 = vrcp.pop %v1013
  %v1016 = vmul.f32 1.0, %v1015
  %v1017 = vrcp.pop %v1014
  %v1018 = vmul.f32 1.0, %v1017
  %1021 = vrot.lane.b32.xlu0 %v999, 64
  %v1022 = vpop.permute.xlu0 %1021
  %1023 = vrot.lane.b32.xlu0 %v1002, 64
  %v1024 = vpop.permute.xlu0 %1023
  %v1027 = vmul.f32 %v1016, %v1022
  %v1028 = vmul.f32 %v1018, %v1024
  %1031 = vrot.lane.b32.xlu0 %v1027, 64
  %v1032 = vpop.permute.xlu0 %1031
  %1033 = vrot.lane.b32.xlu0 %v1028, 64
  %v1034 = vpop.permute.xlu0 %1033
  %v1037 = vadd.f32 %v232, %v1032
  %v1038 = vadd.f32 %v235, %v1034
  %v1039 = vtanh.pop %v1037
  %v1040 = vtanh.pop %v1038
  %v1041 = vsub.f32 1.0, %v1016
  %v1042 = vsub.f32 1.0, %v1018
  %1045 = vrot.lane.b32.xlu0 %v1039, 96
  %v1046 = vpop.permute.xlu0 %1045
  %1047 = vrot.lane.b32.xlu0 %v1040, 96
  %v1048 = vpop.permute.xlu0 %1047
  %v1051 = vmul.f32 %v1041, %v1046
  %v1052 = vmul.f32 %v1042, %v1048
  %v1053 = vmul.f32 %v1016, %v955
  %v1054 = vmul.f32 %v1018, %v956
  %v1055 = vadd.f32 %v1051, %v1053
  %v1056 = vadd.f32 %v1052, %v1054
  %v1057 = vld [vmem:[%s1] sm:$0xff]
  %v1058 = vld [vmem:[%s1 + $0x8] sm:$0xf]
  %1061 = vrot.lane.b32.xlu0 %v1055, 96
  %v1062 = vpop.permute.xlu0 %1061
  %1063 = vrot.lane.b32.xlu0 %v1056, 96
  %v1064 = vpop.permute.xlu0 %1063
  %1069 = vrot.lane.b32.xlu0 %v1057, 32
  %v1070 = vpop.permute.xlu0 %1069
  %1071 = vrot.lane.b32.xlu0 %v1058, 32
  %v1072 = vpop.permute.xlu0 %1071
  %v1075 = vsel %vm116, %v1062, %v1070
  %v1076 = vsel %vm116, %v1064, %v1072
  %v1077 = vld [vmem:[%s2] sm:$0xff]
  %v1078 = vld [vmem:[%s2 + $0x8] sm:$0xf]
  %v1079 = vld [vmem:[%s7] sm:$0x1]
  %v1080 = vld [vmem:[%s8] sm:$0x1]
  %vm1081 = vcmask 523264
  %v1082 = vsel %vm1081, %v1075, 0.0
  %1083 = vadd.xlane.f32.xlu0 %v1082
  %v1084 = vpop.xlane.xlu0 %1083
  %vm1085 = vcmask 519168
  %v1086 = vsel %vm1085, %v1076, 0.0
  %1087 = vadd.xlane.f32.xlu0 %v1086
  %v1088 = vpop.xlane.xlu0 %1087
  %v1089 = vrcp.pop 64.0
  %v1090 = vmul.f32 %v1084, %v1089
  %v1091 = vmul.f32 %v1088, %v1089
  %v1092 = vsub.f32 %v1075, %v1090
  %v1093 = vsub.f32 %v1076, %v1091
  %v1094 = vmul.f32 %v1092, %v1092
  %v1095 = vmul.f32 %v1093, %v1093
  %v1096 = vsel %vm1081, %v1094, 0.0
  %1097 = vadd.xlane.f32.xlu0 %v1096
  %v1098 = vpop.xlane.xlu0 %1097
  %v1099 = vsel %vm1085, %v1095, 0.0
  %1100 = vadd.xlane.f32.xlu0 %v1099
  %v1101 = vpop.xlane.xlu0 %1100
  %v1102 = vmul.f32 %v1098, %v1089
  %v1103 = vmul.f32 %v1101, %v1089
  %v1104 = vadd.f32 %v1102, 1e-06
  %v1105 = vadd.f32 %v1103, 1e-06
  %v1106 = vrsqrt.pop %v1104
  %v1107 = vrsqrt.pop %v1105
  %v1108 = vmul.f32 %v1092, %v1106
  %v1109 = vmul.f32 %v1093, %v1107
  %v1111 = vlaneseq
  %v1112 = vshrl.u32 %v1111, 7
  %v1113 = vsub.s32 0, %v1112
  %v1114 = vrot.slane %v1079, %v1113
  %v1116 = vmul.f32 %v1108, %v1114
  %v1117 = vmul.f32 %v1109, %v1114
  %v1119 = vlaneseq
  %v1120 = vshrl.u32 %v1119, 7
  %v1121 = vsub.s32 0, %v1120
  %v1122 = vrot.slane %v1080, %v1121
  %v1124 = vadd.f32 %v1116, %v1122
  %v1125 = vadd.f32 %v1117, %v1122
  %v1126 = vpack.c.bf16 %v1125, %v1124
  %v1127 = vld [vmem:[%s9] sm:$0xff]
  %v1128 = vld [vmem:[%s9 + $0x8] sm:$0xff]
  %v1129 = vld [vmem:[%s9 + $0x10] sm:$0xff]
  %v1130 = vld [vmem:[%s9 + $0x18] sm:$0xff]
  %v1131 = vld [vmem:[%s9 + $0x20] sm:$0xff]
  %v1132 = vld [vmem:[%s9 + $0x28] sm:$0xff]
  %v1133 = vld [vmem:[%s9 + $0x30] sm:$0xff]
  %v1134 = vld [vmem:[%s9 + $0x38] sm:$0xff]
  %v1135 = vld [vmem:[%s10] sm:$0x3]
  %v1137 = vlaneseq
  %v1138 = vshrl.u32 %v1137, 7
  %v1139 = vsub.s32 0, %v1138
  %v1140 = vrot.slane %v1135, %v1139
  %v1141 = vlaneseq
  %v1142 = vshrl.u32 %v1141, 7
  %v1143 = vsub.s32 1, %v1142
  %v1144 = vrot.slane %v1135, %v1143
  %v1155 = vunpack.c.l.b16 %v1127
  %v1156 = vunpack.c.h.b16 %v1127
  %v1157 = vunpack.c.l.b16 %v1128
  %v1158 = vunpack.c.h.b16 %v1128
  %v1159 = vunpack.c.l.b16 %v1129
  %v1160 = vunpack.c.h.b16 %v1129
  %v1161 = vunpack.c.l.b16 %v1130
  %v1162 = vunpack.c.h.b16 %v1130
  %v1163 = vunpack.c.l.b16 %v1131
  %v1164 = vunpack.c.h.b16 %v1131
  %v1165 = vunpack.c.l.b16 %v1132
  %v1166 = vunpack.c.h.b16 %v1132
  %v1167 = vunpack.c.l.b16 %v1133
  %v1168 = vunpack.c.h.b16 %v1133
  %v1169 = vunpack.c.l.b16 %v1134
  %v1170 = vunpack.c.h.b16 %v1134
  %v1171 = vpack.c.b16 %v1157, %v1155
  %v1172 = vpack.c.b16 %v1158, %v1156
  %v1173 = vpack.c.b16 %v1161, %v1159
  %v1174 = vpack.c.b16 %v1162, %v1160
  %v1175 = vpack.c.b16 %v1165, %v1163
  %v1176 = vpack.c.b16 %v1166, %v1164
  %v1177 = vpack.c.b16 %v1169, %v1167
  %v1178 = vpack.c.b16 %v1170, %v1168
  %v1188 = vsel %vm1081, %v1126, 0
  %1190 = vmatprep.subr.bf16.mxu0 0
  %1191 = vmatpush1.bf16.msra.mxu0 0
  %1192 = vmatprep.subr.bf16.mxu0 0
  %1193 = vmatpush1.bf16.msra.mxu0 0
  %1194 = vmatprep.subr.bf16.mxu0 0
  %1195 = vmatpush1.bf16.msra.mxu0 0
  %1196 = vmatprep.subr.bf16.mxu0 0
  %1197 = vmatpush1.bf16.msra.mxu0 0
  %1198 = vmatprep.subr.bf16.mxu0 %v1178
  %1199 = vmatpush1.bf16.msra.mxu0 %v1177
  %1200 = vmatprep.subr.bf16.mxu0 %v1176
  %1201 = vmatpush1.bf16.msra.mxu0 %v1175
  %1202 = vmatprep.subr.bf16.mxu0 %v1174
  %1203 = vmatpush1.bf16.msra.mxu0 %v1173
  %1204 = vmatprep.subr.bf16.mxu0 %v1172
  %1205 = vmatpush1.bf16.msra.mxu0 %v1171
  %1206 = vmatprep.subr.bf16.mxu0 0
  %1207 = vmatpush2.bf16.msra.mxu0 0
  %1208 = vmatprep.subr.bf16.mxu0 0
  %1209 = vmatpush2.bf16.msra.mxu0 0
  %1210 = vmatprep.subr.bf16.mxu0 0
  %1211 = vmatpush2.bf16.msra.mxu0 0
  %1212 = vmatprep.subr.bf16.mxu0 0
  %1213 = vmatpush2.bf16.msra.mxu0 0
  %1214 = vmatprep.subr.bf16.mxu0 0
  %1215 = vmatpush2.bf16.msra.mxu0 0
  %1216 = vmatprep.subr.bf16.mxu0 0
  %1217 = vmatpush2.bf16.msra.mxu0 0
  %1218 = vmatprep.subr.bf16.mxu0 0
  %1219 = vmatpush2.bf16.msra.mxu0 0
  %1220 = vmatprep.subr.bf16.mxu0 0
  %1221 = vmatpush2.bf16.msra.mxu0 0
  %1222 = vmatprep.mubr.bf16.mxu0 0
  %1223 = vmatmul.mubr.bf16.gmra.mxu0 %v1188
  %v1224 = vpop.f32.mrf.mxu0
  %v1225 = vadd.f32 %v1140, %v1224
  %v1226 = vpop.f32.mrf.mxu0
  %v1227 = vadd.f32 %v1144, %v1226
  %v1228 = vpop.f32.mrf.mxu0
  %v1229 = vadd.f32 %v1140, %v1228
  %v1230 = vpop.f32.mrf.mxu0
  %v1231 = vadd.f32 %v1144, %v1230
  %1232 = vdwg.mxu0
  %v1233 = vld [vmem:[%s11] sm:$0xf]
  %v1234 = vld [vmem:[%s11 + $0x4] sm:$0xf]
  %v1235 = vld [vmem:[%s11 + $0x8] sm:$0xf]
  %v1236 = vld [vmem:[%s11 + $0xc] sm:$0xf]
  %v1237 = vld [vmem:[%s11 + $0x10] sm:$0xf]
  %v1238 = vld [vmem:[%s11 + $0x14] sm:$0xf]
  %v1239 = vld [vmem:[%s11 + $0x18] sm:$0xf]
  %v1240 = vld [vmem:[%s11 + $0x1c] sm:$0xf]
  %1243 = vrot.lane.b32.xlu0 %v1225, 112
  %v1244 = vpop.permute.xlu0 %1243
  %1245 = vrot.lane.b32.xlu0 %v1229, 112
  %v1246 = vpop.permute.xlu0 %1245
  %1249 = vrot.lane.b32.xlu0 %v1225, 96
  %v1250 = vpop.permute.xlu0 %1249
  %1251 = vrot.lane.b32.xlu0 %v1229, 96
  %v1252 = vpop.permute.xlu0 %1251
  %1255 = vrot.lane.b32.xlu0 %v1225, 80
  %v1256 = vpop.permute.xlu0 %1255
  %1257 = vrot.lane.b32.xlu0 %v1229, 80
  %v1258 = vpop.permute.xlu0 %1257
  %v1261 = vpack.c.bf16 %v1229, %v1225
  %v1262 = vpack.c.bf16 %v1246, %v1244
  %v1263 = vpack.c.bf16 %v1252, %v1250
  %v1264 = vpack.c.bf16 %v1258, %v1256
  %1267 = vrot.lane.b32.xlu0 %v1227, 112
  %v1268 = vpop.permute.xlu0 %1267
  %1269 = vrot.lane.b32.xlu0 %v1231, 112
  %v1270 = vpop.permute.xlu0 %1269
  %1273 = vrot.lane.b32.xlu0 %v1227, 96
  %v1274 = vpop.permute.xlu0 %1273
  %1275 = vrot.lane.b32.xlu0 %v1231, 96
  %v1276 = vpop.permute.xlu0 %1275
  %1279 = vrot.lane.b32.xlu0 %v1227, 80
  %v1280 = vpop.permute.xlu0 %1279
  %1281 = vrot.lane.b32.xlu0 %v1231, 80
  %v1282 = vpop.permute.xlu0 %1281
  %v1285 = vpack.c.bf16 %v1231, %v1227
  %v1286 = vpack.c.bf16 %v1270, %v1268
  %v1287 = vpack.c.bf16 %v1276, %v1274
  %v1288 = vpack.c.bf16 %v1282, %v1280
  %1290 = vrot.lane.b32.xlu0 %v1261, 64
  %v1291 = vpop.permute.xlu0 %1290
  %vm1292 = vcmask 130048
  %v1294 = vsel %vm1292, %v1261, 0
  %v1297 = vsel %vm1292, %v1291, 0
  %1299 = vmatprep.subr.bf16.mxu0 0
  %1300 = vmatpush1.bf16.xpose.msra.mxu0 0
  %1301 = vmatprep.subr.bf16.mxu0 0
  %1302 = vmatpush1.bf16.xpose.msra.mxu0 0
  %1303 = vmatprep.subr.bf16.mxu0 0
  %1304 = vmatpush1.bf16.xpose.msra.mxu0 0
  %1305 = vmatprep.subr.bf16.mxu0 0
  %1306 = vmatpush1.bf16.xpose.msra.mxu0 0
  %1307 = vmatprep.subr.bf16.mxu0 0
  %1308 = vmatpush1.bf16.xpose.msra.mxu0 0
  %1309 = vmatprep.subr.bf16.mxu0 0
  %1310 = vmatpush1.bf16.xpose.msra.mxu0 0
  %1311 = vmatprep.subr.bf16.mxu0 0
  %1312 = vmatpush1.bf16.xpose.msra.mxu0 0
  %1313 = vmatprep.subr.bf16.mxu0 0
  %1314 = vmatpush1.bf16.xpose.msra.mxu0 %v1297
  %1315 = vmatprep.subr.bf16.mxu0 0
  %1316 = vmatpush2.bf16.xpose.msra.mxu0 0
  %1317 = vmatprep.subr.bf16.mxu0 0
  %1318 = vmatpush2.bf16.xpose.msra.mxu0 0
  %1319 = vmatprep.subr.bf16.mxu0 0
  %1320 = vmatpush2.bf16.xpose.msra.mxu0 0
  %1321 = vmatprep.subr.bf16.mxu0 0
  %1322 = vmatpush2.bf16.xpose.msra.mxu0 0
  %1323 = vmatprep.subr.bf16.mxu0 0
  %1324 = vmatpush2.bf16.xpose.msra.mxu0 0
  %1325 = vmatprep.subr.bf16.mxu0 0
  %1326 = vmatpush2.bf16.xpose.msra.mxu0 0
  %1327 = vmatprep.subr.bf16.mxu0 0
  %1328 = vmatpush2.bf16.xpose.msra.mxu0 0
  %1329 = vmatprep.subr.bf16.mxu0 0
  %1330 = vmatpush2.bf16.xpose.msra.mxu0 0
  %1331 = vmatprep.mubr.bf16.mxu0 0
  %1332 = vmatmul.mubr.bf16.gmra.mxu0 %v1294
  %v1333 = vpop.f32.mrf.mxu0
  %v1334 = vadd.f32 0.0, %v1333
  %v1335 = vpop.f32.mrf.mxu0
  %v1336 = vpop.f32.mrf.mxu0
  %v1337 = vadd.f32 0.0, %v1336
  %v1338 = vpop.f32.mrf.mxu0
  %1339 = vdwg.mxu0
  %1341 = vrot.lane.b32.xlu0 %v1262, 64
  %v1342 = vpop.permute.xlu0 %1341
  %v1344 = vsel %vm1292, %v1262, 0
  %v1347 = vsel %vm1292, %v1342, 0
  %1349 = vmatprep.subr.bf16.mxu0 0
  %1350 = vmatpush1.bf16.xpose.msra.mxu0 0
  %1351 = vmatprep.subr.bf16.mxu0 0
  %1352 = vmatpush1.bf16.xpose.msra.mxu0 0
  %1353 = vmatprep.subr.bf16.mxu0 0
  %1354 = vmatpush1.bf16.xpose.msra.mxu0 0
  %1355 = vmatprep.subr.bf16.mxu0 0
  %1356 = vmatpush1.bf16.xpose.msra.mxu0 0
  %1357 = vmatprep.subr.bf16.mxu0 0
  %1358 = vmatpush1.bf16.xpose.msra.mxu0 0
  %1359 = vmatprep.subr.bf16.mxu0 0
  %1360 = vmatpush1.bf16.xpose.msra.mxu0 0
  %1361 = vmatprep.subr.bf16.mxu0 0
  %1362 = vmatpush1.bf16.xpose.msra.mxu0 0
  %1363 = vmatprep.subr.bf16.mxu0 0
  %1364 = vmatpush1.bf16.xpose.msra.mxu0 %v1347
  %1365 = vmatprep.subr.bf16.mxu0 0
  %1366 = vmatpush2.bf16.xpose.msra.mxu0 0
  %1367 = vmatprep.subr.bf16.mxu0 0
  %1368 = vmatpush2.bf16.xpose.msra.mxu0 0
  %1369 = vmatprep.subr.bf16.mxu0 0
  %1370 = vmatpush2.bf16.xpose.msra.mxu0 0
  %1371 = vmatprep.subr.bf16.mxu0 0
  %1372 = vmatpush2.bf16.xpose.msra.mxu0 0
  %1373 = vmatprep.subr.bf16.mxu0 0
  %1374 = vmatpush2.bf16.xpose.msra.mxu0 0
  %1375 = vmatprep.subr.bf16.mxu0 0
  %1376 = vmatpush2.bf16.xpose.msra.mxu0 0
  %1377 = vmatprep.subr.bf16.mxu0 0
  %1378 = vmatpush2.bf16.xpose.msra.mxu0 0
  %1379 = vmatprep.subr.bf16.mxu0 0
  %1380 = vmatpush2.bf16.xpose.msra.mxu0 0
  %1381 = vmatprep.mubr.bf16.mxu0 0
  %1382 = vmatmul.mubr.bf16.gmra.mxu0 %v1344
  %v1383 = vpop.f32.mrf.mxu0
  %v1384 = vadd.f32 0.0, %v1383
  %v1385 = vpop.f32.mrf.mxu0
  %v1386 = vpop.f32.mrf.mxu0
  %v1387 = vadd.f32 0.0, %v1386
  %v1388 = vpop.f32.mrf.mxu0
  %1389 = vdwg.mxu0
  %1391 = vrot.lane.b32.xlu0 %v1263, 64
  %v1392 = vpop.permute.xlu0 %1391
  %v1394 = vsel %vm1292, %v1263, 0
  %v1397 = vsel %vm1292, %v1392, 0
  %1399 = vmatprep.subr.bf16.mxu0 0
  %1400 = vmatpush1.bf16.xpose.msra.mxu0 0
  %1401 = vmatprep.subr.bf16.mxu0 0
  %1402 = vmatpush1.bf16.xpose.msra.mxu0 0
  %1403 = vmatprep.subr.bf16.mxu0 0
  %1404 = vmatpush1.bf16.xpose.msra.mxu0 0
  %1405 = vmatprep.subr.bf16.mxu0 0
  %1406 = vmatpush1.bf16.xpose.msra.mxu0 0
  %1407 = vmatprep.subr.bf16.mxu0 0
  %1408 = vmatpush1.bf16.xpose.msra.mxu0 0
  %1409 = vmatprep.subr.bf16.mxu0 0
  %1410 = vmatpush1.bf16.xpose.msra.mxu0 0
  %1411 = vmatprep.subr.bf16.mxu0 0
  %1412 = vmatpush1.bf16.xpose.msra.mxu0 0
  %1413 = vmatprep.subr.bf16.mxu0 0
  %1414 = vmatpush1.bf16.xpose.msra.mxu0 %v1397
  %1415 = vmatprep.subr.bf16.mxu0 0
  %1416 = vmatpush2.bf16.xpose.msra.mxu0 0
  %1417 = vmatprep.subr.bf16.mxu0 0
  %1418 = vmatpush2.bf16.xpose.msra.mxu0 0
  %1419 = vmatprep.subr.bf16.mxu0 0
  %1420 = vmatpush2.bf16.xpose.msra.mxu0 0
  %1421 = vmatprep.subr.bf16.mxu0 0
  %1422 = vmatpush2.bf16.xpose.msra.mxu0 0
  %1423 = vmatprep.subr.bf16.mxu0 0
  %1424 = vmatpush2.bf16.xpose.msra.mxu0 0
  %1425 = vmatprep.subr.bf16.mxu0 0
  %1426 = vmatpush2.bf16.xpose.msra.mxu0 0
  %1427 = vmatprep.subr.bf16.mxu0 0
  %1428 = vmatpush2.bf16.xpose.msra.mxu0 0
  %1429 = vmatprep.subr.bf16.mxu0 0
  %1430 = vmatpush2.bf16.xpose.msra.mxu0 0
  %1431 = vmatprep.mubr.bf16.mxu0 0
  %1432 = vmatmul.mubr.bf16.gmra.mxu0 %v1394
  %v1433 = vpop.f32.mrf.mxu0
  %v1434 = vadd.f32 0.0, %v1433
  %v1435 = vpop.f32.mrf.mxu0
  %v1436 = vpop.f32.mrf.mxu0
  %v1437 = vadd.f32 0.0, %v1436
  %v1438 = vpop.f32.mrf.mxu0
  %1439 = vdwg.mxu0
  %1441 = vrot.lane.b32.xlu0 %v1264, 64
  %v1442 = vpop.permute.xlu0 %1441
  %v1444 = vsel %vm1292, %v1264, 0
  %v1447 = vsel %vm1292, %v1442, 0
  %1449 = vmatprep.subr.bf16.mxu0 0
  %1450 = vmatpush1.bf16.xpose.msra.mxu0 0
  %1451 = vmatprep.subr.bf16.mxu0 0
  %1452 = vmatpush1.bf16.xpose.msra.mxu0 0
  %1453 = vmatprep.subr.bf16.mxu0 0
  %1454 = vmatpush1.bf16.xpose.msra.mxu0 0
  %1455 = vmatprep.subr.bf16.mxu0 0
  %1456 = vmatpush1.bf16.xpose.msra.mxu0 0
  %1457 = vmatprep.subr.bf16.mxu0 0
  %1458 = vmatpush1.bf16.xpose.msra.mxu0 0
  %1459 = vmatprep.subr.bf16.mxu0 0
  %1460 = vmatpush1.bf16.xpose.msra.mxu0 0
  %1461 = vmatprep.subr.bf16.mxu0 0
  %1462 = vmatpush1.bf16.xpose.msra.mxu0 0
  %1463 = vmatprep.subr.bf16.mxu0 0
  %1464 = vmatpush1.bf16.xpose.msra.mxu0 %v1447
  %1465 = vmatprep.subr.bf16.mxu0 0
  %1466 = vmatpush2.bf16.xpose.msra.mxu0 0
  %1467 = vmatprep.subr.bf16.mxu0 0
  %1468 = vmatpush2.bf16.xpose.msra.mxu0 0
  %1469 = vmatprep.subr.bf16.mxu0 0
  %1470 = vmatpush2.bf16.xpose.msra.mxu0 0
  %1471 = vmatprep.subr.bf16.mxu0 0
  %1472 = vmatpush2.bf16.xpose.msra.mxu0 0
  %1473 = vmatprep.subr.bf16.mxu0 0
  %1474 = vmatpush2.bf16.xpose.msra.mxu0 0
  %1475 = vmatprep.subr.bf16.mxu0 0
  %1476 = vmatpush2.bf16.xpose.msra.mxu0 0
  %1477 = vmatprep.subr.bf16.mxu0 0
  %1478 = vmatpush2.bf16.xpose.msra.mxu0 0
  %1479 = vmatprep.subr.bf16.mxu0 0
  %1480 = vmatpush2.bf16.xpose.msra.mxu0 0
  %1481 = vmatprep.mubr.bf16.mxu0 0
  %1482 = vmatmul.mubr.bf16.gmra.mxu0 %v1444
  %v1483 = vpop.f32.mrf.mxu0
  %v1484 = vadd.f32 0.0, %v1483
  %v1485 = vpop.f32.mrf.mxu0
  %v1486 = vpop.f32.mrf.mxu0
  %v1487 = vadd.f32 0.0, %v1486
  %v1488 = vpop.f32.mrf.mxu0
  %1489 = vdwg.mxu0
  %v1490 = vmul.f32 %v1334, 0.25
  %v1491 = vmul.f32 %v1337, 0.25
  %v1492 = vmul.f32 %v1384, 0.25
  %v1493 = vmul.f32 %v1387, 0.25
  %v1494 = vmul.f32 %v1434, 0.25
  %v1495 = vmul.f32 %v1437, 0.25
  %v1496 = vmul.f32 %v1484, 0.25
  %v1497 = vmul.f32 %v1487, 0.25
  %v1498 = vadd.f32 %v1490, %v1077
  %v1499 = vadd.f32 %v1491, %v1078
  %v1500 = vadd.f32 %v1492, %v1077
  %v1501 = vadd.f32 %v1493, %v1078
  %v1502 = vadd.f32 %v1494, %v1077
  %v1503 = vadd.f32 %v1495, %v1078
  %v1504 = vadd.f32 %v1496, %v1077
  %v1505 = vadd.f32 %v1497, %v1078
  %vm1506 = vcmask 97280
  %v1507 = vsel %vm1506, %v1498, -inf
  %1508 = vmax.xlane.f32.xlu0 %v1507
  %v1509 = vpop.xlane.xlu0 %1508
  %vm1510 = vcmask 93184
  %v1511 = vsel %vm1510, %v1499, -inf
  %1512 = vmax.xlane.f32.xlu0 %v1511
  %v1513 = vpop.xlane.xlu0 %1512
  %v1514 = vsel %vm1506, %v1500, -inf
  %1515 = vmax.xlane.f32.xlu0 %v1514
  %v1516 = vpop.xlane.xlu0 %1515
  %v1517 = vsel %vm1510, %v1501, -inf
  %1518 = vmax.xlane.f32.xlu0 %v1517
  %v1519 = vpop.xlane.xlu0 %1518
  %v1520 = vsel %vm1506, %v1502, -inf
  %1521 = vmax.xlane.f32.xlu0 %v1520
  %v1522 = vpop.xlane.xlu0 %1521
  %v1523 = vsel %vm1510, %v1503, -inf
  %1524 = vmax.xlane.f32.xlu0 %v1523
  %v1525 = vpop.xlane.xlu0 %1524
  %v1526 = vsel %vm1506, %v1504, -inf
  %1527 = vmax.xlane.f32.xlu0 %v1526
  %v1528 = vpop.xlane.xlu0 %1527
  %v1529 = vsel %vm1510, %v1505, -inf
  %1530 = vmax.xlane.f32.xlu0 %v1529
  %v1531 = vpop.xlane.xlu0 %1530
  %v1532 = vsub.f32 %v1498, %v1509
  %v1533 = vsub.f32 %v1499, %v1513
  %v1534 = vsub.f32 %v1500, %v1516
  %v1535 = vsub.f32 %v1501, %v1519
  %v1536 = vsub.f32 %v1502, %v1522
  %v1537 = vsub.f32 %v1503, %v1525
  %v1538 = vsub.f32 %v1504, %v1528
  %v1539 = vsub.f32 %v1505, %v1531
  %v1540 = vmul.f32 %v1532, 1.442695
  %v1541 = vpow.pop %v1540
  %v1542 = vmul.f32 %v1533, 1.442695
  %v1543 = vpow.pop %v1542
  %v1544 = vmul.f32 %v1534, 1.442695
  %v1545 = vpow.pop %v1544
  %v1546 = vmul.f32 %v1535, 1.442695
  %v1547 = vpow.pop %v1546
  %v1548 = vmul.f32 %v1536, 1.442695
  %v1549 = vpow.pop %v1548
  %v1550 = vmul.f32 %v1537, 1.442695
  %v1551 = vpow.pop %v1550
  %v1552 = vmul.f32 %v1538, 1.442695
  %v1553 = vpow.pop %v1552
  %v1554 = vmul.f32 %v1539, 1.442695
  %v1555 = vpow.pop %v1554
  %v1556 = vsel %vm1506, %v1541, 0.0
  %1557 = vadd.xlane.f32.xlu0 %v1556
  %v1558 = vpop.xlane.xlu0 %1557
  %v1559 = vsel %vm1510, %v1543, 0.0
  %1560 = vadd.xlane.f32.xlu0 %v1559
  %v1561 = vpop.xlane.xlu0 %1560
  %v1562 = vsel %vm1506, %v1545, 0.0
  %1563 = vadd.xlane.f32.xlu0 %v1562
  %v1564 = vpop.xlane.xlu0 %1563
  %v1565 = vsel %vm1510, %v1547, 0.0
  %1566 = vadd.xlane.f32.xlu0 %v1565
  %v1567 = vpop.xlane.xlu0 %1566
  %v1568 = vsel %vm1506, %v1549, 0.0
  %1569 = vadd.xlane.f32.xlu0 %v1568
  %v1570 = vpop.xlane.xlu0 %1569
  %v1571 = vsel %vm1510, %v1551, 0.0
  %1572 = vadd.xlane.f32.xlu0 %v1571
  %v1573 = vpop.xlane.xlu0 %1572
  %v1574 = vsel %vm1506, %v1553, 0.0
  %1575 = vadd.xlane.f32.xlu0 %v1574
  %v1576 = vpop.xlane.xlu0 %1575
  %v1577 = vsel %vm1510, %v1555, 0.0
  %1578 = vadd.xlane.f32.xlu0 %v1577
  %v1579 = vpop.xlane.xlu0 %1578
  %v1580 = vrcp.pop %v1558
  %v1581 = vrcp.pop %v1561
  %v1582 = vrcp.pop %v1564
  %v1583 = vrcp.pop %v1567
  %v1584 = vrcp.pop %v1570
  %v1585 = vrcp.pop %v1573
  %v1586 = vrcp.pop %v1576
  %v1587 = vrcp.pop %v1579
  %v1588 = vmul.f32 %v1541, %v1580
  %v1589 = vmul.f32 %v1543, %v1581
  %v1590 = vmul.f32 %v1545, %v1582
  %v1591 = vmul.f32 %v1547, %v1583
  %v1592 = vmul.f32 %v1549, %v1584
  %v1593 = vmul.f32 %v1551, %v1585
  %v1594 = vmul.f32 %v1553, %v1586
  %v1595 = vmul.f32 %v1555, %v1587
  %v1596 = vpack.c.bf16 %v1589, %v1588
  %v1597 = vpack.c.bf16 %v1591, %v1590
  %v1598 = vpack.c.bf16 %v1593, %v1592
  %v1599 = vpack.c.bf16 %v1595, %v1594
  %v1601 = vsel %vm1506, %v1596, 0
  %vm1603 = vcmask 1045504
  %v1605 = vsel %vm1603, %v1285, 0
  %1607 = vmatprep.subr.bf16.mxu0 0
  %1608 = vmatpush1.bf16.msra.mxu0 0
  %1609 = vmatprep.subr.bf16.mxu0 0
  %1610 = vmatpush1.bf16.msra.mxu0 0
  %1611 = vmatprep.subr.bf16.mxu0 0
  %1612 = vmatpush1.bf16.msra.mxu0 0
  %1613 = vmatprep.subr.bf16.mxu0 0
  %1614 = vmatpush1.bf16.msra.mxu0 0
  %1615 = vmatprep.subr.bf16.mxu0 0
  %1616 = vmatpush1.bf16.msra.mxu0 0
  %1617 = vmatprep.subr.bf16.mxu0 0
  %1618 = vmatpush1.bf16.msra.mxu0 0
  %1619 = vmatprep.subr.bf16.mxu0 0
  %1620 = vmatpush1.bf16.msra.mxu0 0
  %1621 = vmatprep.subr.bf16.mxu0 0
  %1622 = vmatpush1.bf16.msra.mxu0 %v1605
  %1623 = vmatprep.subr.bf16.mxu0 0
  %1624 = vmatpush2.bf16.msra.mxu0 0
  %1625 = vmatprep.subr.bf16.mxu0 0
  %1626 = vmatpush2.bf16.msra.mxu0 0
  %1627 = vmatprep.subr.bf16.mxu0 0
  %1628 = vmatpush2.bf16.msra.mxu0 0
  %1629 = vmatprep.subr.bf16.mxu0 0
  %1630 = vmatpush2.bf16.msra.mxu0 0
  %1631 = vmatprep.subr.bf16.mxu0 0
  %1632 = vmatpush2.bf16.msra.mxu0 0
  %1633 = vmatprep.subr.bf16.mxu0 0
  %1634 = vmatpush2.bf16.msra.mxu0 0
  %1635 = vmatprep.subr.bf16.mxu0 0
  %1636 = vmatpush2.bf16.msra.mxu0 0
  %1637 = vmatprep.subr.bf16.mxu0 0
  %1638 = vmatpush2.bf16.msra.mxu0 0
  %1639 = vmatprep.mubr.bf16.mxu0 0
  %1640 = vmatmul.mubr.bf16.gmra.mxu0 %v1601
  %v1641 = vpop.f32.mrf.mxu0
  %v1642 = vadd.f32 0.0, %v1641
  %v1643 = vpop.f32.mrf.mxu0
  %v1644 = vpop.f32.mrf.mxu0
  %v1645 = vadd.f32 0.0, %v1644
  %v1646 = vpop.f32.mrf.mxu0
  %1647 = vdwg.mxu0
  %v1649 = vsel %vm1506, %v1597, 0
  %v1652 = vsel %vm1603, %v1286, 0
  %1654 = vmatprep.subr.bf16.mxu0 0
  %1655 = vmatpush1.bf16.msra.mxu0 0
  %1656 = vmatprep.subr.bf16.mxu0 0
  %1657 = vmatpush1.bf16.msra.mxu0 0
  %1658 = vmatprep.subr.bf16.mxu0 0
  %1659 = vmatpush1.bf16.msra.mxu0 0
  %1660 = vmatprep.subr.bf16.mxu0 0
  %1661 = vmatpush1.bf16.msra.mxu0 0
  %1662 = vmatprep.subr.bf16.mxu0 0
  %1663 = vmatpush1.bf16.msra.mxu0 0
  %1664 = vmatprep.subr.bf16.mxu0 0
  %1665 = vmatpush1.bf16.msra.mxu0 0
  %1666 = vmatprep.subr.bf16.mxu0 0
  %1667 = vmatpush1.bf16.msra.mxu0 0
  %1668 = vmatprep.subr.bf16.mxu0 0
  %1669 = vmatpush1.bf16.msra.mxu0 %v1652
  %1670 = vmatprep.subr.bf16.mxu0 0
  %1671 = vmatpush2.bf16.msra.mxu0 0
  %1672 = vmatprep.subr.bf16.mxu0 0
  %1673 = vmatpush2.bf16.msra.mxu0 0
  %1674 = vmatprep.subr.bf16.mxu0 0
  %1675 = vmatpush2.bf16.msra.mxu0 0
  %1676 = vmatprep.subr.bf16.mxu0 0
  %1677 = vmatpush2.bf16.msra.mxu0 0
  %1678 = vmatprep.subr.bf16.mxu0 0
  %1679 = vmatpush2.bf16.msra.mxu0 0
  %1680 = vmatprep.subr.bf16.mxu0 0
  %1681 = vmatpush2.bf16.msra.mxu0 0
  %1682 = vmatprep.subr.bf16.mxu0 0
  %1683 = vmatpush2.bf16.msra.mxu0 0
  %1684 = vmatprep.subr.bf16.mxu0 0
  %1685 = vmatpush2.bf16.msra.mxu0 0
  %1686 = vmatprep.mubr.bf16.mxu0 0
  %1687 = vmatmul.mubr.bf16.gmra.mxu0 %v1649
  %v1688 = vpop.f32.mrf.mxu0
  %v1689 = vadd.f32 0.0, %v1688
  %v1690 = vpop.f32.mrf.mxu0
  %v1691 = vpop.f32.mrf.mxu0
  %v1692 = vadd.f32 0.0, %v1691
  %v1693 = vpop.f32.mrf.mxu0
  %1694 = vdwg.mxu0
  %v1696 = vsel %vm1506, %v1598, 0
  %v1699 = vsel %vm1603, %v1287, 0
  %1701 = vmatprep.subr.bf16.mxu0 0
  %1702 = vmatpush1.bf16.msra.mxu0 0
  %1703 = vmatprep.subr.bf16.mxu0 0
  %1704 = vmatpush1.bf16.msra.mxu0 0
  %1705 = vmatprep.subr.bf16.mxu0 0
  %1706 = vmatpush1.bf16.msra.mxu0 0
  %1707 = vmatprep.subr.bf16.mxu0 0
  %1708 = vmatpush1.bf16.msra.mxu0 0
  %1709 = vmatprep.subr.bf16.mxu0 0
  %1710 = vmatpush1.bf16.msra.mxu0 0
  %1711 = vmatprep.subr.bf16.mxu0 0
  %1712 = vmatpush1.bf16.msra.mxu0 0
  %1713 = vmatprep.subr.bf16.mxu0 0
  %1714 = vmatpush1.bf16.msra.mxu0 0
  %1715 = vmatprep.subr.bf16.mxu0 0
  %1716 = vmatpush1.bf16.msra.mxu0 %v1699
  %1717 = vmatprep.subr.bf16.mxu0 0
  %1718 = vmatpush2.bf16.msra.mxu0 0
  %1719 = vmatprep.subr.bf16.mxu0 0
  %1720 = vmatpush2.bf16.msra.mxu0 0
  %1721 = vmatprep.subr.bf16.mxu0 0
  %1722 = vmatpush2.bf16.msra.mxu0 0
  %1723 = vmatprep.subr.bf16.mxu0 0
  %1724 = vmatpush2.bf16.msra.mxu0 0
  %1725 = vmatprep.subr.bf16.mxu0 0
  %1726 = vmatpush2.bf16.msra.mxu0 0
  %1727 = vmatprep.subr.bf16.mxu0 0
  %1728 = vmatpush2.bf16.msra.mxu0 0
  %1729 = vmatprep.subr.bf16.mxu0 0
  %1730 = vmatpush2.bf16.msra.mxu0 0
  %1731 = vmatprep.subr.bf16.mxu0 0
  %1732 = vmatpush2.bf16.msra.mxu0 0
  %1733 = vmatprep.mubr.bf16.mxu0 0
  %1734 = vmatmul.mubr.bf16.gmra.mxu0 %v1696
  %v1735 = vpop.f32.mrf.mxu0
  %v1736 = vadd.f32 0.0, %v1735
  %v1737 = vpop.f32.mrf.mxu0
  %v1738 = vpop.f32.mrf.mxu0
  %v1739 = vadd.f32 0.0, %v1738
  %v1740 = vpop.f32.mrf.mxu0
  %1741 = vdwg.mxu0
  %v1743 = vsel %vm1506, %v1599, 0
  %v1746 = vsel %vm1603, %v1288, 0
  %1748 = vmatprep.subr.bf16.mxu0 0
  %1749 = vmatpush1.bf16.msra.mxu0 0
  %1750 = vmatprep.subr.bf16.mxu0 0
  %1751 = vmatpush1.bf16.msra.mxu0 0
  %1752 = vmatprep.subr.bf16.mxu0 0
  %1753 = vmatpush1.bf16.msra.mxu0 0
  %1754 = vmatprep.subr.bf16.mxu0 0
  %1755 = vmatpush1.bf16.msra.mxu0 0
  %1756 = vmatprep.subr.bf16.mxu0 0
  %1757 = vmatpush1.bf16.msra.mxu0 0
  %1758 = vmatprep.subr.bf16.mxu0 0
  %1759 = vmatpush1.bf16.msra.mxu0 0
  %1760 = vmatprep.subr.bf16.mxu0 0
  %1761 = vmatpush1.bf16.msra.mxu0 0
  %1762 = vmatprep.subr.bf16.mxu0 0
  %1763 = vmatpush1.bf16.msra.mxu0 %v1746
  %1764 = vmatprep.subr.bf16.mxu0 0
  %1765 = vmatpush2.bf16.msra.mxu0 0
  %1766 = vmatprep.subr.bf16.mxu0 0
  %1767 = vmatpush2.bf16.msra.mxu0 0
  %1768 = vmatprep.subr.bf16.mxu0 0
  %1769 = vmatpush2.bf16.msra.mxu0 0
  %1770 = vmatprep.subr.bf16.mxu0 0
  %1771 = vmatpush2.bf16.msra.mxu0 0
  %1772 = vmatprep.subr.bf16.mxu0 0
  %1773 = vmatpush2.bf16.msra.mxu0 0
  %1774 = vmatprep.subr.bf16.mxu0 0
  %1775 = vmatpush2.bf16.msra.mxu0 0
  %1776 = vmatprep.subr.bf16.mxu0 0
  %1777 = vmatpush2.bf16.msra.mxu0 0
  %1778 = vmatprep.subr.bf16.mxu0 0
  %1779 = vmatpush2.bf16.msra.mxu0 0
  %1780 = vmatprep.mubr.bf16.mxu0 0
  %1781 = vmatmul.mubr.bf16.gmra.mxu0 %v1743
  %v1782 = vpop.f32.mrf.mxu0
  %v1783 = vadd.f32 0.0, %v1782
  %v1784 = vpop.f32.mrf.mxu0
  %v1785 = vpop.f32.mrf.mxu0
  %v1786 = vadd.f32 0.0, %v1785
  %v1787 = vpop.f32.mrf.mxu0
  %1788 = vdwg.mxu0
  %v1789 = vpack.c.bf16 %v1645, %v1642
  %v1790 = vpack.c.bf16 %v1692, %v1689
  %v1793 = vunpack.c.l.b16 %v1235
  %v1794 = vunpack.c.l.b16 %v1236
  %v1795 = vpack.c.b16 %v1794, %v1793
  %v1798 = vsel %vm1292, %v1790, 0
  %1800 = vmatprep.subr.bf16.mxu0 0
  %1801 = vmatpush1.bf16.msra.mxu0 0
  %1802 = vmatprep.subr.bf16.mxu0 0
  %1803 = vmatpush1.bf16.msra.mxu0 0
  %1804 = vmatprep.subr.bf16.mxu0 0
  %1805 = vmatpush1.bf16.msra.mxu0 0
  %1806 = vmatprep.subr.bf16.mxu0 0
  %1807 = vmatpush1.bf16.msra.mxu0 0
  %1808 = vmatprep.subr.bf16.mxu0 0
  %1809 = vmatpush1.bf16.msra.mxu0 0
  %1810 = vmatprep.subr.bf16.mxu0 0
  %1811 = vmatpush1.bf16.msra.mxu0 0
  %1812 = vmatprep.subr.bf16.mxu0 0
  %1813 = vmatpush1.bf16.msra.mxu0 0
  %1814 = vmatprep.subr.bf16.mxu0 0
  %1815 = vmatpush1.bf16.msra.mxu0 %v1795
  %1816 = vmatprep.subr.bf16.mxu0 0
  %1817 = vmatpush2.bf16.msra.mxu0 0
  %1818 = vmatprep.subr.bf16.mxu0 0
  %1819 = vmatpush2.bf16.msra.mxu0 0
  %1820 = vmatprep.subr.bf16.mxu0 0
  %1821 = vmatpush2.bf16.msra.mxu0 0
  %1822 = vmatprep.subr.bf16.mxu0 0
  %1823 = vmatpush2.bf16.msra.mxu0 0
  %1824 = vmatprep.subr.bf16.mxu0 0
  %1825 = vmatpush2.bf16.msra.mxu0 0
  %1826 = vmatprep.subr.bf16.mxu0 0
  %1827 = vmatpush2.bf16.msra.mxu0 0
  %1828 = vmatprep.subr.bf16.mxu0 0
  %1829 = vmatpush2.bf16.msra.mxu0 0
  %1830 = vmatprep.subr.bf16.mxu0 0
  %1831 = vmatpush2.bf16.msra.mxu0 0
  %1832 = vmatprep.mubr.bf16.mxu0 0
  %1833 = vmatmul.mubr.bf16.gmra.mxu0 %v1798
  %v1834 = vpop.f32.mrf.mxu0
  %v1835 = vadd.f32 0.0, %v1834
  %v1836 = vpop.f32.mrf.mxu0
  %v1837 = vpop.f32.mrf.mxu0
  %v1838 = vadd.f32 0.0, %v1837
  %v1839 = vpop.f32.mrf.mxu0
  %1840 = vdwg.mxu0
  %v1843 = vunpack.c.l.b16 %v1233
  %v1844 = vunpack.c.l.b16 %v1234
  %v1845 = vpack.c.b16 %v1844, %v1843
  %v1848 = vsel %vm1292, %v1789, 0
  %1850 = vmatprep.subr.bf16.mxu0 0
  %1851 = vmatpush1.bf16.msra.mxu0 0
  %1852 = vmatprep.subr.bf16.mxu0 0
  %1853 = vmatpush1.bf16.msra.mxu0 0
  %1854 = vmatprep.subr.bf16.mxu0 0
  %1855 = vmatpush1.bf16.msra.mxu0 0
  %1856 = vmatprep.subr.bf16.mxu0 0
  %1857 = vmatpush1.bf16.msra.mxu0 0
  %1858 = vmatprep.subr.bf16.mxu0 0
  %1859 = vmatpush1.bf16.msra.mxu0 0
  %1860 = vmatprep.subr.bf16.mxu0 0
  %1861 = vmatpush1.bf16.msra.mxu0 0
  %1862 = vmatprep.subr.bf16.mxu0 0
  %1863 = vmatpush1.bf16.msra.mxu0 0
  %1864 = vmatprep.subr.bf16.mxu0 0
  %1865 = vmatpush1.bf16.msra.mxu0 %v1845
  %1866 = vmatprep.subr.bf16.mxu0 0
  %1867 = vmatpush2.bf16.msra.mxu0 0
  %1868 = vmatprep.subr.bf16.mxu0 0
  %1869 = vmatpush2.bf16.msra.mxu0 0
  %1870 = vmatprep.subr.bf16.mxu0 0
  %1871 = vmatpush2.bf16.msra.mxu0 0
  %1872 = vmatprep.subr.bf16.mxu0 0
  %1873 = vmatpush2.bf16.msra.mxu0 0
  %1874 = vmatprep.subr.bf16.mxu0 0
  %1875 = vmatpush2.bf16.msra.mxu0 0
  %1876 = vmatprep.subr.bf16.mxu0 0
  %1877 = vmatpush2.bf16.msra.mxu0 0
  %1878 = vmatprep.subr.bf16.mxu0 0
  %1879 = vmatpush2.bf16.msra.mxu0 0
  %1880 = vmatprep.subr.bf16.mxu0 0
  %1881 = vmatpush2.bf16.msra.mxu0 0
  %1882 = vmatprep.mubr.bf16.mxu0 0
  %1883 = vmatmul.mubr.bf16.gmra.mxu0 %v1848
  %v1884 = vpop.f32.mrf.mxu0
  %v1885 = vadd.f32 %v1835, %v1884
  %v1886 = vpop.f32.mrf.mxu0
  %v1887 = vpop.f32.mrf.mxu0
  %v1888 = vadd.f32 %v1838, %v1887
  %v1889 = vpop.f32.mrf.mxu0
  %1890 = vdwg.mxu0
  %v1891 = vpack.c.bf16 %v1739, %v1736
  %v1894 = vunpack.c.l.b16 %v1237
  %v1895 = vunpack.c.l.b16 %v1238
  %v1896 = vpack.c.b16 %v1895, %v1894
  %v1899 = vsel %vm1292, %v1891, 0
  %1901 = vmatprep.subr.bf16.mxu0 0
  %1902 = vmatpush1.bf16.msra.mxu0 0
  %1903 = vmatprep.subr.bf16.mxu0 0
  %1904 = vmatpush1.bf16.msra.mxu0 0
  %1905 = vmatprep.subr.bf16.mxu0 0
  %1906 = vmatpush1.bf16.msra.mxu0 0
  %1907 = vmatprep.subr.bf16.mxu0 0
  %1908 = vmatpush1.bf16.msra.mxu0 0
  %1909 = vmatprep.subr.bf16.mxu0 0
  %1910 = vmatpush1.bf16.msra.mxu0 0
  %1911 = vmatprep.subr.bf16.mxu0 0
  %1912 = vmatpush1.bf16.msra.mxu0 0
  %1913 = vmatprep.subr.bf16.mxu0 0
  %1914 = vmatpush1.bf16.msra.mxu0 0
  %1915 = vmatprep.subr.bf16.mxu0 0
  %1916 = vmatpush1.bf16.msra.mxu0 %v1896
  %1917 = vmatprep.subr.bf16.mxu0 0
  %1918 = vmatpush2.bf16.msra.mxu0 0
  %1919 = vmatprep.subr.bf16.mxu0 0
  %1920 = vmatpush2.bf16.msra.mxu0 0
  %1921 = vmatprep.subr.bf16.mxu0 0
  %1922 = vmatpush2.bf16.msra.mxu0 0
  %1923 = vmatprep.subr.bf16.mxu0 0
  %1924 = vmatpush2.bf16.msra.mxu0 0
  %1925 = vmatprep.subr.bf16.mxu0 0
  %1926 = vmatpush2.bf16.msra.mxu0 0
  %1927 = vmatprep.subr.bf16.mxu0 0
  %1928 = vmatpush2.bf16.msra.mxu0 0
  %1929 = vmatprep.subr.bf16.mxu0 0
  %1930 = vmatpush2.bf16.msra.mxu0 0
  %1931 = vmatprep.subr.bf16.mxu0 0
  %1932 = vmatpush2.bf16.msra.mxu0 0
  %1933 = vmatprep.mubr.bf16.mxu0 0
  %1934 = vmatmul.mubr.bf16.gmra.mxu0 %v1899
  %v1935 = vpop.f32.mrf.mxu0
  %v1936 = vadd.f32 0.0, %v1935
  %v1937 = vpop.f32.mrf.mxu0
  %v1938 = vpop.f32.mrf.mxu0
  %v1939 = vadd.f32 0.0, %v1938
  %v1940 = vpop.f32.mrf.mxu0
  %1941 = vdwg.mxu0
  %v1942 = vadd.f32 %v1885, %v1936
  %v1943 = vadd.f32 %v1888, %v1939
  %v1944 = vpack.c.bf16 %v1786, %v1783
  %v1947 = vunpack.c.l.b16 %v1239
  %v1948 = vunpack.c.l.b16 %v1240
  %v1949 = vpack.c.b16 %v1948, %v1947
  %v1952 = vsel %vm1292, %v1944, 0
  %1954 = vmatprep.subr.bf16.mxu0 0
  %1955 = vmatpush1.bf16.msra.mxu0 0
  %1956 = vmatprep.subr.bf16.mxu0 0
  %1957 = vmatpush1.bf16.msra.mxu0 0
  %1958 = vmatprep.subr.bf16.mxu0 0
  %1959 = vmatpush1.bf16.msra.mxu0 0
  %1960 = vmatprep.subr.bf16.mxu0 0
  %1961 = vmatpush1.bf16.msra.mxu0 0
  %1962 = vmatprep.subr.bf16.mxu0 0
  %1963 = vmatpush1.bf16.msra.mxu0 0
  %1964 = vmatprep.subr.bf16.mxu0 0
  %1965 = vmatpush1.bf16.msra.mxu0 0
  %1966 = vmatprep.subr.bf16.mxu0 0
  %1967 = vmatpush1.bf16.msra.mxu0 0
  %1968 = vmatprep.subr.bf16.mxu0 0
  %1969 = vmatpush1.bf16.msra.mxu0 %v1949
  %1970 = vmatprep.subr.bf16.mxu0 0
  %1971 = vmatpush2.bf16.msra.mxu0 0
  %1972 = vmatprep.subr.bf16.mxu0 0
  %1973 = vmatpush2.bf16.msra.mxu0 0
  %1974 = vmatprep.subr.bf16.mxu0 0
  %1975 = vmatpush2.bf16.msra.mxu0 0
  %1976 = vmatprep.subr.bf16.mxu0 0
  %1977 = vmatpush2.bf16.msra.mxu0 0
  %1978 = vmatprep.subr.bf16.mxu0 0
  %1979 = vmatpush2.bf16.msra.mxu0 0
  %1980 = vmatprep.subr.bf16.mxu0 0
  %1981 = vmatpush2.bf16.msra.mxu0 0
  %1982 = vmatprep.subr.bf16.mxu0 0
  %1983 = vmatpush2.bf16.msra.mxu0 0
  %1984 = vmatprep.subr.bf16.mxu0 0
  %1985 = vmatpush2.bf16.msra.mxu0 0
  %1986 = vmatprep.mubr.bf16.mxu0 0
  %1987 = vmatmul.mubr.bf16.gmra.mxu0 %v1952
  %v1988 = vpop.f32.mrf.mxu0
  %v1989 = vadd.f32 0.0, %v1988
  %v1990 = vpop.f32.mrf.mxu0
  %v1991 = vpop.f32.mrf.mxu0
  %v1992 = vadd.f32 0.0, %v1991
  %v1993 = vpop.f32.mrf.mxu0
  %1994 = vdwg.mxu0
  %v1995 = vadd.f32 %v1942, %v1989
  %v1996 = vadd.f32 %v1943, %v1992
  %v1997 = vadd.f32 %v1075, %v1995
  %v1998 = vadd.f32 %v1076, %v1996
  %v1999 = vld [vmem:[%s12] sm:$0x1]
  %v2001 = vlaneseq
  %v2002 = vshrl.u32 %v2001, 7
  %v2003 = vsub.s32 0, %v2002
  %v2004 = vrot.slane %v1999, %v2003
  %v2006 = vadd.f32 %v1997, %v2004
  %v2007 = vadd.f32 %v1998, %v2004
  %v2008 = vld [vmem:[%s13] sm:$0x1]
  %v2009 = vld [vmem:[%s14] sm:$0x1]
  %v2010 = vsel %vm1081, %v2006, 0.0
  %2011 = vadd.xlane.f32.xlu0 %v2010
  %v2012 = vpop.xlane.xlu0 %2011
  %v2013 = vsel %vm1085, %v2007, 0.0
  %2014 = vadd.xlane.f32.xlu0 %v2013
  %v2015 = vpop.xlane.xlu0 %2014
  %v2016 = vmul.f32 %v2012, %v1089
  %v2017 = vmul.f32 %v2015, %v1089
  %v2018 = vsub.f32 %v2006, %v2016
  %v2019 = vsub.f32 %v2007, %v2017
  %v2020 = vmul.f32 %v2018, %v2018
  %v2021 = vmul.f32 %v2019, %v2019
  %v2022 = vsel %vm1081, %v2020, 0.0
  %2023 = vadd.xlane.f32.xlu0 %v2022
  %v2024 = vpop.xlane.xlu0 %2023
  %v2025 = vsel %vm1085, %v2021, 0.0
  %2026 = vadd.xlane.f32.xlu0 %v2025
  %v2027 = vpop.xlane.xlu0 %2026
  %v2028 = vmul.f32 %v2024, %v1089
  %v2029 = vmul.f32 %v2027, %v1089
  %v2030 = vadd.f32 %v2028, 1e-06
  %v2031 = vadd.f32 %v2029, 1e-06
  %v2032 = vrsqrt.pop %v2030
  %v2033 = vrsqrt.pop %v2031
  %v2034 = vmul.f32 %v2018, %v2032
  %v2035 = vmul.f32 %v2019, %v2033
  %v2037 = vlaneseq
  %v2038 = vshrl.u32 %v2037, 7
  %v2039 = vsub.s32 0, %v2038
  %v2040 = vrot.slane %v2008, %v2039
  %v2042 = vmul.f32 %v2034, %v2040
  %v2043 = vmul.f32 %v2035, %v2040
  %v2045 = vlaneseq
  %v2046 = vshrl.u32 %v2045, 7
  %v2047 = vsub.s32 0, %v2046
  %v2048 = vrot.slane %v2009, %v2047
  %v2050 = vadd.f32 %v2042, %v2048
  %v2051 = vadd.f32 %v2043, %v2048
  %v2052 = vpack.c.bf16 %v2051, %v2050
  %v2053 = vld [vmem:[%s15] sm:$0xf]
  %v2054 = vld [vmem:[%s15 + $0x4] sm:$0xf]
  %v2055 = vld [vmem:[%s15 + $0x8] sm:$0xf]
  %v2056 = vld [vmem:[%s15 + $0xc] sm:$0xf]
  %v2057 = vld [vmem:[%s15 + $0x10] sm:$0xf]
  %v2058 = vld [vmem:[%s15 + $0x14] sm:$0xf]
  %v2059 = vld [vmem:[%s15 + $0x18] sm:$0xf]
  %v2060 = vld [vmem:[%s15 + $0x1c] sm:$0xf]
  %v2061 = vld [vmem:[%s16] sm:$0x1]
  %v2063 = vlaneseq
  %v2064 = vshrl.u32 %v2063, 7
  %v2065 = vsub.s32 0, %v2064
  %v2066 = vrot.slane %v2061, %v2065
  %v2076 = vunpack.c.l.b16 %v2053
  %v2077 = vunpack.c.l.b16 %v2054
  %v2078 = vunpack.c.l.b16 %v2055
  %v2079 = vunpack.c.l.b16 %v2056
  %v2080 = vunpack.c.l.b16 %v2057
  %v2081 = vunpack.c.l.b16 %v2058
  %v2082 = vunpack.c.l.b16 %v2059
  %v2083 = vunpack.c.l.b16 %v2060
  %v2084 = vpack.c.b16 %v2077, %v2076
  %v2085 = vpack.c.b16 %v2079, %v2078
  %v2086 = vpack.c.b16 %v2081, %v2080
  %v2087 = vpack.c.b16 %v2083, %v2082
  %v2093 = vsel %vm1081, %v2052, 0
  %2095 = vmatprep.subr.bf16.mxu0 0
  %2096 = vmatpush1.bf16.msra.mxu0 0
  %2097 = vmatprep.subr.bf16.mxu0 0
  %2098 = vmatpush1.bf16.msra.mxu0 0
  %2099 = vmatprep.subr.bf16.mxu0 0
  %2100 = vmatpush1.bf16.msra.mxu0 0
  %2101 = vmatprep.subr.bf16.mxu0 0
  %2102 = vmatpush1.bf16.msra.mxu0 0
  %2103 = vmatprep.subr.bf16.mxu0 0
  %2104 = vmatpush1.bf16.msra.mxu0 %v2087
  %2105 = vmatprep.subr.bf16.mxu0 0
  %2106 = vmatpush1.bf16.msra.mxu0 %v2086
  %2107 = vmatprep.subr.bf16.mxu0 0
  %2108 = vmatpush1.bf16.msra.mxu0 %v2085
  %2109 = vmatprep.subr.bf16.mxu0 0
  %2110 = vmatpush1.bf16.msra.mxu0 %v2084
  %2111 = vmatprep.subr.bf16.mxu0 0
  %2112 = vmatpush2.bf16.msra.mxu0 0
  %2113 = vmatprep.subr.bf16.mxu0 0
  %2114 = vmatpush2.bf16.msra.mxu0 0
  %2115 = vmatprep.subr.bf16.mxu0 0
  %2116 = vmatpush2.bf16.msra.mxu0 0
  %2117 = vmatprep.subr.bf16.mxu0 0
  %2118 = vmatpush2.bf16.msra.mxu0 0
  %2119 = vmatprep.subr.bf16.mxu0 0
  %2120 = vmatpush2.bf16.msra.mxu0 0
  %2121 = vmatprep.subr.bf16.mxu0 0
  %2122 = vmatpush2.bf16.msra.mxu0 0
  %2123 = vmatprep.subr.bf16.mxu0 0
  %2124 = vmatpush2.bf16.msra.mxu0 0
  %2125 = vmatprep.subr.bf16.mxu0 0
  %2126 = vmatpush2.bf16.msra.mxu0 0
  %2127 = vmatprep.mubr.bf16.mxu0 0
  %2128 = vmatmul.mubr.bf16.gmra.mxu0 %v2093
  %v2129 = vpop.f32.mrf.mxu0
  %v2130 = vadd.f32 %v2066, %v2129
  %v2131 = vpop.f32.mrf.mxu0
  %v2132 = vpop.f32.mrf.mxu0
  %v2133 = vadd.f32 %v2066, %v2132
  %v2134 = vpop.f32.mrf.mxu0
  %2135 = vdwg.mxu0
  %v2136 = vmax.f32 %v2130, 0.0
  %v2137 = vmax.f32 %v2133, 0.0
  %v2138 = vpack.c.bf16 %v2137, %v2136
  %v2139 = vld [vmem:[%s17] sm:$0xf]
  %v2140 = vld [vmem:[%s17 + $0x4] sm:$0xf]
  %v2141 = vld [vmem:[%s17 + $0x8] sm:$0xf]
  %v2142 = vld [vmem:[%s17 + $0xc] sm:$0xf]
  %v2143 = vld [vmem:[%s17 + $0x10] sm:$0xf]
  %v2144 = vld [vmem:[%s17 + $0x14] sm:$0xf]
  %v2145 = vld [vmem:[%s17 + $0x18] sm:$0xf]
  %v2146 = vld [vmem:[%s17 + $0x1c] sm:$0xf]
  %v2155 = vunpack.c.l.b16 %v2139
  %v2156 = vunpack.c.l.b16 %v2140
  %v2157 = vunpack.c.l.b16 %v2141
  %v2158 = vunpack.c.l.b16 %v2142
  %v2159 = vunpack.c.l.b16 %v2143
  %v2160 = vunpack.c.l.b16 %v2144
  %v2161 = vunpack.c.l.b16 %v2145
  %v2162 = vunpack.c.l.b16 %v2146
  %v2163 = vpack.c.b16 %v2156, %v2155
  %v2164 = vpack.c.b16 %v2158, %v2157
  %v2165 = vpack.c.b16 %v2160, %v2159
  %v2166 = vpack.c.b16 %v2162, %v2161
  %v2172 = vsel %vm1081, %v2138, 0
  %2174 = vmatprep.subr.bf16.mxu0 0
  %2175 = vmatpush1.bf16.msra.mxu0 0
  %2176 = vmatprep.subr.bf16.mxu0 0
  %2177 = vmatpush1.bf16.msra.mxu0 0
  %2178 = vmatprep.subr.bf16.mxu0 0
  %2179 = vmatpush1.bf16.msra.mxu0 0
  %2180 = vmatprep.subr.bf16.mxu0 0
  %2181 = vmatpush1.bf16.msra.mxu0 0
  %2182 = vmatprep.subr.bf16.mxu0 0
  %2183 = vmatpush1.bf16.msra.mxu0 %v2166
  %2184 = vmatprep.subr.bf16.mxu0 0
  %2185 = vmatpush1.bf16.msra.mxu0 %v2165
  %2186 = vmatprep.subr.bf16.mxu0 0
  %2187 = vmatpush1.bf16.msra.mxu0 %v2164
  %2188 = vmatprep.subr.bf16.mxu0 0
  %2189 = vmatpush1.bf16.msra.mxu0 %v2163
  %2190 = vmatprep.subr.bf16.mxu0 0
  %2191 = vmatpush2.bf16.msra.mxu0 0
  %2192 = vmatprep.subr.bf16.mxu0 0
  %2193 = vmatpush2.bf16.msra.mxu0 0
  %2194 = vmatprep.subr.bf16.mxu0 0
  %2195 = vmatpush2.bf16.msra.mxu0 0
  %2196 = vmatprep.subr.bf16.mxu0 0
  %2197 = vmatpush2.bf16.msra.mxu0 0
  %2198 = vmatprep.subr.bf16.mxu0 0
  %2199 = vmatpush2.bf16.msra.mxu0 0
  %2200 = vmatprep.subr.bf16.mxu0 0
  %2201 = vmatpush2.bf16.msra.mxu0 0
  %2202 = vmatprep.subr.bf16.mxu0 0
  %2203 = vmatpush2.bf16.msra.mxu0 0
  %2204 = vmatprep.subr.bf16.mxu0 0
  %2205 = vmatpush2.bf16.msra.mxu0 0
  %2206 = vmatprep.mubr.bf16.mxu0 0
  %2207 = vmatmul.mubr.bf16.gmra.mxu0 %v2172
  %v2208 = vpop.f32.mrf.mxu0
  %v2209 = vadd.f32 0.0, %v2208
  %v2210 = vpop.f32.mrf.mxu0
  %v2211 = vpop.f32.mrf.mxu0
  %v2212 = vadd.f32 0.0, %v2211
  %v2213 = vpop.f32.mrf.mxu0
  %2214 = vdwg.mxu0
  %v2215 = vadd.f32 %v2006, %v2209
  %v2216 = vadd.f32 %v2007, %v2212
  %v2217 = vld [vmem:[%s18] sm:$0x1]
  %v2219 = vlaneseq
  %v2220 = vshrl.u32 %v2219, 7
  %v2221 = vsub.s32 0, %v2220
  %v2222 = vrot.slane %v2217, %v2221
  %v2224 = vadd.f32 %v2215, %v2222
  %v2225 = vadd.f32 %v2216, %v2222
  %s2226 = scalar_lea.vmem %s7, 1
  %v2227 = vld [vmem:[%s2226] sm:$0x1]
  %s2228 = scalar_lea.vmem %s8, 1
  %v2229 = vld [vmem:[%s2228] sm:$0x1]
  %v2230 = vsel %vm1081, %v2224, 0.0
  %2231 = vadd.xlane.f32.xlu0 %v2230
  %v2232 = vpop.xlane.xlu0 %2231
  %v2233 = vsel %vm1085, %v2225, 0.0
  %2234 = vadd.xlane.f32.xlu0 %v2233
  %v2235 = vpop.xlane.xlu0 %2234
  %v2236 = vmul.f32 %v2232, %v1089
  %v2237 = vmul.f32 %v2235, %v1089
  %v2238 = vsub.f32 %v2224, %v2236
  %v2239 = vsub.f32 %v2225, %v2237
  %v2240 = vmul.f32 %v2238, %v2238
  %v2241 = vmul.f32 %v2239, %v2239
  %v2242 = vsel %vm1081, %v2240, 0.0
  %2243 = vadd.xlane.f32.xlu0 %v2242
  %v2244 = vpop.xlane.xlu0 %2243
  %v2245 = vsel %vm1085, %v2241, 0.0
  %2246 = vadd.xlane.f32.xlu0 %v2245
  %v2247 = vpop.xlane.xlu0 %2246
  %v2248 = vmul.f32 %v2244, %v1089
  %v2249 = vmul.f32 %v2247, %v1089
  %v2250 = vadd.f32 %v2248, 1e-06
  %v2251 = vadd.f32 %v2249, 1e-06
  %v2252 = vrsqrt.pop %v2250
  %v2253 = vrsqrt.pop %v2251
  %v2254 = vmul.f32 %v2238, %v2252
  %v2255 = vmul.f32 %v2239, %v2253
  %v2257 = vlaneseq
  %v2258 = vshrl.u32 %v2257, 7
  %v2259 = vsub.s32 0, %v2258
  %v2260 = vrot.slane %v2227, %v2259
  %v2262 = vmul.f32 %v2254, %v2260
  %v2263 = vmul.f32 %v2255, %v2260
  %v2265 = vlaneseq
  %v2266 = vshrl.u32 %v2265, 7
  %v2267 = vsub.s32 0, %v2266
  %v2268 = vrot.slane %v2229, %v2267
  %v2270 = vadd.f32 %v2262, %v2268
  %v2271 = vadd.f32 %v2263, %v2268
  %v2272 = vpack.c.bf16 %v2271, %v2270
  %s2273 = scalar_lea.vmem %s9, 64
  %v2274 = vld [vmem:[%s2273] sm:$0xff]
  %v2275 = vld [vmem:[%s2273 + $0x8] sm:$0xff]
  %v2276 = vld [vmem:[%s2273 + $0x10] sm:$0xff]
  %v2277 = vld [vmem:[%s2273 + $0x18] sm:$0xff]
  %v2278 = vld [vmem:[%s2273 + $0x20] sm:$0xff]
  %v2279 = vld [vmem:[%s2273 + $0x28] sm:$0xff]
  %v2280 = vld [vmem:[%s2273 + $0x30] sm:$0xff]
  %v2281 = vld [vmem:[%s2273 + $0x38] sm:$0xff]
  %s2282 = scalar_lea.vmem %s10, 2
  %v2283 = vld [vmem:[%s2282] sm:$0x3]
  %v2285 = vlaneseq
  %v2286 = vshrl.u32 %v2285, 7
  %v2287 = vsub.s32 0, %v2286
  %v2288 = vrot.slane %v2283, %v2287
  %v2289 = vlaneseq
  %v2290 = vshrl.u32 %v2289, 7
  %v2291 = vsub.s32 1, %v2290
  %v2292 = vrot.slane %v2283, %v2291
  %v2303 = vunpack.c.l.b16 %v2274
  %v2304 = vunpack.c.h.b16 %v2274
  %v2305 = vunpack.c.l.b16 %v2275
  %v2306 = vunpack.c.h.b16 %v2275
  %v2307 = vunpack.c.l.b16 %v2276
  %v2308 = vunpack.c.h.b16 %v2276
  %v2309 = vunpack.c.l.b16 %v2277
  %v2310 = vunpack.c.h.b16 %v2277
  %v2311 = vunpack.c.l.b16 %v2278
  %v2312 = vunpack.c.h.b16 %v2278
  %v2313 = vunpack.c.l.b16 %v2279
  %v2314 = vunpack.c.h.b16 %v2279
  %v2315 = vunpack.c.l.b16 %v2280
  %v2316 = vunpack.c.h.b16 %v2280
  %v2317 = vunpack.c.l.b16 %v2281
  %v2318 = vunpack.c.h.b16 %v2281
  %v2319 = vpack.c.b16 %v2305, %v2303
  %v2320 = vpack.c.b16 %v2306, %v2304
  %v2321 = vpack.c.b16 %v2309, %v2307
  %v2322 = vpack.c.b16 %v2310, %v2308
  %v2323 = vpack.c.b16 %v2313, %v2311
  %v2324 = vpack.c.b16 %v2314, %v2312
  %v2325 = vpack.c.b16 %v2317, %v2315
  %v2326 = vpack.c.b16 %v2318, %v2316
  %v2336 = vsel %vm1081, %v2272, 0
  %2338 = vmatprep.subr.bf16.mxu0 0
  %2339 = vmatpush1.bf16.msra.mxu0 0
  %2340 = vmatprep.subr.bf16.mxu0 0
  %2341 = vmatpush1.bf16.msra.mxu0 0
  %2342 = vmatprep.subr.bf16.mxu0 0
  %2343 = vmatpush1.bf16.msra.mxu0 0
  %2344 = vmatprep.subr.bf16.mxu0 0
  %2345 = vmatpush1.bf16.msra.mxu0 0
  %2346 = vmatprep.subr.bf16.mxu0 %v2326
  %2347 = vmatpush1.bf16.msra.mxu0 %v2325
  %2348 = vmatprep.subr.bf16.mxu0 %v2324
  %2349 = vmatpush1.bf16.msra.mxu0 %v2323
  %2350 = vmatprep.subr.bf16.mxu0 %v2322
  %2351 = vmatpush1.bf16.msra.mxu0 %v2321
  %2352 = vmatprep.subr.bf16.mxu0 %v2320
  %2353 = vmatpush1.bf16.msra.mxu0 %v2319
  %2354 = vmatprep.subr.bf16.mxu0 0
  %2355 = vmatpush2.bf16.msra.mxu0 0
  %2356 = vmatprep.subr.bf16.mxu0 0
  %2357 = vmatpush2.bf16.msra.mxu0 0
  %2358 = vmatprep.subr.bf16.mxu0 0
  %2359 = vmatpush2.bf16.msra.mxu0 0
  %2360 = vmatprep.subr.bf16.mxu0 0
  %2361 = vmatpush2.bf16.msra.mxu0 0
  %2362 = vmatprep.subr.bf16.mxu0 0
  %2363 = vmatpush2.bf16.msra.mxu0 0
  %2364 = vmatprep.subr.bf16.mxu0 0
  %2365 = vmatpush2.bf16.msra.mxu0 0
  %2366 = vmatprep.subr.bf16.mxu0 0
  %2367 = vmatpush2.bf16.msra.mxu0 0
  %2368 = vmatprep.subr.bf16.mxu0 0
  %2369 = vmatpush2.bf16.msra.mxu0 0
  %2370 = vmatprep.mubr.bf16.mxu0 0
  %2371 = vmatmul.mubr.bf16.gmra.mxu0 %v2336
  %v2372 = vpop.f32.mrf.mxu0
  %v2373 = vadd.f32 %v2288, %v2372
  %v2374 = vpop.f32.mrf.mxu0
  %v2375 = vadd.f32 %v2292, %v2374
  %v2376 = vpop.f32.mrf.mxu0
  %v2377 = vadd.f32 %v2288, %v2376
  %v2378 = vpop.f32.mrf.mxu0
  %v2379 = vadd.f32 %v2292, %v2378
  %2380 = vdwg.mxu0
  %s2381 = scalar_lea.vmem %s11, 32
  %v2382 = vld [vmem:[%s2381] sm:$0xf]
  %v2383 = vld [vmem:[%s2381 + $0x4] sm:$0xf]
  %v2384 = vld [vmem:[%s2381 + $0x8] sm:$0xf]
  %v2385 = vld [vmem:[%s2381 + $0xc] sm:$0xf]
  %v2386 = vld [vmem:[%s2381 + $0x10] sm:$0xf]
  %v2387 = vld [vmem:[%s2381 + $0x14] sm:$0xf]
  %v2388 = vld [vmem:[%s2381 + $0x18] sm:$0xf]
  %v2389 = vld [vmem:[%s2381 + $0x1c] sm:$0xf]
  %2392 = vrot.lane.b32.xlu0 %v2373, 112
  %v2393 = vpop.permute.xlu0 %2392
  %2394 = vrot.lane.b32.xlu0 %v2377, 112
  %v2395 = vpop.permute.xlu0 %2394
  %2398 = vrot.lane.b32.xlu0 %v2373, 96
  %v2399 = vpop.permute.xlu0 %2398
  %2400 = vrot.lane.b32.xlu0 %v2377, 96
  %v2401 = vpop.permute.xlu0 %2400
  %2404 = vrot.lane.b32.xlu0 %v2373, 80
  %v2405 = vpop.permute.xlu0 %2404
  %2406 = vrot.lane.b32.xlu0 %v2377, 80
  %v2407 = vpop.permute.xlu0 %2406
  %v2410 = vpack.c.bf16 %v2377, %v2373
  %v2411 = vpack.c.bf16 %v2395, %v2393
  %v2412 = vpack.c.bf16 %v2401, %v2399
  %v2413 = vpack.c.bf16 %v2407, %v2405
  %2416 = vrot.lane.b32.xlu0 %v2375, 112
  %v2417 = vpop.permute.xlu0 %2416
  %2418 = vrot.lane.b32.xlu0 %v2379, 112
  %v2419 = vpop.permute.xlu0 %2418
  %2422 = vrot.lane.b32.xlu0 %v2375, 96
  %v2423 = vpop.permute.xlu0 %2422
  %2424 = vrot.lane.b32.xlu0 %v2379, 96
  %v2425 = vpop.permute.xlu0 %2424
  %2428 = vrot.lane.b32.xlu0 %v2375, 80
  %v2429 = vpop.permute.xlu0 %2428
  %2430 = vrot.lane.b32.xlu0 %v2379, 80
  %v2431 = vpop.permute.xlu0 %2430
  %v2434 = vpack.c.bf16 %v2379, %v2375
  %v2435 = vpack.c.bf16 %v2419, %v2417
  %v2436 = vpack.c.bf16 %v2425, %v2423
  %v2437 = vpack.c.bf16 %v2431, %v2429
  %2439 = vrot.lane.b32.xlu0 %v2410, 64
  %v2440 = vpop.permute.xlu0 %2439
  %v2442 = vsel %vm1292, %v2410, 0
  %v2445 = vsel %vm1292, %v2440, 0
  %2447 = vmatprep.subr.bf16.mxu0 0
  %2448 = vmatpush1.bf16.xpose.msra.mxu0 0
  %2449 = vmatprep.subr.bf16.mxu0 0
  %2450 = vmatpush1.bf16.xpose.msra.mxu0 0
  %2451 = vmatprep.subr.bf16.mxu0 0
  %2452 = vmatpush1.bf16.xpose.msra.mxu0 0
  %2453 = vmatprep.subr.bf16.mxu0 0
  %2454 = vmatpush1.bf16.xpose.msra.mxu0 0
  %2455 = vmatprep.subr.bf16.mxu0 0
  %2456 = vmatpush1.bf16.xpose.msra.mxu0 0
  %2457 = vmatprep.subr.bf16.mxu0 0
  %2458 = vmatpush1.bf16.xpose.msra.mxu0 0
  %2459 = vmatprep.subr.bf16.mxu0 0
  %2460 = vmatpush1.bf16.xpose.msra.mxu0 0
  %2461 = vmatprep.subr.bf16.mxu0 0
  %2462 = vmatpush1.bf16.xpose.msra.mxu0 %v2445
  %2463 = vmatprep.subr.bf16.mxu0 0
  %2464 = vmatpush2.bf16.xpose.msra.mxu0 0
  %2465 = vmatprep.subr.bf16.mxu0 0
  %2466 = vmatpush2.bf16.xpose.msra.mxu0 0
  %2467 = vmatprep.subr.bf16.mxu0 0
  %2468 = vmatpush2.bf16.xpose.msra.mxu0 0
  %2469 = vmatprep.subr.bf16.mxu0 0
  %2470 = vmatpush2.bf16.xpose.msra.mxu0 0
  %2471 = vmatprep.subr.bf16.mxu0 0
  %2472 = vmatpush2.bf16.xpose.msra.mxu0 0
  %2473 = vmatprep.subr.bf16.mxu0 0
  %2474 = vmatpush2.bf16.xpose.msra.mxu0 0
  %2475 = vmatprep.subr.bf16.mxu0 0
  %2476 = vmatpush2.bf16.xpose.msra.mxu0 0
  %2477 = vmatprep.subr.bf16.mxu0 0
  %2478 = vmatpush2.bf16.xpose.msra.mxu0 0
  %2479 = vmatprep.mubr.bf16.mxu0 0
  %2480 = vmatmul.mubr.bf16.gmra.mxu0 %v2442
  %v2481 = vpop.f32.mrf.mxu0
  %v2482 = vadd.f32 0.0, %v2481
  %v2483 = vpop.f32.mrf.mxu0
  %v2484 = vpop.f32.mrf.mxu0
  %v2485 = vadd.f32 0.0, %v2484
  %v2486 = vpop.f32.mrf.mxu0
  %2487 = vdwg.mxu0
  %2489 = vrot.lane.b32.xlu0 %v2411, 64
  %v2490 = vpop.permute.xlu0 %2489
  %v2492 = vsel %vm1292, %v2411, 0
  %v2495 = vsel %vm1292, %v2490, 0
  %2497 = vmatprep.subr.bf16.mxu0 0
  %2498 = vmatpush1.bf16.xpose.msra.mxu0 0
  %2499 = vmatprep.subr.bf16.mxu0 0
  %2500 = vmatpush1.bf16.xpose.msra.mxu0 0
  %2501 = vmatprep.subr.bf16.mxu0 0
  %2502 = vmatpush1.bf16.xpose.msra.mxu0 0
  %2503 = vmatprep.subr.bf16.mxu0 0
  %2504 = vmatpush1.bf16.xpose.msra.mxu0 0
  %2505 = vmatprep.subr.bf16.mxu0 0
  %2506 = vmatpush1.bf16.xpose.msra.mxu0 0
  %2507 = vmatprep.subr.bf16.mxu0 0
  %2508 = vmatpush1.bf16.xpose.msra.mxu0 0
  %2509 = vmatprep.subr.bf16.mxu0 0
  %2510 = vmatpush1.bf16.xpose.msra.mxu0 0
  %2511 = vmatprep.subr.bf16.mxu0 0
  %2512 = vmatpush1.bf16.xpose.msra.mxu0 %v2495
  %2513 = vmatprep.subr.bf16.mxu0 0
  %2514 = vmatpush2.bf16.xpose.msra.mxu0 0
  %2515 = vmatprep.subr.bf16.mxu0 0
  %2516 = vmatpush2.bf16.xpose.msra.mxu0 0
  %2517 = vmatprep.subr.bf16.mxu0 0
  %2518 = vmatpush2.bf16.xpose.msra.mxu0 0
  %2519 = vmatprep.subr.bf16.mxu0 0
  %2520 = vmatpush2.bf16.xpose.msra.mxu0 0
  %2521 = vmatprep.subr.bf16.mxu0 0
  %2522 = vmatpush2.bf16.xpose.msra.mxu0 0
  %2523 = vmatprep.subr.bf16.mxu0 0
  %2524 = vmatpush2.bf16.xpose.msra.mxu0 0
  %2525 = vmatprep.subr.bf16.mxu0 0
  %2526 = vmatpush2.bf16.xpose.msra.mxu0 0
  %2527 = vmatprep.subr.bf16.mxu0 0
  %2528 = vmatpush2.bf16.xpose.msra.mxu0 0
  %2529 = vmatprep.mubr.bf16.mxu0 0
  %2530 = vmatmul.mubr.bf16.gmra.mxu0 %v2492
  %v2531 = vpop.f32.mrf.mxu0
  %v2532 = vadd.f32 0.0, %v2531
  %v2533 = vpop.f32.mrf.mxu0
  %v2534 = vpop.f32.mrf.mxu0
  %v2535 = vadd.f32 0.0, %v2534
  %v2536 = vpop.f32.mrf.mxu0
  %2537 = vdwg.mxu0
  %2539 = vrot.lane.b32.xlu0 %v2412, 64
  %v2540 = vpop.permute.xlu0 %2539
  %v2542 = vsel %vm1292, %v2412, 0
  %v2545 = vsel %vm1292, %v2540, 0
  %2547 = vmatprep.subr.bf16.mxu0 0
  %2548 = vmatpush1.bf16.xpose.msra.mxu0 0
  %2549 = vmatprep.subr.bf16.mxu0 0
  %2550 = vmatpush1.bf16.xpose.msra.mxu0 0
  %2551 = vmatprep.subr.bf16.mxu0 0
  %2552 = vmatpush1.bf16.xpose.msra.mxu0 0
  %2553 = vmatprep.subr.bf16.mxu0 0
  %2554 = vmatpush1.bf16.xpose.msra.mxu0 0
  %2555 = vmatprep.subr.bf16.mxu0 0
  %2556 = vmatpush1.bf16.xpose.msra.mxu0 0
  %2557 = vmatprep.subr.bf16.mxu0 0
  %2558 = vmatpush1.bf16.xpose.msra.mxu0 0
  %2559 = vmatprep.subr.bf16.mxu0 0
  %2560 = vmatpush1.bf16.xpose.msra.mxu0 0
  %2561 = vmatprep.subr.bf16.mxu0 0
  %2562 = vmatpush1.bf16.xpose.msra.mxu0 %v2545
  %2563 = vmatprep.subr.bf16.mxu0 0
  %2564 = vmatpush2.bf16.xpose.msra.mxu0 0
  %2565 = vmatprep.subr.bf16.mxu0 0
  %2566 = vmatpush2.bf16.xpose.msra.mxu0 0
  %2567 = vmatprep.subr.bf16.mxu0 0
  %2568 = vmatpush2.bf16.xpose.msra.mxu0 0
  %2569 = vmatprep.subr.bf16.mxu0 0
  %2570 = vmatpush2.bf16.xpose.msra.mxu0 0
  %2571 = vmatprep.subr.bf16.mxu0 0
  %2572 = vmatpush2.bf16.xpose.msra.mxu0 0
  %2573 = vmatprep.subr.bf16.mxu0 0
  %2574 = vmatpush2.bf16.xpose.msra.mxu0 0
  %2575 = vmatprep.subr.bf16.mxu0 0
  %2576 = vmatpush2.bf16.xpose.msra.mxu0 0
  %2577 = vmatprep.subr.bf16.mxu0 0
  %2578 = vmatpush2.bf16.xpose.msra.mxu0 0
  %2579 = vmatprep.mubr.bf16.mxu0 0
  %2580 = vmatmul.mubr.bf16.gmra.mxu0 %v2542
  %v2581 = vpop.f32.mrf.mxu0
  %v2582 = vadd.f32 0.0, %v2581
  %v2583 = vpop.f32.mrf.mxu0
  %v2584 = vpop.f32.mrf.mxu0
  %v2585 = vadd.f32 0.0, %v2584
  %v2586 = vpop.f32.mrf.mxu0
  %2587 = vdwg.mxu0
  %2589 = vrot.lane.b32.xlu0 %v2413, 64
  %v2590 = vpop.permute.xlu0 %2589
  %v2592 = vsel %vm1292, %v2413, 0
  %v2595 = vsel %vm1292, %v2590, 0
  %2597 = vmatprep.subr.bf16.mxu0 0
  %2598 = vmatpush1.bf16.xpose.msra.mxu0 0
  %2599 = vmatprep.subr.bf16.mxu0 0
  %2600 = vmatpush1.bf16.xpose.msra.mxu0 0
  %2601 = vmatprep.subr.bf16.mxu0 0
  %2602 = vmatpush1.bf16.xpose.msra.mxu0 0
  %2603 = vmatprep.subr.bf16.mxu0 0
  %2604 = vmatpush1.bf16.xpose.msra.mxu0 0
  %2605 = vmatprep.subr.bf16.mxu0 0
  %2606 = vmatpush1.bf16.xpose.msra.mxu0 0
  %2607 = vmatprep.subr.bf16.mxu0 0
  %2608 = vmatpush1.bf16.xpose.msra.mxu0 0
  %2609 = vmatprep.subr.bf16.mxu0 0
  %2610 = vmatpush1.bf16.xpose.msra.mxu0 0
  %2611 = vmatprep.subr.bf16.mxu0 0
  %2612 = vmatpush1.bf16.xpose.msra.mxu0 %v2595
  %2613 = vmatprep.subr.bf16.mxu0 0
  %2614 = vmatpush2.bf16.xpose.msra.mxu0 0
  %2615 = vmatprep.subr.bf16.mxu0 0
  %2616 = vmatpush2.bf16.xpose.msra.mxu0 0
  %2617 = vmatprep.subr.bf16.mxu0 0
  %2618 = vmatpush2.bf16.xpose.msra.mxu0 0
  %2619 = vmatprep.subr.bf16.mxu0 0
  %2620 = vmatpush2.bf16.xpose.msra.mxu0 0
  %2621 = vmatprep.subr.bf16.mxu0 0
  %2622 = vmatpush2.bf16.xpose.msra.mxu0 0
  %2623 = vmatprep.subr.bf16.mxu0 0
  %2624 = vmatpush2.bf16.xpose.msra.mxu0 0
  %2625 = vmatprep.subr.bf16.mxu0 0
  %2626 = vmatpush2.bf16.xpose.msra.mxu0 0
  %2627 = vmatprep.subr.bf16.mxu0 0
  %2628 = vmatpush2.bf16.xpose.msra.mxu0 0
  %2629 = vmatprep.mubr.bf16.mxu0 0
  %2630 = vmatmul.mubr.bf16.gmra.mxu0 %v2592
  %v2631 = vpop.f32.mrf.mxu0
  %v2632 = vadd.f32 0.0, %v2631
  %v2633 = vpop.f32.mrf.mxu0
  %v2634 = vpop.f32.mrf.mxu0
  %v2635 = vadd.f32 0.0, %v2634
  %v2636 = vpop.f32.mrf.mxu0
  %2637 = vdwg.mxu0
  %v2638 = vmul.f32 %v2482, 0.25
  %v2639 = vmul.f32 %v2485, 0.25
  %v2640 = vmul.f32 %v2532, 0.25
  %v2641 = vmul.f32 %v2535, 0.25
  %v2642 = vmul.f32 %v2582, 0.25
  %v2643 = vmul.f32 %v2585, 0.25
  %v2644 = vmul.f32 %v2632, 0.25
  %v2645 = vmul.f32 %v2635, 0.25
  %v2646 = vadd.f32 %v2638, %v1077
  %v2647 = vadd.f32 %v2639, %v1078
  %v2648 = vadd.f32 %v2640, %v1077
  %v2649 = vadd.f32 %v2641, %v1078
  %v2650 = vadd.f32 %v2642, %v1077
  %v2651 = vadd.f32 %v2643, %v1078
  %v2652 = vadd.f32 %v2644, %v1077
  %v2653 = vadd.f32 %v2645, %v1078
  %v2654 = vsel %vm1506, %v2646, -inf
  %2655 = vmax.xlane.f32.xlu0 %v2654
  %v2656 = vpop.xlane.xlu0 %2655
  %v2657 = vsel %vm1510, %v2647, -inf
  %2658 = vmax.xlane.f32.xlu0 %v2657
  %v2659 = vpop.xlane.xlu0 %2658
  %v2660 = vsel %vm1506, %v2648, -inf
  %2661 = vmax.xlane.f32.xlu0 %v2660
  %v2662 = vpop.xlane.xlu0 %2661
  %v2663 = vsel %vm1510, %v2649, -inf
  %2664 = vmax.xlane.f32.xlu0 %v2663
  %v2665 = vpop.xlane.xlu0 %2664
  %v2666 = vsel %vm1506, %v2650, -inf
  %2667 = vmax.xlane.f32.xlu0 %v2666
  %v2668 = vpop.xlane.xlu0 %2667
  %v2669 = vsel %vm1510, %v2651, -inf
  %2670 = vmax.xlane.f32.xlu0 %v2669
  %v2671 = vpop.xlane.xlu0 %2670
  %v2672 = vsel %vm1506, %v2652, -inf
  %2673 = vmax.xlane.f32.xlu0 %v2672
  %v2674 = vpop.xlane.xlu0 %2673
  %v2675 = vsel %vm1510, %v2653, -inf
  %2676 = vmax.xlane.f32.xlu0 %v2675
  %v2677 = vpop.xlane.xlu0 %2676
  %v2678 = vsub.f32 %v2646, %v2656
  %v2679 = vsub.f32 %v2647, %v2659
  %v2680 = vsub.f32 %v2648, %v2662
  %v2681 = vsub.f32 %v2649, %v2665
  %v2682 = vsub.f32 %v2650, %v2668
  %v2683 = vsub.f32 %v2651, %v2671
  %v2684 = vsub.f32 %v2652, %v2674
  %v2685 = vsub.f32 %v2653, %v2677
  %v2686 = vmul.f32 %v2678, 1.442695
  %v2687 = vpow.pop %v2686
  %v2688 = vmul.f32 %v2679, 1.442695
  %v2689 = vpow.pop %v2688
  %v2690 = vmul.f32 %v2680, 1.442695
  %v2691 = vpow.pop %v2690
  %v2692 = vmul.f32 %v2681, 1.442695
  %v2693 = vpow.pop %v2692
  %v2694 = vmul.f32 %v2682, 1.442695
  %v2695 = vpow.pop %v2694
  %v2696 = vmul.f32 %v2683, 1.442695
  %v2697 = vpow.pop %v2696
  %v2698 = vmul.f32 %v2684, 1.442695
  %v2699 = vpow.pop %v2698
  %v2700 = vmul.f32 %v2685, 1.442695
  %v2701 = vpow.pop %v2700
  %v2702 = vsel %vm1506, %v2687, 0.0
  %2703 = vadd.xlane.f32.xlu0 %v2702
  %v2704 = vpop.xlane.xlu0 %2703
  %v2705 = vsel %vm1510, %v2689, 0.0
  %2706 = vadd.xlane.f32.xlu0 %v2705
  %v2707 = vpop.xlane.xlu0 %2706
  %v2708 = vsel %vm1506, %v2691, 0.0
  %2709 = vadd.xlane.f32.xlu0 %v2708
  %v2710 = vpop.xlane.xlu0 %2709
  %v2711 = vsel %vm1510, %v2693, 0.0
  %2712 = vadd.xlane.f32.xlu0 %v2711
  %v2713 = vpop.xlane.xlu0 %2712
  %v2714 = vsel %vm1506, %v2695, 0.0
  %2715 = vadd.xlane.f32.xlu0 %v2714
  %v2716 = vpop.xlane.xlu0 %2715
  %v2717 = vsel %vm1510, %v2697, 0.0
  %2718 = vadd.xlane.f32.xlu0 %v2717
  %v2719 = vpop.xlane.xlu0 %2718
  %v2720 = vsel %vm1506, %v2699, 0.0
  %2721 = vadd.xlane.f32.xlu0 %v2720
  %v2722 = vpop.xlane.xlu0 %2721
  %v2723 = vsel %vm1510, %v2701, 0.0
  %2724 = vadd.xlane.f32.xlu0 %v2723
  %v2725 = vpop.xlane.xlu0 %2724
  %v2726 = vrcp.pop %v2704
  %v2727 = vrcp.pop %v2707
  %v2728 = vrcp.pop %v2710
  %v2729 = vrcp.pop %v2713
  %v2730 = vrcp.pop %v2716
  %v2731 = vrcp.pop %v2719
  %v2732 = vrcp.pop %v2722
  %v2733 = vrcp.pop %v2725
  %v2734 = vmul.f32 %v2687, %v2726
  %v2735 = vmul.f32 %v2689, %v2727
  %v2736 = vmul.f32 %v2691, %v2728
  %v2737 = vmul.f32 %v2693, %v2729
  %v2738 = vmul.f32 %v2695, %v2730
  %v2739 = vmul.f32 %v2697, %v2731
  %v2740 = vmul.f32 %v2699, %v2732
  %v2741 = vmul.f32 %v2701, %v2733
  %v2742 = vpack.c.bf16 %v2735, %v2734
  %v2743 = vpack.c.bf16 %v2737, %v2736
  %v2744 = vpack.c.bf16 %v2739, %v2738
  %v2745 = vpack.c.bf16 %v2741, %v2740
  %v2747 = vsel %vm1506, %v2742, 0
  %v2750 = vsel %vm1603, %v2434, 0
  %2752 = vmatprep.subr.bf16.mxu0 0
  %2753 = vmatpush1.bf16.msra.mxu0 0
  %2754 = vmatprep.subr.bf16.mxu0 0
  %2755 = vmatpush1.bf16.msra.mxu0 0
  %2756 = vmatprep.subr.bf16.mxu0 0
  %2757 = vmatpush1.bf16.msra.mxu0 0
  %2758 = vmatprep.subr.bf16.mxu0 0
  %2759 = vmatpush1.bf16.msra.mxu0 0
  %2760 = vmatprep.subr.bf16.mxu0 0
  %2761 = vmatpush1.bf16.msra.mxu0 0
  %2762 = vmatprep.subr.bf16.mxu0 0
  %2763 = vmatpush1.bf16.msra.mxu0 0
  %2764 = vmatprep.subr.bf16.mxu0 0
  %2765 = vmatpush1.bf16.msra.mxu0 0
  %2766 = vmatprep.subr.bf16.mxu0 0
  %2767 = vmatpush1.bf16.msra.mxu0 %v2750
  %2768 = vmatprep.subr.bf16.mxu0 0
  %2769 = vmatpush2.bf16.msra.mxu0 0
  %2770 = vmatprep.subr.bf16.mxu0 0
  %2771 = vmatpush2.bf16.msra.mxu0 0
  %2772 = vmatprep.subr.bf16.mxu0 0
  %2773 = vmatpush2.bf16.msra.mxu0 0
  %2774 = vmatprep.subr.bf16.mxu0 0
  %2775 = vmatpush2.bf16.msra.mxu0 0
  %2776 = vmatprep.subr.bf16.mxu0 0
  %2777 = vmatpush2.bf16.msra.mxu0 0
  %2778 = vmatprep.subr.bf16.mxu0 0
  %2779 = vmatpush2.bf16.msra.mxu0 0
  %2780 = vmatprep.subr.bf16.mxu0 0
  %2781 = vmatpush2.bf16.msra.mxu0 0
  %2782 = vmatprep.subr.bf16.mxu0 0
  %2783 = vmatpush2.bf16.msra.mxu0 0
  %2784 = vmatprep.mubr.bf16.mxu0 0
  %2785 = vmatmul.mubr.bf16.gmra.mxu0 %v2747
  %v2786 = vpop.f32.mrf.mxu0
  %v2787 = vadd.f32 0.0, %v2786
  %v2788 = vpop.f32.mrf.mxu0
  %v2789 = vpop.f32.mrf.mxu0
  %v2790 = vadd.f32 0.0, %v2789
  %v2791 = vpop.f32.mrf.mxu0
  %2792 = vdwg.mxu0
  %v2794 = vsel %vm1506, %v2743, 0
  %v2797 = vsel %vm1603, %v2435, 0
  %2799 = vmatprep.subr.bf16.mxu0 0
  %2800 = vmatpush1.bf16.msra.mxu0 0
  %2801 = vmatprep.subr.bf16.mxu0 0
  %2802 = vmatpush1.bf16.msra.mxu0 0
  %2803 = vmatprep.subr.bf16.mxu0 0
  %2804 = vmatpush1.bf16.msra.mxu0 0
  %2805 = vmatprep.subr.bf16.mxu0 0
  %2806 = vmatpush1.bf16.msra.mxu0 0
  %2807 = vmatprep.subr.bf16.mxu0 0
  %2808 = vmatpush1.bf16.msra.mxu0 0
  %2809 = vmatprep.subr.bf16.mxu0 0
  %2810 = vmatpush1.bf16.msra.mxu0 0
  %2811 = vmatprep.subr.bf16.mxu0 0
  %2812 = vmatpush1.bf16.msra.mxu0 0
  %2813 = vmatprep.subr.bf16.mxu0 0
  %2814 = vmatpush1.bf16.msra.mxu0 %v2797
  %2815 = vmatprep.subr.bf16.mxu0 0
  %2816 = vmatpush2.bf16.msra.mxu0 0
  %2817 = vmatprep.subr.bf16.mxu0 0
  %2818 = vmatpush2.bf16.msra.mxu0 0
  %2819 = vmatprep.subr.bf16.mxu0 0
  %2820 = vmatpush2.bf16.msra.mxu0 0
  %2821 = vmatprep.subr.bf16.mxu0 0
  %2822 = vmatpush2.bf16.msra.mxu0 0
  %2823 = vmatprep.subr.bf16.mxu0 0
  %2824 = vmatpush2.bf16.msra.mxu0 0
  %2825 = vmatprep.subr.bf16.mxu0 0
  %2826 = vmatpush2.bf16.msra.mxu0 0
  %2827 = vmatprep.subr.bf16.mxu0 0
  %2828 = vmatpush2.bf16.msra.mxu0 0
  %2829 = vmatprep.subr.bf16.mxu0 0
  %2830 = vmatpush2.bf16.msra.mxu0 0
  %2831 = vmatprep.mubr.bf16.mxu0 0
  %2832 = vmatmul.mubr.bf16.gmra.mxu0 %v2794
  %v2833 = vpop.f32.mrf.mxu0
  %v2834 = vadd.f32 0.0, %v2833
  %v2835 = vpop.f32.mrf.mxu0
  %v2836 = vpop.f32.mrf.mxu0
  %v2837 = vadd.f32 0.0, %v2836
  %v2838 = vpop.f32.mrf.mxu0
  %2839 = vdwg.mxu0
  %v2841 = vsel %vm1506, %v2744, 0
  %v2844 = vsel %vm1603, %v2436, 0
  %2846 = vmatprep.subr.bf16.mxu0 0
  %2847 = vmatpush1.bf16.msra.mxu0 0
  %2848 = vmatprep.subr.bf16.mxu0 0
  %2849 = vmatpush1.bf16.msra.mxu0 0
  %2850 = vmatprep.subr.bf16.mxu0 0
  %2851 = vmatpush1.bf16.msra.mxu0 0
  %2852 = vmatprep.subr.bf16.mxu0 0
  %2853 = vmatpush1.bf16.msra.mxu0 0
  %2854 = vmatprep.subr.bf16.mxu0 0
  %2855 = vmatpush1.bf16.msra.mxu0 0
  %2856 = vmatprep.subr.bf16.mxu0 0
  %2857 = vmatpush1.bf16.msra.mxu0 0
  %2858 = vmatprep.subr.bf16.mxu0 0
  %2859 = vmatpush1.bf16.msra.mxu0 0
  %2860 = vmatprep.subr.bf16.mxu0 0
  %2861 = vmatpush1.bf16.msra.mxu0 %v2844
  %2862 = vmatprep.subr.bf16.mxu0 0
  %2863 = vmatpush2.bf16.msra.mxu0 0
  %2864 = vmatprep.subr.bf16.mxu0 0
  %2865 = vmatpush2.bf16.msra.mxu0 0
  %2866 = vmatprep.subr.bf16.mxu0 0
  %2867 = vmatpush2.bf16.msra.mxu0 0
  %2868 = vmatprep.subr.bf16.mxu0 0
  %2869 = vmatpush2.bf16.msra.mxu0 0
  %2870 = vmatprep.subr.bf16.mxu0 0
  %2871 = vmatpush2.bf16.msra.mxu0 0
  %2872 = vmatprep.subr.bf16.mxu0 0
  %2873 = vmatpush2.bf16.msra.mxu0 0
  %2874 = vmatprep.subr.bf16.mxu0 0
  %2875 = vmatpush2.bf16.msra.mxu0 0
  %2876 = vmatprep.subr.bf16.mxu0 0
  %2877 = vmatpush2.bf16.msra.mxu0 0
  %2878 = vmatprep.mubr.bf16.mxu0 0
  %2879 = vmatmul.mubr.bf16.gmra.mxu0 %v2841
  %v2880 = vpop.f32.mrf.mxu0
  %v2881 = vadd.f32 0.0, %v2880
  %v2882 = vpop.f32.mrf.mxu0
  %v2883 = vpop.f32.mrf.mxu0
  %v2884 = vadd.f32 0.0, %v2883
  %v2885 = vpop.f32.mrf.mxu0
  %2886 = vdwg.mxu0
  %v2888 = vsel %vm1506, %v2745, 0
  %v2891 = vsel %vm1603, %v2437, 0
  %2893 = vmatprep.subr.bf16.mxu0 0
  %2894 = vmatpush1.bf16.msra.mxu0 0
  %2895 = vmatprep.subr.bf16.mxu0 0
  %2896 = vmatpush1.bf16.msra.mxu0 0
  %2897 = vmatprep.subr.bf16.mxu0 0
  %2898 = vmatpush1.bf16.msra.mxu0 0
  %2899 = vmatprep.subr.bf16.mxu0 0
  %2900 = vmatpush1.bf16.msra.mxu0 0
  %2901 = vmatprep.subr.bf16.mxu0 0
  %2902 = vmatpush1.bf16.msra.mxu0 0
  %2903 = vmatprep.subr.bf16.mxu0 0
  %2904 = vmatpush1.bf16.msra.mxu0 0
  %2905 = vmatprep.subr.bf16.mxu0 0
  %2906 = vmatpush1.bf16.msra.mxu0 0
  %2907 = vmatprep.subr.bf16.mxu0 0
  %2908 = vmatpush1.bf16.msra.mxu0 %v2891
  %2909 = vmatprep.subr.bf16.mxu0 0
  %2910 = vmatpush2.bf16.msra.mxu0 0
  %2911 = vmatprep.subr.bf16.mxu0 0
  %2912 = vmatpush2.bf16.msra.mxu0 0
  %2913 = vmatprep.subr.bf16.mxu0 0
  %2914 = vmatpush2.bf16.msra.mxu0 0
  %2915 = vmatprep.subr.bf16.mxu0 0
  %2916 = vmatpush2.bf16.msra.mxu0 0
  %2917 = vmatprep.subr.bf16.mxu0 0
  %2918 = vmatpush2.bf16.msra.mxu0 0
  %2919 = vmatprep.subr.bf16.mxu0 0
  %2920 = vmatpush2.bf16.msra.mxu0 0
  %2921 = vmatprep.subr.bf16.mxu0 0
  %2922 = vmatpush2.bf16.msra.mxu0 0
  %2923 = vmatprep.subr.bf16.mxu0 0
  %2924 = vmatpush2.bf16.msra.mxu0 0
  %2925 = vmatprep.mubr.bf16.mxu0 0
  %2926 = vmatmul.mubr.bf16.gmra.mxu0 %v2888
  %v2927 = vpop.f32.mrf.mxu0
  %v2928 = vadd.f32 0.0, %v2927
  %v2929 = vpop.f32.mrf.mxu0
  %v2930 = vpop.f32.mrf.mxu0
  %v2931 = vadd.f32 0.0, %v2930
  %v2932 = vpop.f32.mrf.mxu0
  %2933 = vdwg.mxu0
  %v2934 = vpack.c.bf16 %v2790, %v2787
  %v2935 = vpack.c.bf16 %v2837, %v2834
  %v2938 = vunpack.c.l.b16 %v2384
  %v2939 = vunpack.c.l.b16 %v2385
  %v2940 = vpack.c.b16 %v2939, %v2938
  %v2943 = vsel %vm1292, %v2935, 0
  %2945 = vmatprep.subr.bf16.mxu0 0
  %2946 = vmatpush1.bf16.msra.mxu0 0
  %2947 = vmatprep.subr.bf16.mxu0 0
  %2948 = vmatpush1.bf16.msra.mxu0 0
  %2949 = vmatprep.subr.bf16.mxu0 0
  %2950 = vmatpush1.bf16.msra.mxu0 0
  %2951 = vmatprep.subr.bf16.mxu0 0
  %2952 = vmatpush1.bf16.msra.mxu0 0
  %2953 = vmatprep.subr.bf16.mxu0 0
  %2954 = vmatpush1.bf16.msra.mxu0 0
  %2955 = vmatprep.subr.bf16.mxu0 0
  %2956 = vmatpush1.bf16.msra.mxu0 0
  %2957 = vmatprep.subr.bf16.mxu0 0
  %2958 = vmatpush1.bf16.msra.mxu0 0
  %2959 = vmatprep.subr.bf16.mxu0 0
  %2960 = vmatpush1.bf16.msra.mxu0 %v2940
  %2961 = vmatprep.subr.bf16.mxu0 0
  %2962 = vmatpush2.bf16.msra.mxu0 0
  %2963 = vmatprep.subr.bf16.mxu0 0
  %2964 = vmatpush2.bf16.msra.mxu0 0
  %2965 = vmatprep.subr.bf16.mxu0 0
  %2966 = vmatpush2.bf16.msra.mxu0 0
  %2967 = vmatprep.subr.bf16.mxu0 0
  %2968 = vmatpush2.bf16.msra.mxu0 0
  %2969 = vmatprep.subr.bf16.mxu0 0
  %2970 = vmatpush2.bf16.msra.mxu0 0
  %2971 = vmatprep.subr.bf16.mxu0 0
  %2972 = vmatpush2.bf16.msra.mxu0 0
  %2973 = vmatprep.subr.bf16.mxu0 0
  %2974 = vmatpush2.bf16.msra.mxu0 0
  %2975 = vmatprep.subr.bf16.mxu0 0
  %2976 = vmatpush2.bf16.msra.mxu0 0
  %2977 = vmatprep.mubr.bf16.mxu0 0
  %2978 = vmatmul.mubr.bf16.gmra.mxu0 %v2943
  %v2979 = vpop.f32.mrf.mxu0
  %v2980 = vadd.f32 0.0, %v2979
  %v2981 = vpop.f32.mrf.mxu0
  %v2982 = vpop.f32.mrf.mxu0
  %v2983 = vadd.f32 0.0, %v2982
  %v2984 = vpop.f32.mrf.mxu0
  %2985 = vdwg.mxu0
  %v2988 = vunpack.c.l.b16 %v2382
  %v2989 = vunpack.c.l.b16 %v2383
  %v2990 = vpack.c.b16 %v2989, %v2988
  %v2993 = vsel %vm1292, %v2934, 0
  %2995 = vmatprep.subr.bf16.mxu0 0
  %2996 = vmatpush1.bf16.msra.mxu0 0
  %2997 = vmatprep.subr.bf16.mxu0 0
  %2998 = vmatpush1.bf16.msra.mxu0 0
  %2999 = vmatprep.subr.bf16.mxu0 0
  %3000 = vmatpush1.bf16.msra.mxu0 0
  %3001 = vmatprep.subr.bf16.mxu0 0
  %3002 = vmatpush1.bf16.msra.mxu0 0
  %3003 = vmatprep.subr.bf16.mxu0 0
  %3004 = vmatpush1.bf16.msra.mxu0 0
  %3005 = vmatprep.subr.bf16.mxu0 0
  %3006 = vmatpush1.bf16.msra.mxu0 0
  %3007 = vmatprep.subr.bf16.mxu0 0
  %3008 = vmatpush1.bf16.msra.mxu0 0
  %3009 = vmatprep.subr.bf16.mxu0 0
  %3010 = vmatpush1.bf16.msra.mxu0 %v2990
  %3011 = vmatprep.subr.bf16.mxu0 0
  %3012 = vmatpush2.bf16.msra.mxu0 0
  %3013 = vmatprep.subr.bf16.mxu0 0
  %3014 = vmatpush2.bf16.msra.mxu0 0
  %3015 = vmatprep.subr.bf16.mxu0 0
  %3016 = vmatpush2.bf16.msra.mxu0 0
  %3017 = vmatprep.subr.bf16.mxu0 0
  %3018 = vmatpush2.bf16.msra.mxu0 0
  %3019 = vmatprep.subr.bf16.mxu0 0
  %3020 = vmatpush2.bf16.msra.mxu0 0
  %3021 = vmatprep.subr.bf16.mxu0 0
  %3022 = vmatpush2.bf16.msra.mxu0 0
  %3023 = vmatprep.subr.bf16.mxu0 0
  %3024 = vmatpush2.bf16.msra.mxu0 0
  %3025 = vmatprep.subr.bf16.mxu0 0
  %3026 = vmatpush2.bf16.msra.mxu0 0
  %3027 = vmatprep.mubr.bf16.mxu0 0
  %3028 = vmatmul.mubr.bf16.gmra.mxu0 %v2993
  %v3029 = vpop.f32.mrf.mxu0
  %v3030 = vadd.f32 %v2980, %v3029
  %v3031 = vpop.f32.mrf.mxu0
  %v3032 = vpop.f32.mrf.mxu0
  %v3033 = vadd.f32 %v2983, %v3032
  %v3034 = vpop.f32.mrf.mxu0
  %3035 = vdwg.mxu0
  %v3036 = vpack.c.bf16 %v2884, %v2881
  %v3039 = vunpack.c.l.b16 %v2386
  %v3040 = vunpack.c.l.b16 %v2387
  %v3041 = vpack.c.b16 %v3040, %v3039
  %v3044 = vsel %vm1292, %v3036, 0
  %3046 = vmatprep.subr.bf16.mxu0 0
  %3047 = vmatpush1.bf16.msra.mxu0 0
  %3048 = vmatprep.subr.bf16.mxu0 0
  %3049 = vmatpush1.bf16.msra.mxu0 0
  %3050 = vmatprep.subr.bf16.mxu0 0
  %3051 = vmatpush1.bf16.msra.mxu0 0
  %3052 = vmatprep.subr.bf16.mxu0 0
  %3053 = vmatpush1.bf16.msra.mxu0 0
  %3054 = vmatprep.subr.bf16.mxu0 0
  %3055 = vmatpush1.bf16.msra.mxu0 0
  %3056 = vmatprep.subr.bf16.mxu0 0
  %3057 = vmatpush1.bf16.msra.mxu0 0
  %3058 = vmatprep.subr.bf16.mxu0 0
  %3059 = vmatpush1.bf16.msra.mxu0 0
  %3060 = vmatprep.subr.bf16.mxu0 0
  %3061 = vmatpush1.bf16.msra.mxu0 %v3041
  %3062 = vmatprep.subr.bf16.mxu0 0
  %3063 = vmatpush2.bf16.msra.mxu0 0
  %3064 = vmatprep.subr.bf16.mxu0 0
  %3065 = vmatpush2.bf16.msra.mxu0 0
  %3066 = vmatprep.subr.bf16.mxu0 0
  %3067 = vmatpush2.bf16.msra.mxu0 0
  %3068 = vmatprep.subr.bf16.mxu0 0
  %3069 = vmatpush2.bf16.msra.mxu0 0
  %3070 = vmatprep.subr.bf16.mxu0 0
  %3071 = vmatpush2.bf16.msra.mxu0 0
  %3072 = vmatprep.subr.bf16.mxu0 0
  %3073 = vmatpush2.bf16.msra.mxu0 0
  %3074 = vmatprep.subr.bf16.mxu0 0
  %3075 = vmatpush2.bf16.msra.mxu0 0
  %3076 = vmatprep.subr.bf16.mxu0 0
  %3077 = vmatpush2.bf16.msra.mxu0 0
  %3078 = vmatprep.mubr.bf16.mxu0 0
  %3079 = vmatmul.mubr.bf16.gmra.mxu0 %v3044
  %v3080 = vpop.f32.mrf.mxu0
  %v3081 = vadd.f32 0.0, %v3080
  %v3082 = vpop.f32.mrf.mxu0
  %v3083 = vpop.f32.mrf.mxu0
  %v3084 = vadd.f32 0.0, %v3083
  %v3085 = vpop.f32.mrf.mxu0
  %3086 = vdwg.mxu0
  %v3087 = vadd.f32 %v3030, %v3081
  %v3088 = vadd.f32 %v3033, %v3084
  %v3089 = vpack.c.bf16 %v2931, %v2928
  %v3092 = vunpack.c.l.b16 %v2388
  %v3093 = vunpack.c.l.b16 %v2389
  %v3094 = vpack.c.b16 %v3093, %v3092
  %v3097 = vsel %vm1292, %v3089, 0
  %3099 = vmatprep.subr.bf16.mxu0 0
  %3100 = vmatpush1.bf16.msra.mxu0 0
  %3101 = vmatprep.subr.bf16.mxu0 0
  %3102 = vmatpush1.bf16.msra.mxu0 0
  %3103 = vmatprep.subr.bf16.mxu0 0
  %3104 = vmatpush1.bf16.msra.mxu0 0
  %3105 = vmatprep.subr.bf16.mxu0 0
  %3106 = vmatpush1.bf16.msra.mxu0 0
  %3107 = vmatprep.subr.bf16.mxu0 0
  %3108 = vmatpush1.bf16.msra.mxu0 0
  %3109 = vmatprep.subr.bf16.mxu0 0
  %3110 = vmatpush1.bf16.msra.mxu0 0
  %3111 = vmatprep.subr.bf16.mxu0 0
  %3112 = vmatpush1.bf16.msra.mxu0 0
  %3113 = vmatprep.subr.bf16.mxu0 0
  %3114 = vmatpush1.bf16.msra.mxu0 %v3094
  %3115 = vmatprep.subr.bf16.mxu0 0
  %3116 = vmatpush2.bf16.msra.mxu0 0
  %3117 = vmatprep.subr.bf16.mxu0 0
  %3118 = vmatpush2.bf16.msra.mxu0 0
  %3119 = vmatprep.subr.bf16.mxu0 0
  %3120 = vmatpush2.bf16.msra.mxu0 0
  %3121 = vmatprep.subr.bf16.mxu0 0
  %3122 = vmatpush2.bf16.msra.mxu0 0
  %3123 = vmatprep.subr.bf16.mxu0 0
  %3124 = vmatpush2.bf16.msra.mxu0 0
  %3125 = vmatprep.subr.bf16.mxu0 0
  %3126 = vmatpush2.bf16.msra.mxu0 0
  %3127 = vmatprep.subr.bf16.mxu0 0
  %3128 = vmatpush2.bf16.msra.mxu0 0
  %3129 = vmatprep.subr.bf16.mxu0 0
  %3130 = vmatpush2.bf16.msra.mxu0 0
  %3131 = vmatprep.mubr.bf16.mxu0 0
  %3132 = vmatmul.mubr.bf16.gmra.mxu0 %v3097
  %v3133 = vpop.f32.mrf.mxu0
  %v3134 = vadd.f32 0.0, %v3133
  %v3135 = vpop.f32.mrf.mxu0
  %v3136 = vpop.f32.mrf.mxu0
  %v3137 = vadd.f32 0.0, %v3136
  %v3138 = vpop.f32.mrf.mxu0
  %3139 = vdwg.mxu0
  %v3140 = vadd.f32 %v3087, %v3134
  %v3141 = vadd.f32 %v3088, %v3137
  %v3142 = vadd.f32 %v2224, %v3140
  %v3143 = vadd.f32 %v2225, %v3141
  %s3144 = scalar_lea.vmem %s12, 1
  %v3145 = vld [vmem:[%s3144] sm:$0x1]
  %v3147 = vlaneseq
  %v3148 = vshrl.u32 %v3147, 7
  %v3149 = vsub.s32 0, %v3148
  %v3150 = vrot.slane %v3145, %v3149
  %v3152 = vadd.f32 %v3142, %v3150
  %v3153 = vadd.f32 %v3143, %v3150
  %s3154 = scalar_lea.vmem %s13, 1
  %v3155 = vld [vmem:[%s3154] sm:$0x1]
  %s3156 = scalar_lea.vmem %s14, 1
  %v3157 = vld [vmem:[%s3156] sm:$0x1]
  %v3158 = vsel %vm1081, %v3152, 0.0
  %3159 = vadd.xlane.f32.xlu0 %v3158
  %v3160 = vpop.xlane.xlu0 %3159
  %v3161 = vsel %vm1085, %v3153, 0.0
  %3162 = vadd.xlane.f32.xlu0 %v3161
  %v3163 = vpop.xlane.xlu0 %3162
  %v3164 = vmul.f32 %v3160, %v1089
  %v3165 = vmul.f32 %v3163, %v1089
  %v3166 = vsub.f32 %v3152, %v3164
  %v3167 = vsub.f32 %v3153, %v3165
  %v3168 = vmul.f32 %v3166, %v3166
  %v3169 = vmul.f32 %v3167, %v3167
  %v3170 = vsel %vm1081, %v3168, 0.0
  %3171 = vadd.xlane.f32.xlu0 %v3170
  %v3172 = vpop.xlane.xlu0 %3171
  %v3173 = vsel %vm1085, %v3169, 0.0
  %3174 = vadd.xlane.f32.xlu0 %v3173
  %v3175 = vpop.xlane.xlu0 %3174
  %v3176 = vmul.f32 %v3172, %v1089
  %v3177 = vmul.f32 %v3175, %v1089
  %v3178 = vadd.f32 %v3176, 1e-06
  %v3179 = vadd.f32 %v3177, 1e-06
  %v3180 = vrsqrt.pop %v3178
  %v3181 = vrsqrt.pop %v3179
  %v3182 = vmul.f32 %v3166, %v3180
  %v3183 = vmul.f32 %v3167, %v3181
  %v3185 = vlaneseq
  %v3186 = vshrl.u32 %v3185, 7
  %v3187 = vsub.s32 0, %v3186
  %v3188 = vrot.slane %v3155, %v3187
  %v3190 = vmul.f32 %v3182, %v3188
  %v3191 = vmul.f32 %v3183, %v3188
  %v3193 = vlaneseq
  %v3194 = vshrl.u32 %v3193, 7
  %v3195 = vsub.s32 0, %v3194
  %v3196 = vrot.slane %v3157, %v3195
  %v3198 = vadd.f32 %v3190, %v3196
  %v3199 = vadd.f32 %v3191, %v3196
  %v3200 = vpack.c.bf16 %v3199, %v3198
  %s3201 = scalar_lea.vmem %s15, 32
  %v3202 = vld [vmem:[%s3201] sm:$0xf]
  %v3203 = vld [vmem:[%s3201 + $0x4] sm:$0xf]
  %v3204 = vld [vmem:[%s3201 + $0x8] sm:$0xf]
  %v3205 = vld [vmem:[%s3201 + $0xc] sm:$0xf]
  %v3206 = vld [vmem:[%s3201 + $0x10] sm:$0xf]
  %v3207 = vld [vmem:[%s3201 + $0x14] sm:$0xf]
  %v3208 = vld [vmem:[%s3201 + $0x18] sm:$0xf]
  %v3209 = vld [vmem:[%s3201 + $0x1c] sm:$0xf]
  %s3210 = scalar_lea.vmem %s16, 1
  %v3211 = vld [vmem:[%s3210] sm:$0x1]
  %v3213 = vlaneseq
  %v3214 = vshrl.u32 %v3213, 7
  %v3215 = vsub.s32 0, %v3214
  %v3216 = vrot.slane %v3211, %v3215
  %v3226 = vunpack.c.l.b16 %v3202
  %v3227 = vunpack.c.l.b16 %v3203
  %v3228 = vunpack.c.l.b16 %v3204
  %v3229 = vunpack.c.l.b16 %v3205
  %v3230 = vunpack.c.l.b16 %v3206
  %v3231 = vunpack.c.l.b16 %v3207
  %v3232 = vunpack.c.l.b16 %v3208
  %v3233 = vunpack.c.l.b16 %v3209
  %v3234 = vpack.c.b16 %v3227, %v3226
  %v3235 = vpack.c.b16 %v3229, %v3228
  %v3236 = vpack.c.b16 %v3231, %v3230
  %v3237 = vpack.c.b16 %v3233, %v3232
  %v3243 = vsel %vm1081, %v3200, 0
  %3245 = vmatprep.subr.bf16.mxu0 0
  %3246 = vmatpush1.bf16.msra.mxu0 0
  %3247 = vmatprep.subr.bf16.mxu0 0
  %3248 = vmatpush1.bf16.msra.mxu0 0
  %3249 = vmatprep.subr.bf16.mxu0 0
  %3250 = vmatpush1.bf16.msra.mxu0 0
  %3251 = vmatprep.subr.bf16.mxu0 0
  %3252 = vmatpush1.bf16.msra.mxu0 0
  %3253 = vmatprep.subr.bf16.mxu0 0
  %3254 = vmatpush1.bf16.msra.mxu0 %v3237
  %3255 = vmatprep.subr.bf16.mxu0 0
  %3256 = vmatpush1.bf16.msra.mxu0 %v3236
  %3257 = vmatprep.subr.bf16.mxu0 0
  %3258 = vmatpush1.bf16.msra.mxu0 %v3235
  %3259 = vmatprep.subr.bf16.mxu0 0
  %3260 = vmatpush1.bf16.msra.mxu0 %v3234
  %3261 = vmatprep.subr.bf16.mxu0 0
  %3262 = vmatpush2.bf16.msra.mxu0 0
  %3263 = vmatprep.subr.bf16.mxu0 0
  %3264 = vmatpush2.bf16.msra.mxu0 0
  %3265 = vmatprep.subr.bf16.mxu0 0
  %3266 = vmatpush2.bf16.msra.mxu0 0
  %3267 = vmatprep.subr.bf16.mxu0 0
  %3268 = vmatpush2.bf16.msra.mxu0 0
  %3269 = vmatprep.subr.bf16.mxu0 0
  %3270 = vmatpush2.bf16.msra.mxu0 0
  %3271 = vmatprep.subr.bf16.mxu0 0
  %3272 = vmatpush2.bf16.msra.mxu0 0
  %3273 = vmatprep.subr.bf16.mxu0 0
  %3274 = vmatpush2.bf16.msra.mxu0 0
  %3275 = vmatprep.subr.bf16.mxu0 0
  %3276 = vmatpush2.bf16.msra.mxu0 0
  %3277 = vmatprep.mubr.bf16.mxu0 0
  %3278 = vmatmul.mubr.bf16.gmra.mxu0 %v3243
  %v3279 = vpop.f32.mrf.mxu0
  %v3280 = vadd.f32 %v3216, %v3279
  %v3281 = vpop.f32.mrf.mxu0
  %v3282 = vpop.f32.mrf.mxu0
  %v3283 = vadd.f32 %v3216, %v3282
  %v3284 = vpop.f32.mrf.mxu0
  %3285 = vdwg.mxu0
  %v3286 = vmax.f32 %v3280, 0.0
  %v3287 = vmax.f32 %v3283, 0.0
  %v3288 = vpack.c.bf16 %v3287, %v3286
  %s3289 = scalar_lea.vmem %s17, 32
  %v3290 = vld [vmem:[%s3289] sm:$0xf]
  %v3291 = vld [vmem:[%s3289 + $0x4] sm:$0xf]
  %v3292 = vld [vmem:[%s3289 + $0x8] sm:$0xf]
  %v3293 = vld [vmem:[%s3289 + $0xc] sm:$0xf]
  %v3294 = vld [vmem:[%s3289 + $0x10] sm:$0xf]
  %v3295 = vld [vmem:[%s3289 + $0x14] sm:$0xf]
  %v3296 = vld [vmem:[%s3289 + $0x18] sm:$0xf]
  %v3297 = vld [vmem:[%s3289 + $0x1c] sm:$0xf]
  %v3306 = vunpack.c.l.b16 %v3290
  %v3307 = vunpack.c.l.b16 %v3291
  %v3308 = vunpack.c.l.b16 %v3292
  %v3309 = vunpack.c.l.b16 %v3293
  %v3310 = vunpack.c.l.b16 %v3294
  %v3311 = vunpack.c.l.b16 %v3295
  %v3312 = vunpack.c.l.b16 %v3296
  %v3313 = vunpack.c.l.b16 %v3297
  %v3314 = vpack.c.b16 %v3307, %v3306
  %v3315 = vpack.c.b16 %v3309, %v3308
  %v3316 = vpack.c.b16 %v3311, %v3310
  %v3317 = vpack.c.b16 %v3313, %v3312
  %v3323 = vsel %vm1081, %v3288, 0
  %3325 = vmatprep.subr.bf16.mxu0 0
  %3326 = vmatpush1.bf16.msra.mxu0 0
  %3327 = vmatprep.subr.bf16.mxu0 0
  %3328 = vmatpush1.bf16.msra.mxu0 0
  %3329 = vmatprep.subr.bf16.mxu0 0
  %3330 = vmatpush1.bf16.msra.mxu0 0
  %3331 = vmatprep.subr.bf16.mxu0 0
  %3332 = vmatpush1.bf16.msra.mxu0 0
  %3333 = vmatprep.subr.bf16.mxu0 0
  %3334 = vmatpush1.bf16.msra.mxu0 %v3317
  %3335 = vmatprep.subr.bf16.mxu0 0
  %3336 = vmatpush1.bf16.msra.mxu0 %v3316
  %3337 = vmatprep.subr.bf16.mxu0 0
  %3338 = vmatpush1.bf16.msra.mxu0 %v3315
  %3339 = vmatprep.subr.bf16.mxu0 0
  %3340 = vmatpush1.bf16.msra.mxu0 %v3314
  %3341 = vmatprep.subr.bf16.mxu0 0
  %3342 = vmatpush2.bf16.msra.mxu0 0
  %3343 = vmatprep.subr.bf16.mxu0 0
  %3344 = vmatpush2.bf16.msra.mxu0 0
  %3345 = vmatprep.subr.bf16.mxu0 0
  %3346 = vmatpush2.bf16.msra.mxu0 0
  %3347 = vmatprep.subr.bf16.mxu0 0
  %3348 = vmatpush2.bf16.msra.mxu0 0
  %3349 = vmatprep.subr.bf16.mxu0 0
  %3350 = vmatpush2.bf16.msra.mxu0 0
  %3351 = vmatprep.subr.bf16.mxu0 0
  %3352 = vmatpush2.bf16.msra.mxu0 0
  %3353 = vmatprep.subr.bf16.mxu0 0
  %3354 = vmatpush2.bf16.msra.mxu0 0
  %3355 = vmatprep.subr.bf16.mxu0 0
  %3356 = vmatpush2.bf16.msra.mxu0 0
  %3357 = vmatprep.mubr.bf16.mxu0 0
  %3358 = vmatmul.mubr.bf16.gmra.mxu0 %v3323
  %v3359 = vpop.f32.mrf.mxu0
  %v3360 = vadd.f32 0.0, %v3359
  %v3361 = vpop.f32.mrf.mxu0
  %v3362 = vpop.f32.mrf.mxu0
  %v3363 = vadd.f32 0.0, %v3362
  %v3364 = vpop.f32.mrf.mxu0
  %3365 = vdwg.mxu0
  %v3366 = vadd.f32 %v3152, %v3360
  %v3367 = vadd.f32 %v3153, %v3363
  %s3368 = scalar_lea.vmem %s18, 1
  %v3369 = vld [vmem:[%s3368] sm:$0x1]
  %v3371 = vlaneseq
  %v3372 = vshrl.u32 %v3371, 7
  %v3373 = vsub.s32 0, %v3372
  %v3374 = vrot.slane %v3369, %v3373
  %v3376 = vadd.f32 %v3366, %v3374
  %v3377 = vadd.f32 %v3367, %v3374
  %v3378 = vld [vmem:[%s19] sm:$0x1]
  %v3379 = vld [vmem:[%s20] sm:$0x1]
  %v3380 = vsel %vm1081, %v3376, 0.0
  %3381 = vadd.xlane.f32.xlu0 %v3380
  %v3382 = vpop.xlane.xlu0 %3381
  %v3383 = vsel %vm1085, %v3377, 0.0
  %3384 = vadd.xlane.f32.xlu0 %v3383
  %v3385 = vpop.xlane.xlu0 %3384
  %v3386 = vmul.f32 %v3382, %v1089
  %v3387 = vmul.f32 %v3385, %v1089
  %v3388 = vsub.f32 %v3376, %v3386
  %v3389 = vsub.f32 %v3377, %v3387
  %v3390 = vmul.f32 %v3388, %v3388
  %v3391 = vmul.f32 %v3389, %v3389
  %v3392 = vsel %vm1081, %v3390, 0.0
  %3393 = vadd.xlane.f32.xlu0 %v3392
  %v3394 = vpop.xlane.xlu0 %3393
  %v3395 = vsel %vm1085, %v3391, 0.0
  %3396 = vadd.xlane.f32.xlu0 %v3395
  %v3397 = vpop.xlane.xlu0 %3396
  %v3398 = vmul.f32 %v3394, %v1089
  %v3399 = vmul.f32 %v3397, %v1089
  %v3400 = vadd.f32 %v3398, 1e-06
  %v3401 = vadd.f32 %v3399, 1e-06
  %v3402 = vrsqrt.pop %v3400
  %v3403 = vrsqrt.pop %v3401
  %v3404 = vmul.f32 %v3388, %v3402
  %v3405 = vmul.f32 %v3389, %v3403
  %v3407 = vlaneseq
  %v3408 = vshrl.u32 %v3407, 7
  %v3409 = vsub.s32 0, %v3408
  %v3410 = vrot.slane %v3378, %v3409
  %v3412 = vmul.f32 %v3404, %v3410
  %v3413 = vmul.f32 %v3405, %v3410
  %v3415 = vlaneseq
  %v3416 = vshrl.u32 %v3415, 7
  %v3417 = vsub.s32 0, %v3416
  %v3418 = vrot.slane %v3379, %v3417
  %v3420 = vadd.f32 %v3412, %v3418
  %v3421 = vadd.f32 %v3413, %v3418
  %3422 = vst.msk [vmem:[%s21] sm:$0xff] %vm1081, %v3420
  %3423 = vst.msk [vmem:[%s21 + $0x8] sm:$0xf] %vm1085, %v3421
  // Predicated region
  $region86: #{recosa_forward.2} parent=0 // pred_check
    _
  $region87: #{recosa_forward.2} parent=0 // pred_check_branch
    %3425 = sbr.rel (0) target = $region89
  $region88: #{recosa_forward.2} parent=0 // pred_region
    _
  $region89: #{recosa_forward.2} parent=0 // pred_fallthru
    _
  // Predicated region
  $region90: #{recosa_forward.2} parent=0 // pred_check
    _
  $region91: #{recosa_forward.2} parent=0 // pred_check_branch
    %3427 = sbr.rel (0) target = $region93
  $region92: #{recosa_forward.2} parent=0 // pred_region
    _
  $region93: #{recosa_forward.2} parent=0 // pred_fallthru
    _

// kernel: recosa_forward.3
$region0: #{recosa_forward.3}
  #allocation0 [shape = 'u32[]', space=smem, size = 0x4, offset = 0x4, fixed_abs, tag = 'smem constant byte address 0x4 - core index']
  #allocation1 [shape = 'u32[144,128]{1,0:T(1,128)}', space=vmem, size = 0x12000, scoped, tag = 'internal scratch']
  %s0 = inlined_call_operand.smem [shape: u32[30], index: -1, kind: input, shape index: {}]
  %s1 = sld [smem:[%s0]]
  %s2 = scalar_lea.smem %s0, 1
  %s3 = sld [smem:[%s2]]
  %s4 = scalar_lea.smem %s0, 2
  %s5 = sld [smem:[%s4]]
  %s6 = scalar_lea.smem %s0, 3
  %s7 = sld [smem:[%s6]]
  %s8 = scalar_lea.smem %s0, 4
  %s9 = sld [smem:[%s8]]
  %s10 = scalar_lea.smem %s0, 5
  %s11 = sld [smem:[%s10]]
  %s12 = scalar_lea.smem %s0, 6
  %s13 = sld [smem:[%s12]]
  %s14 = scalar_lea.smem %s0, 7
  %s15 = sld [smem:[%s14]]
  %s16 = scalar_lea.smem %s0, 8
  %s17 = sld [smem:[%s16]]
  %s18 = scalar_lea.smem %s0, 9
  %s19 = sld [smem:[%s18]]
  %s20 = scalar_lea.smem %s0, 10
  %s21 = sld [smem:[%s20]]
  %s22 = scalar_lea.smem %s0, 11
  %s23 = sld [smem:[%s22]]
  %s24 = scalar_lea.smem %s0, 12
  %s25 = sld [smem:[%s24]]
  %s26 = scalar_lea.smem %s0, 13
  %s27 = sld [smem:[%s26]]
  %s28 = scalar_lea.smem %s0, 14
  %s29 = sld [smem:[%s28]]
  %s30 = scalar_lea.smem %s0, 15
  %s31 = sld [smem:[%s30]]
  %s32 = scalar_lea.smem %s0, 16
  %s33 = sld [smem:[%s32]]
  %s34 = scalar_lea.smem %s0, 17
  %s35 = sld [smem:[%s34]]
  %s36 = scalar_lea.smem %s0, 18
  %s37 = sld [smem:[%s36]]
  %s38 = scalar_lea.smem %s0, 19
  %s39 = sld [smem:[%s38]]
  %s40 = scalar_lea.smem %s0, 20
  %s41 = sld [smem:[%s40]]
  %s42 = scalar_lea.smem %s0, 21
  %s43 = sld [smem:[%s42]]
  %s44 = scalar_lea.smem %s0, 22
  %s45 = sld [smem:[%s44]]
  %s46 = scalar_lea.smem %s0, 23
  %s47 = sld [smem:[%s46]]
  %s48 = scalar_lea.smem %s0, 24
  %s49 = sld [smem:[%s48]]
  %s50 = scalar_lea.smem %s0, 25
  %s51 = sld [smem:[%s50]]
  %s52 = scalar_lea.smem %s0, 26
  %s53 = sld [smem:[%s52]]
  %s54 = scalar_lea.smem %s0, 27
  %s55 = sld [smem:[%s54]]
  %s56 = scalar_lea.smem %s0, 28
  %s57 = sld [smem:[%s56]]
  %s58 = scalar_lea.smem %s0, 29
  %s59 = sld [smem:[%s58]]
  %s60 = sld [smem:[#allocation0]]
  $region126: #{recosa_forward.3} parent=0
    _
  %s62 = ssub.s32 1, %s60
  %s63 = scalar_select 0, %s62, %s60
  // Predicated region
  $region2: #{recosa_forward.3} parent=0 // pred_check
    _
  $region3: #{recosa_forward.3} parent=0 // pred_check_branch
    %65 = sbr.rel (0) target = $region5
  $region4: #{recosa_forward.3} parent=0 // pred_region
    _
  $region5: #{recosa_forward.3} parent=0 // pred_fallthru
    _
  // Predicated region
  $region6: #{recosa_forward.3} parent=0 // pred_check
    _
  $region7: #{recosa_forward.3} parent=0 // pred_check_branch
    %67 = sbr.rel (0) target = $region9
  $region8: #{recosa_forward.3} parent=0 // pred_region
    _
  $region9: #{recosa_forward.3} parent=0 // pred_fallthru
    _
  // Predicated region
  $region10: #{recosa_forward.3} parent=0 // pred_check
    _
  $region11: #{recosa_forward.3} parent=0 // pred_check_branch
    %69 = sbr.rel (0) target = $region13
  $region12: #{recosa_forward.3} parent=0 // pred_region
    _
  $region13: #{recosa_forward.3} parent=0 // pred_fallthru
    _
  // Predicated region
  $region14: #{recosa_forward.3} parent=0 // pred_check
    _
  $region15: #{recosa_forward.3} parent=0 // pred_check_branch
    %71 = sbr.rel (0) target = $region17
  $region16: #{recosa_forward.3} parent=0 // pred_region
    _
  $region17: #{recosa_forward.3} parent=0 // pred_fallthru
    _
  // Predicated region
  $region18: #{recosa_forward.3} parent=0 // pred_check
    _
  $region19: #{recosa_forward.3} parent=0 // pred_check_branch
    %73 = sbr.rel (0) target = $region21
  $region20: #{recosa_forward.3} parent=0 // pred_region
    _
  $region21: #{recosa_forward.3} parent=0 // pred_fallthru
    _
  // Predicated region
  $region22: #{recosa_forward.3} parent=0 // pred_check
    _
  $region23: #{recosa_forward.3} parent=0 // pred_check_branch
    %75 = sbr.rel (0) target = $region25
  $region24: #{recosa_forward.3} parent=0 // pred_region
    _
  $region25: #{recosa_forward.3} parent=0 // pred_fallthru
    _
  // Predicated region
  $region26: #{recosa_forward.3} parent=0 // pred_check
    _
  $region27: #{recosa_forward.3} parent=0 // pred_check_branch
    %77 = sbr.rel (0) target = $region29
  $region28: #{recosa_forward.3} parent=0 // pred_region
    _
  $region29: #{recosa_forward.3} parent=0 // pred_fallthru
    _
  // Predicated region
  $region30: #{recosa_forward.3} parent=0 // pred_check
    _
  $region31: #{recosa_forward.3} parent=0 // pred_check_branch
    %79 = sbr.rel (0) target = $region33
  $region32: #{recosa_forward.3} parent=0 // pred_region
    _
  $region33: #{recosa_forward.3} parent=0 // pred_fallthru
    _
  // Predicated region
  $region34: #{recosa_forward.3} parent=0 // pred_check
    _
  $region35: #{recosa_forward.3} parent=0 // pred_check_branch
    %81 = sbr.rel (0) target = $region37
  $region36: #{recosa_forward.3} parent=0 // pred_region
    _
  $region37: #{recosa_forward.3} parent=0 // pred_fallthru
    _
  // Predicated region
  $region38: #{recosa_forward.3} parent=0 // pred_check
    _
  $region39: #{recosa_forward.3} parent=0 // pred_check_branch
    %83 = sbr.rel (0) target = $region41
  $region40: #{recosa_forward.3} parent=0 // pred_region
    _
  $region41: #{recosa_forward.3} parent=0 // pred_fallthru
    _
  // Predicated region
  $region42: #{recosa_forward.3} parent=0 // pred_check
    _
  $region43: #{recosa_forward.3} parent=0 // pred_check_branch
    %85 = sbr.rel (0) target = $region45
  $region44: #{recosa_forward.3} parent=0 // pred_region
    _
  $region45: #{recosa_forward.3} parent=0 // pred_fallthru
    _
  // Predicated region
  $region46: #{recosa_forward.3} parent=0 // pred_check
    _
  $region47: #{recosa_forward.3} parent=0 // pred_check_branch
    %87 = sbr.rel (0) target = $region49
  $region48: #{recosa_forward.3} parent=0 // pred_region
    _
  $region49: #{recosa_forward.3} parent=0 // pred_fallthru
    _
  // Predicated region
  $region50: #{recosa_forward.3} parent=0 // pred_check
    _
  $region51: #{recosa_forward.3} parent=0 // pred_check_branch
    %89 = sbr.rel (0) target = $region53
  $region52: #{recosa_forward.3} parent=0 // pred_region
    _
  $region53: #{recosa_forward.3} parent=0 // pred_fallthru
    _
  // Predicated region
  $region54: #{recosa_forward.3} parent=0 // pred_check
    _
  $region55: #{recosa_forward.3} parent=0 // pred_check_branch
    %91 = sbr.rel (0) target = $region57
  $region56: #{recosa_forward.3} parent=0 // pred_region
    _
  $region57: #{recosa_forward.3} parent=0 // pred_fallthru
    _
  // Predicated region
  $region58: #{recosa_forward.3} parent=0 // pred_check
    _
  $region59: #{recosa_forward.3} parent=0 // pred_check_branch
    %93 = sbr.rel (0) target = $region61
  $region60: #{recosa_forward.3} parent=0 // pred_region
    _
  $region61: #{recosa_forward.3} parent=0 // pred_fallthru
    _
  // Predicated region
  $region62: #{recosa_forward.3} parent=0 // pred_check
    _
  $region63: #{recosa_forward.3} parent=0 // pred_check_branch
    %95 = sbr.rel (0) target = $region65
  $region64: #{recosa_forward.3} parent=0 // pred_region
    _
  $region65: #{recosa_forward.3} parent=0 // pred_fallthru
    _
  // Predicated region
  $region66: #{recosa_forward.3} parent=0 // pred_check
    _
  $region67: #{recosa_forward.3} parent=0 // pred_check_branch
    %97 = sbr.rel (0) target = $region69
  $region68: #{recosa_forward.3} parent=0 // pred_region
    _
  $region69: #{recosa_forward.3} parent=0 // pred_fallthru
    _
  // Predicated region
  $region70: #{recosa_forward.3} parent=0 // pred_check
    _
  $region71: #{recosa_forward.3} parent=0 // pred_check_branch
    %99 = sbr.rel (0) target = $region73
  $region72: #{recosa_forward.3} parent=0 // pred_region
    _
  $region73: #{recosa_forward.3} parent=0 // pred_fallthru
    _
  // Predicated region
  $region74: #{recosa_forward.3} parent=0 // pred_check
    _
  $region75: #{recosa_forward.3} parent=0 // pred_check_branch
    %101 = sbr.rel (0) target = $region77
  $region76: #{recosa_forward.3} parent=0 // pred_region
    _
  $region77: #{recosa_forward.3} parent=0 // pred_fallthru
    _
  // Predicated region
  $region78: #{recosa_forward.3} parent=0 // pred_check
    _
  $region79: #{recosa_forward.3} parent=0 // pred_check_branch
    %103 = sbr.rel (0) target = $region81
  $region80: #{recosa_forward.3} parent=0 // pred_region
    _
  $region81: #{recosa_forward.3} parent=0 // pred_fallthru
    _
  // Predicated region
  $region82: #{recosa_forward.3} parent=0 // pred_check
    _
  $region83: #{recosa_forward.3} parent=0 // pred_check_branch
    %105 = sbr.rel (0) target = $region85
  $region84: #{recosa_forward.3} parent=0 // pred_region
    _
  $region85: #{recosa_forward.3} parent=0 // pred_fallthru
    _
  // Predicated region
  $region86: #{recosa_forward.3} parent=0 // pred_check
    _
  $region87: #{recosa_forward.3} parent=0 // pred_check_branch
    %107 = sbr.rel (0) target = $region89
  $region88: #{recosa_forward.3} parent=0 // pred_region
    _
  $region89: #{recosa_forward.3} parent=0 // pred_fallthru
    _
  // Predicated region
  $region90: #{recosa_forward.3} parent=0 // pred_check
    _
  $region91: #{recosa_forward.3} parent=0 // pred_check_branch
    %109 = sbr.rel (0) target = $region93
  $region92: #{recosa_forward.3} parent=0 // pred_region
    _
  $region93: #{recosa_forward.3} parent=0 // pred_fallthru
    _
  // Predicated region
  $region94: #{recosa_forward.3} parent=0 // pred_check
    _
  $region95: #{recosa_forward.3} parent=0 // pred_check_branch
    %111 = sbr.rel (0) target = $region97
  $region96: #{recosa_forward.3} parent=0 // pred_region
    _
  $region97: #{recosa_forward.3} parent=0 // pred_fallthru
    _
  // Predicated region
  $region98: #{recosa_forward.3} parent=0 // pred_check
    _
  $region99: #{recosa_forward.3} parent=0 // pred_check_branch
    %113 = sbr.rel (0) target = $region101
  $region100: #{recosa_forward.3} parent=0 // pred_region
    _
  $region101: #{recosa_forward.3} parent=0 // pred_fallthru
    _
  // Predicated region
  $region102: #{recosa_forward.3} parent=0 // pred_check
    _
  $region103: #{recosa_forward.3} parent=0 // pred_check_branch
    %115 = sbr.rel (0) target = $region105
  $region104: #{recosa_forward.3} parent=0 // pred_region
    _
  $region105: #{recosa_forward.3} parent=0 // pred_fallthru
    _
  // Predicated region
  $region106: #{recosa_forward.3} parent=0 // pred_check
    _
  $region107: #{recosa_forward.3} parent=0 // pred_check_branch
    %117 = sbr.rel (0) target = $region109
  $region108: #{recosa_forward.3} parent=0 // pred_region
    _
  $region109: #{recosa_forward.3} parent=0 // pred_fallthru
    _
  // Predicated region
  $region110: #{recosa_forward.3} parent=0 // pred_check
    _
  $region111: #{recosa_forward.3} parent=0 // pred_check_branch
    %119 = sbr.rel (0) target = $region113
  $region112: #{recosa_forward.3} parent=0 // pred_region
    _
  $region113: #{recosa_forward.3} parent=0 // pred_fallthru
    _
  // Predicated region
  $region114: #{recosa_forward.3} parent=0 // pred_check
    _
  $region115: #{recosa_forward.3} parent=0 // pred_check_branch
    %121 = sbr.rel (0) target = $region117
  $region116: #{recosa_forward.3} parent=0 // pred_region
    _
  $region117: #{recosa_forward.3} parent=0 // pred_fallthru
    _
  %v123 = vld [vmem:[%s1] sm:$0xff]
  %v124 = vld [vmem:[%s1 + $0x8] sm:$0xff]
  %v125 = vld [vmem:[%s3] sm:$0xff]
  %v126 = vld [vmem:[%s3 + $0x8] sm:$0xff]
  %129 = vrot.lane.b32.xlu0 %v125, 32
  %v130 = vpop.permute.xlu0 %129
  %131 = vrot.lane.b32.xlu0 %v126, 32
  %v132 = vpop.permute.xlu0 %131
  %vm135 = vcmask 261120
  %v136 = vsel %vm135, %v123, %v130
  %v137 = vsel %vm135, %v124, %v132
  %v138 = vld [vmem:[%s5] sm:$0xff]
  %v139 = vld [vmem:[%s5 + $0x8] sm:$0xf]
  %v140 = vld [vmem:[%s7] sm:$0xff]
  %v141 = vld [vmem:[%s7 + $0x8] sm:$0xff]
  %v142 = vld [vmem:[%s9] sm:$0xff]
  %v143 = vld [vmem:[%s9 + $0x8] sm:$0xff]
  %v144 = vld [vmem:[%s11] sm:$0x1]
  %v145 = vld [vmem:[%s13] sm:$0x1]
  %vm146 = vcmask 523264
  %v147 = vsel %vm146, %v136, 0.0
  %148 = vadd.xlane.f32.xlu0 %v147
  %v149 = vpop.xlane.xlu0 %148
  %v150 = vsel %vm146, %v137, 0.0
  %151 = vadd.xlane.f32.xlu0 %v150
  %v152 = vpop.xlane.xlu0 %151
  %v153 = vrcp.pop 64.0
  %v154 = vmul.f32 %v149, %v153
  %v155 = vmul.f32 %v152, %v153
  %v156 = vsub.f32 %v136, %v154
  %v157 = vsub.f32 %v137, %v155
  %v158 = vmul.f32 %v156, %v156
  %v159 = vmul.f32 %v157, %v157
  %v160 = vsel %vm146, %v158, 0.0
  %161 = vadd.xlane.f32.xlu0 %v160
  %v162 = vpop.xlane.xlu0 %161
  %v163 = vsel %vm146, %v159, 0.0
  %164 = vadd.xlane.f32.xlu0 %v163
  %v165 = vpop.xlane.xlu0 %164
  %v166 = vmul.f32 %v162, %v153
  %v167 = vmul.f32 %v165, %v153
  %v168 = vadd.f32 %v166, 1e-06
  %v169 = vadd.f32 %v167, 1e-06
  %v170 = vrsqrt.pop %v168
  %v171 = vrsqrt.pop %v169
  %v172 = vmul.f32 %v156, %v170
  %v173 = vmul.f32 %v157, %v171
  %v175 = vlaneseq
  %v176 = vshrl.u32 %v175, 7
  %v177 = vsub.s32 0, %v176
  %v178 = vrot.slane %v144, %v177
  %v180 = vmul.f32 %v172, %v178
  %v181 = vmul.f32 %v173, %v178
  %v183 = vlaneseq
  %v184 = vshrl.u32 %v183, 7
  %v185 = vsub.s32 0, %v184
  %v186 = vrot.slane %v145, %v185
  %v188 = vadd.f32 %v180, %v186
  %v189 = vadd.f32 %v181, %v186
  %v190 = vpack.c.bf16 %v189, %v188
  %v191 = vld [vmem:[%s15] sm:$0xff]
  %v192 = vld [vmem:[%s15 + $0x8] sm:$0xff]
  %v193 = vld [vmem:[%s15 + $0x10] sm:$0xff]
  %v194 = vld [vmem:[%s15 + $0x18] sm:$0xff]
  %v195 = vld [vmem:[%s15 + $0x20] sm:$0xff]
  %v196 = vld [vmem:[%s15 + $0x28] sm:$0xff]
  %v197 = vld [vmem:[%s15 + $0x30] sm:$0xff]
  %v198 = vld [vmem:[%s15 + $0x38] sm:$0xff]
  %v199 = vld [vmem:[%s17] sm:$0x3]
  %v201 = vlaneseq
  %v202 = vshrl.u32 %v201, 7
  %v203 = vsub.s32 0, %v202
  %v204 = vrot.slane %v199, %v203
  %v205 = vlaneseq
  %v206 = vshrl.u32 %v205, 7
  %v207 = vsub.s32 1, %v206
  %v208 = vrot.slane %v199, %v207
  %v219 = vunpack.c.l.b16 %v191
  %v220 = vunpack.c.h.b16 %v191
  %v221 = vunpack.c.l.b16 %v192
  %v222 = vunpack.c.h.b16 %v192
  %v223 = vunpack.c.l.b16 %v193
  %v224 = vunpack.c.h.b16 %v193
  %v225 = vunpack.c.l.b16 %v194
  %v226 = vunpack.c.h.b16 %v194
  %v227 = vunpack.c.l.b16 %v195
  %v228 = vunpack.c.h.b16 %v195
  %v229 = vunpack.c.l.b16 %v196
  %v230 = vunpack.c.h.b16 %v196
  %v231 = vunpack.c.l.b16 %v197
  %v232 = vunpack.c.h.b16 %v197
  %v233 = vunpack.c.l.b16 %v198
  %v234 = vunpack.c.h.b16 %v198
  %v235 = vpack.c.b16 %v221, %v219
  %v236 = vpack.c.b16 %v222, %v220
  %v237 = vpack.c.b16 %v225, %v223
  %v238 = vpack.c.b16 %v226, %v224
  %v239 = vpack.c.b16 %v229, %v227
  %v240 = vpack.c.b16 %v230, %v228
  %v241 = vpack.c.b16 %v233, %v231
  %v242 = vpack.c.b16 %v234, %v232
  %v252 = vsel %vm146, %v190, 0
  %254 = vmatprep.subr.bf16.mxu0 0
  %255 = vmatpush1.bf16.msra.mxu0 0
  %256 = vmatprep.subr.bf16.mxu0 0
  %257 = vmatpush1.bf16.msra.mxu0 0
  %258 = vmatprep.subr.bf16.mxu0 0
  %259 = vmatpush1.bf16.msra.mxu0 0
  %260 = vmatprep.subr.bf16.mxu0 0
  %261 = vmatpush1.bf16.msra.mxu0 0
  %262 = vmatprep.subr.bf16.mxu0 %v242
  %263 = vmatpush1.bf16.msra.mxu0 %v241
  %264 = vmatprep.subr.bf16.mxu0 %v240
  %265 = vmatpush1.bf16.msra.mxu0 %v239
  %266 = vmatprep.subr.bf16.mxu0 %v238
  %267 = vmatpush1.bf16.msra.mxu0 %v237
  %268 = vmatprep.subr.bf16.mxu0 %v236
  %269 = vmatpush1.bf16.msra.mxu0 %v235
  %270 = vmatprep.subr.bf16.mxu0 0
  %271 = vmatpush2.bf16.msra.mxu0 0
  %272 = vmatprep.subr.bf16.mxu0 0
  %273 = vmatpush2.bf16.msra.mxu0 0
  %274 = vmatprep.subr.bf16.mxu0 0
  %275 = vmatpush2.bf16.msra.mxu0 0
  %276 = vmatprep.subr.bf16.mxu0 0
  %277 = vmatpush2.bf16.msra.mxu0 0
  %278 = vmatprep.subr.bf16.mxu0 0
  %279 = vmatpush2.bf16.msra.mxu0 0
  %280 = vmatprep.subr.bf16.mxu0 0
  %281 = vmatpush2.bf16.msra.mxu0 0
  %282 = vmatprep.subr.bf16.mxu0 0
  %283 = vmatpush2.bf16.msra.mxu0 0
  %284 = vmatprep.subr.bf16.mxu0 0
  %285 = vmatpush2.bf16.msra.mxu0 0
  %286 = vmatprep.mubr.bf16.mxu0 0
  %287 = vmatmul.mubr.bf16.gmra.mxu0 %v252
  %v288 = vpop.f32.mrf.mxu0
  %v289 = vadd.f32 %v204, %v288
  %v290 = vpop.f32.mrf.mxu0
  %v291 = vadd.f32 %v208, %v290
  %v292 = vpop.f32.mrf.mxu0
  %v293 = vadd.f32 %v204, %v292
  %v294 = vpop.f32.mrf.mxu0
  %v295 = vadd.f32 %v208, %v294
  %296 = vdwg.mxu0
  %v297 = vld [vmem:[%s19] sm:$0xf]
  %v298 = vld [vmem:[%s19 + $0x4] sm:$0xf]
  %v299 = vld [vmem:[%s19 + $0x8] sm:$0xf]
  %v300 = vld [vmem:[%s19 + $0xc] sm:$0xf]
  %v301 = vld [vmem:[%s19 + $0x10] sm:$0xf]
  %v302 = vld [vmem:[%s19 + $0x14] sm:$0xf]
  %v303 = vld [vmem:[%s19 + $0x18] sm:$0xf]
  %v304 = vld [vmem:[%s19 + $0x1c] sm:$0xf]
  %307 = vrot.lane.b32.xlu0 %v289, 112
  %v308 = vpop.permute.xlu0 %307
  %309 = vrot.lane.b32.xlu0 %v293, 112
  %v310 = vpop.permute.xlu0 %309
  %313 = vrot.lane.b32.xlu0 %v289, 96
  %v314 = vpop.permute.xlu0 %313
  %315 = vrot.lane.b32.xlu0 %v293, 96
  %v316 = vpop.permute.xlu0 %315
  %319 = vrot.lane.b32.xlu0 %v289, 80
  %v320 = vpop.permute.xlu0 %319
  %321 = vrot.lane.b32.xlu0 %v293, 80
  %v322 = vpop.permute.xlu0 %321
  %v325 = vpack.c.bf16 %v293, %v289
  %v326 = vpack.c.bf16 %v310, %v308
  %v327 = vpack.c.bf16 %v316, %v314
  %v328 = vpack.c.bf16 %v322, %v320
  %331 = vrot.lane.b32.xlu0 %v291, 112
  %v332 = vpop.permute.xlu0 %331
  %333 = vrot.lane.b32.xlu0 %v295, 112
  %v334 = vpop.permute.xlu0 %333
  %337 = vrot.lane.b32.xlu0 %v291, 96
  %v338 = vpop.permute.xlu0 %337
  %339 = vrot.lane.b32.xlu0 %v295, 96
  %v340 = vpop.permute.xlu0 %339
  %343 = vrot.lane.b32.xlu0 %v291, 80
  %v344 = vpop.permute.xlu0 %343
  %345 = vrot.lane.b32.xlu0 %v295, 80
  %v346 = vpop.permute.xlu0 %345
  %v349 = vpack.c.bf16 %v295, %v291
  %v350 = vpack.c.bf16 %v334, %v332
  %v351 = vpack.c.bf16 %v340, %v338
  %v352 = vpack.c.bf16 %v346, %v344
  %354 = vrot.lane.b32.xlu0 %v325, 64
  %v355 = vpop.permute.xlu0 %354
  %vm356 = vcmask 130048
  %v358 = vsel %vm356, %v325, 0
  %v361 = vsel %vm356, %v355, 0
  %363 = vmatprep.subr.bf16.mxu0 0
  %364 = vmatpush1.bf16.xpose.msra.mxu0 0
  %365 = vmatprep.subr.bf16.mxu0 0
  %366 = vmatpush1.bf16.xpose.msra.mxu0 0
  %367 = vmatprep.subr.bf16.mxu0 0
  %368 = vmatpush1.bf16.xpose.msra.mxu0 0
  %369 = vmatprep.subr.bf16.mxu0 0
  %370 = vmatpush1.bf16.xpose.msra.mxu0 0
  %371 = vmatprep.subr.bf16.mxu0 0
  %372 = vmatpush1.bf16.xpose.msra.mxu0 0
  %373 = vmatprep.subr.bf16.mxu0 0
  %374 = vmatpush1.bf16.xpose.msra.mxu0 0
  %375 = vmatprep.subr.bf16.mxu0 0
  %376 = vmatpush1.bf16.xpose.msra.mxu0 0
  %377 = vmatprep.subr.bf16.mxu0 0
  %378 = vmatpush1.bf16.xpose.msra.mxu0 %v361
  %379 = vmatprep.subr.bf16.mxu0 0
  %380 = vmatpush2.bf16.xpose.msra.mxu0 0
  %381 = vmatprep.subr.bf16.mxu0 0
  %382 = vmatpush2.bf16.xpose.msra.mxu0 0
  %383 = vmatprep.subr.bf16.mxu0 0
  %384 = vmatpush2.bf16.xpose.msra.mxu0 0
  %385 = vmatprep.subr.bf16.mxu0 0
  %386 = vmatpush2.bf16.xpose.msra.mxu0 0
  %387 = vmatprep.subr.bf16.mxu0 0
  %388 = vmatpush2.bf16.xpose.msra.mxu0 0
  %389 = vmatprep.subr.bf16.mxu0 0
  %390 = vmatpush2.bf16.xpose.msra.mxu0 0
  %391 = vmatprep.subr.bf16.mxu0 0
  %392 = vmatpush2.bf16.xpose.msra.mxu0 0
  %393 = vmatprep.subr.bf16.mxu0 0
  %394 = vmatpush2.bf16.xpose.msra.mxu0 0
  %395 = vmatprep.mubr.bf16.mxu0 0
  %396 = vmatmul.mubr.bf16.gmra.mxu0 %v358
  %v397 = vpop.f32.mrf.mxu0
  %v398 = vadd.f32 0.0, %v397
  %v399 = vpop.f32.mrf.mxu0
  %v400 = vpop.f32.mrf.mxu0
  %v401 = vadd.f32 0.0, %v400
  %v402 = vpop.f32.mrf.mxu0
  %403 = vdwg.mxu0
  %405 = vrot.lane.b32.xlu0 %v326, 64
  %v406 = vpop.permute.xlu0 %405
  %v408 = vsel %vm356, %v326, 0
  %v411 = vsel %vm356, %v406, 0
  %413 = vmatprep.subr.bf16.mxu0 0
  %414 = vmatpush1.bf16.xpose.msra.mxu0 0
  %415 = vmatprep.subr.bf16.mxu0 0
  %416 = vmatpush1.bf16.xpose.msra.mxu0 0
  %417 = vmatprep.subr.bf16.mxu0 0
  %418 = vmatpush1.bf16.xpose.msra.mxu0 0
  %419 = vmatprep.subr.bf16.mxu0 0
  %420 = vmatpush1.bf16.xpose.msra.mxu0 0
  %421 = vmatprep.subr.bf16.mxu0 0
  %422 = vmatpush1.bf16.xpose.msra.mxu0 0
  %423 = vmatprep.subr.bf16.mxu0 0
  %424 = vmatpush1.bf16.xpose.msra.mxu0 0
  %425 = vmatprep.subr.bf16.mxu0 0
  %426 = vmatpush1.bf16.xpose.msra.mxu0 0
  %427 = vmatprep.subr.bf16.mxu0 0
  %428 = vmatpush1.bf16.xpose.msra.mxu0 %v411
  %429 = vmatprep.subr.bf16.mxu0 0
  %430 = vmatpush2.bf16.xpose.msra.mxu0 0
  %431 = vmatprep.subr.bf16.mxu0 0
  %432 = vmatpush2.bf16.xpose.msra.mxu0 0
  %433 = vmatprep.subr.bf16.mxu0 0
  %434 = vmatpush2.bf16.xpose.msra.mxu0 0
  %435 = vmatprep.subr.bf16.mxu0 0
  %436 = vmatpush2.bf16.xpose.msra.mxu0 0
  %437 = vmatprep.subr.bf16.mxu0 0
  %438 = vmatpush2.bf16.xpose.msra.mxu0 0
  %439 = vmatprep.subr.bf16.mxu0 0
  %440 = vmatpush2.bf16.xpose.msra.mxu0 0
  %441 = vmatprep.subr.bf16.mxu0 0
  %442 = vmatpush2.bf16.xpose.msra.mxu0 0
  %443 = vmatprep.subr.bf16.mxu0 0
  %444 = vmatpush2.bf16.xpose.msra.mxu0 0
  %445 = vmatprep.mubr.bf16.mxu0 0
  %446 = vmatmul.mubr.bf16.gmra.mxu0 %v408
  %v447 = vpop.f32.mrf.mxu0
  %v448 = vadd.f32 0.0, %v447
  %v449 = vpop.f32.mrf.mxu0
  %v450 = vpop.f32.mrf.mxu0
  %v451 = vadd.f32 0.0, %v450
  %v452 = vpop.f32.mrf.mxu0
  %453 = vdwg.mxu0
  %455 = vrot.lane.b32.xlu0 %v327, 64
  %v456 = vpop.permute.xlu0 %455
  %v458 = vsel %vm356, %v327, 0
  %v461 = vsel %vm356, %v456, 0
  %463 = vmatprep.subr.bf16.mxu0 0
  %464 = vmatpush1.bf16.xpose.msra.mxu0 0
  %465 = vmatprep.subr.bf16.mxu0 0
  %466 = vmatpush1.bf16.xpose.msra.mxu0 0
  %467 = vmatprep.subr.bf16.mxu0 0
  %468 = vmatpush1.bf16.xpose.msra.mxu0 0
  %469 = vmatprep.subr.bf16.mxu0 0
  %470 = vmatpush1.bf16.xpose.msra.mxu0 0
  %471 = vmatprep.subr.bf16.mxu0 0
  %472 = vmatpush1.bf16.xpose.msra.mxu0 0
  %473 = vmatprep.subr.bf16.mxu0 0
  %474 = vmatpush1.bf16.xpose.msra.mxu0 0
  %475 = vmatprep.subr.bf16.mxu0 0
  %476 = vmatpush1.bf16.xpose.msra.mxu0 0
  %477 = vmatprep.subr.bf16.mxu0 0
  %478 = vmatpush1.bf16.xpose.msra.mxu0 %v461
  %479 = vmatprep.subr.bf16.mxu0 0
  %480 = vmatpush2.bf16.xpose.msra.mxu0 0
  %481 = vmatprep.subr.bf16.mxu0 0
  %482 = vmatpush2.bf16.xpose.msra.mxu0 0
  %483 = vmatprep.subr.bf16.mxu0 0
  %484 = vmatpush2.bf16.xpose.msra.mxu0 0
  %485 = vmatprep.subr.bf16.mxu0 0
  %486 = vmatpush2.bf16.xpose.msra.mxu0 0
  %487 = vmatprep.subr.bf16.mxu0 0
  %488 = vmatpush2.bf16.xpose.msra.mxu0 0
  %489 = vmatprep.subr.bf16.mxu0 0
  %490 = vmatpush2.bf16.xpose.msra.mxu0 0
  %491 = vmatprep.subr.bf16.mxu0 0
  %492 = vmatpush2.bf16.xpose.msra.mxu0 0
  %493 = vmatprep.subr.bf16.mxu0 0
  %494 = vmatpush2.bf16.xpose.msra.mxu0 0
  %495 = vmatprep.mubr.bf16.mxu0 0
  %496 = vmatmul.mubr.bf16.gmra.mxu0 %v458
  %v497 = vpop.f32.mrf.mxu0
  %v498 = vadd.f32 0.0, %v497
  %v499 = vpop.f32.mrf.mxu0
  %v500 = vpop.f32.mrf.mxu0
  %v501 = vadd.f32 0.0, %v500
  %v502 = vpop.f32.mrf.mxu0
  %503 = vdwg.mxu0
  %505 = vrot.lane.b32.xlu0 %v328, 64
  %v506 = vpop.permute.xlu0 %505
  %v508 = vsel %vm356, %v328, 0
  %v511 = vsel %vm356, %v506, 0
  %513 = vmatprep.subr.bf16.mxu0 0
  %514 = vmatpush1.bf16.xpose.msra.mxu0 0
  %515 = vmatprep.subr.bf16.mxu0 0
  %516 = vmatpush1.bf16.xpose.msra.mxu0 0
  %517 = vmatprep.subr.bf16.mxu0 0
  %518 = vmatpush1.bf16.xpose.msra.mxu0 0
  %519 = vmatprep.subr.bf16.mxu0 0
  %520 = vmatpush1.bf16.xpose.msra.mxu0 0
  %521 = vmatprep.subr.bf16.mxu0 0
  %522 = vmatpush1.bf16.xpose.msra.mxu0 0
  %523 = vmatprep.subr.bf16.mxu0 0
  %524 = vmatpush1.bf16.xpose.msra.mxu0 0
  %525 = vmatprep.subr.bf16.mxu0 0
  %526 = vmatpush1.bf16.xpose.msra.mxu0 0
  %527 = vmatprep.subr.bf16.mxu0 0
  %528 = vmatpush1.bf16.xpose.msra.mxu0 %v511
  %529 = vmatprep.subr.bf16.mxu0 0
  %530 = vmatpush2.bf16.xpose.msra.mxu0 0
  %531 = vmatprep.subr.bf16.mxu0 0
  %532 = vmatpush2.bf16.xpose.msra.mxu0 0
  %533 = vmatprep.subr.bf16.mxu0 0
  %534 = vmatpush2.bf16.xpose.msra.mxu0 0
  %535 = vmatprep.subr.bf16.mxu0 0
  %536 = vmatpush2.bf16.xpose.msra.mxu0 0
  %537 = vmatprep.subr.bf16.mxu0 0
  %538 = vmatpush2.bf16.xpose.msra.mxu0 0
  %539 = vmatprep.subr.bf16.mxu0 0
  %540 = vmatpush2.bf16.xpose.msra.mxu0 0
  %541 = vmatprep.subr.bf16.mxu0 0
  %542 = vmatpush2.bf16.xpose.msra.mxu0 0
  %543 = vmatprep.subr.bf16.mxu0 0
  %544 = vmatpush2.bf16.xpose.msra.mxu0 0
  %545 = vmatprep.mubr.bf16.mxu0 0
  %546 = vmatmul.mubr.bf16.gmra.mxu0 %v508
  %v547 = vpop.f32.mrf.mxu0
  %v548 = vadd.f32 0.0, %v547
  %v549 = vpop.f32.mrf.mxu0
  %v550 = vpop.f32.mrf.mxu0
  %v551 = vadd.f32 0.0, %v550
  %v552 = vpop.f32.mrf.mxu0
  %553 = vdwg.mxu0
  %v554 = vmul.f32 %v398, 0.25
  %v555 = vmul.f32 %v401, 0.25
  %v556 = vmul.f32 %v448, 0.25
  %v557 = vmul.f32 %v451, 0.25
  %v558 = vmul.f32 %v498, 0.25
  %v559 = vmul.f32 %v501, 0.25
  %v560 = vmul.f32 %v548, 0.25
  %v561 = vmul.f32 %v551, 0.25
  %v562 = vadd.f32 %v554, %v140
  %v563 = vadd.f32 %v555, %v141
  %v564 = vadd.f32 %v556, %v140
  %v565 = vadd.f32 %v557, %v141
  %v566 = vadd.f32 %v558, %v140
  %v567 = vadd.f32 %v559, %v141
  %v568 = vadd.f32 %v560, %v140
  %v569 = vadd.f32 %v561, %v141
  %v570 = vsel %vm356, %v562, -inf
  %571 = vmax.xlane.f32.xlu0 %v570
  %v572 = vpop.xlane.xlu0 %571
  %v573 = vsel %vm356, %v563, -inf
  %574 = vmax.xlane.f32.xlu0 %v573
  %v575 = vpop.xlane.xlu0 %574
  %v576 = vsel %vm356, %v564, -inf
  %577 = vmax.xlane.f32.xlu0 %v576
  %v578 = vpop.xlane.xlu0 %577
  %v579 = vsel %vm356, %v565, -inf
  %580 = vmax.xlane.f32.xlu0 %v579
  %v581 = vpop.xlane.xlu0 %580
  %v582 = vsel %vm356, %v566, -inf
  %583 = vmax.xlane.f32.xlu0 %v582
  %v584 = vpop.xlane.xlu0 %583
  %v585 = vsel %vm356, %v567, -inf
  %586 = vmax.xlane.f32.xlu0 %v585
  %v587 = vpop.xlane.xlu0 %586
  %v588 = vsel %vm356, %v568, -inf
  %589 = vmax.xlane.f32.xlu0 %v588
  %v590 = vpop.xlane.xlu0 %589
  %v591 = vsel %vm356, %v569, -inf
  %592 = vmax.xlane.f32.xlu0 %v591
  %v593 = vpop.xlane.xlu0 %592
  %v594 = vsub.f32 %v562, %v572
  %v595 = vsub.f32 %v563, %v575
  %v596 = vsub.f32 %v564, %v578
  %v597 = vsub.f32 %v565, %v581
  %v598 = vsub.f32 %v566, %v584
  %v599 = vsub.f32 %v567, %v587
  %v600 = vsub.f32 %v568, %v590
  %v601 = vsub.f32 %v569, %v593
  %v602 = vmul.f32 %v594, 1.442695
  %v603 = vpow.pop %v602
  %v604 = vmul.f32 %v595, 1.442695
  %v605 = vpow.pop %v604
  %v606 = vmul.f32 %v596, 1.442695
  %v607 = vpow.pop %v606
  %v608 = vmul.f32 %v597, 1.442695
  %v609 = vpow.pop %v608
  %v610 = vmul.f32 %v598, 1.442695
  %v611 = vpow.pop %v610
  %v612 = vmul.f32 %v599, 1.442695
  %v613 = vpow.pop %v612
  %v614 = vmul.f32 %v600, 1.442695
  %v615 = vpow.pop %v614
  %v616 = vmul.f32 %v601, 1.442695
  %v617 = vpow.pop %v616
  %v618 = vsel %vm356, %v603, 0.0
  %619 = vadd.xlane.f32.xlu0 %v618
  %v620 = vpop.xlane.xlu0 %619
  %v621 = vsel %vm356, %v605, 0.0
  %622 = vadd.xlane.f32.xlu0 %v621
  %v623 = vpop.xlane.xlu0 %622
  %v624 = vsel %vm356, %v607, 0.0
  %625 = vadd.xlane.f32.xlu0 %v624
  %v626 = vpop.xlane.xlu0 %625
  %v627 = vsel %vm356, %v609, 0.0
  %628 = vadd.xlane.f32.xlu0 %v627
  %v629 = vpop.xlane.xlu0 %628
  %v630 = vsel %vm356, %v611, 0.0
  %631 = vadd.xlane.f32.xlu0 %v630
  %v632 = vpop.xlane.xlu0 %631
  %v633 = vsel %vm356, %v613, 0.0
  %634 = vadd.xlane.f32.xlu0 %v633
  %v635 = vpop.xlane.xlu0 %634
  %v636 = vsel %vm356, %v615, 0.0
  %637 = vadd.xlane.f32.xlu0 %v636
  %v638 = vpop.xlane.xlu0 %637
  %v639 = vsel %vm356, %v617, 0.0
  %640 = vadd.xlane.f32.xlu0 %v639
  %v641 = vpop.xlane.xlu0 %640
  %v642 = vrcp.pop %v620
  %v643 = vrcp.pop %v623
  %v644 = vrcp.pop %v626
  %v645 = vrcp.pop %v629
  %v646 = vrcp.pop %v632
  %v647 = vrcp.pop %v635
  %v648 = vrcp.pop %v638
  %v649 = vrcp.pop %v641
  %v650 = vmul.f32 %v603, %v642
  %v651 = vmul.f32 %v605, %v643
  %v652 = vmul.f32 %v607, %v644
  %v653 = vmul.f32 %v609, %v645
  %v654 = vmul.f32 %v611, %v646
  %v655 = vmul.f32 %v613, %v647
  %v656 = vmul.f32 %v615, %v648
  %v657 = vmul.f32 %v617, %v649
  %v658 = vpack.c.bf16 %v651, %v650
  %v659 = vpack.c.bf16 %v653, %v652
  %v660 = vpack.c.bf16 %v655, %v654
  %v661 = vpack.c.bf16 %v657, %v656
  %v663 = vsel %vm356, %v658, 0
  %665 = vmatprep.subr.bf16.mxu0 0
  %666 = vmatpush1.bf16.msra.mxu0 0
  %667 = vmatprep.subr.bf16.mxu0 0
  %668 = vmatpush1.bf16.msra.mxu0 0
  %669 = vmatprep.subr.bf16.mxu0 0
  %670 = vmatpush1.bf16.msra.mxu0 0
  %671 = vmatprep.subr.bf16.mxu0 0
  %672 = vmatpush1.bf16.msra.mxu0 0
  %673 = vmatprep.subr.bf16.mxu0 0
  %674 = vmatpush1.bf16.msra.mxu0 0
  %675 = vmatprep.subr.bf16.mxu0 0
  %676 = vmatpush1.bf16.msra.mxu0 0
  %677 = vmatprep.subr.bf16.mxu0 0
  %678 = vmatpush1.bf16.msra.mxu0 0
  %679 = vmatprep.subr.bf16.mxu0 0
  %680 = vmatpush1.bf16.msra.mxu0 %v349
  %681 = vmatprep.subr.bf16.mxu0 0
  %682 = vmatpush2.bf16.msra.mxu0 0
  %683 = vmatprep.subr.bf16.mxu0 0
  %684 = vmatpush2.bf16.msra.mxu0 0
  %685 = vmatprep.subr.bf16.mxu0 0
  %686 = vmatpush2.bf16.msra.mxu0 0
  %687 = vmatprep.subr.bf16.mxu0 0
  %688 = vmatpush2.bf16.msra.mxu0 0
  %689 = vmatprep.subr.bf16.mxu0 0
  %690 = vmatpush2.bf16.msra.mxu0 0
  %691 = vmatprep.subr.bf16.mxu0 0
  %692 = vmatpush2.bf16.msra.mxu0 0
  %693 = vmatprep.subr.bf16.mxu0 0
  %694 = vmatpush2.bf16.msra.mxu0 0
  %695 = vmatprep.subr.bf16.mxu0 0
  %696 = vmatpush2.bf16.msra.mxu0 0
  %697 = vmatprep.mubr.bf16.mxu0 0
  %698 = vmatmul.mubr.bf16.gmra.mxu0 %v663
  %v699 = vpop.f32.mrf.mxu0
  %v700 = vadd.f32 0.0, %v699
  %v701 = vpop.f32.mrf.mxu0
  %v702 = vpop.f32.mrf.mxu0
  %v703 = vadd.f32 0.0, %v702
  %v704 = vpop.f32.mrf.mxu0
  %705 = vdwg.mxu0
  %v707 = vsel %vm356, %v659, 0
  %709 = vmatprep.subr.bf16.mxu0 0
  %710 = vmatpush1.bf16.msra.mxu0 0
  %711 = vmatprep.subr.bf16.mxu0 0
  %712 = vmatpush1.bf16.msra.mxu0 0
  %713 = vmatprep.subr.bf16.mxu0 0
  %714 = vmatpush1.bf16.msra.mxu0 0
  %715 = vmatprep.subr.bf16.mxu0 0
  %716 = vmatpush1.bf16.msra.mxu0 0
  %717 = vmatprep.subr.bf16.mxu0 0
  %718 = vmatpush1.bf16.msra.mxu0 0
  %719 = vmatprep.subr.bf16.mxu0 0
  %720 = vmatpush1.bf16.msra.mxu0 0
  %721 = vmatprep.subr.bf16.mxu0 0
  %722 = vmatpush1.bf16.msra.mxu0 0
  %723 = vmatprep.subr.bf16.mxu0 0
  %724 = vmatpush1.bf16.msra.mxu0 %v350
  %725 = vmatprep.subr.bf16.mxu0 0
  %726 = vmatpush2.bf16.msra.mxu0 0
  %727 = vmatprep.subr.bf16.mxu0 0
  %728 = vmatpush2.bf16.msra.mxu0 0
  %729 = vmatprep.subr.bf16.mxu0 0
  %730 = vmatpush2.bf16.msra.mxu0 0
  %731 = vmatprep.subr.bf16.mxu0 0
  %732 = vmatpush2.bf16.msra.mxu0 0
  %733 = vmatprep.subr.bf16.mxu0 0
  %734 = vmatpush2.bf16.msra.mxu0 0
  %735 = vmatprep.subr.bf16.mxu0 0
  %736 = vmatpush2.bf16.msra.mxu0 0
  %737 = vmatprep.subr.bf16.mxu0 0
  %738 = vmatpush2.bf16.msra.mxu0 0
  %739 = vmatprep.subr.bf16.mxu0 0
  %740 = vmatpush2.bf16.msra.mxu0 0
  %741 = vmatprep.mubr.bf16.mxu0 0
  %742 = vmatmul.mubr.bf16.gmra.mxu0 %v707
  %v743 = vpop.f32.mrf.mxu0
  %v744 = vadd.f32 0.0, %v743
  %v745 = vpop.f32.mrf.mxu0
  %v746 = vpop.f32.mrf.mxu0
  %v747 = vadd.f32 0.0, %v746
  %v748 = vpop.f32.mrf.mxu0
  %749 = vdwg.mxu0
  %v751 = vsel %vm356, %v660, 0
  %753 = vmatprep.subr.bf16.mxu0 0
  %754 = vmatpush1.bf16.msra.mxu0 0
  %755 = vmatprep.subr.bf16.mxu0 0
  %756 = vmatpush1.bf16.msra.mxu0 0
  %757 = vmatprep.subr.bf16.mxu0 0
  %758 = vmatpush1.bf16.msra.mxu0 0
  %759 = vmatprep.subr.bf16.mxu0 0
  %760 = vmatpush1.bf16.msra.mxu0 0
  %761 = vmatprep.subr.bf16.mxu0 0
  %762 = vmatpush1.bf16.msra.mxu0 0
  %763 = vmatprep.subr.bf16.mxu0 0
  %764 = vmatpush1.bf16.msra.mxu0 0
  %765 = vmatprep.subr.bf16.mxu0 0
  %766 = vmatpush1.bf16.msra.mxu0 0
  %767 = vmatprep.subr.bf16.mxu0 0
  %768 = vmatpush1.bf16.msra.mxu0 %v351
  %769 = vmatprep.subr.bf16.mxu0 0
  %770 = vmatpush2.bf16.msra.mxu0 0
  %771 = vmatprep.subr.bf16.mxu0 0
  %772 = vmatpush2.bf16.msra.mxu0 0
  %773 = vmatprep.subr.bf16.mxu0 0
  %774 = vmatpush2.bf16.msra.mxu0 0
  %775 = vmatprep.subr.bf16.mxu0 0
  %776 = vmatpush2.bf16.msra.mxu0 0
  %777 = vmatprep.subr.bf16.mxu0 0
  %778 = vmatpush2.bf16.msra.mxu0 0
  %779 = vmatprep.subr.bf16.mxu0 0
  %780 = vmatpush2.bf16.msra.mxu0 0
  %781 = vmatprep.subr.bf16.mxu0 0
  %782 = vmatpush2.bf16.msra.mxu0 0
  %783 = vmatprep.subr.bf16.mxu0 0
  %784 = vmatpush2.bf16.msra.mxu0 0
  %785 = vmatprep.mubr.bf16.mxu0 0
  %786 = vmatmul.mubr.bf16.gmra.mxu0 %v751
  %v787 = vpop.f32.mrf.mxu0
  %v788 = vadd.f32 0.0, %v787
  %v789 = vpop.f32.mrf.mxu0
  %v790 = vpop.f32.mrf.mxu0
  %v791 = vadd.f32 0.0, %v790
  %v792 = vpop.f32.mrf.mxu0
  %793 = vdwg.mxu0
  %v795 = vsel %vm356, %v661, 0
  %797 = vmatprep.subr.bf16.mxu0 0
  %798 = vmatpush1.bf16.msra.mxu0 0
  %799 = vmatprep.subr.bf16.mxu0 0
  %800 = vmatpush1.bf16.msra.mxu0 0
  %801 = vmatprep.subr.bf16.mxu0 0
  %802 = vmatpush1.bf16.msra.mxu0 0
  %803 = vmatprep.subr.bf16.mxu0 0
  %804 = vmatpush1.bf16.msra.mxu0 0
  %805 = vmatprep.subr.bf16.mxu0 0
  %806 = vmatpush1.bf16.msra.mxu0 0
  %807 = vmatprep.subr.bf16.mxu0 0
  %808 = vmatpush1.bf16.msra.mxu0 0
  %809 = vmatprep.subr.bf16.mxu0 0
  %810 = vmatpush1.bf16.msra.mxu0 0
  %811 = vmatprep.subr.bf16.mxu0 0
  %812 = vmatpush1.bf16.msra.mxu0 %v352
  %813 = vmatprep.subr.bf16.mxu0 0
  %814 = vmatpush2.bf16.msra.mxu0 0
  %815 = vmatprep.subr.bf16.mxu0 0
  %816 = vmatpush2.bf16.msra.mxu0 0
  %817 = vmatprep.subr.bf16.mxu0 0
  %818 = vmatpush2.bf16.msra.mxu0 0
  %819 = vmatprep.subr.bf16.mxu0 0
  %820 = vmatpush2.bf16.msra.mxu0 0
  %821 = vmatprep.subr.bf16.mxu0 0
  %822 = vmatpush2.bf16.msra.mxu0 0
  %823 = vmatprep.subr.bf16.mxu0 0
  %824 = vmatpush2.bf16.msra.mxu0 0
  %825 = vmatprep.subr.bf16.mxu0 0
  %826 = vmatpush2.bf16.msra.mxu0 0
  %827 = vmatprep.subr.bf16.mxu0 0
  %828 = vmatpush2.bf16.msra.mxu0 0
  %829 = vmatprep.mubr.bf16.mxu0 0
  %830 = vmatmul.mubr.bf16.gmra.mxu0 %v795
  %v831 = vpop.f32.mrf.mxu0
  %v832 = vadd.f32 0.0, %v831
  %v833 = vpop.f32.mrf.mxu0
  %v834 = vpop.f32.mrf.mxu0
  %v835 = vadd.f32 0.0, %v834
  %v836 = vpop.f32.mrf.mxu0
  %837 = vdwg.mxu0
  %v838 = vpack.c.bf16 %v703, %v700
  %v839 = vpack.c.bf16 %v747, %v744
  %v842 = vunpack.c.l.b16 %v299
  %v843 = vunpack.c.l.b16 %v300
  %v844 = vpack.c.b16 %v843, %v842
  %v847 = vsel %vm356, %v839, 0
  %849 = vmatprep.subr.bf16.mxu0 0
  %850 = vmatpush1.bf16.msra.mxu0 0
  %851 = vmatprep.subr.bf16.mxu0 0
  %852 = vmatpush1.bf16.msra.mxu0 0
  %853 = vmatprep.subr.bf16.mxu0 0
  %854 = vmatpush1.bf16.msra.mxu0 0
  %855 = vmatprep.subr.bf16.mxu0 0
  %856 = vmatpush1.bf16.msra.mxu0 0
  %857 = vmatprep.subr.bf16.mxu0 0
  %858 = vmatpush1.bf16.msra.mxu0 0
  %859 = vmatprep.subr.bf16.mxu0 0
  %860 = vmatpush1.bf16.msra.mxu0 0
  %861 = vmatprep.subr.bf16.mxu0 0
  %862 = vmatpush1.bf16.msra.mxu0 0
  %863 = vmatprep.subr.bf16.mxu0 0
  %864 = vmatpush1.bf16.msra.mxu0 %v844
  %865 = vmatprep.subr.bf16.mxu0 0
  %866 = vmatpush2.bf16.msra.mxu0 0
  %867 = vmatprep.subr.bf16.mxu0 0
  %868 = vmatpush2.bf16.msra.mxu0 0
  %869 = vmatprep.subr.bf16.mxu0 0
  %870 = vmatpush2.bf16.msra.mxu0 0
  %871 = vmatprep.subr.bf16.mxu0 0
  %872 = vmatpush2.bf16.msra.mxu0 0
  %873 = vmatprep.subr.bf16.mxu0 0
  %874 = vmatpush2.bf16.msra.mxu0 0
  %875 = vmatprep.subr.bf16.mxu0 0
  %876 = vmatpush2.bf16.msra.mxu0 0
  %877 = vmatprep.subr.bf16.mxu0 0
  %878 = vmatpush2.bf16.msra.mxu0 0
  %879 = vmatprep.subr.bf16.mxu0 0
  %880 = vmatpush2.bf16.msra.mxu0 0
  %881 = vmatprep.mubr.bf16.mxu0 0
  %882 = vmatmul.mubr.bf16.gmra.mxu0 %v847
  %v883 = vpop.f32.mrf.mxu0
  %v884 = vadd.f32 0.0, %v883
  %v885 = vpop.f32.mrf.mxu0
  %v886 = vpop.f32.mrf.mxu0
  %v887 = vadd.f32 0.0, %v886
  %v888 = vpop.f32.mrf.mxu0
  %889 = vdwg.mxu0
  %v892 = vunpack.c.l.b16 %v297
  %v893 = vunpack.c.l.b16 %v298
  %v894 = vpack.c.b16 %v893, %v892
  %v897 = vsel %vm356, %v838, 0
  %899 = vmatprep.subr.bf16.mxu0 0
  %900 = vmatpush1.bf16.msra.mxu0 0
  %901 = vmatprep.subr.bf16.mxu0 0
  %902 = vmatpush1.bf16.msra.mxu0 0
  %903 = vmatprep.subr.bf16.mxu0 0
  %904 = vmatpush1.bf16.msra.mxu0 0
  %905 = vmatprep.subr.bf16.mxu0 0
  %906 = vmatpush1.bf16.msra.mxu0 0
  %907 = vmatprep.subr.bf16.mxu0 0
  %908 = vmatpush1.bf16.msra.mxu0 0
  %909 = vmatprep.subr.bf16.mxu0 0
  %910 = vmatpush1.bf16.msra.mxu0 0
  %911 = vmatprep.subr.bf16.mxu0 0
  %912 = vmatpush1.bf16.msra.mxu0 0
  %913 = vmatprep.subr.bf16.mxu0 0
  %914 = vmatpush1.bf16.msra.mxu0 %v894
  %915 = vmatprep.subr.bf16.mxu0 0
  %916 = vmatpush2.bf16.msra.mxu0 0
  %917 = vmatprep.subr.bf16.mxu0 0
  %918 = vmatpush2.bf16.msra.mxu0 0
  %919 = vmatprep.subr.bf16.mxu0 0
  %920 = vmatpush2.bf16.msra.mxu0 0
  %921 = vmatprep.subr.bf16.mxu0 0
  %922 = vmatpush2.bf16.msra.mxu0 0
  %923 = vmatprep.subr.bf16.mxu0 0
  %924 = vmatpush2.bf16.msra.mxu0 0
  %925 = vmatprep.subr.bf16.mxu0 0
  %926 = vmatpush2.bf16.msra.mxu0 0
  %927 = vmatprep.subr.bf16.mxu0 0
  %928 = vmatpush2.bf16.msra.mxu0 0
  %929 = vmatprep.subr.bf16.mxu0 0
  %930 = vmatpush2.bf16.msra.mxu0 0
  %931 = vmatprep.mubr.bf16.mxu0 0
  %932 = vmatmul.mubr.bf16.gmra.mxu0 %v897
  %v933 = vpop.f32.mrf.mxu0
  %v934 = vadd.f32 %v884, %v933
  %v935 = vpop.f32.mrf.mxu0
  %v936 = vpop.f32.mrf.mxu0
  %v937 = vadd.f32 %v887, %v936
  %v938 = vpop.f32.mrf.mxu0
  %939 = vdwg.mxu0
  %v940 = vpack.c.bf16 %v791, %v788
  %v943 = vunpack.c.l.b16 %v301
  %v944 = vunpack.c.l.b16 %v302
  %v945 = vpack.c.b16 %v944, %v943
  %v948 = vsel %vm356, %v940, 0
  %950 = vmatprep.subr.bf16.mxu0 0
  %951 = vmatpush1.bf16.msra.mxu0 0
  %952 = vmatprep.subr.bf16.mxu0 0
  %953 = vmatpush1.bf16.msra.mxu0 0
  %954 = vmatprep.subr.bf16.mxu0 0
  %955 = vmatpush1.bf16.msra.mxu0 0
  %956 = vmatprep.subr.bf16.mxu0 0
  %957 = vmatpush1.bf16.msra.mxu0 0
  %958 = vmatprep.subr.bf16.mxu0 0
  %959 = vmatpush1.bf16.msra.mxu0 0
  %960 = vmatprep.subr.bf16.mxu0 0
  %961 = vmatpush1.bf16.msra.mxu0 0
  %962 = vmatprep.subr.bf16.mxu0 0
  %963 = vmatpush1.bf16.msra.mxu0 0
  %964 = vmatprep.subr.bf16.mxu0 0
  %965 = vmatpush1.bf16.msra.mxu0 %v945
  %966 = vmatprep.subr.bf16.mxu0 0
  %967 = vmatpush2.bf16.msra.mxu0 0
  %968 = vmatprep.subr.bf16.mxu0 0
  %969 = vmatpush2.bf16.msra.mxu0 0
  %970 = vmatprep.subr.bf16.mxu0 0
  %971 = vmatpush2.bf16.msra.mxu0 0
  %972 = vmatprep.subr.bf16.mxu0 0
  %973 = vmatpush2.bf16.msra.mxu0 0
  %974 = vmatprep.subr.bf16.mxu0 0
  %975 = vmatpush2.bf16.msra.mxu0 0
  %976 = vmatprep.subr.bf16.mxu0 0
  %977 = vmatpush2.bf16.msra.mxu0 0
  %978 = vmatprep.subr.bf16.mxu0 0
  %979 = vmatpush2.bf16.msra.mxu0 0
  %980 = vmatprep.subr.bf16.mxu0 0
  %981 = vmatpush2.bf16.msra.mxu0 0
  %982 = vmatprep.mubr.bf16.mxu0 0
  %983 = vmatmul.mubr.bf16.gmra.mxu0 %v948
  %v984 = vpop.f32.mrf.mxu0
  %v985 = vadd.f32 0.0, %v984
  %v986 = vpop.f32.mrf.mxu0
  %v987 = vpop.f32.mrf.mxu0
  %v988 = vadd.f32 0.0, %v987
  %v989 = vpop.f32.mrf.mxu0
  %990 = vdwg.mxu0
  %v991 = vadd.f32 %v934, %v985
  %v992 = vadd.f32 %v937, %v988
  %v993 = vpack.c.bf16 %v835, %v832
  %v996 = vunpack.c.l.b16 %v303
  %v997 = vunpack.c.l.b16 %v304
  %v998 = vpack.c.b16 %v997, %v996
  %v1001 = vsel %vm356, %v993, 0
  %1003 = vmatprep.subr.bf16.mxu0 0
  %1004 = vmatpush1.bf16.msra.mxu0 0
  %1005 = vmatprep.subr.bf16.mxu0 0
  %1006 = vmatpush1.bf16.msra.mxu0 0
  %1007 = vmatprep.subr.bf16.mxu0 0
  %1008 = vmatpush1.bf16.msra.mxu0 0
  %1009 = vmatprep.subr.bf16.mxu0 0
  %1010 = vmatpush1.bf16.msra.mxu0 0
  %1011 = vmatprep.subr.bf16.mxu0 0
  %1012 = vmatpush1.bf16.msra.mxu0 0
  %1013 = vmatprep.subr.bf16.mxu0 0
  %1014 = vmatpush1.bf16.msra.mxu0 0
  %1015 = vmatprep.subr.bf16.mxu0 0
  %1016 = vmatpush1.bf16.msra.mxu0 0
  %1017 = vmatprep.subr.bf16.mxu0 0
  %1018 = vmatpush1.bf16.msra.mxu0 %v998
  %1019 = vmatprep.subr.bf16.mxu0 0
  %1020 = vmatpush2.bf16.msra.mxu0 0
  %1021 = vmatprep.subr.bf16.mxu0 0
  %1022 = vmatpush2.bf16.msra.mxu0 0
  %1023 = vmatprep.subr.bf16.mxu0 0
  %1024 = vmatpush2.bf16.msra.mxu0 0
  %1025 = vmatprep.subr.bf16.mxu0 0
  %1026 = vmatpush2.bf16.msra.mxu0 0
  %1027 = vmatprep.subr.bf16.mxu0 0
  %1028 = vmatpush2.bf16.msra.mxu0 0
  %1029 = vmatprep.subr.bf16.mxu0 0
  %1030 = vmatpush2.bf16.msra.mxu0 0
  %1031 = vmatprep.subr.bf16.mxu0 0
  %1032 = vmatpush2.bf16.msra.mxu0 0
  %1033 = vmatprep.subr.bf16.mxu0 0
  %1034 = vmatpush2.bf16.msra.mxu0 0
  %1035 = vmatprep.mubr.bf16.mxu0 0
  %1036 = vmatmul.mubr.bf16.gmra.mxu0 %v1001
  %v1037 = vpop.f32.mrf.mxu0
  %v1038 = vadd.f32 0.0, %v1037
  %v1039 = vpop.f32.mrf.mxu0
  %v1040 = vpop.f32.mrf.mxu0
  %v1041 = vadd.f32 0.0, %v1040
  %v1042 = vpop.f32.mrf.mxu0
  %1043 = vdwg.mxu0
  %v1044 = vadd.f32 %v991, %v1038
  %v1045 = vadd.f32 %v992, %v1041
  %v1046 = vadd.f32 %v136, %v1044
  %v1047 = vadd.f32 %v137, %v1045
  %v1048 = vld [vmem:[%s21] sm:$0x1]
  %v1050 = vlaneseq
  %v1051 = vshrl.u32 %v1050, 7
  %v1052 = vsub.s32 0, %v1051
  %v1053 = vrot.slane %v1048, %v1052
  %v1055 = vadd.f32 %v1046, %v1053
  %v1056 = vadd.f32 %v1047, %v1053
  %v1057 = vld [vmem:[%s23] sm:$0x1]
  %v1058 = vld [vmem:[%s25] sm:$0x1]
  %v1059 = vsel %vm146, %v1055, 0.0
  %1060 = vadd.xlane.f32.xlu0 %v1059
  %v1061 = vpop.xlane.xlu0 %1060
  %v1062 = vsel %vm146, %v1056, 0.0
  %1063 = vadd.xlane.f32.xlu0 %v1062
  %v1064 = vpop.xlane.xlu0 %1063
  %v1065 = vmul.f32 %v1061, %v153
  %v1066 = vmul.f32 %v1064, %v153
  %v1067 = vsub.f32 %v1055, %v1065
  %v1068 = vsub.f32 %v1056, %v1066
  %v1069 = vmul.f32 %v1067, %v1067
  %v1070 = vmul.f32 %v1068, %v1068
  %v1071 = vsel %vm146, %v1069, 0.0
  %1072 = vadd.xlane.f32.xlu0 %v1071
  %v1073 = vpop.xlane.xlu0 %1072
  %v1074 = vsel %vm146, %v1070, 0.0
  %1075 = vadd.xlane.f32.xlu0 %v1074
  %v1076 = vpop.xlane.xlu0 %1075
  %v1077 = vmul.f32 %v1073, %v153
  %v1078 = vmul.f32 %v1076, %v153
  %v1079 = vadd.f32 %v1077, 1e-06
  %v1080 = vadd.f32 %v1078, 1e-06
  %v1081 = vrsqrt.pop %v1079
  %v1082 = vrsqrt.pop %v1080
  %v1083 = vmul.f32 %v1067, %v1081
  %v1084 = vmul.f32 %v1068, %v1082
  %v1086 = vlaneseq
  %v1087 = vshrl.u32 %v1086, 7
  %v1088 = vsub.s32 0, %v1087
  %v1089 = vrot.slane %v1057, %v1088
  %v1091 = vmul.f32 %v1083, %v1089
  %v1092 = vmul.f32 %v1084, %v1089
  %v1094 = vlaneseq
  %v1095 = vshrl.u32 %v1094, 7
  %v1096 = vsub.s32 0, %v1095
  %v1097 = vrot.slane %v1058, %v1096
  %v1099 = vadd.f32 %v1091, %v1097
  %v1100 = vadd.f32 %v1092, %v1097
  %v1101 = vpack.c.bf16 %v1100, %v1099
  %v1102 = vld [vmem:[%s27] sm:$0xf]
  %v1103 = vld [vmem:[%s27 + $0x4] sm:$0xf]
  %v1104 = vld [vmem:[%s27 + $0x8] sm:$0xf]
  %v1105 = vld [vmem:[%s27 + $0xc] sm:$0xf]
  %v1106 = vld [vmem:[%s27 + $0x10] sm:$0xf]
  %v1107 = vld [vmem:[%s27 + $0x14] sm:$0xf]
  %v1108 = vld [vmem:[%s27 + $0x18] sm:$0xf]
  %v1109 = vld [vmem:[%s27 + $0x1c] sm:$0xf]
  %v1110 = vld [vmem:[%s29] sm:$0x1]
  %v1112 = vlaneseq
  %v1113 = vshrl.u32 %v1112, 7
  %v1114 = vsub.s32 0, %v1113
  %v1115 = vrot.slane %v1110, %v1114
  %v1125 = vunpack.c.l.b16 %v1102
  %v1126 = vunpack.c.l.b16 %v1103
  %v1127 = vunpack.c.l.b16 %v1104
  %v1128 = vunpack.c.l.b16 %v1105
  %v1129 = vunpack.c.l.b16 %v1106
  %v1130 = vunpack.c.l.b16 %v1107
  %v1131 = vunpack.c.l.b16 %v1108
  %v1132 = vunpack.c.l.b16 %v1109
  %v1133 = vpack.c.b16 %v1126, %v1125
  %v1134 = vpack.c.b16 %v1128, %v1127
  %v1135 = vpack.c.b16 %v1130, %v1129
  %v1136 = vpack.c.b16 %v1132, %v1131
  %v1142 = vsel %vm146, %v1101, 0
  %1144 = vmatprep.subr.bf16.mxu0 0
  %1145 = vmatpush1.bf16.msra.mxu0 0
  %1146 = vmatprep.subr.bf16.mxu0 0
  %1147 = vmatpush1.bf16.msra.mxu0 0
  %1148 = vmatprep.subr.bf16.mxu0 0
  %1149 = vmatpush1.bf16.msra.mxu0 0
  %1150 = vmatprep.subr.bf16.mxu0 0
  %1151 = vmatpush1.bf16.msra.mxu0 0
  %1152 = vmatprep.subr.bf16.mxu0 0
  %1153 = vmatpush1.bf16.msra.mxu0 %v1136
  %1154 = vmatprep.subr.bf16.mxu0 0
  %1155 = vmatpush1.bf16.msra.mxu0 %v1135
  %1156 = vmatprep.subr.bf16.mxu0 0
  %1157 = vmatpush1.bf16.msra.mxu0 %v1134
  %1158 = vmatprep.subr.bf16.mxu0 0
  %1159 = vmatpush1.bf16.msra.mxu0 %v1133
  %1160 = vmatprep.subr.bf16.mxu0 0
  %1161 = vmatpush2.bf16.msra.mxu0 0
  %1162 = vmatprep.subr.bf16.mxu0 0
  %1163 = vmatpush2.bf16.msra.mxu0 0
  %1164 = vmatprep.subr.bf16.mxu0 0
  %1165 = vmatpush2.bf16.msra.mxu0 0
  %1166 = vmatprep.subr.bf16.mxu0 0
  %1167 = vmatpush2.bf16.msra.mxu0 0
  %1168 = vmatprep.subr.bf16.mxu0 0
  %1169 = vmatpush2.bf16.msra.mxu0 0
  %1170 = vmatprep.subr.bf16.mxu0 0
  %1171 = vmatpush2.bf16.msra.mxu0 0
  %1172 = vmatprep.subr.bf16.mxu0 0
  %1173 = vmatpush2.bf16.msra.mxu0 0
  %1174 = vmatprep.subr.bf16.mxu0 0
  %1175 = vmatpush2.bf16.msra.mxu0 0
  %1176 = vmatprep.mubr.bf16.mxu0 0
  %1177 = vmatmul.mubr.bf16.gmra.mxu0 %v1142
  %v1178 = vpop.f32.mrf.mxu0
  %v1179 = vadd.f32 %v1115, %v1178
  %v1180 = vpop.f32.mrf.mxu0
  %v1181 = vpop.f32.mrf.mxu0
  %v1182 = vadd.f32 %v1115, %v1181
  %v1183 = vpop.f32.mrf.mxu0
  %1184 = vdwg.mxu0
  %v1185 = vpack.c.bf16 %v139, %v138
  %v1186 = vld [vmem:[%s31] sm:$0xf]
  %v1187 = vld [vmem:[%s31 + $0x4] sm:$0xf]
  %v1188 = vld [vmem:[%s31 + $0x8] sm:$0xf]
  %v1189 = vld [vmem:[%s31 + $0xc] sm:$0xf]
  %v1190 = vld [vmem:[%s31 + $0x10] sm:$0xf]
  %v1191 = vld [vmem:[%s31 + $0x14] sm:$0xf]
  %v1192 = vld [vmem:[%s31 + $0x18] sm:$0xf]
  %v1193 = vld [vmem:[%s31 + $0x1c] sm:$0xf]
  %v1194 = vld [vmem:[%s33] sm:$0x1]
  %v1196 = vlaneseq
  %v1197 = vshrl.u32 %v1196, 7
  %v1198 = vsub.s32 0, %v1197
  %v1199 = vrot.slane %v1194, %v1198
  %v1209 = vunpack.c.l.b16 %v1186
  %v1210 = vunpack.c.l.b16 %v1187
  %v1211 = vunpack.c.l.b16 %v1188
  %v1212 = vunpack.c.l.b16 %v1189
  %v1213 = vunpack.c.l.b16 %v1190
  %v1214 = vunpack.c.l.b16 %v1191
  %v1215 = vunpack.c.l.b16 %v1192
  %v1216 = vunpack.c.l.b16 %v1193
  %v1217 = vpack.c.b16 %v1210, %v1209
  %v1218 = vpack.c.b16 %v1212, %v1211
  %v1219 = vpack.c.b16 %v1214, %v1213
  %v1220 = vpack.c.b16 %v1216, %v1215
  %v1226 = vsel %vm146, %v1185, 0
  %1228 = vmatprep.subr.bf16.mxu0 0
  %1229 = vmatpush1.bf16.msra.mxu0 0
  %1230 = vmatprep.subr.bf16.mxu0 0
  %1231 = vmatpush1.bf16.msra.mxu0 0
  %1232 = vmatprep.subr.bf16.mxu0 0
  %1233 = vmatpush1.bf16.msra.mxu0 0
  %1234 = vmatprep.subr.bf16.mxu0 0
  %1235 = vmatpush1.bf16.msra.mxu0 0
  %1236 = vmatprep.subr.bf16.mxu0 0
  %1237 = vmatpush1.bf16.msra.mxu0 %v1220
  %1238 = vmatprep.subr.bf16.mxu0 0
  %1239 = vmatpush1.bf16.msra.mxu0 %v1219
  %1240 = vmatprep.subr.bf16.mxu0 0
  %1241 = vmatpush1.bf16.msra.mxu0 %v1218
  %1242 = vmatprep.subr.bf16.mxu0 0
  %1243 = vmatpush1.bf16.msra.mxu0 %v1217
  %1244 = vmatprep.subr.bf16.mxu0 0
  %1245 = vmatpush2.bf16.msra.mxu0 0
  %1246 = vmatprep.subr.bf16.mxu0 0
  %1247 = vmatpush2.bf16.msra.mxu0 0
  %1248 = vmatprep.subr.bf16.mxu0 0
  %1249 = vmatpush2.bf16.msra.mxu0 0
  %1250 = vmatprep.subr.bf16.mxu0 0
  %1251 = vmatpush2.bf16.msra.mxu0 0
  %1252 = vmatprep.subr.bf16.mxu0 0
  %1253 = vmatpush2.bf16.msra.mxu0 0
  %1254 = vmatprep.subr.bf16.mxu0 0
  %1255 = vmatpush2.bf16.msra.mxu0 0
  %1256 = vmatprep.subr.bf16.mxu0 0
  %1257 = vmatpush2.bf16.msra.mxu0 0
  %1258 = vmatprep.subr.bf16.mxu0 0
  %1259 = vmatpush2.bf16.msra.mxu0 0
  %1260 = vmatprep.mubr.bf16.mxu0 0
  %1261 = vmatmul.mubr.bf16.gmra.mxu0 %v1226
  %v1262 = vpop.f32.mrf.mxu0
  %v1263 = vadd.f32 %v1199, %v1262
  %v1264 = vpop.f32.mrf.mxu0
  %v1265 = vpop.f32.mrf.mxu0
  %v1266 = vadd.f32 %v1199, %v1265
  %v1267 = vpop.f32.mrf.mxu0
  %1268 = vdwg.mxu0
  %v1269 = vld [vmem:[%s35] sm:$0xf]
  %v1270 = vld [vmem:[%s35 + $0x4] sm:$0xf]
  %v1271 = vld [vmem:[%s35 + $0x8] sm:$0xf]
  %v1272 = vld [vmem:[%s35 + $0xc] sm:$0xf]
  %v1273 = vld [vmem:[%s35 + $0x10] sm:$0xf]
  %v1274 = vld [vmem:[%s35 + $0x14] sm:$0xf]
  %v1275 = vld [vmem:[%s35 + $0x18] sm:$0xf]
  %v1276 = vld [vmem:[%s35 + $0x1c] sm:$0xf]
  %1279 = vrot.lane.b32.xlu0 %v1179, 112
  %v1280 = vpop.permute.xlu0 %1279
  %1281 = vrot.lane.b32.xlu0 %v1182, 112
  %v1282 = vpop.permute.xlu0 %1281
  %1285 = vrot.lane.b32.xlu0 %v1179, 96
  %v1286 = vpop.permute.xlu0 %1285
  %1287 = vrot.lane.b32.xlu0 %v1182, 96
  %v1288 = vpop.permute.xlu0 %1287
  %1291 = vrot.lane.b32.xlu0 %v1179, 80
  %v1292 = vpop.permute.xlu0 %1291
  %1293 = vrot.lane.b32.xlu0 %v1182, 80
  %v1294 = vpop.permute.xlu0 %1293
  %v1297 = vpack.c.bf16 %v1182, %v1179
  %v1298 = vpack.c.bf16 %v1282, %v1280
  %v1299 = vpack.c.bf16 %v1288, %v1286
  %v1300 = vpack.c.bf16 %v1294, %v1292
  %1303 = vrot.lane.b32.xlu0 %v1263, 112
  %v1304 = vpop.permute.xlu0 %1303
  %1305 = vrot.lane.b32.xlu0 %v1266, 112
  %v1306 = vpop.permute.xlu0 %1305
  %1309 = vrot.lane.b32.xlu0 %v1263, 96
  %v1310 = vpop.permute.xlu0 %1309
  %1311 = vrot.lane.b32.xlu0 %v1266, 96
  %v1312 = vpop.permute.xlu0 %1311
  %1315 = vrot.lane.b32.xlu0 %v1263, 80
  %v1316 = vpop.permute.xlu0 %1315
  %1317 = vrot.lane.b32.xlu0 %v1266, 80
  %v1318 = vpop.permute.xlu0 %1317
  %v1321 = vpack.c.bf16 %v1266, %v1263
  %v1322 = vpack.c.bf16 %v1306, %v1304
  %v1323 = vpack.c.bf16 %v1312, %v1310
  %v1324 = vpack.c.bf16 %v1318, %v1316
  %v1326 = vsel %vm356, %v1297, 0
  %v1329 = vsel %vm356, %v1321, 0
  %1331 = vmatprep.subr.bf16.mxu0 0
  %1332 = vmatpush1.bf16.xpose.msra.mxu0 0
  %1333 = vmatprep.subr.bf16.mxu0 0
  %1334 = vmatpush1.bf16.xpose.msra.mxu0 0
  %1335 = vmatprep.subr.bf16.mxu0 0
  %1336 = vmatpush1.bf16.xpose.msra.mxu0 0
  %1337 = vmatprep.subr.bf16.mxu0 0
  %1338 = vmatpush1.bf16.xpose.msra.mxu0 0
  %1339 = vmatprep.subr.bf16.mxu0 0
  %1340 = vmatpush1.bf16.xpose.msra.mxu0 0
  %1341 = vmatprep.subr.bf16.mxu0 0
  %1342 = vmatpush1.bf16.xpose.msra.mxu0 0
  %1343 = vmatprep.subr.bf16.mxu0 0
  %1344 = vmatpush1.bf16.xpose.msra.mxu0 0
  %1345 = vmatprep.subr.bf16.mxu0 0
  %1346 = vmatpush1.bf16.xpose.msra.mxu0 %v1329
  %1347 = vmatprep.subr.bf16.mxu0 0
  %1348 = vmatpush2.bf16.xpose.msra.mxu0 0
  %1349 = vmatprep.subr.bf16.mxu0 0
  %1350 = vmatpush2.bf16.xpose.msra.mxu0 0
  %1351 = vmatprep.subr.bf16.mxu0 0
  %1352 = vmatpush2.bf16.xpose.msra.mxu0 0
  %1353 = vmatprep.subr.bf16.mxu0 0
  %1354 = vmatpush2.bf16.xpose.msra.mxu0 0
  %1355 = vmatprep.subr.bf16.mxu0 0
  %1356 = vmatpush2.bf16.xpose.msra.mxu0 0
  %1357 = vmatprep.subr.bf16.mxu0 0
  %1358 = vmatpush2.bf16.xpose.msra.mxu0 0
  %1359 = vmatprep.subr.bf16.mxu0 0
  %1360 = vmatpush2.bf16.xpose.msra.mxu0 0
  %1361 = vmatprep.subr.bf16.mxu0 0
  %1362 = vmatpush2.bf16.xpose.msra.mxu0 0
  %1363 = vmatprep.mubr.bf16.mxu0 0
  %1364 = vmatmul.mubr.bf16.gmra.mxu0 %v1326
  %v1365 = vpop.f32.mrf.mxu0
  %v1366 = vadd.f32 0.0, %v1365
  %v1367 = vpop.f32.mrf.mxu0
  %v1368 = vpop.f32.mrf.mxu0
  %v1369 = vadd.f32 0.0, %v1368
  %v1370 = vpop.f32.mrf.mxu0
  %1371 = vdwg.mxu0
  %v1373 = vsel %vm356, %v1298, 0
  %v1376 = vsel %vm356, %v1322, 0
  %1378 = vmatprep.subr.bf16.mxu0 0
  %1379 = vmatpush1.bf16.xpose.msra.mxu0 0
  %1380 = vmatprep.subr.bf16.mxu0 0
  %1381 = vmatpush1.bf16.xpose.msra.mxu0 0
  %1382 = vmatprep.subr.bf16.mxu0 0
  %1383 = vmatpush1.bf16.xpose.msra.mxu0 0
  %1384 = vmatprep.subr.bf16.mxu0 0
  %1385 = vmatpush1.bf16.xpose.msra.mxu0 0
  %1386 = vmatprep.subr.bf16.mxu0 0
  %1387 = vmatpush1.bf16.xpose.msra.mxu0 0
  %1388 = vmatprep.subr.bf16.mxu0 0
  %1389 = vmatpush1.bf16.xpose.msra.mxu0 0
  %1390 = vmatprep.subr.bf16.mxu0 0
  %1391 = vmatpush1.bf16.xpose.msra.mxu0 0
  %1392 = vmatprep.subr.bf16.mxu0 0
  %1393 = vmatpush1.bf16.xpose.msra.mxu0 %v1376
  %1394 = vmatprep.subr.bf16.mxu0 0
  %1395 = vmatpush2.bf16.xpose.msra.mxu0 0
  %1396 = vmatprep.subr.bf16.mxu0 0
  %1397 = vmatpush2.bf16.xpose.msra.mxu0 0
  %1398 = vmatprep.subr.bf16.mxu0 0
  %1399 = vmatpush2.bf16.xpose.msra.mxu0 0
  %1400 = vmatprep.subr.bf16.mxu0 0
  %1401 = vmatpush2.bf16.xpose.msra.mxu0 0
  %1402 = vmatprep.subr.bf16.mxu0 0
  %1403 = vmatpush2.bf16.xpose.msra.mxu0 0
  %1404 = vmatprep.subr.bf16.mxu0 0
  %1405 = vmatpush2.bf16.xpose.msra.mxu0 0
  %1406 = vmatprep.subr.bf16.mxu0 0
  %1407 = vmatpush2.bf16.xpose.msra.mxu0 0
  %1408 = vmatprep.subr.bf16.mxu0 0
  %1409 = vmatpush2.bf16.xpose.msra.mxu0 0
  %1410 = vmatprep.mubr.bf16.mxu0 0
  %1411 = vmatmul.mubr.bf16.gmra.mxu0 %v1373
  %v1412 = vpop.f32.mrf.mxu0
  %v1413 = vadd.f32 0.0, %v1412
  %v1414 = vpop.f32.mrf.mxu0
  %v1415 = vpop.f32.mrf.mxu0
  %v1416 = vadd.f32 0.0, %v1415
  %v1417 = vpop.f32.mrf.mxu0
  %1418 = vdwg.mxu0
  %v1420 = vsel %vm356, %v1299, 0
  %v1423 = vsel %vm356, %v1323, 0
  %1425 = vmatprep.subr.bf16.mxu0 0
  %1426 = vmatpush1.bf16.xpose.msra.mxu0 0
  %1427 = vmatprep.subr.bf16.mxu0 0
  %1428 = vmatpush1.bf16.xpose.msra.mxu0 0
  %1429 = vmatprep.subr.bf16.mxu0 0
  %1430 = vmatpush1.bf16.xpose.msra.mxu0 0
  %1431 = vmatprep.subr.bf16.mxu0 0
  %1432 = vmatpush1.bf16.xpose.msra.mxu0 0
  %1433 = vmatprep.subr.bf16.mxu0 0
  %1434 = vmatpush1.bf16.xpose.msra.mxu0 0
  %1435 = vmatprep.subr.bf16.mxu0 0
  %1436 = vmatpush1.bf16.xpose.msra.mxu0 0
  %1437 = vmatprep.subr.bf16.mxu0 0
  %1438 = vmatpush1.bf16.xpose.msra.mxu0 0
  %1439 = vmatprep.subr.bf16.mxu0 0
  %1440 = vmatpush1.bf16.xpose.msra.mxu0 %v1423
  %1441 = vmatprep.subr.bf16.mxu0 0
  %1442 = vmatpush2.bf16.xpose.msra.mxu0 0
  %1443 = vmatprep.subr.bf16.mxu0 0
  %1444 = vmatpush2.bf16.xpose.msra.mxu0 0
  %1445 = vmatprep.subr.bf16.mxu0 0
  %1446 = vmatpush2.bf16.xpose.msra.mxu0 0
  %1447 = vmatprep.subr.bf16.mxu0 0
  %1448 = vmatpush2.bf16.xpose.msra.mxu0 0
  %1449 = vmatprep.subr.bf16.mxu0 0
  %1450 = vmatpush2.bf16.xpose.msra.mxu0 0
  %1451 = vmatprep.subr.bf16.mxu0 0
  %1452 = vmatpush2.bf16.xpose.msra.mxu0 0
  %1453 = vmatprep.subr.bf16.mxu0 0
  %1454 = vmatpush2.bf16.xpose.msra.mxu0 0
  %1455 = vmatprep.subr.bf16.mxu0 0
  %1456 = vmatpush2.bf16.xpose.msra.mxu0 0
  %1457 = vmatprep.mubr.bf16.mxu0 0
  %1458 = vmatmul.mubr.bf16.gmra.mxu0 %v1420
  %v1459 = vpop.f32.mrf.mxu0
  %v1460 = vadd.f32 0.0, %v1459
  %v1461 = vpop.f32.mrf.mxu0
  %v1462 = vpop.f32.mrf.mxu0
  %v1463 = vadd.f32 0.0, %v1462
  %v1464 = vpop.f32.mrf.mxu0
  %1465 = vdwg.mxu0
  %v1467 = vsel %vm356, %v1300, 0
  %v1470 = vsel %vm356, %v1324, 0
  %1472 = vmatprep.subr.bf16.mxu0 0
  %1473 = vmatpush1.bf16.xpose.msra.mxu0 0
  %1474 = vmatprep.subr.bf16.mxu0 0
  %1475 = vmatpush1.bf16.xpose.msra.mxu0 0
  %1476 = vmatprep.subr.bf16.mxu0 0
  %1477 = vmatpush1.bf16.xpose.msra.mxu0 0
  %1478 = vmatprep.subr.bf16.mxu0 0
  %1479 = vmatpush1.bf16.xpose.msra.mxu0 0
  %1480 = vmatprep.subr.bf16.mxu0 0
  %1481 = vmatpush1.bf16.xpose.msra.mxu0 0
  %1482 = vmatprep.subr.bf16.mxu0 0
  %1483 = vmatpush1.bf16.xpose.msra.mxu0 0
  %1484 = vmatprep.subr.bf16.mxu0 0
  %1485 = vmatpush1.bf16.xpose.msra.mxu0 0
  %1486 = vmatprep.subr.bf16.mxu0 0
  %1487 = vmatpush1.bf16.xpose.msra.mxu0 %v1470
  %1488 = vmatprep.subr.bf16.mxu0 0
  %1489 = vmatpush2.bf16.xpose.msra.mxu0 0
  %1490 = vmatprep.subr.bf16.mxu0 0
  %1491 = vmatpush2.bf16.xpose.msra.mxu0 0
  %1492 = vmatprep.subr.bf16.mxu0 0
  %1493 = vmatpush2.bf16.xpose.msra.mxu0 0
  %1494 = vmatprep.subr.bf16.mxu0 0
  %1495 = vmatpush2.bf16.xpose.msra.mxu0 0
  %1496 = vmatprep.subr.bf16.mxu0 0
  %1497 = vmatpush2.bf16.xpose.msra.mxu0 0
  %1498 = vmatprep.subr.bf16.mxu0 0
  %1499 = vmatpush2.bf16.xpose.msra.mxu0 0
  %1500 = vmatprep.subr.bf16.mxu0 0
  %1501 = vmatpush2.bf16.xpose.msra.mxu0 0
  %1502 = vmatprep.subr.bf16.mxu0 0
  %1503 = vmatpush2.bf16.xpose.msra.mxu0 0
  %1504 = vmatprep.mubr.bf16.mxu0 0
  %1505 = vmatmul.mubr.bf16.gmra.mxu0 %v1467
  %v1506 = vpop.f32.mrf.mxu0
  %v1507 = vadd.f32 0.0, %v1506
  %v1508 = vpop.f32.mrf.mxu0
  %v1509 = vpop.f32.mrf.mxu0
  %v1510 = vadd.f32 0.0, %v1509
  %v1511 = vpop.f32.mrf.mxu0
  %1512 = vdwg.mxu0
  %v1513 = vmul.f32 %v1366, 0.25
  %v1514 = vmul.f32 %v1369, 0.25
  %v1515 = vmul.f32 %v1413, 0.25
  %v1516 = vmul.f32 %v1416, 0.25
  %v1517 = vmul.f32 %v1460, 0.25
  %v1518 = vmul.f32 %v1463, 0.25
  %v1519 = vmul.f32 %v1507, 0.25
  %v1520 = vmul.f32 %v1510, 0.25
  %v1521 = vadd.f32 %v1513, %v142
  %v1522 = vadd.f32 %v1514, %v143
  %v1523 = vadd.f32 %v1515, %v142
  %v1524 = vadd.f32 %v1516, %v143
  %v1525 = vadd.f32 %v1517, %v142
  %v1526 = vadd.f32 %v1518, %v143
  %v1527 = vadd.f32 %v1519, %v142
  %v1528 = vadd.f32 %v1520, %v143
  %vm1529 = vcmask 97280
  %v1530 = vsel %vm1529, %v1521, -inf
  %1531 = vmax.xlane.f32.xlu0 %v1530
  %v1532 = vpop.xlane.xlu0 %1531
  %v1533 = vsel %vm1529, %v1522, -inf
  %1534 = vmax.xlane.f32.xlu0 %v1533
  %v1535 = vpop.xlane.xlu0 %1534
  %v1536 = vsel %vm1529, %v1523, -inf
  %1537 = vmax.xlane.f32.xlu0 %v1536
  %v1538 = vpop.xlane.xlu0 %1537
  %v1539 = vsel %vm1529, %v1524, -inf
  %1540 = vmax.xlane.f32.xlu0 %v1539
  %v1541 = vpop.xlane.xlu0 %1540
  %v1542 = vsel %vm1529, %v1525, -inf
  %1543 = vmax.xlane.f32.xlu0 %v1542
  %v1544 = vpop.xlane.xlu0 %1543
  %v1545 = vsel %vm1529, %v1526, -inf
  %1546 = vmax.xlane.f32.xlu0 %v1545
  %v1547 = vpop.xlane.xlu0 %1546
  %v1548 = vsel %vm1529, %v1527, -inf
  %1549 = vmax.xlane.f32.xlu0 %v1548
  %v1550 = vpop.xlane.xlu0 %1549
  %v1551 = vsel %vm1529, %v1528, -inf
  %1552 = vmax.xlane.f32.xlu0 %v1551
  %v1553 = vpop.xlane.xlu0 %1552
  %v1554 = vsub.f32 %v1521, %v1532
  %v1555 = vsub.f32 %v1522, %v1535
  %v1556 = vsub.f32 %v1523, %v1538
  %v1557 = vsub.f32 %v1524, %v1541
  %v1558 = vsub.f32 %v1525, %v1544
  %v1559 = vsub.f32 %v1526, %v1547
  %v1560 = vsub.f32 %v1527, %v1550
  %v1561 = vsub.f32 %v1528, %v1553
  %v1562 = vmul.f32 %v1554, 1.442695
  %v1563 = vpow.pop %v1562
  %v1564 = vmul.f32 %v1555, 1.442695
  %v1565 = vpow.pop %v1564
  %v1566 = vmul.f32 %v1556, 1.442695
  %v1567 = vpow.pop %v1566
  %v1568 = vmul.f32 %v1557, 1.442695
  %v1569 = vpow.pop %v1568
  %v1570 = vmul.f32 %v1558, 1.442695
  %v1571 = vpow.pop %v1570
  %v1572 = vmul.f32 %v1559, 1.442695
  %v1573 = vpow.pop %v1572
  %v1574 = vmul.f32 %v1560, 1.442695
  %v1575 = vpow.pop %v1574
  %v1576 = vmul.f32 %v1561, 1.442695
  %v1577 = vpow.pop %v1576
  %v1578 = vsel %vm1529, %v1563, 0.0
  %1579 = vadd.xlane.f32.xlu0 %v1578
  %v1580 = vpop.xlane.xlu0 %1579
  %v1581 = vsel %vm1529, %v1565, 0.0
  %1582 = vadd.xlane.f32.xlu0 %v1581
  %v1583 = vpop.xlane.xlu0 %1582
  %v1584 = vsel %vm1529, %v1567, 0.0
  %1585 = vadd.xlane.f32.xlu0 %v1584
  %v1586 = vpop.xlane.xlu0 %1585
  %v1587 = vsel %vm1529, %v1569, 0.0
  %1588 = vadd.xlane.f32.xlu0 %v1587
  %v1589 = vpop.xlane.xlu0 %1588
  %v1590 = vsel %vm1529, %v1571, 0.0
  %1591 = vadd.xlane.f32.xlu0 %v1590
  %v1592 = vpop.xlane.xlu0 %1591
  %v1593 = vsel %vm1529, %v1573, 0.0
  %1594 = vadd.xlane.f32.xlu0 %v1593
  %v1595 = vpop.xlane.xlu0 %1594
  %v1596 = vsel %vm1529, %v1575, 0.0
  %1597 = vadd.xlane.f32.xlu0 %v1596
  %v1598 = vpop.xlane.xlu0 %1597
  %v1599 = vsel %vm1529, %v1577, 0.0
  %1600 = vadd.xlane.f32.xlu0 %v1599
  %v1601 = vpop.xlane.xlu0 %1600
  %v1602 = vrcp.pop %v1580
  %v1603 = vrcp.pop %v1583
  %v1604 = vrcp.pop %v1586
  %v1605 = vrcp.pop %v1589
  %v1606 = vrcp.pop %v1592
  %v1607 = vrcp.pop %v1595
  %v1608 = vrcp.pop %v1598
  %v1609 = vrcp.pop %v1601
  %v1610 = vmul.f32 %v1563, %v1602
  %v1611 = vmul.f32 %v1565, %v1603
  %v1612 = vmul.f32 %v1567, %v1604
  %v1613 = vmul.f32 %v1569, %v1605
  %v1614 = vmul.f32 %v1571, %v1606
  %v1615 = vmul.f32 %v1573, %v1607
  %v1616 = vmul.f32 %v1575, %v1608
  %v1617 = vmul.f32 %v1577, %v1609
  %v1618 = vpack.c.bf16 %v1611, %v1610
  %v1619 = vpack.c.bf16 %v1613, %v1612
  %v1620 = vpack.c.bf16 %v1615, %v1614
  %v1621 = vpack.c.bf16 %v1617, %v1616
  %1623 = vrot.lane.b32.xlu0 %v1321, 64
  %v1624 = vpop.permute.xlu0 %1623
  %v1626 = vsel %vm1529, %v1618, 0
  %vm1628 = vcmask 1045504
  %v1630 = vsel %vm1628, %v1624, 0
  %1632 = vmatprep.subr.bf16.mxu0 0
  %1633 = vmatpush1.bf16.msra.mxu0 0
  %1634 = vmatprep.subr.bf16.mxu0 0
  %1635 = vmatpush1.bf16.msra.mxu0 0
  %1636 = vmatprep.subr.bf16.mxu0 0
  %1637 = vmatpush1.bf16.msra.mxu0 0
  %1638 = vmatprep.subr.bf16.mxu0 0
  %1639 = vmatpush1.bf16.msra.mxu0 0
  %1640 = vmatprep.subr.bf16.mxu0 0
  %1641 = vmatpush1.bf16.msra.mxu0 0
  %1642 = vmatprep.subr.bf16.mxu0 0
  %1643 = vmatpush1.bf16.msra.mxu0 0
  %1644 = vmatprep.subr.bf16.mxu0 0
  %1645 = vmatpush1.bf16.msra.mxu0 0
  %1646 = vmatprep.subr.bf16.mxu0 0
  %1647 = vmatpush1.bf16.msra.mxu0 %v1630
  %1648 = vmatprep.subr.bf16.mxu0 0
  %1649 = vmatpush2.bf16.msra.mxu0 0
  %1650 = vmatprep.subr.bf16.mxu0 0
  %1651 = vmatpush2.bf16.msra.mxu0 0
  %1652 = vmatprep.subr.bf16.mxu0 0
  %1653 = vmatpush2.bf16.msra.mxu0 0
  %1654 = vmatprep.subr.bf16.mxu0 0
  %1655 = vmatpush2.bf16.msra.mxu0 0
  %1656 = vmatprep.subr.bf16.mxu0 0
  %1657 = vmatpush2.bf16.msra.mxu0 0
  %1658 = vmatprep.subr.bf16.mxu0 0
  %1659 = vmatpush2.bf16.msra.mxu0 0
  %1660 = vmatprep.subr.bf16.mxu0 0
  %1661 = vmatpush2.bf16.msra.mxu0 0
  %1662 = vmatprep.subr.bf16.mxu0 0
  %1663 = vmatpush2.bf16.msra.mxu0 0
  %1664 = vmatprep.mubr.bf16.mxu0 0
  %1665 = vmatmul.mubr.bf16.gmra.mxu0 %v1626
  %v1666 = vpop.f32.mrf.mxu0
  %v1667 = vadd.f32 0.0, %v1666
  %v1668 = vpop.f32.mrf.mxu0
  %v1669 = vpop.f32.mrf.mxu0
  %v1670 = vadd.f32 0.0, %v1669
  %v1671 = vpop.f32.mrf.mxu0
  %1672 = vdwg.mxu0
  %1674 = vrot.lane.b32.xlu0 %v1322, 64
  %v1675 = vpop.permute.xlu0 %1674
  %v1677 = vsel %vm1529, %v1619, 0
  %v1680 = vsel %vm1628, %v1675, 0
  %1682 = vmatprep.subr.bf16.mxu0 0
  %1683 = vmatpush1.bf16.msra.mxu0 0
  %1684 = vmatprep.subr.bf16.mxu0 0
  %1685 = vmatpush1.bf16.msra.mxu0 0
  %1686 = vmatprep.subr.bf16.mxu0 0
  %1687 = vmatpush1.bf16.msra.mxu0 0
  %1688 = vmatprep.subr.bf16.mxu0 0
  %1689 = vmatpush1.bf16.msra.mxu0 0
  %1690 = vmatprep.subr.bf16.mxu0 0
  %1691 = vmatpush1.bf16.msra.mxu0 0
  %1692 = vmatprep.subr.bf16.mxu0 0
  %1693 = vmatpush1.bf16.msra.mxu0 0
  %1694 = vmatprep.subr.bf16.mxu0 0
  %1695 = vmatpush1.bf16.msra.mxu0 0
  %1696 = vmatprep.subr.bf16.mxu0 0
  %1697 = vmatpush1.bf16.msra.mxu0 %v1680
  %1698 = vmatprep.subr.bf16.mxu0 0
  %1699 = vmatpush2.bf16.msra.mxu0 0
  %1700 = vmatprep.subr.bf16.mxu0 0
  %1701 = vmatpush2.bf16.msra.mxu0 0
  %1702 = vmatprep.subr.bf16.mxu0 0
  %1703 = vmatpush2.bf16.msra.mxu0 0
  %1704 = vmatprep.subr.bf16.mxu0 0
  %1705 = vmatpush2.bf16.msra.mxu0 0
  %1706 = vmatprep.subr.bf16.mxu0 0
  %1707 = vmatpush2.bf16.msra.mxu0 0
  %1708 = vmatprep.subr.bf16.mxu0 0
  %1709 = vmatpush2.bf16.msra.mxu0 0
  %1710 = vmatprep.subr.bf16.mxu0 0
  %1711 = vmatpush2.bf16.msra.mxu0 0
  %1712 = vmatprep.subr.bf16.mxu0 0
  %1713 = vmatpush2.bf16.msra.mxu0 0
  %1714 = vmatprep.mubr.bf16.mxu0 0
  %1715 = vmatmul.mubr.bf16.gmra.mxu0 %v1677
  %v1716 = vpop.f32.mrf.mxu0
  %v1717 = vadd.f32 0.0, %v1716
  %v1718 = vpop.f32.mrf.mxu0
  %v1719 = vpop.f32.mrf.mxu0
  %v1720 = vadd.f32 0.0, %v1719
  %v1721 = vpop.f32.mrf.mxu0
  %1722 = vdwg.mxu0
  %1724 = vrot.lane.b32.xlu0 %v1323, 64
  %v1725 = vpop.permute.xlu0 %1724
  %v1727 = vsel %vm1529, %v1620, 0
  %v1730 = vsel %vm1628, %v1725, 0
  %1732 = vmatprep.subr.bf16.mxu0 0
  %1733 = vmatpush1.bf16.msra.mxu0 0
  %1734 = vmatprep.subr.bf16.mxu0 0
  %1735 = vmatpush1.bf16.msra.mxu0 0
  %1736 = vmatprep.subr.bf16.mxu0 0
  %1737 = vmatpush1.bf16.msra.mxu0 0
  %1738 = vmatprep.subr.bf16.mxu0 0
  %1739 = vmatpush1.bf16.msra.mxu0 0
  %1740 = vmatprep.subr.bf16.mxu0 0
  %1741 = vmatpush1.bf16.msra.mxu0 0
  %1742 = vmatprep.subr.bf16.mxu0 0
  %1743 = vmatpush1.bf16.msra.mxu0 0
  %1744 = vmatprep.subr.bf16.mxu0 0
  %1745 = vmatpush1.bf16.msra.mxu0 0
  %1746 = vmatprep.subr.bf16.mxu0 0
  %1747 = vmatpush1.bf16.msra.mxu0 %v1730
  %1748 = vmatprep.subr.bf16.mxu0 0
  %1749 = vmatpush2.bf16.msra.mxu0 0
  %1750 = vmatprep.subr.bf16.mxu0 0
  %1751 = vmatpush2.bf16.msra.mxu0 0
  %1752 = vmatprep.subr.bf16.mxu0 0
  %1753 = vmatpush2.bf16.msra.mxu0 0
  %1754 = vmatprep.subr.bf16.mxu0 0
  %1755 = vmatpush2.bf16.msra.mxu0 0
  %1756 = vmatprep.subr.bf16.mxu0 0
  %1757 = vmatpush2.bf16.msra.mxu0 0
  %1758 = vmatprep.subr.bf16.mxu0 0
  %1759 = vmatpush2.bf16.msra.mxu0 0
  %1760 = vmatprep.subr.bf16.mxu0 0
  %1761 = vmatpush2.bf16.msra.mxu0 0
  %1762 = vmatprep.subr.bf16.mxu0 0
  %1763 = vmatpush2.bf16.msra.mxu0 0
  %1764 = vmatprep.mubr.bf16.mxu0 0
  %1765 = vmatmul.mubr.bf16.gmra.mxu0 %v1727
  %v1766 = vpop.f32.mrf.mxu0
  %v1767 = vadd.f32 0.0, %v1766
  %v1768 = vpop.f32.mrf.mxu0
  %v1769 = vpop.f32.mrf.mxu0
  %v1770 = vadd.f32 0.0, %v1769
  %v1771 = vpop.f32.mrf.mxu0
  %1772 = vdwg.mxu0
  %1774 = vrot.lane.b32.xlu0 %v1324, 64
  %v1775 = vpop.permute.xlu0 %1774
  %v1777 = vsel %vm1529, %v1621, 0
  %v1780 = vsel %vm1628, %v1775, 0
  %1782 = vmatprep.subr.bf16.mxu0 0
  %1783 = vmatpush1.bf16.msra.mxu0 0
  %1784 = vmatprep.subr.bf16.mxu0 0
  %1785 = vmatpush1.bf16.msra.mxu0 0
  %1786 = vmatprep.subr.bf16.mxu0 0
  %1787 = vmatpush1.bf16.msra.mxu0 0
  %1788 = vmatprep.subr.bf16.mxu0 0
  %1789 = vmatpush1.bf16.msra.mxu0 0
  %1790 = vmatprep.subr.bf16.mxu0 0
  %1791 = vmatpush1.bf16.msra.mxu0 0
  %1792 = vmatprep.subr.bf16.mxu0 0
  %1793 = vmatpush1.bf16.msra.mxu0 0
  %1794 = vmatprep.subr.bf16.mxu0 0
  %1795 = vmatpush1.bf16.msra.mxu0 0
  %1796 = vmatprep.subr.bf16.mxu0 0
  %1797 = vmatpush1.bf16.msra.mxu0 %v1780
  %1798 = vmatprep.subr.bf16.mxu0 0
  %1799 = vmatpush2.bf16.msra.mxu0 0
  %1800 = vmatprep.subr.bf16.mxu0 0
  %1801 = vmatpush2.bf16.msra.mxu0 0
  %1802 = vmatprep.subr.bf16.mxu0 0
  %1803 = vmatpush2.bf16.msra.mxu0 0
  %1804 = vmatprep.subr.bf16.mxu0 0
  %1805 = vmatpush2.bf16.msra.mxu0 0
  %1806 = vmatprep.subr.bf16.mxu0 0
  %1807 = vmatpush2.bf16.msra.mxu0 0
  %1808 = vmatprep.subr.bf16.mxu0 0
  %1809 = vmatpush2.bf16.msra.mxu0 0
  %1810 = vmatprep.subr.bf16.mxu0 0
  %1811 = vmatpush2.bf16.msra.mxu0 0
  %1812 = vmatprep.subr.bf16.mxu0 0
  %1813 = vmatpush2.bf16.msra.mxu0 0
  %1814 = vmatprep.mubr.bf16.mxu0 0
  %1815 = vmatmul.mubr.bf16.gmra.mxu0 %v1777
  %v1816 = vpop.f32.mrf.mxu0
  %v1817 = vadd.f32 0.0, %v1816
  %v1818 = vpop.f32.mrf.mxu0
  %v1819 = vpop.f32.mrf.mxu0
  %v1820 = vadd.f32 0.0, %v1819
  %v1821 = vpop.f32.mrf.mxu0
  %1822 = vdwg.mxu0
  %v1823 = vpack.c.bf16 %v1670, %v1667
  %v1824 = vpack.c.bf16 %v1720, %v1717
  %v1827 = vunpack.c.l.b16 %v1271
  %v1828 = vunpack.c.l.b16 %v1272
  %v1829 = vpack.c.b16 %v1828, %v1827
  %v1832 = vsel %vm356, %v1824, 0
  %1834 = vmatprep.subr.bf16.mxu0 0
  %1835 = vmatpush1.bf16.msra.mxu0 0
  %1836 = vmatprep.subr.bf16.mxu0 0
  %1837 = vmatpush1.bf16.msra.mxu0 0
  %1838 = vmatprep.subr.bf16.mxu0 0
  %1839 = vmatpush1.bf16.msra.mxu0 0
  %1840 = vmatprep.subr.bf16.mxu0 0
  %1841 = vmatpush1.bf16.msra.mxu0 0
  %1842 = vmatprep.subr.bf16.mxu0 0
  %1843 = vmatpush1.bf16.msra.mxu0 0
  %1844 = vmatprep.subr.bf16.mxu0 0
  %1845 = vmatpush1.bf16.msra.mxu0 0
  %1846 = vmatprep.subr.bf16.mxu0 0
  %1847 = vmatpush1.bf16.msra.mxu0 0
  %1848 = vmatprep.subr.bf16.mxu0 0
  %1849 = vmatpush1.bf16.msra.mxu0 %v1829
  %1850 = vmatprep.subr.bf16.mxu0 0
  %1851 = vmatpush2.bf16.msra.mxu0 0
  %1852 = vmatprep.subr.bf16.mxu0 0
  %1853 = vmatpush2.bf16.msra.mxu0 0
  %1854 = vmatprep.subr.bf16.mxu0 0
  %1855 = vmatpush2.bf16.msra.mxu0 0
  %1856 = vmatprep.subr.bf16.mxu0 0
  %1857 = vmatpush2.bf16.msra.mxu0 0
  %1858 = vmatprep.subr.bf16.mxu0 0
  %1859 = vmatpush2.bf16.msra.mxu0 0
  %1860 = vmatprep.subr.bf16.mxu0 0
  %1861 = vmatpush2.bf16.msra.mxu0 0
  %1862 = vmatprep.subr.bf16.mxu0 0
  %1863 = vmatpush2.bf16.msra.mxu0 0
  %1864 = vmatprep.subr.bf16.mxu0 0
  %1865 = vmatpush2.bf16.msra.mxu0 0
  %1866 = vmatprep.mubr.bf16.mxu0 0
  %1867 = vmatmul.mubr.bf16.gmra.mxu0 %v1832
  %v1868 = vpop.f32.mrf.mxu0
  %v1869 = vadd.f32 0.0, %v1868
  %v1870 = vpop.f32.mrf.mxu0
  %v1871 = vpop.f32.mrf.mxu0
  %v1872 = vadd.f32 0.0, %v1871
  %v1873 = vpop.f32.mrf.mxu0
  %1874 = vdwg.mxu0
  %v1877 = vunpack.c.l.b16 %v1269
  %v1878 = vunpack.c.l.b16 %v1270
  %v1879 = vpack.c.b16 %v1878, %v1877
  %v1882 = vsel %vm356, %v1823, 0
  %1884 = vmatprep.subr.bf16.mxu0 0
  %1885 = vmatpush1.bf16.msra.mxu0 0
  %1886 = vmatprep.subr.bf16.mxu0 0
  %1887 = vmatpush1.bf16.msra.mxu0 0
  %1888 = vmatprep.subr.bf16.mxu0 0
  %1889 = vmatpush1.bf16.msra.mxu0 0
  %1890 = vmatprep.subr.bf16.mxu0 0
  %1891 = vmatpush1.bf16.msra.mxu0 0
  %1892 = vmatprep.subr.bf16.mxu0 0
  %1893 = vmatpush1.bf16.msra.mxu0 0
  %1894 = vmatprep.subr.bf16.mxu0 0
  %1895 = vmatpush1.bf16.msra.mxu0 0
  %1896 = vmatprep.subr.bf16.mxu0 0
  %1897 = vmatpush1.bf16.msra.mxu0 0
  %1898 = vmatprep.subr.bf16.mxu0 0
  %1899 = vmatpush1.bf16.msra.mxu0 %v1879
  %1900 = vmatprep.subr.bf16.mxu0 0
  %1901 = vmatpush2.bf16.msra.mxu0 0
  %1902 = vmatprep.subr.bf16.mxu0 0
  %1903 = vmatpush2.bf16.msra.mxu0 0
  %1904 = vmatprep.subr.bf16.mxu0 0
  %1905 = vmatpush2.bf16.msra.mxu0 0
  %1906 = vmatprep.subr.bf16.mxu0 0
  %1907 = vmatpush2.bf16.msra.mxu0 0
  %1908 = vmatprep.subr.bf16.mxu0 0
  %1909 = vmatpush2.bf16.msra.mxu0 0
  %1910 = vmatprep.subr.bf16.mxu0 0
  %1911 = vmatpush2.bf16.msra.mxu0 0
  %1912 = vmatprep.subr.bf16.mxu0 0
  %1913 = vmatpush2.bf16.msra.mxu0 0
  %1914 = vmatprep.subr.bf16.mxu0 0
  %1915 = vmatpush2.bf16.msra.mxu0 0
  %1916 = vmatprep.mubr.bf16.mxu0 0
  %1917 = vmatmul.mubr.bf16.gmra.mxu0 %v1882
  %v1918 = vpop.f32.mrf.mxu0
  %v1919 = vadd.f32 %v1869, %v1918
  %v1920 = vpop.f32.mrf.mxu0
  %v1921 = vpop.f32.mrf.mxu0
  %v1922 = vadd.f32 %v1872, %v1921
  %v1923 = vpop.f32.mrf.mxu0
  %1924 = vdwg.mxu0
  %v1925 = vpack.c.bf16 %v1770, %v1767
  %v1928 = vunpack.c.l.b16 %v1273
  %v1929 = vunpack.c.l.b16 %v1274
  %v1930 = vpack.c.b16 %v1929, %v1928
  %v1933 = vsel %vm356, %v1925, 0
  %1935 = vmatprep.subr.bf16.mxu0 0
  %1936 = vmatpush1.bf16.msra.mxu0 0
  %1937 = vmatprep.subr.bf16.mxu0 0
  %1938 = vmatpush1.bf16.msra.mxu0 0
  %1939 = vmatprep.subr.bf16.mxu0 0
  %1940 = vmatpush1.bf16.msra.mxu0 0
  %1941 = vmatprep.subr.bf16.mxu0 0
  %1942 = vmatpush1.bf16.msra.mxu0 0
  %1943 = vmatprep.subr.bf16.mxu0 0
  %1944 = vmatpush1.bf16.msra.mxu0 0
  %1945 = vmatprep.subr.bf16.mxu0 0
  %1946 = vmatpush1.bf16.msra.mxu0 0
  %1947 = vmatprep.subr.bf16.mxu0 0
  %1948 = vmatpush1.bf16.msra.mxu0 0
  %1949 = vmatprep.subr.bf16.mxu0 0
  %1950 = vmatpush1.bf16.msra.mxu0 %v1930
  %1951 = vmatprep.subr.bf16.mxu0 0
  %1952 = vmatpush2.bf16.msra.mxu0 0
  %1953 = vmatprep.subr.bf16.mxu0 0
  %1954 = vmatpush2.bf16.msra.mxu0 0
  %1955 = vmatprep.subr.bf16.mxu0 0
  %1956 = vmatpush2.bf16.msra.mxu0 0
  %1957 = vmatprep.subr.bf16.mxu0 0
  %1958 = vmatpush2.bf16.msra.mxu0 0
  %1959 = vmatprep.subr.bf16.mxu0 0
  %1960 = vmatpush2.bf16.msra.mxu0 0
  %1961 = vmatprep.subr.bf16.mxu0 0
  %1962 = vmatpush2.bf16.msra.mxu0 0
  %1963 = vmatprep.subr.bf16.mxu0 0
  %1964 = vmatpush2.bf16.msra.mxu0 0
  %1965 = vmatprep.subr.bf16.mxu0 0
  %1966 = vmatpush2.bf16.msra.mxu0 0
  %1967 = vmatprep.mubr.bf16.mxu0 0
  %1968 = vmatmul.mubr.bf16.gmra.mxu0 %v1933
  %v1969 = vpop.f32.mrf.mxu0
  %v1970 = vadd.f32 0.0, %v1969
  %v1971 = vpop.f32.mrf.mxu0
  %v1972 = vpop.f32.mrf.mxu0
  %v1973 = vadd.f32 0.0, %v1972
  %v1974 = vpop.f32.mrf.mxu0
  %1975 = vdwg.mxu0
  %v1976 = vadd.f32 %v1919, %v1970
  %v1977 = vadd.f32 %v1922, %v1973
  %v1978 = vpack.c.bf16 %v1820, %v1817
  %v1981 = vunpack.c.l.b16 %v1275
  %v1982 = vunpack.c.l.b16 %v1276
  %v1983 = vpack.c.b16 %v1982, %v1981
  %v1986 = vsel %vm356, %v1978, 0
  %1988 = vmatprep.subr.bf16.mxu0 0
  %1989 = vmatpush1.bf16.msra.mxu0 0
  %1990 = vmatprep.subr.bf16.mxu0 0
  %1991 = vmatpush1.bf16.msra.mxu0 0
  %1992 = vmatprep.subr.bf16.mxu0 0
  %1993 = vmatpush1.bf16.msra.mxu0 0
  %1994 = vmatprep.subr.bf16.mxu0 0
  %1995 = vmatpush1.bf16.msra.mxu0 0
  %1996 = vmatprep.subr.bf16.mxu0 0
  %1997 = vmatpush1.bf16.msra.mxu0 0
  %1998 = vmatprep.subr.bf16.mxu0 0
  %1999 = vmatpush1.bf16.msra.mxu0 0
  %2000 = vmatprep.subr.bf16.mxu0 0
  %2001 = vmatpush1.bf16.msra.mxu0 0
  %2002 = vmatprep.subr.bf16.mxu0 0
  %2003 = vmatpush1.bf16.msra.mxu0 %v1983
  %2004 = vmatprep.subr.bf16.mxu0 0
  %2005 = vmatpush2.bf16.msra.mxu0 0
  %2006 = vmatprep.subr.bf16.mxu0 0
  %2007 = vmatpush2.bf16.msra.mxu0 0
  %2008 = vmatprep.subr.bf16.mxu0 0
  %2009 = vmatpush2.bf16.msra.mxu0 0
  %2010 = vmatprep.subr.bf16.mxu0 0
  %2011 = vmatpush2.bf16.msra.mxu0 0
  %2012 = vmatprep.subr.bf16.mxu0 0
  %2013 = vmatpush2.bf16.msra.mxu0 0
  %2014 = vmatprep.subr.bf16.mxu0 0
  %2015 = vmatpush2.bf16.msra.mxu0 0
  %2016 = vmatprep.subr.bf16.mxu0 0
  %2017 = vmatpush2.bf16.msra.mxu0 0
  %2018 = vmatprep.subr.bf16.mxu0 0
  %2019 = vmatpush2.bf16.msra.mxu0 0
  %2020 = vmatprep.mubr.bf16.mxu0 0
  %2021 = vmatmul.mubr.bf16.gmra.mxu0 %v1986
  %v2022 = vpop.f32.mrf.mxu0
  %v2023 = vadd.f32 0.0, %v2022
  %v2024 = vpop.f32.mrf.mxu0
  %v2025 = vpop.f32.mrf.mxu0
  %v2026 = vadd.f32 0.0, %v2025
  %v2027 = vpop.f32.mrf.mxu0
  %2028 = vdwg.mxu0
  %v2029 = vadd.f32 %v1976, %v2023
  %v2030 = vadd.f32 %v1977, %v2026
  %v2031 = vadd.f32 %v1055, %v2029
  %v2032 = vadd.f32 %v1056, %v2030
  %v2033 = vld [vmem:[%s37] sm:$0x1]
  %v2035 = vlaneseq
  %v2036 = vshrl.u32 %v2035, 7
  %v2037 = vsub.s32 0, %v2036
  %v2038 = vrot.slane %v2033, %v2037
  %v2040 = vadd.f32 %v2031, %v2038
  %v2041 = vadd.f32 %v2032, %v2038
  %v2042 = vld [vmem:[%s39] sm:$0x1]
  %v2043 = vld [vmem:[%s41] sm:$0x1]
  %v2044 = vsel %vm146, %v2040, 0.0
  %2045 = vadd.xlane.f32.xlu0 %v2044
  %v2046 = vpop.xlane.xlu0 %2045
  %v2047 = vsel %vm146, %v2041, 0.0
  %2048 = vadd.xlane.f32.xlu0 %v2047
  %v2049 = vpop.xlane.xlu0 %2048
  %v2050 = vmul.f32 %v2046, %v153
  %v2051 = vmul.f32 %v2049, %v153
  %v2052 = vsub.f32 %v2040, %v2050
  %v2053 = vsub.f32 %v2041, %v2051
  %v2054 = vmul.f32 %v2052, %v2052
  %v2055 = vmul.f32 %v2053, %v2053
  %v2056 = vsel %vm146, %v2054, 0.0
  %2057 = vadd.xlane.f32.xlu0 %v2056
  %v2058 = vpop.xlane.xlu0 %2057
  %v2059 = vsel %vm146, %v2055, 0.0
  %2060 = vadd.xlane.f32.xlu0 %v2059
  %v2061 = vpop.xlane.xlu0 %2060
  %v2062 = vmul.f32 %v2058, %v153
  %v2063 = vmul.f32 %v2061, %v153
  %v2064 = vadd.f32 %v2062, 1e-06
  %v2065 = vadd.f32 %v2063, 1e-06
  %v2066 = vrsqrt.pop %v2064
  %v2067 = vrsqrt.pop %v2065
  %v2068 = vmul.f32 %v2052, %v2066
  %v2069 = vmul.f32 %v2053, %v2067
  %v2071 = vlaneseq
  %v2072 = vshrl.u32 %v2071, 7
  %v2073 = vsub.s32 0, %v2072
  %v2074 = vrot.slane %v2042, %v2073
  %v2076 = vmul.f32 %v2068, %v2074
  %v2077 = vmul.f32 %v2069, %v2074
  %v2079 = vlaneseq
  %v2080 = vshrl.u32 %v2079, 7
  %v2081 = vsub.s32 0, %v2080
  %v2082 = vrot.slane %v2043, %v2081
  %v2084 = vadd.f32 %v2076, %v2082
  %v2085 = vadd.f32 %v2077, %v2082
  %v2086 = vpack.c.bf16 %v2085, %v2084
  %v2087 = vld [vmem:[%s43] sm:$0xf]
  %v2088 = vld [vmem:[%s43 + $0x4] sm:$0xf]
  %v2089 = vld [vmem:[%s43 + $0x8] sm:$0xf]
  %v2090 = vld [vmem:[%s43 + $0xc] sm:$0xf]
  %v2091 = vld [vmem:[%s43 + $0x10] sm:$0xf]
  %v2092 = vld [vmem:[%s43 + $0x14] sm:$0xf]
  %v2093 = vld [vmem:[%s43 + $0x18] sm:$0xf]
  %v2094 = vld [vmem:[%s43 + $0x1c] sm:$0xf]
  %v2095 = vld [vmem:[%s45] sm:$0x1]
  %v2097 = vlaneseq
  %v2098 = vshrl.u32 %v2097, 7
  %v2099 = vsub.s32 0, %v2098
  %v2100 = vrot.slane %v2095, %v2099
  %v2110 = vunpack.c.l.b16 %v2087
  %v2111 = vunpack.c.l.b16 %v2088
  %v2112 = vunpack.c.l.b16 %v2089
  %v2113 = vunpack.c.l.b16 %v2090
  %v2114 = vunpack.c.l.b16 %v2091
  %v2115 = vunpack.c.l.b16 %v2092
  %v2116 = vunpack.c.l.b16 %v2093
  %v2117 = vunpack.c.l.b16 %v2094
  %v2118 = vpack.c.b16 %v2111, %v2110
  %v2119 = vpack.c.b16 %v2113, %v2112
  %v2120 = vpack.c.b16 %v2115, %v2114
  %v2121 = vpack.c.b16 %v2117, %v2116
  %v2127 = vsel %vm146, %v2086, 0
  %2129 = vmatprep.subr.bf16.mxu0 0
  %2130 = vmatpush1.bf16.msra.mxu0 0
  %2131 = vmatprep.subr.bf16.mxu0 0
  %2132 = vmatpush1.bf16.msra.mxu0 0
  %2133 = vmatprep.subr.bf16.mxu0 0
  %2134 = vmatpush1.bf16.msra.mxu0 0
  %2135 = vmatprep.subr.bf16.mxu0 0
  %2136 = vmatpush1.bf16.msra.mxu0 0
  %2137 = vmatprep.subr.bf16.mxu0 0
  %2138 = vmatpush1.bf16.msra.mxu0 %v2121
  %2139 = vmatprep.subr.bf16.mxu0 0
  %2140 = vmatpush1.bf16.msra.mxu0 %v2120
  %2141 = vmatprep.subr.bf16.mxu0 0
  %2142 = vmatpush1.bf16.msra.mxu0 %v2119
  %2143 = vmatprep.subr.bf16.mxu0 0
  %2144 = vmatpush1.bf16.msra.mxu0 %v2118
  %2145 = vmatprep.subr.bf16.mxu0 0
  %2146 = vmatpush2.bf16.msra.mxu0 0
  %2147 = vmatprep.subr.bf16.mxu0 0
  %2148 = vmatpush2.bf16.msra.mxu0 0
  %2149 = vmatprep.subr.bf16.mxu0 0
  %2150 = vmatpush2.bf16.msra.mxu0 0
  %2151 = vmatprep.subr.bf16.mxu0 0
  %2152 = vmatpush2.bf16.msra.mxu0 0
  %2153 = vmatprep.subr.bf16.mxu0 0
  %2154 = vmatpush2.bf16.msra.mxu0 0
  %2155 = vmatprep.subr.bf16.mxu0 0
  %2156 = vmatpush2.bf16.msra.mxu0 0
  %2157 = vmatprep.subr.bf16.mxu0 0
  %2158 = vmatpush2.bf16.msra.mxu0 0
  %2159 = vmatprep.subr.bf16.mxu0 0
  %2160 = vmatpush2.bf16.msra.mxu0 0
  %2161 = vmatprep.mubr.bf16.mxu0 0
  %2162 = vmatmul.mubr.bf16.gmra.mxu0 %v2127
  %v2163 = vpop.f32.mrf.mxu0
  %v2164 = vadd.f32 %v2100, %v2163
  %v2165 = vpop.f32.mrf.mxu0
  %v2166 = vpop.f32.mrf.mxu0
  %v2167 = vadd.f32 %v2100, %v2166
  %v2168 = vpop.f32.mrf.mxu0
  %2169 = vdwg.mxu0
  %v2170 = vmax.f32 %v2164, 0.0
  %v2171 = vmax.f32 %v2167, 0.0
  %v2172 = vpack.c.bf16 %v2171, %v2170
  %v2173 = vld [vmem:[%s47] sm:$0xf]
  %v2174 = vld [vmem:[%s47 + $0x4] sm:$0xf]
  %v2175 = vld [vmem:[%s47 + $0x8] sm:$0xf]
  %v2176 = vld [vmem:[%s47 + $0xc] sm:$0xf]
  %v2177 = vld [vmem:[%s47 + $0x10] sm:$0xf]
  %v2178 = vld [vmem:[%s47 + $0x14] sm:$0xf]
  %v2179 = vld [vmem:[%s47 + $0x18] sm:$0xf]
  %v2180 = vld [vmem:[%s47 + $0x1c] sm:$0xf]
  %v2189 = vunpack.c.l.b16 %v2173
  %v2190 = vunpack.c.l.b16 %v2174
  %v2191 = vunpack.c.l.b16 %v2175
  %v2192 = vunpack.c.l.b16 %v2176
  %v2193 = vunpack.c.l.b16 %v2177
  %v2194 = vunpack.c.l.b16 %v2178
  %v2195 = vunpack.c.l.b16 %v2179
  %v2196 = vunpack.c.l.b16 %v2180
  %v2197 = vpack.c.b16 %v2190, %v2189
  %v2198 = vpack.c.b16 %v2192, %v2191
  %v2199 = vpack.c.b16 %v2194, %v2193
  %v2200 = vpack.c.b16 %v2196, %v2195
  %v2206 = vsel %vm146, %v2172, 0
  %2208 = vmatprep.subr.bf16.mxu0 0
  %2209 = vmatpush1.bf16.msra.mxu0 0
  %2210 = vmatprep.subr.bf16.mxu0 0
  %2211 = vmatpush1.bf16.msra.mxu0 0
  %2212 = vmatprep.subr.bf16.mxu0 0
  %2213 = vmatpush1.bf16.msra.mxu0 0
  %2214 = vmatprep.subr.bf16.mxu0 0
  %2215 = vmatpush1.bf16.msra.mxu0 0
  %2216 = vmatprep.subr.bf16.mxu0 0
  %2217 = vmatpush1.bf16.msra.mxu0 %v2200
  %2218 = vmatprep.subr.bf16.mxu0 0
  %2219 = vmatpush1.bf16.msra.mxu0 %v2199
  %2220 = vmatprep.subr.bf16.mxu0 0
  %2221 = vmatpush1.bf16.msra.mxu0 %v2198
  %2222 = vmatprep.subr.bf16.mxu0 0
  %2223 = vmatpush1.bf16.msra.mxu0 %v2197
  %2224 = vmatprep.subr.bf16.mxu0 0
  %2225 = vmatpush2.bf16.msra.mxu0 0
  %2226 = vmatprep.subr.bf16.mxu0 0
  %2227 = vmatpush2.bf16.msra.mxu0 0
  %2228 = vmatprep.subr.bf16.mxu0 0
  %2229 = vmatpush2.bf16.msra.mxu0 0
  %2230 = vmatprep.subr.bf16.mxu0 0
  %2231 = vmatpush2.bf16.msra.mxu0 0
  %2232 = vmatprep.subr.bf16.mxu0 0
  %2233 = vmatpush2.bf16.msra.mxu0 0
  %2234 = vmatprep.subr.bf16.mxu0 0
  %2235 = vmatpush2.bf16.msra.mxu0 0
  %2236 = vmatprep.subr.bf16.mxu0 0
  %2237 = vmatpush2.bf16.msra.mxu0 0
  %2238 = vmatprep.subr.bf16.mxu0 0
  %2239 = vmatpush2.bf16.msra.mxu0 0
  %2240 = vmatprep.mubr.bf16.mxu0 0
  %2241 = vmatmul.mubr.bf16.gmra.mxu0 %v2206
  %v2242 = vpop.f32.mrf.mxu0
  %v2243 = vadd.f32 0.0, %v2242
  %v2244 = vpop.f32.mrf.mxu0
  %v2245 = vpop.f32.mrf.mxu0
  %v2246 = vadd.f32 0.0, %v2245
  %v2247 = vpop.f32.mrf.mxu0
  %2248 = vdwg.mxu0
  %v2249 = vadd.f32 %v2040, %v2243
  %v2250 = vadd.f32 %v2041, %v2246
  %v2251 = vld [vmem:[%s49] sm:$0x1]
  %v2253 = vlaneseq
  %v2254 = vshrl.u32 %v2253, 7
  %v2255 = vsub.s32 0, %v2254
  %v2256 = vrot.slane %v2251, %v2255
  %v2258 = vadd.f32 %v2249, %v2256
  %v2259 = vadd.f32 %v2250, %v2256
  %s2260 = scalar_lea.vmem %s11, 1
  %v2261 = vld [vmem:[%s2260] sm:$0x1]
  %s2262 = scalar_lea.vmem %s13, 1
  %v2263 = vld [vmem:[%s2262] sm:$0x1]
  %v2264 = vsel %vm146, %v2258, 0.0
  %2265 = vadd.xlane.f32.xlu0 %v2264
  %v2266 = vpop.xlane.xlu0 %2265
  %v2267 = vsel %vm146, %v2259, 0.0
  %2268 = vadd.xlane.f32.xlu0 %v2267
  %v2269 = vpop.xlane.xlu0 %2268
  %v2270 = vmul.f32 %v2266, %v153
  %v2271 = vmul.f32 %v2269, %v153
  %v2272 = vsub.f32 %v2258, %v2270
  %v2273 = vsub.f32 %v2259, %v2271
  %v2274 = vmul.f32 %v2272, %v2272
  %v2275 = vmul.f32 %v2273, %v2273
  %v2276 = vsel %vm146, %v2274, 0.0
  %2277 = vadd.xlane.f32.xlu0 %v2276
  %v2278 = vpop.xlane.xlu0 %2277
  %v2279 = vsel %vm146, %v2275, 0.0
  %2280 = vadd.xlane.f32.xlu0 %v2279
  %v2281 = vpop.xlane.xlu0 %2280
  %v2282 = vmul.f32 %v2278, %v153
  %v2283 = vmul.f32 %v2281, %v153
  %v2284 = vadd.f32 %v2282, 1e-06
  %v2285 = vadd.f32 %v2283, 1e-06
  %v2286 = vrsqrt.pop %v2284
  %v2287 = vrsqrt.pop %v2285
  %v2288 = vmul.f32 %v2272, %v2286
  %v2289 = vmul.f32 %v2273, %v2287
  %v2291 = vlaneseq
  %v2292 = vshrl.u32 %v2291, 7
  %v2293 = vsub.s32 0, %v2292
  %v2294 = vrot.slane %v2261, %v2293
  %v2296 = vmul.f32 %v2288, %v2294
  %v2297 = vmul.f32 %v2289, %v2294
  %v2299 = vlaneseq
  %v2300 = vshrl.u32 %v2299, 7
  %v2301 = vsub.s32 0, %v2300
  %v2302 = vrot.slane %v2263, %v2301
  %v2304 = vadd.f32 %v2296, %v2302
  %v2305 = vadd.f32 %v2297, %v2302
  %v2306 = vpack.c.bf16 %v2305, %v2304
  %s2307 = scalar_lea.vmem %s15, 64
  %v2308 = vld [vmem:[%s2307] sm:$0xff]
  %v2309 = vld [vmem:[%s2307 + $0x8] sm:$0xff]
  %v2310 = vld [vmem:[%s2307 + $0x10] sm:$0xff]
  %v2311 = vld [vmem:[%s2307 + $0x18] sm:$0xff]
  %v2312 = vld [vmem:[%s2307 + $0x20] sm:$0xff]
  %v2313 = vld [vmem:[%s2307 + $0x28] sm:$0xff]
  %v2314 = vld [vmem:[%s2307 + $0x30] sm:$0xff]
  %v2315 = vld [vmem:[%s2307 + $0x38] sm:$0xff]
  %s2316 = scalar_lea.vmem %s17, 2
  %v2317 = vld [vmem:[%s2316] sm:$0x3]
  %v2319 = vlaneseq
  %v2320 = vshrl.u32 %v2319, 7
  %v2321 = vsub.s32 0, %v2320
  %v2322 = vrot.slane %v2317, %v2321
  %v2323 = vlaneseq
  %v2324 = vshrl.u32 %v2323, 7
  %v2325 = vsub.s32 1, %v2324
  %v2326 = vrot.slane %v2317, %v2325
  %v2337 = vunpack.c.l.b16 %v2308
  %v2338 = vunpack.c.h.b16 %v2308
  %v2339 = vunpack.c.l.b16 %v2309
  %v2340 = vunpack.c.h.b16 %v2309
  %v2341 = vunpack.c.l.b16 %v2310
  %v2342 = vunpack.c.h.b16 %v2310
  %v2343 = vunpack.c.l.b16 %v2311
  %v2344 = vunpack.c.h.b16 %v2311
  %v2345 = vunpack.c.l.b16 %v2312
  %v2346 = vunpack.c.h.b16 %v2312
  %v2347 = vunpack.c.l.b16 %v2313
  %v2348 = vunpack.c.h.b16 %v2313
  %v2349 = vunpack.c.l.b16 %v2314
  %v2350 = vunpack.c.h.b16 %v2314
  %v2351 = vunpack.c.l.b16 %v2315
  %v2352 = vunpack.c.h.b16 %v2315
  %v2353 = vpack.c.b16 %v2339, %v2337
  %v2354 = vpack.c.b16 %v2340, %v2338
  %v2355 = vpack.c.b16 %v2343, %v2341
  %v2356 = vpack.c.b16 %v2344, %v2342
  %v2357 = vpack.c.b16 %v2347, %v2345
  %v2358 = vpack.c.b16 %v2348, %v2346
  %v2359 = vpack.c.b16 %v2351, %v2349
  %v2360 = vpack.c.b16 %v2352, %v2350
  %v2370 = vsel %vm146, %v2306, 0
  %2372 = vmatprep.subr.bf16.mxu0 0
  %2373 = vmatpush1.bf16.msra.mxu0 0
  %2374 = vmatprep.subr.bf16.mxu0 0
  %2375 = vmatpush1.bf16.msra.mxu0 0
  %2376 = vmatprep.subr.bf16.mxu0 0
  %2377 = vmatpush1.bf16.msra.mxu0 0
  %2378 = vmatprep.subr.bf16.mxu0 0
  %2379 = vmatpush1.bf16.msra.mxu0 0
  %2380 = vmatprep.subr.bf16.mxu0 %v2360
  %2381 = vmatpush1.bf16.msra.mxu0 %v2359
  %2382 = vmatprep.subr.bf16.mxu0 %v2358
  %2383 = vmatpush1.bf16.msra.mxu0 %v2357
  %2384 = vmatprep.subr.bf16.mxu0 %v2356
  %2385 = vmatpush1.bf16.msra.mxu0 %v2355
  %2386 = vmatprep.subr.bf16.mxu0 %v2354
  %2387 = vmatpush1.bf16.msra.mxu0 %v2353
  %2388 = vmatprep.subr.bf16.mxu0 0
  %2389 = vmatpush2.bf16.msra.mxu0 0
  %2390 = vmatprep.subr.bf16.mxu0 0
  %2391 = vmatpush2.bf16.msra.mxu0 0
  %2392 = vmatprep.subr.bf16.mxu0 0
  %2393 = vmatpush2.bf16.msra.mxu0 0
  %2394 = vmatprep.subr.bf16.mxu0 0
  %2395 = vmatpush2.bf16.msra.mxu0 0
  %2396 = vmatprep.subr.bf16.mxu0 0
  %2397 = vmatpush2.bf16.msra.mxu0 0
  %2398 = vmatprep.subr.bf16.mxu0 0
  %2399 = vmatpush2.bf16.msra.mxu0 0
  %2400 = vmatprep.subr.bf16.mxu0 0
  %2401 = vmatpush2.bf16.msra.mxu0 0
  %2402 = vmatprep.subr.bf16.mxu0 0
  %2403 = vmatpush2.bf16.msra.mxu0 0
  %2404 = vmatprep.mubr.bf16.mxu0 0
  %2405 = vmatmul.mubr.bf16.gmra.mxu0 %v2370
  %v2406 = vpop.f32.mrf.mxu0
  %v2407 = vadd.f32 %v2322, %v2406
  %v2408 = vpop.f32.mrf.mxu0
  %v2409 = vadd.f32 %v2326, %v2408
  %v2410 = vpop.f32.mrf.mxu0
  %v2411 = vadd.f32 %v2322, %v2410
  %v2412 = vpop.f32.mrf.mxu0
  %v2413 = vadd.f32 %v2326, %v2412
  %2414 = vdwg.mxu0
  %s2415 = scalar_lea.vmem %s19, 32
  %v2416 = vld [vmem:[%s2415] sm:$0xf]
  %v2417 = vld [vmem:[%s2415 + $0x4] sm:$0xf]
  %v2418 = vld [vmem:[%s2415 + $0x8] sm:$0xf]
  %v2419 = vld [vmem:[%s2415 + $0xc] sm:$0xf]
  %v2420 = vld [vmem:[%s2415 + $0x10] sm:$0xf]
  %v2421 = vld [vmem:[%s2415 + $0x14] sm:$0xf]
  %v2422 = vld [vmem:[%s2415 + $0x18] sm:$0xf]
  %v2423 = vld [vmem:[%s2415 + $0x1c] sm:$0xf]
  %2426 = vrot.lane.b32.xlu0 %v2407, 112
  %v2427 = vpop.permute.xlu0 %2426
  %2428 = vrot.lane.b32.xlu0 %v2411, 112
  %v2429 = vpop.permute.xlu0 %2428
  %2432 = vrot.lane.b32.xlu0 %v2407, 96
  %v2433 = vpop.permute.xlu0 %2432
  %2434 = vrot.lane.b32.xlu0 %v2411, 96
  %v2435 = vpop.permute.xlu0 %2434
  %2438 = vrot.lane.b32.xlu0 %v2407, 80
  %v2439 = vpop.permute.xlu0 %2438
  %2440 = vrot.lane.b32.xlu0 %v2411, 80
  %v2441 = vpop.permute.xlu0 %2440
  %v2444 = vpack.c.bf16 %v2411, %v2407
  %v2445 = vpack.c.bf16 %v2429, %v2427
  %v2446 = vpack.c.bf16 %v2435, %v2433
  %v2447 = vpack.c.bf16 %v2441, %v2439
  %2450 = vrot.lane.b32.xlu0 %v2409, 112
  %v2451 = vpop.permute.xlu0 %2450
  %2452 = vrot.lane.b32.xlu0 %v2413, 112
  %v2453 = vpop.permute.xlu0 %2452
  %2456 = vrot.lane.b32.xlu0 %v2409, 96
  %v2457 = vpop.permute.xlu0 %2456
  %2458 = vrot.lane.b32.xlu0 %v2413, 96
  %v2459 = vpop.permute.xlu0 %2458
  %2462 = vrot.lane.b32.xlu0 %v2409, 80
  %v2463 = vpop.permute.xlu0 %2462
  %2464 = vrot.lane.b32.xlu0 %v2413, 80
  %v2465 = vpop.permute.xlu0 %2464
  %v2468 = vpack.c.bf16 %v2413, %v2409
  %v2469 = vpack.c.bf16 %v2453, %v2451
  %v2470 = vpack.c.bf16 %v2459, %v2457
  %v2471 = vpack.c.bf16 %v2465, %v2463
  %2473 = vrot.lane.b32.xlu0 %v2444, 64
  %v2474 = vpop.permute.xlu0 %2473
  %v2476 = vsel %vm356, %v2444, 0
  %v2479 = vsel %vm356, %v2474, 0
  %2481 = vmatprep.subr.bf16.mxu0 0
  %2482 = vmatpush1.bf16.xpose.msra.mxu0 0
  %2483 = vmatprep.subr.bf16.mxu0 0
  %2484 = vmatpush1.bf16.xpose.msra.mxu0 0
  %2485 = vmatprep.subr.bf16.mxu0 0
  %2486 = vmatpush1.bf16.xpose.msra.mxu0 0
  %2487 = vmatprep.subr.bf16.mxu0 0
  %2488 = vmatpush1.bf16.xpose.msra.mxu0 0
  %2489 = vmatprep.subr.bf16.mxu0 0
  %2490 = vmatpush1.bf16.xpose.msra.mxu0 0
  %2491 = vmatprep.subr.bf16.mxu0 0
  %2492 = vmatpush1.bf16.xpose.msra.mxu0 0
  %2493 = vmatprep.subr.bf16.mxu0 0
  %2494 = vmatpush1.bf16.xpose.msra.mxu0 0
  %2495 = vmatprep.subr.bf16.mxu0 0
  %2496 = vmatpush1.bf16.xpose.msra.mxu0 %v2479
  %2497 = vmatprep.subr.bf16.mxu0 0
  %2498 = vmatpush2.bf16.xpose.msra.mxu0 0
  %2499 = vmatprep.subr.bf16.mxu0 0
  %2500 = vmatpush2.bf16.xpose.msra.mxu0 0
  %2501 = vmatprep.subr.bf16.mxu0 0
  %2502 = vmatpush2.bf16.xpose.msra.mxu0 0
  %2503 = vmatprep.subr.bf16.mxu0 0
  %2504 = vmatpush2.bf16.xpose.msra.mxu0 0
  %2505 = vmatprep.subr.bf16.mxu0 0
  %2506 = vmatpush2.bf16.xpose.msra.mxu0 0
  %2507 = vmatprep.subr.bf16.mxu0 0
  %2508 = vmatpush2.bf16.xpose.msra.mxu0 0
  %2509 = vmatprep.subr.bf16.mxu0 0
  %2510 = vmatpush2.bf16.xpose.msra.mxu0 0
  %2511 = vmatprep.subr.bf16.mxu0 0
  %2512 = vmatpush2.bf16.xpose.msra.mxu0 0
  %2513 = vmatprep.mubr.bf16.mxu0 0
  %2514 = vmatmul.mubr.bf16.gmra.mxu0 %v2476
  %v2515 = vpop.f32.mrf.mxu0
  %v2516 = vadd.f32 0.0, %v2515
  %v2517 = vpop.f32.mrf.mxu0
  %v2518 = vpop.f32.mrf.mxu0
  %v2519 = vadd.f32 0.0, %v2518
  %v2520 = vpop.f32.mrf.mxu0
  %2521 = vdwg.mxu0
  %2523 = vrot.lane.b32.xlu0 %v2445, 64
  %v2524 = vpop.permute.xlu0 %2523
  %v2526 = vsel %vm356, %v2445, 0
  %v2529 = vsel %vm356, %v2524, 0
  %2531 = vmatprep.subr.bf16.mxu0 0
  %2532 = vmatpush1.bf16.xpose.msra.mxu0 0
  %2533 = vmatprep.subr.bf16.mxu0 0
  %2534 = vmatpush1.bf16.xpose.msra.mxu0 0
  %2535 = vmatprep.subr.bf16.mxu0 0
  %2536 = vmatpush1.bf16.xpose.msra.mxu0 0
  %2537 = vmatprep.subr.bf16.mxu0 0
  %2538 = vmatpush1.bf16.xpose.msra.mxu0 0
  %2539 = vmatprep.subr.bf16.mxu0 0
  %2540 = vmatpush1.bf16.xpose.msra.mxu0 0
  %2541 = vmatprep.subr.bf16.mxu0 0
  %2542 = vmatpush1.bf16.xpose.msra.mxu0 0
  %2543 = vmatprep.subr.bf16.mxu0 0
  %2544 = vmatpush1.bf16.xpose.msra.mxu0 0
  %2545 = vmatprep.subr.bf16.mxu0 0
  %2546 = vmatpush1.bf16.xpose.msra.mxu0 %v2529
  %2547 = vmatprep.subr.bf16.mxu0 0
  %2548 = vmatpush2.bf16.xpose.msra.mxu0 0
  %2549 = vmatprep.subr.bf16.mxu0 0
  %2550 = vmatpush2.bf16.xpose.msra.mxu0 0
  %2551 = vmatprep.subr.bf16.mxu0 0
  %2552 = vmatpush2.bf16.xpose.msra.mxu0 0
  %2553 = vmatprep.subr.bf16.mxu0 0
  %2554 = vmatpush2.bf16.xpose.msra.mxu0 0
  %2555 = vmatprep.subr.bf16.mxu0 0
  %2556 = vmatpush2.bf16.xpose.msra.mxu0 0
  %2557 = vmatprep.subr.bf16.mxu0 0
  %2558 = vmatpush2.bf16.xpose.msra.mxu0 0
  %2559 = vmatprep.subr.bf16.mxu0 0
  %2560 = vmatpush2.bf16.xpose.msra.mxu0 0
  %2561 = vmatprep.subr.bf16.mxu0 0
  %2562 = vmatpush2.bf16.xpose.msra.mxu0 0
  %2563 = vmatprep.mubr.bf16.mxu0 0
  %2564 = vmatmul.mubr.bf16.gmra.mxu0 %v2526
  %v2565 = vpop.f32.mrf.mxu0
  %v2566 = vadd.f32 0.0, %v2565
  %v2567 = vpop.f32.mrf.mxu0
  %v2568 = vpop.f32.mrf.mxu0
  %v2569 = vadd.f32 0.0, %v2568
  %v2570 = vpop.f32.mrf.mxu0
  %2571 = vdwg.mxu0
  %2573 = vrot.lane.b32.xlu0 %v2446, 64
  %v2574 = vpop.permute.xlu0 %2573
  %v2576 = vsel %vm356, %v2446, 0
  %v2579 = vsel %vm356, %v2574, 0
  %2581 = vmatprep.subr.bf16.mxu0 0
  %2582 = vmatpush1.bf16.xpose.msra.mxu0 0
  %2583 = vmatprep.subr.bf16.mxu0 0
  %2584 = vmatpush1.bf16.xpose.msra.mxu0 0
  %2585 = vmatprep.subr.bf16.mxu0 0
  %2586 = vmatpush1.bf16.xpose.msra.mxu0 0
  %2587 = vmatprep.subr.bf16.mxu0 0
  %2588 = vmatpush1.bf16.xpose.msra.mxu0 0
  %2589 = vmatprep.subr.bf16.mxu0 0
  %2590 = vmatpush1.bf16.xpose.msra.mxu0 0
  %2591 = vmatprep.subr.bf16.mxu0 0
  %2592 = vmatpush1.bf16.xpose.msra.mxu0 0
  %2593 = vmatprep.subr.bf16.mxu0 0
  %2594 = vmatpush1.bf16.xpose.msra.mxu0 0
  %2595 = vmatprep.subr.bf16.mxu0 0
  %2596 = vmatpush1.bf16.xpose.msra.mxu0 %v2579
  %2597 = vmatprep.subr.bf16.mxu0 0
  %2598 = vmatpush2.bf16.xpose.msra.mxu0 0
  %2599 = vmatprep.subr.bf16.mxu0 0
  %2600 = vmatpush2.bf16.xpose.msra.mxu0 0
  %2601 = vmatprep.subr.bf16.mxu0 0
  %2602 = vmatpush2.bf16.xpose.msra.mxu0 0
  %2603 = vmatprep.subr.bf16.mxu0 0
  %2604 = vmatpush2.bf16.xpose.msra.mxu0 0
  %2605 = vmatprep.subr.bf16.mxu0 0
  %2606 = vmatpush2.bf16.xpose.msra.mxu0 0
  %2607 = vmatprep.subr.bf16.mxu0 0
  %2608 = vmatpush2.bf16.xpose.msra.mxu0 0
  %2609 = vmatprep.subr.bf16.mxu0 0
  %2610 = vmatpush2.bf16.xpose.msra.mxu0 0
  %2611 = vmatprep.subr.bf16.mxu0 0
  %2612 = vmatpush2.bf16.xpose.msra.mxu0 0
  %2613 = vmatprep.mubr.bf16.mxu0 0
  %2614 = vmatmul.mubr.bf16.gmra.mxu0 %v2576
  %v2615 = vpop.f32.mrf.mxu0
  %v2616 = vadd.f32 0.0, %v2615
  %v2617 = vpop.f32.mrf.mxu0
  %v2618 = vpop.f32.mrf.mxu0
  %v2619 = vadd.f32 0.0, %v2618
  %v2620 = vpop.f32.mrf.mxu0
  %2621 = vdwg.mxu0
  %2623 = vrot.lane.b32.xlu0 %v2447, 64
  %v2624 = vpop.permute.xlu0 %2623
  %v2626 = vsel %vm356, %v2447, 0
  %v2629 = vsel %vm356, %v2624, 0
  %2631 = vmatprep.subr.bf16.mxu0 0
  %2632 = vmatpush1.bf16.xpose.msra.mxu0 0
  %2633 = vmatprep.subr.bf16.mxu0 0
  %2634 = vmatpush1.bf16.xpose.msra.mxu0 0
  %2635 = vmatprep.subr.bf16.mxu0 0
  %2636 = vmatpush1.bf16.xpose.msra.mxu0 0
  %2637 = vmatprep.subr.bf16.mxu0 0
  %2638 = vmatpush1.bf16.xpose.msra.mxu0 0
  %2639 = vmatprep.subr.bf16.mxu0 0
  %2640 = vmatpush1.bf16.xpose.msra.mxu0 0
  %2641 = vmatprep.subr.bf16.mxu0 0
  %2642 = vmatpush1.bf16.xpose.msra.mxu0 0
  %2643 = vmatprep.subr.bf16.mxu0 0
  %2644 = vmatpush1.bf16.xpose.msra.mxu0 0
  %2645 = vmatprep.subr.bf16.mxu0 0
  %2646 = vmatpush1.bf16.xpose.msra.mxu0 %v2629
  %2647 = vmatprep.subr.bf16.mxu0 0
  %2648 = vmatpush2.bf16.xpose.msra.mxu0 0
  %2649 = vmatprep.subr.bf16.mxu0 0
  %2650 = vmatpush2.bf16.xpose.msra.mxu0 0
  %2651 = vmatprep.subr.bf16.mxu0 0
  %2652 = vmatpush2.bf16.xpose.msra.mxu0 0
  %2653 = vmatprep.subr.bf16.mxu0 0
  %2654 = vmatpush2.bf16.xpose.msra.mxu0 0
  %2655 = vmatprep.subr.bf16.mxu0 0
  %2656 = vmatpush2.bf16.xpose.msra.mxu0 0
  %2657 = vmatprep.subr.bf16.mxu0 0
  %2658 = vmatpush2.bf16.xpose.msra.mxu0 0
  %2659 = vmatprep.subr.bf16.mxu0 0
  %2660 = vmatpush2.bf16.xpose.msra.mxu0 0
  %2661 = vmatprep.subr.bf16.mxu0 0
  %2662 = vmatpush2.bf16.xpose.msra.mxu0 0
  %2663 = vmatprep.mubr.bf16.mxu0 0
  %2664 = vmatmul.mubr.bf16.gmra.mxu0 %v2626
  %v2665 = vpop.f32.mrf.mxu0
  %v2666 = vadd.f32 0.0, %v2665
  %v2667 = vpop.f32.mrf.mxu0
  %v2668 = vpop.f32.mrf.mxu0
  %v2669 = vadd.f32 0.0, %v2668
  %v2670 = vpop.f32.mrf.mxu0
  %2671 = vdwg.mxu0
  %v2672 = vmul.f32 %v2516, 0.25
  %v2673 = vmul.f32 %v2519, 0.25
  %v2674 = vmul.f32 %v2566, 0.25
  %v2675 = vmul.f32 %v2569, 0.25
  %v2676 = vmul.f32 %v2616, 0.25
  %v2677 = vmul.f32 %v2619, 0.25
  %v2678 = vmul.f32 %v2666, 0.25
  %v2679 = vmul.f32 %v2669, 0.25
  %v2680 = vadd.f32 %v2672, %v140
  %v2681 = vadd.f32 %v2673, %v141
  %v2682 = vadd.f32 %v2674, %v140
  %v2683 = vadd.f32 %v2675, %v141
  %v2684 = vadd.f32 %v2676, %v140
  %v2685 = vadd.f32 %v2677, %v141
  %v2686 = vadd.f32 %v2678, %v140
  %v2687 = vadd.f32 %v2679, %v141
  %v2688 = vsel %vm356, %v2680, -inf
  %2689 = vmax.xlane.f32.xlu0 %v2688
  %v2690 = vpop.xlane.xlu0 %2689
  %v2691 = vsel %vm356, %v2681, -inf
  %2692 = vmax.xlane.f32.xlu0 %v2691
  %v2693 = vpop.xlane.xlu0 %2692
  %v2694 = vsel %vm356, %v2682, -inf
  %2695 = vmax.xlane.f32.xlu0 %v2694
  %v2696 = vpop.xlane.xlu0 %2695
  %v2697 = vsel %vm356, %v2683, -inf
  %2698 = vmax.xlane.f32.xlu0 %v2697
  %v2699 = vpop.xlane.xlu0 %2698
  %v2700 = vsel %vm356, %v2684, -inf
  %2701 = vmax.xlane.f32.xlu0 %v2700
  %v2702 = vpop.xlane.xlu0 %2701
  %v2703 = vsel %vm356, %v2685, -inf
  %2704 = vmax.xlane.f32.xlu0 %v2703
  %v2705 = vpop.xlane.xlu0 %2704
  %v2706 = vsel %vm356, %v2686, -inf
  %2707 = vmax.xlane.f32.xlu0 %v2706
  %v2708 = vpop.xlane.xlu0 %2707
  %v2709 = vsel %vm356, %v2687, -inf
  %2710 = vmax.xlane.f32.xlu0 %v2709
  %v2711 = vpop.xlane.xlu0 %2710
  %v2712 = vsub.f32 %v2680, %v2690
  %v2713 = vsub.f32 %v2681, %v2693
  %v2714 = vsub.f32 %v2682, %v2696
  %v2715 = vsub.f32 %v2683, %v2699
  %v2716 = vsub.f32 %v2684, %v2702
  %v2717 = vsub.f32 %v2685, %v2705
  %v2718 = vsub.f32 %v2686, %v2708
  %v2719 = vsub.f32 %v2687, %v2711
  %v2720 = vmul.f32 %v2712, 1.442695
  %v2721 = vpow.pop %v2720
  %v2722 = vmul.f32 %v2713, 1.442695
  %v2723 = vpow.pop %v2722
  %v2724 = vmul.f32 %v2714, 1.442695
  %v2725 = vpow.pop %v2724
  %v2726 = vmul.f32 %v2715, 1.442695
  %v2727 = vpow.pop %v2726
  %v2728 = vmul.f32 %v2716, 1.442695
  %v2729 = vpow.pop %v2728
  %v2730 = vmul.f32 %v2717, 1.442695
  %v2731 = vpow.pop %v2730
  %v2732 = vmul.f32 %v2718, 1.442695
  %v2733 = vpow.pop %v2732
  %v2734 = vmul.f32 %v2719, 1.442695
  %v2735 = vpow.pop %v2734
  %v2736 = vsel %vm356, %v2721, 0.0
  %2737 = vadd.xlane.f32.xlu0 %v2736
  %v2738 = vpop.xlane.xlu0 %2737
  %v2739 = vsel %vm356, %v2723, 0.0
  %2740 = vadd.xlane.f32.xlu0 %v2739
  %v2741 = vpop.xlane.xlu0 %2740
  %v2742 = vsel %vm356, %v2725, 0.0
  %2743 = vadd.xlane.f32.xlu0 %v2742
  %v2744 = vpop.xlane.xlu0 %2743
  %v2745 = vsel %vm356, %v2727, 0.0
  %2746 = vadd.xlane.f32.xlu0 %v2745
  %v2747 = vpop.xlane.xlu0 %2746
  %v2748 = vsel %vm356, %v2729, 0.0
  %2749 = vadd.xlane.f32.xlu0 %v2748
  %v2750 = vpop.xlane.xlu0 %2749
  %v2751 = vsel %vm356, %v2731, 0.0
  %2752 = vadd.xlane.f32.xlu0 %v2751
  %v2753 = vpop.xlane.xlu0 %2752
  %v2754 = vsel %vm356, %v2733, 0.0
  %2755 = vadd.xlane.f32.xlu0 %v2754
  %v2756 = vpop.xlane.xlu0 %2755
  %v2757 = vsel %vm356, %v2735, 0.0
  %2758 = vadd.xlane.f32.xlu0 %v2757
  %v2759 = vpop.xlane.xlu0 %2758
  %v2760 = vrcp.pop %v2738
  %v2761 = vrcp.pop %v2741
  %v2762 = vrcp.pop %v2744
  %v2763 = vrcp.pop %v2747
  %v2764 = vrcp.pop %v2750
  %v2765 = vrcp.pop %v2753
  %v2766 = vrcp.pop %v2756
  %v2767 = vrcp.pop %v2759
  %v2768 = vmul.f32 %v2721, %v2760
  %v2769 = vmul.f32 %v2723, %v2761
  %v2770 = vmul.f32 %v2725, %v2762
  %v2771 = vmul.f32 %v2727, %v2763
  %v2772 = vmul.f32 %v2729, %v2764
  %v2773 = vmul.f32 %v2731, %v2765
  %v2774 = vmul.f32 %v2733, %v2766
  %v2775 = vmul.f32 %v2735, %v2767
  %v2776 = vpack.c.bf16 %v2769, %v2768
  %v2777 = vpack.c.bf16 %v2771, %v2770
  %v2778 = vpack.c.bf16 %v2773, %v2772
  %v2779 = vpack.c.bf16 %v2775, %v2774
  %v2781 = vsel %vm356, %v2776, 0
  %2783 = vmatprep.subr.bf16.mxu0 0
  %2784 = vmatpush1.bf16.msra.mxu0 0
  %2785 = vmatprep.subr.bf16.mxu0 0
  %2786 = vmatpush1.bf16.msra.mxu0 0
  %2787 = vmatprep.subr.bf16.mxu0 0
  %2788 = vmatpush1.bf16.msra.mxu0 0
  %2789 = vmatprep.subr.bf16.mxu0 0
  %2790 = vmatpush1.bf16.msra.mxu0 0
  %2791 = vmatprep.subr.bf16.mxu0 0
  %2792 = vmatpush1.bf16.msra.mxu0 0
  %2793 = vmatprep.subr.bf16.mxu0 0
  %2794 = vmatpush1.bf16.msra.mxu0 0
  %2795 = vmatprep.subr.bf16.mxu0 0
  %2796 = vmatpush1.bf16.msra.mxu0 0
  %2797 = vmatprep.subr.bf16.mxu0 0
  %2798 = vmatpush1.bf16.msra.mxu0 %v2468
  %2799 = vmatprep.subr.bf16.mxu0 0
  %2800 = vmatpush2.bf16.msra.mxu0 0
  %2801 = vmatprep.subr.bf16.mxu0 0
  %2802 = vmatpush2.bf16.msra.mxu0 0
  %2803 = vmatprep.subr.bf16.mxu0 0
  %2804 = vmatpush2.bf16.msra.mxu0 0
  %2805 = vmatprep.subr.bf16.mxu0 0
  %2806 = vmatpush2.bf16.msra.mxu0 0
  %2807 = vmatprep.subr.bf16.mxu0 0
  %2808 = vmatpush2.bf16.msra.mxu0 0
  %2809 = vmatprep.subr.bf16.mxu0 0
  %2810 = vmatpush2.bf16.msra.mxu0 0
  %2811 = vmatprep.subr.bf16.mxu0 0
  %2812 = vmatpush2.bf16.msra.mxu0 0
  %2813 = vmatprep.subr.bf16.mxu0 0
  %2814 = vmatpush2.bf16.msra.mxu0 0
  %2815 = vmatprep.mubr.bf16.mxu0 0
  %2816 = vmatmul.mubr.bf16.gmra.mxu0 %v2781
  %v2817 = vpop.f32.mrf.mxu0
  %v2818 = vadd.f32 0.0, %v2817
  %v2819 = vpop.f32.mrf.mxu0
  %v2820 = vpop.f32.mrf.mxu0
  %v2821 = vadd.f32 0.0, %v2820
  %v2822 = vpop.f32.mrf.mxu0
  %2823 = vdwg.mxu0
  %v2825 = vsel %vm356, %v2777, 0
  %2827 = vmatprep.subr.bf16.mxu0 0
  %2828 = vmatpush1.bf16.msra.mxu0 0
  %2829 = vmatprep.subr.bf16.mxu0 0
  %2830 = vmatpush1.bf16.msra.mxu0 0
  %2831 = vmatprep.subr.bf16.mxu0 0
  %2832 = vmatpush1.bf16.msra.mxu0 0
  %2833 = vmatprep.subr.bf16.mxu0 0
  %2834 = vmatpush1.bf16.msra.mxu0 0
  %2835 = vmatprep.subr.bf16.mxu0 0
  %2836 = vmatpush1.bf16.msra.mxu0 0
  %2837 = vmatprep.subr.bf16.mxu0 0
  %2838 = vmatpush1.bf16.msra.mxu0 0
  %2839 = vmatprep.subr.bf16.mxu0 0
  %2840 = vmatpush1.bf16.msra.mxu0 0
  %2841 = vmatprep.subr.bf16.mxu0 0
  %2842 = vmatpush1.bf16.msra.mxu0 %v2469
  %2843 = vmatprep.subr.bf16.mxu0 0
  %2844 = vmatpush2.bf16.msra.mxu0 0
  %2845 = vmatprep.subr.bf16.mxu0 0
  %2846 = vmatpush2.bf16.msra.mxu0 0
  %2847 = vmatprep.subr.bf16.mxu0 0
  %2848 = vmatpush2.bf16.msra.mxu0 0
  %2849 = vmatprep.subr.bf16.mxu0 0
  %2850 = vmatpush2.bf16.msra.mxu0 0
  %2851 = vmatprep.subr.bf16.mxu0 0
  %2852 = vmatpush2.bf16.msra.mxu0 0
  %2853 = vmatprep.subr.bf16.mxu0 0
  %2854 = vmatpush2.bf16.msra.mxu0 0
  %2855 = vmatprep.subr.bf16.mxu0 0
  %2856 = vmatpush2.bf16.msra.mxu0 0
  %2857 = vmatprep.subr.bf16.mxu0 0
  %2858 = vmatpush2.bf16.msra.mxu0 0
  %2859 = vmatprep.mubr.bf16.mxu0 0
  %2860 = vmatmul.mubr.bf16.gmra.mxu0 %v2825
  %v2861 = vpop.f32.mrf.mxu0
  %v2862 = vadd.f32 0.0, %v2861
  %v2863 = vpop.f32.mrf.mxu0
  %v2864 = vpop.f32.mrf.mxu0
  %v2865 = vadd.f32 0.0, %v2864
  %v2866 = vpop.f32.mrf.mxu0
  %2867 = vdwg.mxu0
  %v2869 = vsel %vm356, %v2778, 0
  %2871 = vmatprep.subr.bf16.mxu0 0
  %2872 = vmatpush1.bf16.msra.mxu0 0
  %2873 = vmatprep.subr.bf16.mxu0 0
  %2874 = vmatpush1.bf16.msra.mxu0 0
  %2875 = vmatprep.subr.bf16.mxu0 0
  %2876 = vmatpush1.bf16.msra.mxu0 0
  %2877 = vmatprep.subr.bf16.mxu0 0
  %2878 = vmatpush1.bf16.msra.mxu0 0
  %2879 = vmatprep.subr.bf16.mxu0 0
  %2880 = vmatpush1.bf16.msra.mxu0 0
  %2881 = vmatprep.subr.bf16.mxu0 0
  %2882 = vmatpush1.bf16.msra.mxu0 0
  %2883 = vmatprep.subr.bf16.mxu0 0
  %2884 = vmatpush1.bf16.msra.mxu0 0
  %2885 = vmatprep.subr.bf16.mxu0 0
  %2886 = vmatpush1.bf16.msra.mxu0 %v2470
  %2887 = vmatprep.subr.bf16.mxu0 0
  %2888 = vmatpush2.bf16.msra.mxu0 0
  %2889 = vmatprep.subr.bf16.mxu0 0
  %2890 = vmatpush2.bf16.msra.mxu0 0
  %2891 = vmatprep.subr.bf16.mxu0 0
  %2892 = vmatpush2.bf16.msra.mxu0 0
  %2893 = vmatprep.subr.bf16.mxu0 0
  %2894 = vmatpush2.bf16.msra.mxu0 0
  %2895 = vmatprep.subr.bf16.mxu0 0
  %2896 = vmatpush2.bf16.msra.mxu0 0
  %2897 = vmatprep.subr.bf16.mxu0 0
  %2898 = vmatpush2.bf16.msra.mxu0 0
  %2899 = vmatprep.subr.bf16.mxu0 0
  %2900 = vmatpush2.bf16.msra.mxu0 0
  %2901 = vmatprep.subr.bf16.mxu0 0
  %2902 = vmatpush2.bf16.msra.mxu0 0
  %2903 = vmatprep.mubr.bf16.mxu0 0
  %2904 = vmatmul.mubr.bf16.gmra.mxu0 %v2869
  %v2905 = vpop.f32.mrf.mxu0
  %v2906 = vadd.f32 0.0, %v2905
  %v2907 = vpop.f32.mrf.mxu0
  %v2908 = vpop.f32.mrf.mxu0
  %v2909 = vadd.f32 0.0, %v2908
  %v2910 = vpop.f32.mrf.mxu0
  %2911 = vdwg.mxu0
  %v2913 = vsel %vm356, %v2779, 0
  %2915 = vmatprep.subr.bf16.mxu0 0
  %2916 = vmatpush1.bf16.msra.mxu0 0
  %2917 = vmatprep.subr.bf16.mxu0 0
  %2918 = vmatpush1.bf16.msra.mxu0 0
  %2919 = vmatprep.subr.bf16.mxu0 0
  %2920 = vmatpush1.bf16.msra.mxu0 0
  %2921 = vmatprep.subr.bf16.mxu0 0
  %2922 = vmatpush1.bf16.msra.mxu0 0
  %2923 = vmatprep.subr.bf16.mxu0 0
  %2924 = vmatpush1.bf16.msra.mxu0 0
  %2925 = vmatprep.subr.bf16.mxu0 0
  %2926 = vmatpush1.bf16.msra.mxu0 0
  %2927 = vmatprep.subr.bf16.mxu0 0
  %2928 = vmatpush1.bf16.msra.mxu0 0
  %2929 = vmatprep.subr.bf16.mxu0 0
  %2930 = vmatpush1.bf16.msra.mxu0 %v2471
  %2931 = vmatprep.subr.bf16.mxu0 0
  %2932 = vmatpush2.bf16.msra.mxu0 0
  %2933 = vmatprep.subr.bf16.mxu0 0
  %2934 = vmatpush2.bf16.msra.mxu0 0
  %2935 = vmatprep.subr.bf16.mxu0 0
  %2936 = vmatpush2.bf16.msra.mxu0 0
  %2937 = vmatprep.subr.bf16.mxu0 0
  %2938 = vmatpush2.bf16.msra.mxu0 0
  %2939 = vmatprep.subr.bf16.mxu0 0
  %2940 = vmatpush2.bf16.msra.mxu0 0
  %2941 = vmatprep.subr.bf16.mxu0 0
  %2942 = vmatpush2.bf16.msra.mxu0 0
  %2943 = vmatprep.subr.bf16.mxu0 0
  %2944 = vmatpush2.bf16.msra.mxu0 0
  %2945 = vmatprep.subr.bf16.mxu0 0
  %2946 = vmatpush2.bf16.msra.mxu0 0
  %2947 = vmatprep.mubr.bf16.mxu0 0
  %2948 = vmatmul.mubr.bf16.gmra.mxu0 %v2913
  %v2949 = vpop.f32.mrf.mxu0
  %v2950 = vadd.f32 0.0, %v2949
  %v2951 = vpop.f32.mrf.mxu0
  %v2952 = vpop.f32.mrf.mxu0
  %v2953 = vadd.f32 0.0, %v2952
  %v2954 = vpop.f32.mrf.mxu0
  %2955 = vdwg.mxu0
  %v2956 = vpack.c.bf16 %v2821, %v2818
  %v2957 = vpack.c.bf16 %v2865, %v2862
  %v2960 = vunpack.c.l.b16 %v2418
  %v2961 = vunpack.c.l.b16 %v2419
  %v2962 = vpack.c.b16 %v2961, %v2960
  %v2965 = vsel %vm356, %v2957, 0
  %2967 = vmatprep.subr.bf16.mxu0 0
  %2968 = vmatpush1.bf16.msra.mxu0 0
  %2969 = vmatprep.subr.bf16.mxu0 0
  %2970 = vmatpush1.bf16.msra.mxu0 0
  %2971 = vmatprep.subr.bf16.mxu0 0
  %2972 = vmatpush1.bf16.msra.mxu0 0
  %2973 = vmatprep.subr.bf16.mxu0 0
  %2974 = vmatpush1.bf16.msra.mxu0 0
  %2975 = vmatprep.subr.bf16.mxu0 0
  %2976 = vmatpush1.bf16.msra.mxu0 0
  %2977 = vmatprep.subr.bf16.mxu0 0
  %2978 = vmatpush1.bf16.msra.mxu0 0
  %2979 = vmatprep.subr.bf16.mxu0 0
  %2980 = vmatpush1.bf16.msra.mxu0 0
  %2981 = vmatprep.subr.bf16.mxu0 0
  %2982 = vmatpush1.bf16.msra.mxu0 %v2962
  %2983 = vmatprep.subr.bf16.mxu0 0
  %2984 = vmatpush2.bf16.msra.mxu0 0
  %2985 = vmatprep.subr.bf16.mxu0 0
  %2986 = vmatpush2.bf16.msra.mxu0 0
  %2987 = vmatprep.subr.bf16.mxu0 0
  %2988 = vmatpush2.bf16.msra.mxu0 0
  %2989 = vmatprep.subr.bf16.mxu0 0
  %2990 = vmatpush2.bf16.msra.mxu0 0
  %2991 = vmatprep.subr.bf16.mxu0 0
  %2992 = vmatpush2.bf16.msra.mxu0 0
  %2993 = vmatprep.subr.bf16.mxu0 0
  %2994 = vmatpush2.bf16.msra.mxu0 0
  %2995 = vmatprep.subr.bf16.mxu0 0
  %2996 = vmatpush2.bf16.msra.mxu0 0
  %2997 = vmatprep.subr.bf16.mxu0 0
  %2998 = vmatpush2.bf16.msra.mxu0 0
  %2999 = vmatprep.mubr.bf16.mxu0 0
  %3000 = vmatmul.mubr.bf16.gmra.mxu0 %v2965
  %v3001 = vpop.f32.mrf.mxu0
  %v3002 = vadd.f32 0.0, %v3001
  %v3003 = vpop.f32.mrf.mxu0
  %v3004 = vpop.f32.mrf.mxu0
  %v3005 = vadd.f32 0.0, %v3004
  %v3006 = vpop.f32.mrf.mxu0
  %3007 = vdwg.mxu0
  %v3010 = vunpack.c.l.b16 %v2416
  %v3011 = vunpack.c.l.b16 %v2417
  %v3012 = vpack.c.b16 %v3011, %v3010
  %v3015 = vsel %vm356, %v2956, 0
  %3017 = vmatprep.subr.bf16.mxu0 0
  %3018 = vmatpush1.bf16.msra.mxu0 0
  %3019 = vmatprep.subr.bf16.mxu0 0
  %3020 = vmatpush1.bf16.msra.mxu0 0
  %3021 = vmatprep.subr.bf16.mxu0 0
  %3022 = vmatpush1.bf16.msra.mxu0 0
  %3023 = vmatprep.subr.bf16.mxu0 0
  %3024 = vmatpush1.bf16.msra.mxu0 0
  %3025 = vmatprep.subr.bf16.mxu0 0
  %3026 = vmatpush1.bf16.msra.mxu0 0
  %3027 = vmatprep.subr.bf16.mxu0 0
  %3028 = vmatpush1.bf16.msra.mxu0 0
  %3029 = vmatprep.subr.bf16.mxu0 0
  %3030 = vmatpush1.bf16.msra.mxu0 0
  %3031 = vmatprep.subr.bf16.mxu0 0
  %3032 = vmatpush1.bf16.msra.mxu0 %v3012
  %3033 = vmatprep.subr.bf16.mxu0 0
  %3034 = vmatpush2.bf16.msra.mxu0 0
  %3035 = vmatprep.subr.bf16.mxu0 0
  %3036 = vmatpush2.bf16.msra.mxu0 0
  %3037 = vmatprep.subr.bf16.mxu0 0
  %3038 = vmatpush2.bf16.msra.mxu0 0
  %3039 = vmatprep.subr.bf16.mxu0 0
  %3040 = vmatpush2.bf16.msra.mxu0 0
  %3041 = vmatprep.subr.bf16.mxu0 0
  %3042 = vmatpush2.bf16.msra.mxu0 0
  %3043 = vmatprep.subr.bf16.mxu0 0
  %3044 = vmatpush2.bf16.msra.mxu0 0
  %3045 = vmatprep.subr.bf16.mxu0 0
  %3046 = vmatpush2.bf16.msra.mxu0 0
  %3047 = vmatprep.subr.bf16.mxu0 0
  %3048 = vmatpush2.bf16.msra.mxu0 0
  %3049 = vmatprep.mubr.bf16.mxu0 0
  %3050 = vmatmul.mubr.bf16.gmra.mxu0 %v3015
  %v3051 = vpop.f32.mrf.mxu0
  %v3052 = vadd.f32 %v3002, %v3051
  %v3053 = vpop.f32.mrf.mxu0
  %v3054 = vpop.f32.mrf.mxu0
  %v3055 = vadd.f32 %v3005, %v3054
  %v3056 = vpop.f32.mrf.mxu0
  %3057 = vdwg.mxu0
  %v3058 = vpack.c.bf16 %v2909, %v2906
  %v3061 = vunpack.c.l.b16 %v2420
  %v3062 = vunpack.c.l.b16 %v2421
  %v3063 = vpack.c.b16 %v3062, %v3061
  %v3066 = vsel %vm356, %v3058, 0
  %3068 = vmatprep.subr.bf16.mxu0 0
  %3069 = vmatpush1.bf16.msra.mxu0 0
  %3070 = vmatprep.subr.bf16.mxu0 0
  %3071 = vmatpush1.bf16.msra.mxu0 0
  %3072 = vmatprep.subr.bf16.mxu0 0
  %3073 = vmatpush1.bf16.msra.mxu0 0
  %3074 = vmatprep.subr.bf16.mxu0 0
  %3075 = vmatpush1.bf16.msra.mxu0 0
  %3076 = vmatprep.subr.bf16.mxu0 0
  %3077 = vmatpush1.bf16.msra.mxu0 0
  %3078 = vmatprep.subr.bf16.mxu0 0
  %3079 = vmatpush1.bf16.msra.mxu0 0
  %3080 = vmatprep.subr.bf16.mxu0 0
  %3081 = vmatpush1.bf16.msra.mxu0 0
  %3082 = vmatprep.subr.bf16.mxu0 0
  %3083 = vmatpush1.bf16.msra.mxu0 %v3063
  %3084 = vmatprep.subr.bf16.mxu0 0
  %3085 = vmatpush2.bf16.msra.mxu0 0
  %3086 = vmatprep.subr.bf16.mxu0 0
  %3087 = vmatpush2.bf16.msra.mxu0 0
  %3088 = vmatprep.subr.bf16.mxu0 0
  %3089 = vmatpush2.bf16.msra.mxu0 0
  %3090 = vmatprep.subr.bf16.mxu0 0
  %3091 = vmatpush2.bf16.msra.mxu0 0
  %3092 = vmatprep.subr.bf16.mxu0 0
  %3093 = vmatpush2.bf16.msra.mxu0 0
  %3094 = vmatprep.subr.bf16.mxu0 0
  %3095 = vmatpush2.bf16.msra.mxu0 0
  %3096 = vmatprep.subr.bf16.mxu0 0
  %3097 = vmatpush2.bf16.msra.mxu0 0
  %3098 = vmatprep.subr.bf16.mxu0 0
  %3099 = vmatpush2.bf16.msra.mxu0 0
  %3100 = vmatprep.mubr.bf16.mxu0 0
  %3101 = vmatmul.mubr.bf16.gmra.mxu0 %v3066
  %v3102 = vpop.f32.mrf.mxu0
  %v3103 = vadd.f32 0.0, %v3102
  %v3104 = vpop.f32.mrf.mxu0
  %v3105 = vpop.f32.mrf.mxu0
  %v3106 = vadd.f32 0.0, %v3105
  %v3107 = vpop.f32.mrf.mxu0
  %3108 = vdwg.mxu0
  %v3109 = vadd.f32 %v3052, %v3103
  %v3110 = vadd.f32 %v3055, %v3106
  %v3111 = vpack.c.bf16 %v2953, %v2950
  %v3114 = vunpack.c.l.b16 %v2422
  %v3115 = vunpack.c.l.b16 %v2423
  %v3116 = vpack.c.b16 %v3115, %v3114
  %v3119 = vsel %vm356, %v3111, 0
  %3121 = vmatprep.subr.bf16.mxu0 0
  %3122 = vmatpush1.bf16.msra.mxu0 0
  %3123 = vmatprep.subr.bf16.mxu0 0
  %3124 = vmatpush1.bf16.msra.mxu0 0
  %3125 = vmatprep.subr.bf16.mxu0 0
  %3126 = vmatpush1.bf16.msra.mxu0 0
  %3127 = vmatprep.subr.bf16.mxu0 0
  %3128 = vmatpush1.bf16.msra.mxu0 0
  %3129 = vmatprep.subr.bf16.mxu0 0
  %3130 = vmatpush1.bf16.msra.mxu0 0
  %3131 = vmatprep.subr.bf16.mxu0 0
  %3132 = vmatpush1.bf16.msra.mxu0 0
  %3133 = vmatprep.subr.bf16.mxu0 0
  %3134 = vmatpush1.bf16.msra.mxu0 0
  %3135 = vmatprep.subr.bf16.mxu0 0
  %3136 = vmatpush1.bf16.msra.mxu0 %v3116
  %3137 = vmatprep.subr.bf16.mxu0 0
  %3138 = vmatpush2.bf16.msra.mxu0 0
  %3139 = vmatprep.subr.bf16.mxu0 0
  %3140 = vmatpush2.bf16.msra.mxu0 0
  %3141 = vmatprep.subr.bf16.mxu0 0
  %3142 = vmatpush2.bf16.msra.mxu0 0
  %3143 = vmatprep.subr.bf16.mxu0 0
  %3144 = vmatpush2.bf16.msra.mxu0 0
  %3145 = vmatprep.subr.bf16.mxu0 0
  %3146 = vmatpush2.bf16.msra.mxu0 0
  %3147 = vmatprep.subr.bf16.mxu0 0
  %3148 = vmatpush2.bf16.msra.mxu0 0
  %3149 = vmatprep.subr.bf16.mxu0 0
  %3150 = vmatpush2.bf16.msra.mxu0 0
  %3151 = vmatprep.subr.bf16.mxu0 0
  %3152 = vmatpush2.bf16.msra.mxu0 0
  %3153 = vmatprep.mubr.bf16.mxu0 0
  %3154 = vmatmul.mubr.bf16.gmra.mxu0 %v3119
  %v3155 = vpop.f32.mrf.mxu0
  %v3156 = vadd.f32 0.0, %v3155
  %v3157 = vpop.f32.mrf.mxu0
  %v3158 = vpop.f32.mrf.mxu0
  %v3159 = vadd.f32 0.0, %v3158
  %v3160 = vpop.f32.mrf.mxu0
  %3161 = vdwg.mxu0
  %v3162 = vadd.f32 %v3109, %v3156
  %v3163 = vadd.f32 %v3110, %v3159
  %v3164 = vadd.f32 %v2258, %v3162
  %v3165 = vadd.f32 %v2259, %v3163
  %s3166 = scalar_lea.vmem %s21, 1
  %v3167 = vld [vmem:[%s3166] sm:$0x1]
  %v3169 = vlaneseq
  %v3170 = vshrl.u32 %v3169, 7
  %v3171 = vsub.s32 0, %v3170
  %v3172 = vrot.slane %v3167, %v3171
  %v3174 = vadd.f32 %v3164, %v3172
  %v3175 = vadd.f32 %v3165, %v3172
  %s3176 = scalar_lea.vmem %s23, 1
  %v3177 = vld [vmem:[%s3176] sm:$0x1]
  %s3178 = scalar_lea.vmem %s25, 1
  %v3179 = vld [vmem:[%s3178] sm:$0x1]
  %v3180 = vsel %vm146, %v3174, 0.0
  %3181 = vadd.xlane.f32.xlu0 %v3180
  %v3182 = vpop.xlane.xlu0 %3181
  %v3183 = vsel %vm146, %v3175, 0.0
  %3184 = vadd.xlane.f32.xlu0 %v3183
  %v3185 = vpop.xlane.xlu0 %3184
  %v3186 = vmul.f32 %v3182, %v153
  %v3187 = vmul.f32 %v3185, %v153
  %v3188 = vsub.f32 %v3174, %v3186
  %v3189 = vsub.f32 %v3175, %v3187
  %v3190 = vmul.f32 %v3188, %v3188
  %v3191 = vmul.f32 %v3189, %v3189
  %v3192 = vsel %vm146, %v3190, 0.0
  %3193 = vadd.xlane.f32.xlu0 %v3192
  %v3194 = vpop.xlane.xlu0 %3193
  %v3195 = vsel %vm146, %v3191, 0.0
  %3196 = vadd.xlane.f32.xlu0 %v3195
  %v3197 = vpop.xlane.xlu0 %3196
  %v3198 = vmul.f32 %v3194, %v153
  %v3199 = vmul.f32 %v3197, %v153
  %v3200 = vadd.f32 %v3198, 1e-06
  %v3201 = vadd.f32 %v3199, 1e-06
  %v3202 = vrsqrt.pop %v3200
  %v3203 = vrsqrt.pop %v3201
  %v3204 = vmul.f32 %v3188, %v3202
  %v3205 = vmul.f32 %v3189, %v3203
  %v3207 = vlaneseq
  %v3208 = vshrl.u32 %v3207, 7
  %v3209 = vsub.s32 0, %v3208
  %v3210 = vrot.slane %v3177, %v3209
  %v3212 = vmul.f32 %v3204, %v3210
  %v3213 = vmul.f32 %v3205, %v3210
  %v3215 = vlaneseq
  %v3216 = vshrl.u32 %v3215, 7
  %v3217 = vsub.s32 0, %v3216
  %v3218 = vrot.slane %v3179, %v3217
  %v3220 = vadd.f32 %v3212, %v3218
  %v3221 = vadd.f32 %v3213, %v3218
  %v3222 = vpack.c.bf16 %v3221, %v3220
  %s3223 = scalar_lea.vmem %s27, 32
  %v3224 = vld [vmem:[%s3223] sm:$0xf]
  %v3225 = vld [vmem:[%s3223 + $0x4] sm:$0xf]
  %v3226 = vld [vmem:[%s3223 + $0x8] sm:$0xf]
  %v3227 = vld [vmem:[%s3223 + $0xc] sm:$0xf]
  %v3228 = vld [vmem:[%s3223 + $0x10] sm:$0xf]
  %v3229 = vld [vmem:[%s3223 + $0x14] sm:$0xf]
  %v3230 = vld [vmem:[%s3223 + $0x18] sm:$0xf]
  %v3231 = vld [vmem:[%s3223 + $0x1c] sm:$0xf]
  %s3232 = scalar_lea.vmem %s29, 1
  %v3233 = vld [vmem:[%s3232] sm:$0x1]
  %v3235 = vlaneseq
  %v3236 = vshrl.u32 %v3235, 7
  %v3237 = vsub.s32 0, %v3236
  %v3238 = vrot.slane %v3233, %v3237
  %v3248 = vunpack.c.l.b16 %v3224
  %v3249 = vunpack.c.l.b16 %v3225
  %v3250 = vunpack.c.l.b16 %v3226
  %v3251 = vunpack.c.l.b16 %v3227
  %v3252 = vunpack.c.l.b16 %v3228
  %v3253 = vunpack.c.l.b16 %v3229
  %v3254 = vunpack.c.l.b16 %v3230
  %v3255 = vunpack.c.l.b16 %v3231
  %v3256 = vpack.c.b16 %v3249, %v3248
  %v3257 = vpack.c.b16 %v3251, %v3250
  %v3258 = vpack.c.b16 %v3253, %v3252
  %v3259 = vpack.c.b16 %v3255, %v3254
  %v3265 = vsel %vm146, %v3222, 0
  %3267 = vmatprep.subr.bf16.mxu0 0
  %3268 = vmatpush1.bf16.msra.mxu0 0
  %3269 = vmatprep.subr.bf16.mxu0 0
  %3270 = vmatpush1.bf16.msra.mxu0 0
  %3271 = vmatprep.subr.bf16.mxu0 0
  %3272 = vmatpush1.bf16.msra.mxu0 0
  %3273 = vmatprep.subr.bf16.mxu0 0
  %3274 = vmatpush1.bf16.msra.mxu0 0
  %3275 = vmatprep.subr.bf16.mxu0 0
  %3276 = vmatpush1.bf16.msra.mxu0 %v3259
  %3277 = vmatprep.subr.bf16.mxu0 0
  %3278 = vmatpush1.bf16.msra.mxu0 %v3258
  %3279 = vmatprep.subr.bf16.mxu0 0
  %3280 = vmatpush1.bf16.msra.mxu0 %v3257
  %3281 = vmatprep.subr.bf16.mxu0 0
  %3282 = vmatpush1.bf16.msra.mxu0 %v3256
  %3283 = vmatprep.subr.bf16.mxu0 0
  %3284 = vmatpush2.bf16.msra.mxu0 0
  %3285 = vmatprep.subr.bf16.mxu0 0
  %3286 = vmatpush2.bf16.msra.mxu0 0
  %3287 = vmatprep.subr.bf16.mxu0 0
  %3288 = vmatpush2.bf16.msra.mxu0 0
  %3289 = vmatprep.subr.bf16.mxu0 0
  %3290 = vmatpush2.bf16.msra.mxu0 0
  %3291 = vmatprep.subr.bf16.mxu0 0
  %3292 = vmatpush2.bf16.msra.mxu0 0
  %3293 = vmatprep.subr.bf16.mxu0 0
  %3294 = vmatpush2.bf16.msra.mxu0 0
  %3295 = vmatprep.subr.bf16.mxu0 0
  %3296 = vmatpush2.bf16.msra.mxu0 0
  %3297 = vmatprep.subr.bf16.mxu0 0
  %3298 = vmatpush2.bf16.msra.mxu0 0
  %3299 = vmatprep.mubr.bf16.mxu0 0
  %3300 = vmatmul.mubr.bf16.gmra.mxu0 %v3265
  %v3301 = vpop.f32.mrf.mxu0
  %v3302 = vadd.f32 %v3238, %v3301
  %v3303 = vpop.f32.mrf.mxu0
  %v3304 = vpop.f32.mrf.mxu0
  %v3305 = vadd.f32 %v3238, %v3304
  %v3306 = vpop.f32.mrf.mxu0
  %3307 = vdwg.mxu0
  %s3308 = scalar_lea.vmem %s31, 32
  %v3309 = vld [vmem:[%s3308] sm:$0xf]
  %v3310 = vld [vmem:[%s3308 + $0x4] sm:$0xf]
  %v3311 = vld [vmem:[%s3308 + $0x8] sm:$0xf]
  %v3312 = vld [vmem:[%s3308 + $0xc] sm:$0xf]
  %v3313 = vld [vmem:[%s3308 + $0x10] sm:$0xf]
  %v3314 = vld [vmem:[%s3308 + $0x14] sm:$0xf]
  %v3315 = vld [vmem:[%s3308 + $0x18] sm:$0xf]
  %v3316 = vld [vmem:[%s3308 + $0x1c] sm:$0xf]
  %s3317 = scalar_lea.vmem %s33, 1
  %v3318 = vld [vmem:[%s3317] sm:$0x1]
  %v3320 = vlaneseq
  %v3321 = vshrl.u32 %v3320, 7
  %v3322 = vsub.s32 0, %v3321
  %v3323 = vrot.slane %v3318, %v3322
  %v3333 = vunpack.c.l.b16 %v3309
  %v3334 = vunpack.c.l.b16 %v3310
  %v3335 = vunpack.c.l.b16 %v3311
  %v3336 = vunpack.c.l.b16 %v3312
  %v3337 = vunpack.c.l.b16 %v3313
  %v3338 = vunpack.c.l.b16 %v3314
  %v3339 = vunpack.c.l.b16 %v3315
  %v3340 = vunpack.c.l.b16 %v3316
  %v3341 = vpack.c.b16 %v3334, %v3333
  %v3342 = vpack.c.b16 %v3336, %v3335
  %v3343 = vpack.c.b16 %v3338, %v3337
  %v3344 = vpack.c.b16 %v3340, %v3339
  %3349 = vmatprep.subr.bf16.mxu0 0
  %3350 = vmatpush1.bf16.msra.mxu0 0
  %3351 = vmatprep.subr.bf16.mxu0 0
  %3352 = vmatpush1.bf16.msra.mxu0 0
  %3353 = vmatprep.subr.bf16.mxu0 0
  %3354 = vmatpush1.bf16.msra.mxu0 0
  %3355 = vmatprep.subr.bf16.mxu0 0
  %3356 = vmatpush1.bf16.msra.mxu0 0
  %3357 = vmatprep.subr.bf16.mxu0 0
  %3358 = vmatpush1.bf16.msra.mxu0 %v3344
  %3359 = vmatprep.subr.bf16.mxu0 0
  %3360 = vmatpush1.bf16.msra.mxu0 %v3343
  %3361 = vmatprep.subr.bf16.mxu0 0
  %3362 = vmatpush1.bf16.msra.mxu0 %v3342
  %3363 = vmatprep.subr.bf16.mxu0 0
  %3364 = vmatpush1.bf16.msra.mxu0 %v3341
  %3365 = vmatprep.subr.bf16.mxu0 0
  %3366 = vmatpush2.bf16.msra.mxu0 0
  %3367 = vmatprep.subr.bf16.mxu0 0
  %3368 = vmatpush2.bf16.msra.mxu0 0
  %3369 = vmatprep.subr.bf16.mxu0 0
  %3370 = vmatpush2.bf16.msra.mxu0 0
  %3371 = vmatprep.subr.bf16.mxu0 0
  %3372 = vmatpush2.bf16.msra.mxu0 0
  %3373 = vmatprep.subr.bf16.mxu0 0
  %3374 = vmatpush2.bf16.msra.mxu0 0
  %3375 = vmatprep.subr.bf16.mxu0 0
  %3376 = vmatpush2.bf16.msra.mxu0 0
  %3377 = vmatprep.subr.bf16.mxu0 0
  %3378 = vmatpush2.bf16.msra.mxu0 0
  %3379 = vmatprep.subr.bf16.mxu0 0
  %3380 = vmatpush2.bf16.msra.mxu0 0
  %3381 = vmatprep.mubr.bf16.mxu0 0
  %3382 = vmatmul.mubr.bf16.gmra.mxu0 %v1226
  %v3383 = vpop.f32.mrf.mxu0
  %v3384 = vadd.f32 %v3323, %v3383
  %v3385 = vpop.f32.mrf.mxu0
  %v3386 = vpop.f32.mrf.mxu0
  %v3387 = vadd.f32 %v3323, %v3386
  %v3388 = vpop.f32.mrf.mxu0
  %3389 = vdwg.mxu0
  %s3390 = scalar_lea.vmem %s35, 32
  %v3391 = vld [vmem:[%s3390] sm:$0xf]
  %v3392 = vld [vmem:[%s3390 + $0x4] sm:$0xf]
  %v3393 = vld [vmem:[%s3390 + $0x8] sm:$0xf]
  %v3394 = vld [vmem:[%s3390 + $0xc] sm:$0xf]
  %v3395 = vld [vmem:[%s3390 + $0x10] sm:$0xf]
  %v3396 = vld [vmem:[%s3390 + $0x14] sm:$0xf]
  %v3397 = vld [vmem:[%s3390 + $0x18] sm:$0xf]
  %v3398 = vld [vmem:[%s3390 + $0x1c] sm:$0xf]
  %3401 = vrot.lane.b32.xlu0 %v3302, 112
  %v3402 = vpop.permute.xlu0 %3401
  %3403 = vrot.lane.b32.xlu0 %v3305, 112
  %v3404 = vpop.permute.xlu0 %3403
  %3407 = vrot.lane.b32.xlu0 %v3302, 96
  %v3408 = vpop.permute.xlu0 %3407
  %3409 = vrot.lane.b32.xlu0 %v3305, 96
  %v3410 = vpop.permute.xlu0 %3409
  %3413 = vrot.lane.b32.xlu0 %v3302, 80
  %v3414 = vpop.permute.xlu0 %3413
  %3415 = vrot.lane.b32.xlu0 %v3305, 80
  %v3416 = vpop.permute.xlu0 %3415
  %v3419 = vpack.c.bf16 %v3305, %v3302
  %v3420 = vpack.c.bf16 %v3404, %v3402
  %v3421 = vpack.c.bf16 %v3410, %v3408
  %v3422 = vpack.c.bf16 %v3416, %v3414
  %3425 = vrot.lane.b32.xlu0 %v3384, 112
  %v3426 = vpop.permute.xlu0 %3425
  %3427 = vrot.lane.b32.xlu0 %v3387, 112
  %v3428 = vpop.permute.xlu0 %3427
  %3431 = vrot.lane.b32.xlu0 %v3384, 96
  %v3432 = vpop.permute.xlu0 %3431
  %3433 = vrot.lane.b32.xlu0 %v3387, 96
  %v3434 = vpop.permute.xlu0 %3433
  %3437 = vrot.lane.b32.xlu0 %v3384, 80
  %v3438 = vpop.permute.xlu0 %3437
  %3439 = vrot.lane.b32.xlu0 %v3387, 80
  %v3440 = vpop.permute.xlu0 %3439
  %v3443 = vpack.c.bf16 %v3387, %v3384
  %v3444 = vpack.c.bf16 %v3428, %v3426
  %v3445 = vpack.c.bf16 %v3434, %v3432
  %v3446 = vpack.c.bf16 %v3440, %v3438
  %v3448 = vsel %vm356, %v3419, 0
  %v3451 = vsel %vm356, %v3443, 0
  %3453 = vmatprep.subr.bf16.mxu0 0
  %3454 = vmatpush1.bf16.xpose.msra.mxu0 0
  %3455 = vmatprep.subr.bf16.mxu0 0
  %3456 = vmatpush1.bf16.xpose.msra.mxu0 0
  %3457 = vmatprep.subr.bf16.mxu0 0
  %3458 = vmatpush1.bf16.xpose.msra.mxu0 0
  %3459 = vmatprep.subr.bf16.mxu0 0
  %3460 = vmatpush1.bf16.xpose.msra.mxu0 0
  %3461 = vmatprep.subr.bf16.mxu0 0
  %3462 = vmatpush1.bf16.xpose.msra.mxu0 0
  %3463 = vmatprep.subr.bf16.mxu0 0
  %3464 = vmatpush1.bf16.xpose.msra.mxu0 0
  %3465 = vmatprep.subr.bf16.mxu0 0
  %3466 = vmatpush1.bf16.xpose.msra.mxu0 0
  %3467 = vmatprep.subr.bf16.mxu0 0
  %3468 = vmatpush1.bf16.xpose.msra.mxu0 %v3451
  %3469 = vmatprep.subr.bf16.mxu0 0
  %3470 = vmatpush2.bf16.xpose.msra.mxu0 0
  %3471 = vmatprep.subr.bf16.mxu0 0
  %3472 = vmatpush2.bf16.xpose.msra.mxu0 0
  %3473 = vmatprep.subr.bf16.mxu0 0
  %3474 = vmatpush2.bf16.xpose.msra.mxu0 0
  %3475 = vmatprep.subr.bf16.mxu0 0
  %3476 = vmatpush2.bf16.xpose.msra.mxu0 0
  %3477 = vmatprep.subr.bf16.mxu0 0
  %3478 = vmatpush2.bf16.xpose.msra.mxu0 0
  %3479 = vmatprep.subr.bf16.mxu0 0
  %3480 = vmatpush2.bf16.xpose.msra.mxu0 0
  %3481 = vmatprep.subr.bf16.mxu0 0
  %3482 = vmatpush2.bf16.xpose.msra.mxu0 0
  %3483 = vmatprep.subr.bf16.mxu0 0
  %3484 = vmatpush2.bf16.xpose.msra.mxu0 0
  %3485 = vmatprep.mubr.bf16.mxu0 0
  %3486 = vmatmul.mubr.bf16.gmra.mxu0 %v3448
  %v3487 = vpop.f32.mrf.mxu0
  %v3488 = vadd.f32 0.0, %v3487
  %v3489 = vpop.f32.mrf.mxu0
  %v3490 = vpop.f32.mrf.mxu0
  %v3491 = vadd.f32 0.0, %v3490
  %v3492 = vpop.f32.mrf.mxu0
  %3493 = vdwg.mxu0
  %v3495 = vsel %vm356, %v3420, 0
  %v3498 = vsel %vm356, %v3444, 0
  %3500 = vmatprep.subr.bf16.mxu0 0
  %3501 = vmatpush1.bf16.xpose.msra.mxu0 0
  %3502 = vmatprep.subr.bf16.mxu0 0
  %3503 = vmatpush1.bf16.xpose.msra.mxu0 0
  %3504 = vmatprep.subr.bf16.mxu0 0
  %3505 = vmatpush1.bf16.xpose.msra.mxu0 0
  %3506 = vmatprep.subr.bf16.mxu0 0
  %3507 = vmatpush1.bf16.xpose.msra.mxu0 0
  %3508 = vmatprep.subr.bf16.mxu0 0
  %3509 = vmatpush1.bf16.xpose.msra.mxu0 0
  %3510 = vmatprep.subr.bf16.mxu0 0
  %3511 = vmatpush1.bf16.xpose.msra.mxu0 0
  %3512 = vmatprep.subr.bf16.mxu0 0
  %3513 = vmatpush1.bf16.xpose.msra.mxu0 0
  %3514 = vmatprep.subr.bf16.mxu0 0
  %3515 = vmatpush1.bf16.xpose.msra.mxu0 %v3498
  %3516 = vmatprep.subr.bf16.mxu0 0
  %3517 = vmatpush2.bf16.xpose.msra.mxu0 0
  %3518 = vmatprep.subr.bf16.mxu0 0
  %3519 = vmatpush2.bf16.xpose.msra.mxu0 0
  %3520 = vmatprep.subr.bf16.mxu0 0
  %3521 = vmatpush2.bf16.xpose.msra.mxu0 0
  %3522 = vmatprep.subr.bf16.mxu0 0
  %3523 = vmatpush2.bf16.xpose.msra.mxu0 0
  %3524 = vmatprep.subr.bf16.mxu0 0
  %3525 = vmatpush2.bf16.xpose.msra.mxu0 0
  %3526 = vmatprep.subr.bf16.mxu0 0
  %3527 = vmatpush2.bf16.xpose.msra.mxu0 0
  %3528 = vmatprep.subr.bf16.mxu0 0
  %3529 = vmatpush2.bf16.xpose.msra.mxu0 0
  %3530 = vmatprep.subr.bf16.mxu0 0
  %3531 = vmatpush2.bf16.xpose.msra.mxu0 0
  %3532 = vmatprep.mubr.bf16.mxu0 0
  %3533 = vmatmul.mubr.bf16.gmra.mxu0 %v3495
  %v3534 = vpop.f32.mrf.mxu0
  %v3535 = vadd.f32 0.0, %v3534
  %v3536 = vpop.f32.mrf.mxu0
  %v3537 = vpop.f32.mrf.mxu0
  %v3538 = vadd.f32 0.0, %v3537
  %v3539 = vpop.f32.mrf.mxu0
  %3540 = vdwg.mxu0
  %v3542 = vsel %vm356, %v3421, 0
  %v3545 = vsel %vm356, %v3445, 0
  %3547 = vmatprep.subr.bf16.mxu0 0
  %3548 = vmatpush1.bf16.xpose.msra.mxu0 0
  %3549 = vmatprep.subr.bf16.mxu0 0
  %3550 = vmatpush1.bf16.xpose.msra.mxu0 0
  %3551 = vmatprep.subr.bf16.mxu0 0
  %3552 = vmatpush1.bf16.xpose.msra.mxu0 0
  %3553 = vmatprep.subr.bf16.mxu0 0
  %3554 = vmatpush1.bf16.xpose.msra.mxu0 0
  %3555 = vmatprep.subr.bf16.mxu0 0
  %3556 = vmatpush1.bf16.xpose.msra.mxu0 0
  %3557 = vmatprep.subr.bf16.mxu0 0
  %3558 = vmatpush1.bf16.xpose.msra.mxu0 0
  %3559 = vmatprep.subr.bf16.mxu0 0
  %3560 = vmatpush1.bf16.xpose.msra.mxu0 0
  %3561 = vmatprep.subr.bf16.mxu0 0
  %3562 = vmatpush1.bf16.xpose.msra.mxu0 %v3545
  %3563 = vmatprep.subr.bf16.mxu0 0
  %3564 = vmatpush2.bf16.xpose.msra.mxu0 0
  %3565 = vmatprep.subr.bf16.mxu0 0
  %3566 = vmatpush2.bf16.xpose.msra.mxu0 0
  %3567 = vmatprep.subr.bf16.mxu0 0
  %3568 = vmatpush2.bf16.xpose.msra.mxu0 0
  %3569 = vmatprep.subr.bf16.mxu0 0
  %3570 = vmatpush2.bf16.xpose.msra.mxu0 0
  %3571 = vmatprep.subr.bf16.mxu0 0
  %3572 = vmatpush2.bf16.xpose.msra.mxu0 0
  %3573 = vmatprep.subr.bf16.mxu0 0
  %3574 = vmatpush2.bf16.xpose.msra.mxu0 0
  %3575 = vmatprep.subr.bf16.mxu0 0
  %3576 = vmatpush2.bf16.xpose.msra.mxu0 0
  %3577 = vmatprep.subr.bf16.mxu0 0
  %3578 = vmatpush2.bf16.xpose.msra.mxu0 0
  %3579 = vmatprep.mubr.bf16.mxu0 0
  %3580 = vmatmul.mubr.bf16.gmra.mxu0 %v3542
  %v3581 = vpop.f32.mrf.mxu0
  %v3582 = vadd.f32 0.0, %v3581
  %v3583 = vpop.f32.mrf.mxu0
  %v3584 = vpop.f32.mrf.mxu0
  %v3585 = vadd.f32 0.0, %v3584
  %v3586 = vpop.f32.mrf.mxu0
  %3587 = vdwg.mxu0
  %v3589 = vsel %vm356, %v3422, 0
  %v3592 = vsel %vm356, %v3446, 0
  %3594 = vmatprep.subr.bf16.mxu0 0
  %3595 = vmatpush1.bf16.xpose.msra.mxu0 0
  %3596 = vmatprep.subr.bf16.mxu0 0
  %3597 = vmatpush1.bf16.xpose.msra.mxu0 0
  %3598 = vmatprep.subr.bf16.mxu0 0
  %3599 = vmatpush1.bf16.xpose.msra.mxu0 0
  %3600 = vmatprep.subr.bf16.mxu0 0
  %3601 = vmatpush1.bf16.xpose.msra.mxu0 0
  %3602 = vmatprep.subr.bf16.mxu0 0
  %3603 = vmatpush1.bf16.xpose.msra.mxu0 0
  %3604 = vmatprep.subr.bf16.mxu0 0
  %3605 = vmatpush1.bf16.xpose.msra.mxu0 0
  %3606 = vmatprep.subr.bf16.mxu0 0
  %3607 = vmatpush1.bf16.xpose.msra.mxu0 0
  %3608 = vmatprep.subr.bf16.mxu0 0
  %3609 = vmatpush1.bf16.xpose.msra.mxu0 %v3592
  %3610 = vmatprep.subr.bf16.mxu0 0
  %3611 = vmatpush2.bf16.xpose.msra.mxu0 0
  %3612 = vmatprep.subr.bf16.mxu0 0
  %3613 = vmatpush2.bf16.xpose.msra.mxu0 0
  %3614 = vmatprep.subr.bf16.mxu0 0
  %3615 = vmatpush2.bf16.xpose.msra.mxu0 0
  %3616 = vmatprep.subr.bf16.mxu0 0
  %3617 = vmatpush2.bf16.xpose.msra.mxu0 0
  %3618 = vmatprep.subr.bf16.mxu0 0
  %3619 = vmatpush2.bf16.xpose.msra.mxu0 0
  %3620 = vmatprep.subr.bf16.mxu0 0
  %3621 = vmatpush2.bf16.xpose.msra.mxu0 0
  %3622 = vmatprep.subr.bf16.mxu0 0
  %3623 = vmatpush2.bf16.xpose.msra.mxu0 0
  %3624 = vmatprep.subr.bf16.mxu0 0
  %3625 = vmatpush2.bf16.xpose.msra.mxu0 0
  %3626 = vmatprep.mubr.bf16.mxu0 0
  %3627 = vmatmul.mubr.bf16.gmra.mxu0 %v3589
  %v3628 = vpop.f32.mrf.mxu0
  %v3629 = vadd.f32 0.0, %v3628
  %v3630 = vpop.f32.mrf.mxu0
  %v3631 = vpop.f32.mrf.mxu0
  %v3632 = vadd.f32 0.0, %v3631
  %v3633 = vpop.f32.mrf.mxu0
  %3634 = vdwg.mxu0
  %v3635 = vmul.f32 %v3488, 0.25
  %v3636 = vmul.f32 %v3491, 0.25
  %v3637 = vmul.f32 %v3535, 0.25
  %v3638 = vmul.f32 %v3538, 0.25
  %v3639 = vmul.f32 %v3582, 0.25
  %v3640 = vmul.f32 %v3585, 0.25
  %v3641 = vmul.f32 %v3629, 0.25
  %v3642 = vmul.f32 %v3632, 0.25
  %v3643 = vadd.f32 %v3635, %v142
  %v3644 = vadd.f32 %v3636, %v143
  %v3645 = vadd.f32 %v3637, %v142
  %v3646 = vadd.f32 %v3638, %v143
  %v3647 = vadd.f32 %v3639, %v142
  %v3648 = vadd.f32 %v3640, %v143
  %v3649 = vadd.f32 %v3641, %v142
  %v3650 = vadd.f32 %v3642, %v143
  %v3651 = vsel %vm1529, %v3643, -inf
  %3652 = vmax.xlane.f32.xlu0 %v3651
  %v3653 = vpop.xlane.xlu0 %3652
  %v3654 = vsel %vm1529, %v3644, -inf
  %3655 = vmax.xlane.f32.xlu0 %v3654
  %v3656 = vpop.xlane.xlu0 %3655
  %v3657 = vsel %vm1529, %v3645, -inf
  %3658 = vmax.xlane.f32.xlu0 %v3657
  %v3659 = vpop.xlane.xlu0 %3658
  %v3660 = vsel %vm1529, %v3646, -inf
  %3661 = vmax.xlane.f32.xlu0 %v3660
  %v3662 = vpop.xlane.xlu0 %3661
  %v3663 = vsel %vm1529, %v3647, -inf
  %3664 = vmax.xlane.f32.xlu0 %v3663
  %v3665 = vpop.xlane.xlu0 %3664
  %v3666 = vsel %vm1529, %v3648, -inf
  %3667 = vmax.xlane.f32.xlu0 %v3666
  %v3668 = vpop.xlane.xlu0 %3667
  %v3669 = vsel %vm1529, %v3649, -inf
  %3670 = vmax.xlane.f32.xlu0 %v3669
  %v3671 = vpop.xlane.xlu0 %3670
  %v3672 = vsel %vm1529, %v3650, -inf
  %3673 = vmax.xlane.f32.xlu0 %v3672
  %v3674 = vpop.xlane.xlu0 %3673
  %v3675 = vsub.f32 %v3643, %v3653
  %v3676 = vsub.f32 %v3644, %v3656
  %v3677 = vsub.f32 %v3645, %v3659
  %v3678 = vsub.f32 %v3646, %v3662
  %v3679 = vsub.f32 %v3647, %v3665
  %v3680 = vsub.f32 %v3648, %v3668
  %v3681 = vsub.f32 %v3649, %v3671
  %v3682 = vsub.f32 %v3650, %v3674
  %v3683 = vmul.f32 %v3675, 1.442695
  %v3684 = vpow.pop %v3683
  %v3685 = vmul.f32 %v3676, 1.442695
  %v3686 = vpow.pop %v3685
  %v3687 = vmul.f32 %v3677, 1.442695
  %v3688 = vpow.pop %v3687
  %v3689 = vmul.f32 %v3678, 1.442695
  %v3690 = vpow.pop %v3689
  %v3691 = vmul.f32 %v3679, 1.442695
  %v3692 = vpow.pop %v3691
  %v3693 = vmul.f32 %v3680, 1.442695
  %v3694 = vpow.pop %v3693
  %v3695 = vmul.f32 %v3681, 1.442695
  %v3696 = vpow.pop %v3695
  %v3697 = vmul.f32 %v3682, 1.442695
  %v3698 = vpow.pop %v3697
  %v3699 = vsel %vm1529, %v3684, 0.0
  %3700 = vadd.xlane.f32.xlu0 %v3699
  %v3701 = vpop.xlane.xlu0 %3700
  %v3702 = vsel %vm1529, %v3686, 0.0
  %3703 = vadd.xlane.f32.xlu0 %v3702
  %v3704 = vpop.xlane.xlu0 %3703
  %v3705 = vsel %vm1529, %v3688, 0.0
  %3706 = vadd.xlane.f32.xlu0 %v3705
  %v3707 = vpop.xlane.xlu0 %3706
  %v3708 = vsel %vm1529, %v3690, 0.0
  %3709 = vadd.xlane.f32.xlu0 %v3708
  %v3710 = vpop.xlane.xlu0 %3709
  %v3711 = vsel %vm1529, %v3692, 0.0
  %3712 = vadd.xlane.f32.xlu0 %v3711
  %v3713 = vpop.xlane.xlu0 %3712
  %v3714 = vsel %vm1529, %v3694, 0.0
  %3715 = vadd.xlane.f32.xlu0 %v3714
  %v3716 = vpop.xlane.xlu0 %3715
  %v3717 = vsel %vm1529, %v3696, 0.0
  %3718 = vadd.xlane.f32.xlu0 %v3717
  %v3719 = vpop.xlane.xlu0 %3718
  %v3720 = vsel %vm1529, %v3698, 0.0
  %3721 = vadd.xlane.f32.xlu0 %v3720
  %v3722 = vpop.xlane.xlu0 %3721
  %v3723 = vrcp.pop %v3701
  %v3724 = vrcp.pop %v3704
  %v3725 = vrcp.pop %v3707
  %v3726 = vrcp.pop %v3710
  %v3727 = vrcp.pop %v3713
  %v3728 = vrcp.pop %v3716
  %v3729 = vrcp.pop %v3719
  %v3730 = vrcp.pop %v3722
  %v3731 = vmul.f32 %v3684, %v3723
  %v3732 = vmul.f32 %v3686, %v3724
  %v3733 = vmul.f32 %v3688, %v3725
  %v3734 = vmul.f32 %v3690, %v3726
  %v3735 = vmul.f32 %v3692, %v3727
  %v3736 = vmul.f32 %v3694, %v3728
  %v3737 = vmul.f32 %v3696, %v3729
  %v3738 = vmul.f32 %v3698, %v3730
  %v3739 = vpack.c.bf16 %v3732, %v3731
  %v3740 = vpack.c.bf16 %v3734, %v3733
  %v3741 = vpack.c.bf16 %v3736, %v3735
  %v3742 = vpack.c.bf16 %v3738, %v3737
  %3744 = vrot.lane.b32.xlu0 %v3443, 64
  %v3745 = vpop.permute.xlu0 %3744
  %v3747 = vsel %vm1529, %v3739, 0
  %v3750 = vsel %vm1628, %v3745, 0
  %3752 = vmatprep.subr.bf16.mxu0 0
  %3753 = vmatpush1.bf16.msra.mxu0 0
  %3754 = vmatprep.subr.bf16.mxu0 0
  %3755 = vmatpush1.bf16.msra.mxu0 0
  %3756 = vmatprep.subr.bf16.mxu0 0
  %3757 = vmatpush1.bf16.msra.mxu0 0
  %3758 = vmatprep.subr.bf16.mxu0 0
  %3759 = vmatpush1.bf16.msra.mxu0 0
  %3760 = vmatprep.subr.bf16.mxu0 0
  %3761 = vmatpush1.bf16.msra.mxu0 0
  %3762 = vmatprep.subr.bf16.mxu0 0
  %3763 = vmatpush1.bf16.msra.mxu0 0
  %3764 = vmatprep.subr.bf16.mxu0 0
  %3765 = vmatpush1.bf16.msra.mxu0 0
  %3766 = vmatprep.subr.bf16.mxu0 0
  %3767 = vmatpush1.bf16.msra.mxu0 %v3750
  %3768 = vmatprep.subr.bf16.mxu0 0
  %3769 = vmatpush2.bf16.msra.mxu0 0
  %3770 = vmatprep.subr.bf16.mxu0 0
  %3771 = vmatpush2.bf16.msra.mxu0 0
  %3772 = vmatprep.subr.bf16.mxu0 0
  %3773 = vmatpush2.bf16.msra.mxu0 0
  %3774 = vmatprep.subr.bf16.mxu0 0
  %3775 = vmatpush2.bf16.msra.mxu0 0
  %3776 = vmatprep.subr.bf16.mxu0 0
  %3777 = vmatpush2.bf16.msra.mxu0 0
  %3778 = vmatprep.subr.bf16.mxu0 0
  %3779 = vmatpush2.bf16.msra.mxu0 0
  %3780 = vmatprep.subr.bf16.mxu0 0
  %3781 = vmatpush2.bf16.msra.mxu0 0
  %3782 = vmatprep.subr.bf16.mxu0 0
  %3783 = vmatpush2.bf16.msra.mxu0 0
  %3784 = vmatprep.mubr.bf16.mxu0 0
  %3785 = vmatmul.mubr.bf16.gmra.mxu0 %v3747
  %v3786 = vpop.f32.mrf.mxu0
  %v3787 = vadd.f32 0.0, %v3786
  %v3788 = vpop.f32.mrf.mxu0
  %v3789 = vpop.f32.mrf.mxu0
  %v3790 = vadd.f32 0.0, %v3789
  %v3791 = vpop.f32.mrf.mxu0
  %3792 = vdwg.mxu0
  %3794 = vrot.lane.b32.xlu0 %v3444, 64
  %v3795 = vpop.permute.xlu0 %3794
  %v3797 = vsel %vm1529, %v3740, 0
  %v3800 = vsel %vm1628, %v3795, 0
  %3802 = vmatprep.subr.bf16.mxu0 0
  %3803 = vmatpush1.bf16.msra.mxu0 0
  %3804 = vmatprep.subr.bf16.mxu0 0
  %3805 = vmatpush1.bf16.msra.mxu0 0
  %3806 = vmatprep.subr.bf16.mxu0 0
  %3807 = vmatpush1.bf16.msra.mxu0 0
  %3808 = vmatprep.subr.bf16.mxu0 0
  %3809 = vmatpush1.bf16.msra.mxu0 0
  %3810 = vmatprep.subr.bf16.mxu0 0
  %3811 = vmatpush1.bf16.msra.mxu0 0
  %3812 = vmatprep.subr.bf16.mxu0 0
  %3813 = vmatpush1.bf16.msra.mxu0 0
  %3814 = vmatprep.subr.bf16.mxu0 0
  %3815 = vmatpush1.bf16.msra.mxu0 0
  %3816 = vmatprep.subr.bf16.mxu0 0
  %3817 = vmatpush1.bf16.msra.mxu0 %v3800
  %3818 = vmatprep.subr.bf16.mxu0 0
  %3819 = vmatpush2.bf16.msra.mxu0 0
  %3820 = vmatprep.subr.bf16.mxu0 0
  %3821 = vmatpush2.bf16.msra.mxu0 0
  %3822 = vmatprep.subr.bf16.mxu0 0
  %3823 = vmatpush2.bf16.msra.mxu0 0
  %3824 = vmatprep.subr.bf16.mxu0 0
  %3825 = vmatpush2.bf16.msra.mxu0 0
  %3826 = vmatprep.subr.bf16.mxu0 0
  %3827 = vmatpush2.bf16.msra.mxu0 0
  %3828 = vmatprep.subr.bf16.mxu0 0
  %3829 = vmatpush2.bf16.msra.mxu0 0
  %3830 = vmatprep.subr.bf16.mxu0 0
  %3831 = vmatpush2.bf16.msra.mxu0 0
  %3832 = vmatprep.subr.bf16.mxu0 0
  %3833 = vmatpush2.bf16.msra.mxu0 0
  %3834 = vmatprep.mubr.bf16.mxu0 0
  %3835 = vmatmul.mubr.bf16.gmra.mxu0 %v3797
  %v3836 = vpop.f32.mrf.mxu0
  %v3837 = vadd.f32 0.0, %v3836
  %v3838 = vpop.f32.mrf.mxu0
  %v3839 = vpop.f32.mrf.mxu0
  %v3840 = vadd.f32 0.0, %v3839
  %v3841 = vpop.f32.mrf.mxu0
  %3842 = vdwg.mxu0
  %3844 = vrot.lane.b32.xlu0 %v3445, 64
  %v3845 = vpop.permute.xlu0 %3844
  %v3847 = vsel %vm1529, %v3741, 0
  %v3850 = vsel %vm1628, %v3845, 0
  %3852 = vmatprep.subr.bf16.mxu0 0
  %3853 = vmatpush1.bf16.msra.mxu0 0
  %3854 = vmatprep.subr.bf16.mxu0 0
  %3855 = vmatpush1.bf16.msra.mxu0 0
  %3856 = vmatprep.subr.bf16.mxu0 0
  %3857 = vmatpush1.bf16.msra.mxu0 0
  %3858 = vmatprep.subr.bf16.mxu0 0
  %3859 = vmatpush1.bf16.msra.mxu0 0
  %3860 = vmatprep.subr.bf16.mxu0 0
  %3861 = vmatpush1.bf16.msra.mxu0 0
  %3862 = vmatprep.subr.bf16.mxu0 0
  %3863 = vmatpush1.bf16.msra.mxu0 0
  %3864 = vmatprep.subr.bf16.mxu0 0
  %3865 = vmatpush1.bf16.msra.mxu0 0
  %3866 = vmatprep.subr.bf16.mxu0 0
  %3867 = vmatpush1.bf16.msra.mxu0 %v3850
  %3868 = vmatprep.subr.bf16.mxu0 0
  %3869 = vmatpush2.bf16.msra.mxu0 0
  %3870 = vmatprep.subr.bf16.mxu0 0
  %3871 = vmatpush2.bf16.msra.mxu0 0
  %3872 = vmatprep.subr.bf16.mxu0 0
  %3873 = vmatpush2.bf16.msra.mxu0 0
  %3874 = vmatprep.subr.bf16.mxu0 0
  %3875 = vmatpush2.bf16.msra.mxu0 0
  %3876 = vmatprep.subr.bf16.mxu0 0
  %3877 = vmatpush2.bf16.msra.mxu0 0
  %3878 = vmatprep.subr.bf16.mxu0 0
  %3879 = vmatpush2.bf16.msra.mxu0 0
  %3880 = vmatprep.subr.bf16.mxu0 0
  %3881 = vmatpush2.bf16.msra.mxu0 0
  %3882 = vmatprep.subr.bf16.mxu0 0
  %3883 = vmatpush2.bf16.msra.mxu0 0
  %3884 = vmatprep.mubr.bf16.mxu0 0
  %3885 = vmatmul.mubr.bf16.gmra.mxu0 %v3847
  %v3886 = vpop.f32.mrf.mxu0
  %v3887 = vadd.f32 0.0, %v3886
  %v3888 = vpop.f32.mrf.mxu0
  %v3889 = vpop.f32.mrf.mxu0
  %v3890 = vadd.f32 0.0, %v3889
  %v3891 = vpop.f32.mrf.mxu0
  %3892 = vdwg.mxu0
  %3894 = vrot.lane.b32.xlu0 %v3446, 64
  %v3895 = vpop.permute.xlu0 %3894
  %v3897 = vsel %vm1529, %v3742, 0
  %v3900 = vsel %vm1628, %v3895, 0
  %3902 = vmatprep.subr.bf16.mxu0 0
  %3903 = vmatpush1.bf16.msra.mxu0 0
  %3904 = vmatprep.subr.bf16.mxu0 0
  %3905 = vmatpush1.bf16.msra.mxu0 0
  %3906 = vmatprep.subr.bf16.mxu0 0
  %3907 = vmatpush1.bf16.msra.mxu0 0
  %3908 = vmatprep.subr.bf16.mxu0 0
  %3909 = vmatpush1.bf16.msra.mxu0 0
  %3910 = vmatprep.subr.bf16.mxu0 0
  %3911 = vmatpush1.bf16.msra.mxu0 0
  %3912 = vmatprep.subr.bf16.mxu0 0
  %3913 = vmatpush1.bf16.msra.mxu0 0
  %3914 = vmatprep.subr.bf16.mxu0 0
  %3915 = vmatpush1.bf16.msra.mxu0 0
  %3916 = vmatprep.subr.bf16.mxu0 0
  %3917 = vmatpush1.bf16.msra.mxu0 %v3900
  %3918 = vmatprep.subr.bf16.mxu0 0
  %3919 = vmatpush2.bf16.msra.mxu0 0
  %3920 = vmatprep.subr.bf16.mxu0 0
  %3921 = vmatpush2.bf16.msra.mxu0 0
  %3922 = vmatprep.subr.bf16.mxu0 0
  %3923 = vmatpush2.bf16.msra.mxu0 0
  %3924 = vmatprep.subr.bf16.mxu0 0
  %3925 = vmatpush2.bf16.msra.mxu0 0
  %3926 = vmatprep.subr.bf16.mxu0 0
  %3927 = vmatpush2.bf16.msra.mxu0 0
  %3928 = vmatprep.subr.bf16.mxu0 0
  %3929 = vmatpush2.bf16.msra.mxu0 0
  %3930 = vmatprep.subr.bf16.mxu0 0
  %3931 = vmatpush2.bf16.msra.mxu0 0
  %3932 = vmatprep.subr.bf16.mxu0 0
  %3933 = vmatpush2.bf16.msra.mxu0 0
  %3934 = vmatprep.mubr.bf16.mxu0 0
  %3935 = vmatmul.mubr.bf16.gmra.mxu0 %v3897
  %v3936 = vpop.f32.mrf.mxu0
  %v3937 = vadd.f32 0.0, %v3936
  %v3938 = vpop.f32.mrf.mxu0
  %v3939 = vpop.f32.mrf.mxu0
  %v3940 = vadd.f32 0.0, %v3939
  %v3941 = vpop.f32.mrf.mxu0
  %3942 = vdwg.mxu0
  %v3943 = vpack.c.bf16 %v3790, %v3787
  %v3944 = vpack.c.bf16 %v3840, %v3837
  %v3947 = vunpack.c.l.b16 %v3393
  %v3948 = vunpack.c.l.b16 %v3394
  %v3949 = vpack.c.b16 %v3948, %v3947
  %v3952 = vsel %vm356, %v3944, 0
  %3954 = vmatprep.subr.bf16.mxu0 0
  %3955 = vmatpush1.bf16.msra.mxu0 0
  %3956 = vmatprep.subr.bf16.mxu0 0
  %3957 = vmatpush1.bf16.msra.mxu0 0
  %3958 = vmatprep.subr.bf16.mxu0 0
  %3959 = vmatpush1.bf16.msra.mxu0 0
  %3960 = vmatprep.subr.bf16.mxu0 0
  %3961 = vmatpush1.bf16.msra.mxu0 0
  %3962 = vmatprep.subr.bf16.mxu0 0
  %3963 = vmatpush1.bf16.msra.mxu0 0
  %3964 = vmatprep.subr.bf16.mxu0 0
  %3965 = vmatpush1.bf16.msra.mxu0 0
  %3966 = vmatprep.subr.bf16.mxu0 0
  %3967 = vmatpush1.bf16.msra.mxu0 0
  %3968 = vmatprep.subr.bf16.mxu0 0
  %3969 = vmatpush1.bf16.msra.mxu0 %v3949
  %3970 = vmatprep.subr.bf16.mxu0 0
  %3971 = vmatpush2.bf16.msra.mxu0 0
  %3972 = vmatprep.subr.bf16.mxu0 0
  %3973 = vmatpush2.bf16.msra.mxu0 0
  %3974 = vmatprep.subr.bf16.mxu0 0
  %3975 = vmatpush2.bf16.msra.mxu0 0
  %3976 = vmatprep.subr.bf16.mxu0 0
  %3977 = vmatpush2.bf16.msra.mxu0 0
  %3978 = vmatprep.subr.bf16.mxu0 0
  %3979 = vmatpush2.bf16.msra.mxu0 0
  %3980 = vmatprep.subr.bf16.mxu0 0
  %3981 = vmatpush2.bf16.msra.mxu0 0
  %3982 = vmatprep.subr.bf16.mxu0 0
  %3983 = vmatpush2.bf16.msra.mxu0 0
  %3984 = vmatprep.subr.bf16.mxu0 0
  %3985 = vmatpush2.bf16.msra.mxu0 0
  %3986 = vmatprep.mubr.bf16.mxu0 0
  %3987 = vmatmul.mubr.bf16.gmra.mxu0 %v3952
  %v3988 = vpop.f32.mrf.mxu0
  %v3989 = vadd.f32 0.0, %v3988
  %v3990 = vpop.f32.mrf.mxu0
  %v3991 = vpop.f32.mrf.mxu0
  %v3992 = vadd.f32 0.0, %v3991
  %v3993 = vpop.f32.mrf.mxu0
  %3994 = vdwg.mxu0
  %v3997 = vunpack.c.l.b16 %v3391
  %v3998 = vunpack.c.l.b16 %v3392
  %v3999 = vpack.c.b16 %v3998, %v3997
  %v4002 = vsel %vm356, %v3943, 0
  %4004 = vmatprep.subr.bf16.mxu0 0
  %4005 = vmatpush1.bf16.msra.mxu0 0
  %4006 = vmatprep.subr.bf16.mxu0 0
  %4007 = vmatpush1.bf16.msra.mxu0 0
  %4008 = vmatprep.subr.bf16.mxu0 0
  %4009 = vmatpush1.bf16.msra.mxu0 0
  %4010 = vmatprep.subr.bf16.mxu0 0
  %4011 = vmatpush1.bf16.msra.mxu0 0
  %4012 = vmatprep.subr.bf16.mxu0 0
  %4013 = vmatpush1.bf16.msra.mxu0 0
  %4014 = vmatprep.subr.bf16.mxu0 0
  %4015 = vmatpush1.bf16.msra.mxu0 0
  %4016 = vmatprep.subr.bf16.mxu0 0
  %4017 = vmatpush1.bf16.msra.mxu0 0
  %4018 = vmatprep.subr.bf16.mxu0 0
  %4019 = vmatpush1.bf16.msra.mxu0 %v3999
  %4020 = vmatprep.subr.bf16.mxu0 0
  %4021 = vmatpush2.bf16.msra.mxu0 0
  %4022 = vmatprep.subr.bf16.mxu0 0
  %4023 = vmatpush2.bf16.msra.mxu0 0
  %4024 = vmatprep.subr.bf16.mxu0 0
  %4025 = vmatpush2.bf16.msra.mxu0 0
  %4026 = vmatprep.subr.bf16.mxu0 0
  %4027 = vmatpush2.bf16.msra.mxu0 0
  %4028 = vmatprep.subr.bf16.mxu0 0
  %4029 = vmatpush2.bf16.msra.mxu0 0
  %4030 = vmatprep.subr.bf16.mxu0 0
  %4031 = vmatpush2.bf16.msra.mxu0 0
  %4032 = vmatprep.subr.bf16.mxu0 0
  %4033 = vmatpush2.bf16.msra.mxu0 0
  %4034 = vmatprep.subr.bf16.mxu0 0
  %4035 = vmatpush2.bf16.msra.mxu0 0
  %4036 = vmatprep.mubr.bf16.mxu0 0
  %4037 = vmatmul.mubr.bf16.gmra.mxu0 %v4002
  %v4038 = vpop.f32.mrf.mxu0
  %v4039 = vadd.f32 %v3989, %v4038
  %v4040 = vpop.f32.mrf.mxu0
  %v4041 = vpop.f32.mrf.mxu0
  %v4042 = vadd.f32 %v3992, %v4041
  %v4043 = vpop.f32.mrf.mxu0
  %4044 = vdwg.mxu0
  %v4045 = vpack.c.bf16 %v3890, %v3887
  %v4048 = vunpack.c.l.b16 %v3395
  %v4049 = vunpack.c.l.b16 %v3396
  %v4050 = vpack.c.b16 %v4049, %v4048
  %v4053 = vsel %vm356, %v4045, 0
  %4055 = vmatprep.subr.bf16.mxu0 0
  %4056 = vmatpush1.bf16.msra.mxu0 0
  %4057 = vmatprep.subr.bf16.mxu0 0
  %4058 = vmatpush1.bf16.msra.mxu0 0
  %4059 = vmatprep.subr.bf16.mxu0 0
  %4060 = vmatpush1.bf16.msra.mxu0 0
  %4061 = vmatprep.subr.bf16.mxu0 0
  %4062 = vmatpush1.bf16.msra.mxu0 0
  %4063 = vmatprep.subr.bf16.mxu0 0
  %4064 = vmatpush1.bf16.msra.mxu0 0
  %4065 = vmatprep.subr.bf16.mxu0 0
  %4066 = vmatpush1.bf16.msra.mxu0 0
  %4067 = vmatprep.subr.bf16.mxu0 0
  %4068 = vmatpush1.bf16.msra.mxu0 0
  %4069 = vmatprep.subr.bf16.mxu0 0
  %4070 = vmatpush1.bf16.msra.mxu0 %v4050
  %4071 = vmatprep.subr.bf16.mxu0 0
  %4072 = vmatpush2.bf16.msra.mxu0 0
  %4073 = vmatprep.subr.bf16.mxu0 0
  %4074 = vmatpush2.bf16.msra.mxu0 0
  %4075 = vmatprep.subr.bf16.mxu0 0
  %4076 = vmatpush2.bf16.msra.mxu0 0
  %4077 = vmatprep.subr.bf16.mxu0 0
  %4078 = vmatpush2.bf16.msra.mxu0 0
  %4079 = vmatprep.subr.bf16.mxu0 0
  %4080 = vmatpush2.bf16.msra.mxu0 0
  %4081 = vmatprep.subr.bf16.mxu0 0
  %4082 = vmatpush2.bf16.msra.mxu0 0
  %4083 = vmatprep.subr.bf16.mxu0 0
  %4084 = vmatpush2.bf16.msra.mxu0 0
  %4085 = vmatprep.subr.bf16.mxu0 0
  %4086 = vmatpush2.bf16.msra.mxu0 0
  %4087 = vmatprep.mubr.bf16.mxu0 0
  %4088 = vmatmul.mubr.bf16.gmra.mxu0 %v4053
  %v4089 = vpop.f32.mrf.mxu0
  %v4090 = vadd.f32 0.0, %v4089
  %v4091 = vpop.f32.mrf.mxu0
  %v4092 = vpop.f32.mrf.mxu0
  %v4093 = vadd.f32 0.0, %v4092
  %v4094 = vpop.f32.mrf.mxu0
  %4095 = vdwg.mxu0
  %v4096 = vadd.f32 %v4039, %v4090
  %v4097 = vadd.f32 %v4042, %v4093
  %v4098 = vpack.c.bf16 %v3940, %v3937
  %v4101 = vunpack.c.l.b16 %v3397
  %v4102 = vunpack.c.l.b16 %v3398
  %v4103 = vpack.c.b16 %v4102, %v4101
  %v4106 = vsel %vm356, %v4098, 0
  %4108 = vmatprep.subr.bf16.mxu0 0
  %4109 = vmatpush1.bf16.msra.mxu0 0
  %4110 = vmatprep.subr.bf16.mxu0 0
  %4111 = vmatpush1.bf16.msra.mxu0 0
  %4112 = vmatprep.subr.bf16.mxu0 0
  %4113 = vmatpush1.bf16.msra.mxu0 0
  %4114 = vmatprep.subr.bf16.mxu0 0
  %4115 = vmatpush1.bf16.msra.mxu0 0
  %4116 = vmatprep.subr.bf16.mxu0 0
  %4117 = vmatpush1.bf16.msra.mxu0 0
  %4118 = vmatprep.subr.bf16.mxu0 0
  %4119 = vmatpush1.bf16.msra.mxu0 0
  %4120 = vmatprep.subr.bf16.mxu0 0
  %4121 = vmatpush1.bf16.msra.mxu0 0
  %4122 = vmatprep.subr.bf16.mxu0 0
  %4123 = vmatpush1.bf16.msra.mxu0 %v4103
  %4124 = vmatprep.subr.bf16.mxu0 0
  %4125 = vmatpush2.bf16.msra.mxu0 0
  %4126 = vmatprep.subr.bf16.mxu0 0
  %4127 = vmatpush2.bf16.msra.mxu0 0
  %4128 = vmatprep.subr.bf16.mxu0 0
  %4129 = vmatpush2.bf16.msra.mxu0 0
  %4130 = vmatprep.subr.bf16.mxu0 0
  %4131 = vmatpush2.bf16.msra.mxu0 0
  %4132 = vmatprep.subr.bf16.mxu0 0
  %4133 = vmatpush2.bf16.msra.mxu0 0
  %4134 = vmatprep.subr.bf16.mxu0 0
  %4135 = vmatpush2.bf16.msra.mxu0 0
  %4136 = vmatprep.subr.bf16.mxu0 0
  %4137 = vmatpush2.bf16.msra.mxu0 0
  %4138 = vmatprep.subr.bf16.mxu0 0
  %4139 = vmatpush2.bf16.msra.mxu0 0
  %4140 = vmatprep.mubr.bf16.mxu0 0
  %4141 = vmatmul.mubr.bf16.gmra.mxu0 %v4106
  %v4142 = vpop.f32.mrf.mxu0
  %v4143 = vadd.f32 0.0, %v4142
  %v4144 = vpop.f32.mrf.mxu0
  %v4145 = vpop.f32.mrf.mxu0
  %v4146 = vadd.f32 0.0, %v4145
  %v4147 = vpop.f32.mrf.mxu0
  %4148 = vdwg.mxu0
  %v4149 = vadd.f32 %v4096, %v4143
  %v4150 = vadd.f32 %v4097, %v4146
  %v4151 = vadd.f32 %v3174, %v4149
  %v4152 = vadd.f32 %v3175, %v4150
  %s4153 = scalar_lea.vmem %s37, 1
  %v4154 = vld [vmem:[%s4153] sm:$0x1]
  %v4156 = vlaneseq
  %v4157 = vshrl.u32 %v4156, 7
  %v4158 = vsub.s32 0, %v4157
  %v4159 = vrot.slane %v4154, %v4158
  %v4161 = vadd.f32 %v4151, %v4159
  %v4162 = vadd.f32 %v4152, %v4159
  %s4163 = scalar_lea.vmem %s39, 1
  %v4164 = vld [vmem:[%s4163] sm:$0x1]
  %s4165 = scalar_lea.vmem %s41, 1
  %v4166 = vld [vmem:[%s4165] sm:$0x1]
  %v4167 = vsel %vm146, %v4161, 0.0
  %4168 = vadd.xlane.f32.xlu0 %v4167
  %v4169 = vpop.xlane.xlu0 %4168
  %v4170 = vsel %vm146, %v4162, 0.0
  %4171 = vadd.xlane.f32.xlu0 %v4170
  %v4172 = vpop.xlane.xlu0 %4171
  %v4173 = vmul.f32 %v4169, %v153
  %v4174 = vmul.f32 %v4172, %v153
  %v4175 = vsub.f32 %v4161, %v4173
  %v4176 = vsub.f32 %v4162, %v4174
  %v4177 = vmul.f32 %v4175, %v4175
  %v4178 = vmul.f32 %v4176, %v4176
  %v4179 = vsel %vm146, %v4177, 0.0
  %4180 = vadd.xlane.f32.xlu0 %v4179
  %v4181 = vpop.xlane.xlu0 %4180
  %v4182 = vsel %vm146, %v4178, 0.0
  %4183 = vadd.xlane.f32.xlu0 %v4182
  %v4184 = vpop.xlane.xlu0 %4183
  %v4185 = vmul.f32 %v4181, %v153
  %v4186 = vmul.f32 %v4184, %v153
  %v4187 = vadd.f32 %v4185, 1e-06
  %v4188 = vadd.f32 %v4186, 1e-06
  %v4189 = vrsqrt.pop %v4187
  %v4190 = vrsqrt.pop %v4188
  %v4191 = vmul.f32 %v4175, %v4189
  %v4192 = vmul.f32 %v4176, %v4190
  %v4194 = vlaneseq
  %v4195 = vshrl.u32 %v4194, 7
  %v4196 = vsub.s32 0, %v4195
  %v4197 = vrot.slane %v4164, %v4196
  %v4199 = vmul.f32 %v4191, %v4197
  %v4200 = vmul.f32 %v4192, %v4197
  %v4202 = vlaneseq
  %v4203 = vshrl.u32 %v4202, 7
  %v4204 = vsub.s32 0, %v4203
  %v4205 = vrot.slane %v4166, %v4204
  %v4207 = vadd.f32 %v4199, %v4205
  %v4208 = vadd.f32 %v4200, %v4205
  %v4209 = vpack.c.bf16 %v4208, %v4207
  %s4210 = scalar_lea.vmem %s43, 32
  %v4211 = vld [vmem:[%s4210] sm:$0xf]
  %v4212 = vld [vmem:[%s4210 + $0x4] sm:$0xf]
  %v4213 = vld [vmem:[%s4210 + $0x8] sm:$0xf]
  %v4214 = vld [vmem:[%s4210 + $0xc] sm:$0xf]
  %v4215 = vld [vmem:[%s4210 + $0x10] sm:$0xf]
  %v4216 = vld [vmem:[%s4210 + $0x14] sm:$0xf]
  %v4217 = vld [vmem:[%s4210 + $0x18] sm:$0xf]
  %v4218 = vld [vmem:[%s4210 + $0x1c] sm:$0xf]
  %s4219 = scalar_lea.vmem %s45, 1
  %v4220 = vld [vmem:[%s4219] sm:$0x1]
  %v4222 = vlaneseq
  %v4223 = vshrl.u32 %v4222, 7
  %v4224 = vsub.s32 0, %v4223
  %v4225 = vrot.slane %v4220, %v4224
  %v4235 = vunpack.c.l.b16 %v4211
  %v4236 = vunpack.c.l.b16 %v4212
  %v4237 = vunpack.c.l.b16 %v4213
  %v4238 = vunpack.c.l.b16 %v4214
  %v4239 = vunpack.c.l.b16 %v4215
  %v4240 = vunpack.c.l.b16 %v4216
  %v4241 = vunpack.c.l.b16 %v4217
  %v4242 = vunpack.c.l.b16 %v4218
  %v4243 = vpack.c.b16 %v4236, %v4235
  %v4244 = vpack.c.b16 %v4238, %v4237
  %v4245 = vpack.c.b16 %v4240, %v4239
  %v4246 = vpack.c.b16 %v4242, %v4241
  %v4252 = vsel %vm146, %v4209, 0
  %4254 = vmatprep.subr.bf16.mxu0 0
  %4255 = vmatpush1.bf16.msra.mxu0 0
  %4256 = vmatprep.subr.bf16.mxu0 0
  %4257 = vmatpush1.bf16.msra.mxu0 0
  %4258 = vmatprep.subr.bf16.mxu0 0
  %4259 = vmatpush1.bf16.msra.mxu0 0
  %4260 = vmatprep.subr.bf16.mxu0 0
  %4261 = vmatpush1.bf16.msra.mxu0 0
  %4262 = vmatprep.subr.bf16.mxu0 0
  %4263 = vmatpush1.bf16.msra.mxu0 %v4246
  %4264 = vmatprep.subr.bf16.mxu0 0
  %4265 = vmatpush1.bf16.msra.mxu0 %v4245
  %4266 = vmatprep.subr.bf16.mxu0 0
  %4267 = vmatpush1.bf16.msra.mxu0 %v4244
  %4268 = vmatprep.subr.bf16.mxu0 0
  %4269 = vmatpush1.bf16.msra.mxu0 %v4243
  %4270 = vmatprep.subr.bf16.mxu0 0
  %4271 = vmatpush2.bf16.msra.mxu0 0
  %4272 = vmatprep.subr.bf16.mxu0 0
  %4273 = vmatpush2.bf16.msra.mxu0 0
  %4274 = vmatprep.subr.bf16.mxu0 0
  %4275 = vmatpush2.bf16.msra.mxu0 0
  %4276 = vmatprep.subr.bf16.mxu0 0
  %4277 = vmatpush2.bf16.msra.mxu0 0
  %4278 = vmatprep.subr.bf16.mxu0 0
  %4279 = vmatpush2.bf16.msra.mxu0 0
  %4280 = vmatprep.subr.bf16.mxu0 0
  %4281 = vmatpush2.bf16.msra.mxu0 0
  %4282 = vmatprep.subr.bf16.mxu0 0
  %4283 = vmatpush2.bf16.msra.mxu0 0
  %4284 = vmatprep.subr.bf16.mxu0 0
  %4285 = vmatpush2.bf16.msra.mxu0 0
  %4286 = vmatprep.mubr.bf16.mxu0 0
  %4287 = vmatmul.mubr.bf16.gmra.mxu0 %v4252
  %v4288 = vpop.f32.mrf.mxu0
  %v4289 = vadd.f32 %v4225, %v4288
  %v4290 = vpop.f32.mrf.mxu0
  %v4291 = vpop.f32.mrf.mxu0
  %v4292 = vadd.f32 %v4225, %v4291
  %v4293 = vpop.f32.mrf.mxu0
  %4294 = vdwg.mxu0
  %v4295 = vmax.f32 %v4289, 0.0
  %v4296 = vmax.f32 %v4292, 0.0
  %v4297 = vpack.c.bf16 %v4296, %v4295
  %s4298 = scalar_lea.vmem %s47, 32
  %v4299 = vld [vmem:[%s4298] sm:$0xf]
  %v4300 = vld [vmem:[%s4298 + $0x4] sm:$0xf]
  %v4301 = vld [vmem:[%s4298 + $0x8] sm:$0xf]
  %v4302 = vld [vmem:[%s4298 + $0xc] sm:$0xf]
  %v4303 = vld [vmem:[%s4298 + $0x10] sm:$0xf]
  %v4304 = vld [vmem:[%s4298 + $0x14] sm:$0xf]
  %v4305 = vld [vmem:[%s4298 + $0x18] sm:$0xf]
  %v4306 = vld [vmem:[%s4298 + $0x1c] sm:$0xf]
  %v4315 = vunpack.c.l.b16 %v4299
  %v4316 = vunpack.c.l.b16 %v4300
  %v4317 = vunpack.c.l.b16 %v4301
  %v4318 = vunpack.c.l.b16 %v4302
  %v4319 = vunpack.c.l.b16 %v4303
  %v4320 = vunpack.c.l.b16 %v4304
  %v4321 = vunpack.c.l.b16 %v4305
  %v4322 = vunpack.c.l.b16 %v4306
  %v4323 = vpack.c.b16 %v4316, %v4315
  %v4324 = vpack.c.b16 %v4318, %v4317
  %v4325 = vpack.c.b16 %v4320, %v4319
  %v4326 = vpack.c.b16 %v4322, %v4321
  %v4332 = vsel %vm146, %v4297, 0
  %4334 = vmatprep.subr.bf16.mxu0 0
  %4335 = vmatpush1.bf16.msra.mxu0 0
  %4336 = vmatprep.subr.bf16.mxu0 0
  %4337 = vmatpush1.bf16.msra.mxu0 0
  %4338 = vmatprep.subr.bf16.mxu0 0
  %4339 = vmatpush1.bf16.msra.mxu0 0
  %4340 = vmatprep.subr.bf16.mxu0 0
  %4341 = vmatpush1.bf16.msra.mxu0 0
  %4342 = vmatprep.subr.bf16.mxu0 0
  %4343 = vmatpush1.bf16.msra.mxu0 %v4326
  %4344 = vmatprep.subr.bf16.mxu0 0
  %4345 = vmatpush1.bf16.msra.mxu0 %v4325
  %4346 = vmatprep.subr.bf16.mxu0 0
  %4347 = vmatpush1.bf16.msra.mxu0 %v4324
  %4348 = vmatprep.subr.bf16.mxu0 0
  %4349 = vmatpush1.bf16.msra.mxu0 %v4323
  %4350 = vmatprep.subr.bf16.mxu0 0
  %4351 = vmatpush2.bf16.msra.mxu0 0
  %4352 = vmatprep.subr.bf16.mxu0 0
  %4353 = vmatpush2.bf16.msra.mxu0 0
  %4354 = vmatprep.subr.bf16.mxu0 0
  %4355 = vmatpush2.bf16.msra.mxu0 0
  %4356 = vmatprep.subr.bf16.mxu0 0
  %4357 = vmatpush2.bf16.msra.mxu0 0
  %4358 = vmatprep.subr.bf16.mxu0 0
  %4359 = vmatpush2.bf16.msra.mxu0 0
  %4360 = vmatprep.subr.bf16.mxu0 0
  %4361 = vmatpush2.bf16.msra.mxu0 0
  %4362 = vmatprep.subr.bf16.mxu0 0
  %4363 = vmatpush2.bf16.msra.mxu0 0
  %4364 = vmatprep.subr.bf16.mxu0 0
  %4365 = vmatpush2.bf16.msra.mxu0 0
  %4366 = vmatprep.mubr.bf16.mxu0 0
  %4367 = vmatmul.mubr.bf16.gmra.mxu0 %v4332
  %v4368 = vpop.f32.mrf.mxu0
  %v4369 = vadd.f32 0.0, %v4368
  %v4370 = vpop.f32.mrf.mxu0
  %v4371 = vpop.f32.mrf.mxu0
  %v4372 = vadd.f32 0.0, %v4371
  %v4373 = vpop.f32.mrf.mxu0
  %4374 = vdwg.mxu0
  %v4375 = vadd.f32 %v4161, %v4369
  %v4376 = vadd.f32 %v4162, %v4372
  %s4377 = scalar_lea.vmem %s49, 1
  %v4378 = vld [vmem:[%s4377] sm:$0x1]
  %v4380 = vlaneseq
  %v4381 = vshrl.u32 %v4380, 7
  %v4382 = vsub.s32 0, %v4381
  %v4383 = vrot.slane %v4378, %v4382
  %v4385 = vadd.f32 %v4375, %v4383
  %v4386 = vadd.f32 %v4376, %v4383
  %v4387 = vld [vmem:[%s51] sm:$0x1]
  %v4388 = vld [vmem:[%s53] sm:$0x1]
  %v4389 = vsel %vm146, %v4385, 0.0
  %4390 = vadd.xlane.f32.xlu0 %v4389
  %v4391 = vpop.xlane.xlu0 %4390
  %v4392 = vsel %vm146, %v4386, 0.0
  %4393 = vadd.xlane.f32.xlu0 %v4392
  %v4394 = vpop.xlane.xlu0 %4393
  %v4395 = vmul.f32 %v4391, %v153
  %v4396 = vmul.f32 %v4394, %v153
  %v4397 = vsub.f32 %v4385, %v4395
  %v4398 = vsub.f32 %v4386, %v4396
  %v4399 = vmul.f32 %v4397, %v4397
  %v4400 = vmul.f32 %v4398, %v4398
  %v4401 = vsel %vm146, %v4399, 0.0
  %4402 = vadd.xlane.f32.xlu0 %v4401
  %v4403 = vpop.xlane.xlu0 %4402
  %v4404 = vsel %vm146, %v4400, 0.0
  %4405 = vadd.xlane.f32.xlu0 %v4404
  %v4406 = vpop.xlane.xlu0 %4405
  %v4407 = vmul.f32 %v4403, %v153
  %v4408 = vmul.f32 %v4406, %v153
  %v4409 = vadd.f32 %v4407, 1e-06
  %v4410 = vadd.f32 %v4408, 1e-06
  %v4411 = vrsqrt.pop %v4409
  %v4412 = vrsqrt.pop %v4410
  %v4413 = vmul.f32 %v4397, %v4411
  %v4414 = vmul.f32 %v4398, %v4412
  %v4416 = vlaneseq
  %v4417 = vshrl.u32 %v4416, 7
  %v4418 = vsub.s32 0, %v4417
  %v4419 = vrot.slane %v4387, %v4418
  %v4421 = vmul.f32 %v4413, %v4419
  %v4422 = vmul.f32 %v4414, %v4419
  %v4424 = vlaneseq
  %v4425 = vshrl.u32 %v4424, 7
  %v4426 = vsub.s32 0, %v4425
  %v4427 = vrot.slane %v4388, %v4426
  %v4429 = vadd.f32 %v4421, %v4427
  %v4430 = vadd.f32 %v4422, %v4427
  %v4431 = vpack.c.bf16 %v4430, %v4429
  %v4432 = vld [vmem:[%s55] sm:$0xf]
  %v4433 = vld [vmem:[%s55 + $0x4] sm:$0xf]
  %v4434 = vld [vmem:[%s55 + $0x8] sm:$0xf]
  %v4435 = vld [vmem:[%s55 + $0xc] sm:$0xf]
  %v4436 = vld [vmem:[%s55 + $0x10] sm:$0xf]
  %v4437 = vld [vmem:[%s55 + $0x14] sm:$0xf]
  %v4438 = vld [vmem:[%s55 + $0x18] sm:$0xf]
  %v4439 = vld [vmem:[%s55 + $0x1c] sm:$0xf]
  %v4440 = vld [vmem:[%s57] sm:$0x1]
  %v4442 = vlaneseq
  %v4443 = vshrl.u32 %v4442, 7
  %v4444 = vsub.s32 0, %v4443
  %v4445 = vrot.slane %v4440, %v4444
  %v4455 = vunpack.c.l.b16 %v4432
  %v4456 = vunpack.c.l.b16 %v4433
  %v4457 = vunpack.c.l.b16 %v4434
  %v4458 = vunpack.c.l.b16 %v4435
  %v4459 = vunpack.c.l.b16 %v4436
  %v4460 = vunpack.c.l.b16 %v4437
  %v4461 = vunpack.c.l.b16 %v4438
  %v4462 = vunpack.c.l.b16 %v4439
  %v4463 = vpack.c.b16 %v4456, %v4455
  %v4464 = vpack.c.b16 %v4458, %v4457
  %v4465 = vpack.c.b16 %v4460, %v4459
  %v4466 = vpack.c.b16 %v4462, %v4461
  %v4472 = vsel %vm146, %v4431, 0
  %4474 = vmatprep.subr.bf16.mxu0 0
  %4475 = vmatpush1.bf16.msra.mxu0 0
  %4476 = vmatprep.subr.bf16.mxu0 0
  %4477 = vmatpush1.bf16.msra.mxu0 0
  %4478 = vmatprep.subr.bf16.mxu0 0
  %4479 = vmatpush1.bf16.msra.mxu0 0
  %4480 = vmatprep.subr.bf16.mxu0 0
  %4481 = vmatpush1.bf16.msra.mxu0 0
  %4482 = vmatprep.subr.bf16.mxu0 0
  %4483 = vmatpush1.bf16.msra.mxu0 %v4466
  %4484 = vmatprep.subr.bf16.mxu0 0
  %4485 = vmatpush1.bf16.msra.mxu0 %v4465
  %4486 = vmatprep.subr.bf16.mxu0 0
  %4487 = vmatpush1.bf16.msra.mxu0 %v4464
  %4488 = vmatprep.subr.bf16.mxu0 0
  %4489 = vmatpush1.bf16.msra.mxu0 %v4463
  %4490 = vmatprep.subr.bf16.mxu0 0
  %4491 = vmatpush2.bf16.msra.mxu0 0
  %4492 = vmatprep.subr.bf16.mxu0 0
  %4493 = vmatpush2.bf16.msra.mxu0 0
  %4494 = vmatprep.subr.bf16.mxu0 0
  %4495 = vmatpush2.bf16.msra.mxu0 0
  %4496 = vmatprep.subr.bf16.mxu0 0
  %4497 = vmatpush2.bf16.msra.mxu0 0
  %4498 = vmatprep.subr.bf16.mxu0 0
  %4499 = vmatpush2.bf16.msra.mxu0 0
  %4500 = vmatprep.subr.bf16.mxu0 0
  %4501 = vmatpush2.bf16.msra.mxu0 0
  %4502 = vmatprep.subr.bf16.mxu0 0
  %4503 = vmatpush2.bf16.msra.mxu0 0
  %4504 = vmatprep.subr.bf16.mxu0 0
  %4505 = vmatpush2.bf16.msra.mxu0 0
  %4506 = vmatprep.mubr.bf16.mxu0 0
  %4507 = vmatmul.mubr.bf16.gmra.mxu0 %v4472
  %v4508 = vpop.f32.mrf.mxu0
  %v4509 = vadd.f32 %v4445, %v4508
  %v4510 = vpop.f32.mrf.mxu0
  %v4511 = vpop.f32.mrf.mxu0
  %v4512 = vadd.f32 %v4445, %v4511
  %v4513 = vpop.f32.mrf.mxu0
  %4514 = vdwg.mxu0
  %4515 = vmax.xlane.f32.xlu0 %v4509
  %v4516 = vpop.xlane.xlu0 %4515
  %4517 = vmax.xlane.f32.xlu0 %v4512
  %v4518 = vpop.xlane.xlu0 %4517
  %v4519 = vsub.f32 %v4509, %v4516
  %v4520 = vsub.f32 %v4512, %v4518
  %v4521 = vmul.f32 %v4519, 1.442695
  %v4522 = vpow.pop %v4521
  %v4523 = vmul.f32 %v4520, 1.442695
  %v4524 = vpow.pop %v4523
  %4525 = vadd.xlane.f32.xlu0 %v4522
  %v4526 = vpop.xlane.xlu0 %4525
  %4527 = vadd.xlane.f32.xlu0 %v4524
  %v4528 = vpop.xlane.xlu0 %4527
  %v4529 = vlog2.pop %v4526
  %v4530 = vmul.f32 %v4529, 0.6931472
  %v4531 = vlog2.pop %v4528
  %v4532 = vmul.f32 %v4531, 0.6931472
  %v4533 = vsub.f32 %v4519, %v4530
  %v4534 = vsub.f32 %v4520, %v4532
  %4535 = vst [vmem:[%s59] sm:$0xff] %v4533
  %4536 = vst [vmem:[%s59 + $0x8] sm:$0xff] %v4534
  // Predicated region
  $region118: #{recosa_forward.3} parent=0 // pred_check
    _
  $region119: #{recosa_forward.3} parent=0 // pred_check_branch
    %4538 = sbr.rel (0) target = $region121
  $region120: #{recosa_forward.3} parent=0 // pred_region
    _
  $region121: #{recosa_forward.3} parent=0 // pred_fallthru
    _
  // Predicated region
  $region122: #{recosa_forward.3} parent=0 // pred_check
    _
  $region123: #{recosa_forward.3} parent=0 // pred_check_branch
    %4540 = sbr.rel (0) target = $region125
  $region124: #{recosa_forward.3} parent=0 // pred_region
    _
  $region125: #{recosa_forward.3} parent=0 // pred_fallthru
    _

</llo_original>
